<compile_context>
chip_gen: v6e
topology: v6e:2x2x1
jax: 0.10.0
libtpu: 0.0.40
codegen_flags: <defaults>
</compile_context>

<pallas_src>
import jax
import jax.numpy as jnp
from jax.experimental import pallas as pl
from jax.experimental.pallas import tpu as pltpu


# ---------------------------------------------------------------------------
# Fused Pallas kernel: fc head + all nested branches + joins + feedback residual
# ---------------------------------------------------------------------------
def _make_fused_kernel(latent, top_classes, num_branches, num_rest_layers, layer0_width):
    def kernel(x_ref, fw1_ref, fb1_ref, fw2_ref, fb2_ref, w0_ref, b0_ref, *rest):
        stack_refs = rest[:2 * num_rest_layers]                 # (w_stack, b_stack) per layer 1..
        wjn_ref, wjt_ref, bj_ref, fsel_ref, out_ref = rest[2 * num_rest_layers:]

        x = x_ref[...]
        cd = w0_ref.dtype        # MXU-operand compute dtype (f32 or bf16); VPU math stays f32

        # ---- fc head: Dropout(id) -> Linear(in, latent) -> Linear(latent, C).  f32 only.
        h = jnp.dot(x, fw1_ref[...], preferred_element_type=jnp.float32) + fb1_ref[...]
        fw2 = fw2_ref[...]
        # latent (=3) -> top_classes contraction: tiny K, keep it on the VPU as broadcast-FMAs.
        tc = fb2_ref[...] + h[:, 0:1] * fw2[0:1, :]
        for l in range(1, latent):
            tc = tc + h[:, l:l + 1] * fw2[l:l + 1, :]
        tc_relu = jnp.maximum(tc, 0.0)

        # ---- join tc-half + feedback residual + bias (tiny-K VPU FMAs, f32).
        # fsel also routes raw tc into the trailing top_classes columns of the merged slab.
        wjt = wjt_ref[...]
        fsel = fsel_ref[...]
        acc = bj_ref[...] + tc_relu[:, 0:1] * wjt[0:1, :] + tc[:, 0:1] * fsel[0:1, :]
        for c in range(1, top_classes):
            acc = acc + tc_relu[:, c:c + 1] * wjt[c:c + 1, :] + tc[:, c:c + 1] * fsel[c:c + 1, :]

        # ---- branches.  Layer 0 is fused across branches into one wide MXU pass.
        xr = jnp.maximum(x, 0.0).astype(cd)
        h0 = jnp.maximum(
            jnp.dot(xr, w0_ref[...], preferred_element_type=jnp.float32) + b0_ref[...], 0.0)
        for b in range(num_branches):            # statically unrolled (nb is tiny)
            hb = h0[:, b * layer0_width:(b + 1) * layer0_width]   # 128-aligned lane-group slice
            for li in range(num_rest_layers):
                w = stack_refs[2 * li][b]
                bvec = stack_refs[2 * li + 1][b]
                hb = jnp.dot(hb.astype(cd), w, preferred_element_type=jnp.float32) + bvec
                if li < num_rest_layers - 1:
                    hb = jnp.maximum(hb, 0.0)
            # join "nested" half: wjn[b] is zero outside this branch's output columns,
            # so the accumulate stays full-slab lane-dense (single store below).
            acc = acc + jnp.dot(jnp.maximum(hb, 0.0).astype(cd), wjn_ref[b],
                                preferred_element_type=jnp.float32)

        out_ref[...] = acc.astype(out_ref.dtype)

    return kernel


def model_forward(x, packed, *, tile_b=256):
    """Fused forward.  Returns (branch_outputs [B, total_out], top_class [B, C])."""
    m = packed["meta"]
    B, in_features = x.shape
    TB = B if B <= tile_b else tile_b            # TB=256 keeps the largest temp (TB,512)f32 ~0.5 MB
    grid = (pl.cdiv(B, TB),)

    kernel = _make_fused_kernel(m["latent"], m["top_classes"], m["num_branches"],
                                m["num_rest_layers"], m["layer0_width"])

    weights = (packed["fc"] + (packed["w0"], packed["b0"]) + packed["nested"]
               + (packed["wjn"], packed["wjt"], packed["bj"], packed["fsel"]))

    def _resident(a):                            # whole-array, VMEM-resident across batch tiles
        nd = a.ndim
        return pl.BlockSpec(a.shape, lambda i, _nd=nd: (0,) * _nd)

    in_specs = ([pl.BlockSpec((TB, in_features), lambda i: (i, 0))]
                + [_resident(a) for a in weights])
    out_spec = pl.BlockSpec((TB, m["total_width"]), lambda i: (i, 0))

    # Advisory cost estimate with real FLOPs / bytes.
    rest_mm = sum(packed["nested"][2 * li].shape[1] * packed["nested"][2 * li].shape[2]
                  for li in range(m["num_rest_layers"]))
    flops = 2 * B * (in_features * m["latent"] + m["latent"] * m["top_classes"]
                     + in_features * packed["w0"].shape[1]
                     + m["num_branches"] * rest_mm
                     + m["num_branches"] * packed["wjn"].shape[1] * m["total_width"]
                     + 2 * m["top_classes"] * m["total_width"])
    w_bytes = sum(a.size * a.dtype.itemsize for a in weights)
    bytes_accessed = int(w_bytes + x.size * 4 + B * m["total_width"] * 4)

    slab = pl.pallas_call(
        kernel,
        out_shape=jax.ShapeDtypeStruct((B, m["total_width"]), jnp.float32),
        grid=grid,
        in_specs=in_specs,
        out_specs=out_spec,
        compiler_params=pltpu.CompilerParams(
            dimension_semantics=("parallel",),            # batch tiles shard across v7x's 2 TCs
            vmem_limit_bytes=32 * 1024 * 1024),           # safe on v5e/v6e/v7x, >> resident need
        cost_estimate=pl.CostEstimate(flops=int(flops), transcendentals=0,
                                      bytes_accessed=bytes_accessed),
    )(x.astype(jnp.float32), *weights)

    return slab[:, :m["total_out"]], slab[:, m["total_out"]:]


# ---------------------------------------------------------------------------
# Parameter init (PyTorch Linear default-style) and one-time packing
# ---------------------------------------------------------------------------
def _linear_init(key, fan_in, fan_out):
    k1, k2 = jax.random.split(key)
    bound = 1.0 / jnp.sqrt(jnp.float32(fan_in))
    w = jax.random.uniform(k1, (fan_in, fan_out), jnp.float32, -bound, bound)
    b = jax.random.uniform(k2, (1, fan_out), jnp.float32, -bound, bound)
    return w, b


def init_params(key, categories, in_features, latent=3, fc_layers=(512, 256, 128, 56)):
    top_classes = len(categories)
    keys = jax.random.split(key, 2 + (len(fc_layers) + 1) * len(categories))
    ki = iter(range(len(keys)))

    w1, b1 = _linear_init(keys[next(ki)], in_features, latent)
    w2, b2 = _linear_init(keys[next(ki)], latent, top_classes)
    params = {"fc": (w1, b1, w2, b2), "nested": [], "join": []}

    dims = [in_features] + list(fc_layers)      # len(fc_layers) linears per nested branch
    for values in categories.values():
        nested = []
        for d_in, d_out in zip(dims[:-1], dims[1:]):
            nested.append(_linear_init(keys[next(ki)], d_in, d_out))
        params["nested"].append(tuple(nested))
        wj, bj = _linear_init(keys[next(ki)], fc_layers[-1] + top_classes, len(values))
        params["join"].append((wj, bj))
    return params


def pack_params(raw, categories, fc_layers=(512, 256, 128, 56), param_dtype=jnp.float32):
    """One-time repack for the fused kernel.

    param_dtype only affects MXU-fed weights (fused layer-0 matrix, stacked nested weights,
    zero-padded join slab).  All VPU-path params (fc head, biases, wjt, fsel) stay f32 so the
    fc-head output is bit-tight and v5e (no bf16 VPU) never sees bf16 elementwise math.
    """
    top_classes = len(categories)
    out_widths = [len(v) for v in categories.values()]
    total_out = int(sum(out_widths))
    nb = len(out_widths)
    assert nb == top_classes, "feedback selection packing requires num_branches == top_classes"
    n_feat = fc_layers[-1]
    n_layers = len(fc_layers)
    layer0_width = fc_layers[0]
    total_width = total_out + top_classes       # merged output slab: [branch outs | top_class]

    mxu_cast = lambda a: a.astype(param_dtype)
    f32 = lambda a: a.astype(jnp.float32)

    fc = tuple(f32(a) for a in raw["fc"])

    # fused layer-0: concat along N -> (in, nb*layer0_width); 512-wide lane groups are 128-aligned.
    w0 = mxu_cast(jnp.concatenate([raw["nested"][b][0][0] for b in range(nb)], axis=1))
    b0 = f32(jnp.concatenate([raw["nested"][b][0][1] for b in range(nb)], axis=1))

    nested = []
    for li in range(1, n_layers):
        nested.append(mxu_cast(jnp.stack([raw["nested"][b][li][0] for b in range(nb)])))
        nested.append(f32(jnp.stack([raw["nested"][b][li][1] for b in range(nb)])))

    wjn = jnp.zeros((nb, n_feat, total_width), jnp.float32)
    wjt = jnp.zeros((top_classes, total_width), jnp.float32)
    bj = jnp.zeros((1, total_width), jnp.float32)
    fsel = jnp.zeros((top_classes, total_width), jnp.float32)
    off = 0
    for b, w in enumerate(out_widths):
        wj_b, bj_b = raw["join"][b]
        wjn = wjn.at[b, :, off:off + w].set(wj_b[:n_feat])
        wjt = wjt.at[:, off:off + w].set(wj_b[n_feat:])
        bj = bj.at[:, off:off + w].set(bj_b)
        fsel = fsel.at[b, off:off + w].set(1.0)         # feedback: + tc[:, b] on branch b's cols
        off += w
    for c in range(top_classes):                         # route raw tc into trailing slab columns
        fsel = fsel.at[c, total_out + c].set(1.0)

    return dict(
        fc=fc, w0=w0, b0=b0, nested=tuple(nested),
        wjn=mxu_cast(wjn), wjt=wjt, bj=bj, fsel=fsel,
        meta=dict(latent=int(raw["fc"][0].shape[1]), top_classes=top_classes,
                  num_branches=nb, num_rest_layers=n_layers - 1,
                  layer0_width=layer0_width, total_out=total_out, total_width=total_width),
    )


# ---------------------------------------------------------------------------
# Pure-JAX reference (mirrors the PyTorch module, eval mode), HIGHEST precision matmuls
# ---------------------------------------------------------------------------
def reference_forward(x, raw):
    hi = jax.lax.Precision.HIGHEST
    w1, b1, w2, b2 = raw["fc"]
    tc = jnp.dot(jnp.dot(x, w1, precision=hi) + b1, w2, precision=hi) + b2
    outs = []
    for i, (nested_p, (wj, bj)) in enumerate(zip(raw["nested"], raw["join"])):
        h = jnp.maximum(x, 0.0)
        for (w, b) in nested_p[:-1]:
            h = jnp.maximum(jnp.dot(h, w, precision=hi) + b, 0.0)
        w_last, b_last = nested_p[-1]
        n = jnp.dot(h, w_last, precision=hi) + b_last
        j_in = jnp.concatenate([n, tc], axis=1)
        o = jnp.dot(jnp.maximum(j_in, 0.0), wj, precision=hi) + bj + tc[:, i:i + 1]
        outs.append(o)
    return jnp.concatenate(outs, axis=1), tc


# ---------------------------------------------------------------------------
if __name__ == "__main__":
    categories = {"cat_a": [0, 1, 2, 3], "cat_b": [0, 1, 2], "cat_c": [0, 1, 2, 3, 4]}
    in_features = 32
    latent = 3
    fc_layers = (512, 256, 128, 56)
    batch = 512          # streamed through the batch grid in TB=256 tiles (2 grid steps)
    total_out = sum(len(v) for v in categories.values())

    key = jax.random.PRNGKey(0)
    k_params, k_x = jax.random.split(key)
    raw = init_params(k_params, categories, in_features, latent, fc_layers)
    x = jax.random.normal(k_x, (batch, in_features), jnp.float32)

    ref_out, ref_tc = reference_forward(x, raw)

    # ---- f32 weights: tight check against the full-precision reference
    packed_f32 = pack_params(raw, categories, fc_layers, param_dtype=jnp.float32)
    fwd_f32 = jax.jit(lambda xx: model_forward(xx, packed_f32, tile_b=256))
    out, top_class = fwd_f32(x)
    out = jax.block_until_ready(out)
    top_class = jax.block_until_ready(top_class)
    assert out.shape == (batch, total_out)
    assert top_class.shape == (batch, len(categories))
    assert jnp.allclose(out, ref_out, rtol=2e-4, atol=2e-4)
    assert jnp.allclose(top_class, ref_tc, rtol=2e-4, atol=2e-4)

    # ---- bf16 storage for MXU-fed weights only (fc head / VPU paths stay f32) -> looser check
    packed_bf16 = pack_params(raw, categories, fc_layers, param_dtype=jnp.bfloat16)
    fwd_bf16 = jax.jit(lambda xx: model_forward(xx, packed_bf16, tile_b=256))
    out_b, tc_b = fwd_bf16(x)
    out_b = jax.block_until_ready(out_b)
    tc_b = jax.block_until_ready(tc_b)
    assert jnp.allclose(tc_b, ref_tc, rtol=2e-4, atol=2e-4)     # fc head is still pure f32
    assert jnp.allclose(out_b, ref_out, rtol=5e-2, atol=5e-2)   # bf16 weight quantization

    print("KERNEL_OK")
</pallas_src>

<mosaic_0001>
module attributes {stable_mosaic.version = 11 : i64} {
  func.func @kernel(%arg0: i32, %arg1: memref<256x32xf32, #tpu.memory_space<vmem>>, %arg2: memref<32x3xf32, #tpu.memory_space<vmem>>, %arg3: memref<1x3xf32, #tpu.memory_space<vmem>>, %arg4: memref<3x3xf32, #tpu.memory_space<vmem>>, %arg5: memref<1x3xf32, #tpu.memory_space<vmem>>, %arg6: memref<32x1536xf32, #tpu.memory_space<vmem>>, %arg7: memref<1x1536xf32, #tpu.memory_space<vmem>>, %arg8: memref<3x512x256xf32, #tpu.memory_space<vmem>>, %arg9: memref<3x1x256xf32, #tpu.memory_space<vmem>>, %arg10: memref<3x256x128xf32, #tpu.memory_space<vmem>>, %arg11: memref<3x1x128xf32, #tpu.memory_space<vmem>>, %arg12: memref<3x128x56xf32, #tpu.memory_space<vmem>>, %arg13: memref<3x1x56xf32, #tpu.memory_space<vmem>>, %arg14: memref<3x56x15xf32, #tpu.memory_space<vmem>>, %arg15: memref<3x15xf32, #tpu.memory_space<vmem>>, %arg16: memref<1x15xf32, #tpu.memory_space<vmem>>, %arg17: memref<3x15xf32, #tpu.memory_space<vmem>>, %arg18: memref<256x15xf32, #tpu.memory_space<vmem>>) attributes {dimension_semantics = [#tpu.dimension_semantics<parallel>], iteration_bounds = array<i64: 2>, scalar_prefetch = 0 : i64, scratch_operands = 0 : i64, tpu.core_type = #tpu.core_type<tc>, window_params = [{transform_indices = @transform_0, window_bounds = array<i64: 256, 32>}, {pipeline_mode = #tpu.pipeline_mode<synchronous>, transform_indices = @transform_1, window_bounds = array<i64: 32, 3>}, {pipeline_mode = #tpu.pipeline_mode<synchronous>, transform_indices = @transform_2, window_bounds = array<i64: 1, 3>}, {pipeline_mode = #tpu.pipeline_mode<synchronous>, transform_indices = @transform_3, window_bounds = array<i64: 3, 3>}, {pipeline_mode = #tpu.pipeline_mode<synchronous>, transform_indices = @transform_4, window_bounds = array<i64: 1, 3>}, {pipeline_mode = #tpu.pipeline_mode<synchronous>, transform_indices = @transform_5, window_bounds = array<i64: 32, 1536>}, {pipeline_mode = #tpu.pipeline_mode<synchronous>, transform_indices = @transform_6, window_bounds = array<i64: 1, 1536>}, {pipeline_mode = #tpu.pipeline_mode<synchronous>, transform_indices = @transform_7, window_bounds = array<i64: 3, 512, 256>}, {pipeline_mode = #tpu.pipeline_mode<synchronous>, transform_indices = @transform_8, window_bounds = array<i64: 3, 1, 256>}, {pipeline_mode = #tpu.pipeline_mode<synchronous>, transform_indices = @transform_9, window_bounds = array<i64: 3, 256, 128>}, {pipeline_mode = #tpu.pipeline_mode<synchronous>, transform_indices = @transform_10, window_bounds = array<i64: 3, 1, 128>}, {pipeline_mode = #tpu.pipeline_mode<synchronous>, transform_indices = @transform_11, window_bounds = array<i64: 3, 128, 56>}, {pipeline_mode = #tpu.pipeline_mode<synchronous>, transform_indices = @transform_12, window_bounds = array<i64: 3, 1, 56>}, {pipeline_mode = #tpu.pipeline_mode<synchronous>, transform_indices = @transform_13, window_bounds = array<i64: 3, 56, 15>}, {pipeline_mode = #tpu.pipeline_mode<synchronous>, transform_indices = @transform_14, window_bounds = array<i64: 3, 15>}, {pipeline_mode = #tpu.pipeline_mode<synchronous>, transform_indices = @transform_15, window_bounds = array<i64: 1, 15>}, {pipeline_mode = #tpu.pipeline_mode<synchronous>, transform_indices = @transform_16, window_bounds = array<i64: 3, 15>}, {transform_indices = @transform_17, window_bounds = array<i64: 256, 15>}]} {
    %c0 = arith.constant 0 : index
    %c0_0 = arith.constant 0 : index
    %0 = vector.load %arg1[%c0, %c0_0] : memref<256x32xf32, #tpu.memory_space<vmem>>, vector<256x32xf32>
    %c0_1 = arith.constant 0 : index
    %c0_2 = arith.constant 0 : index
    %1 = vector.load %arg2[%c0_1, %c0_2] : memref<32x3xf32, #tpu.memory_space<vmem>>, vector<32x3xf32>
    %cst = arith.constant dense<0.000000e+00> : vector<256x3xf32>
    %2 = tpu.matmul %0, %1, %cst {dimension_numbers = #tpu.dot_dimension_numbers<[1], [0], [0], [1], [0, 0, 1, 1], [], []>} : vector<256x32xf32>, vector<32x3xf32>, vector<256x3xf32> -> vector<256x3xf32>
    %c0_3 = arith.constant 0 : index
    %c0_4 = arith.constant 0 : index
    %3 = vector.load %arg3[%c0_3, %c0_4] : memref<1x3xf32, #tpu.memory_space<vmem>>, vector<1x3xf32>
    %4 = vector.broadcast %3 : vector<1x3xf32> to vector<256x3xf32>
    %5 = arith.addf %2, %4 : vector<256x3xf32>
    %c0_5 = arith.constant 0 : index
    %c0_6 = arith.constant 0 : index
    %6 = vector.load %arg4[%c0_5, %c0_6] : memref<3x3xf32, #tpu.memory_space<vmem>>, vector<3x3xf32>
    %c0_7 = arith.constant 0 : index
    %c0_8 = arith.constant 0 : index
    %7 = vector.load %arg5[%c0_7, %c0_8] : memref<1x3xf32, #tpu.memory_space<vmem>>, vector<1x3xf32>
    %8 = vector.extract_strided_slice %5 {offsets = [0, 0], sizes = [256, 1], strides = [1, 1]} : vector<256x3xf32> to vector<256x1xf32>
    %9 = vector.extract_strided_slice %6 {offsets = [0, 0], sizes = [1, 3], strides = [1, 1]} : vector<3x3xf32> to vector<1x3xf32>
    %10 = vector.broadcast %8 : vector<256x1xf32> to vector<256x3xf32>
    %11 = vector.broadcast %9 : vector<1x3xf32> to vector<256x3xf32>
    %12 = arith.mulf %10, %11 : vector<256x3xf32>
    %13 = vector.broadcast %7 : vector<1x3xf32> to vector<256x3xf32>
    %14 = arith.addf %13, %12 : vector<256x3xf32>
    %15 = vector.extract_strided_slice %5 {offsets = [0, 1], sizes = [256, 1], strides = [1, 1]} : vector<256x3xf32> to vector<256x1xf32>
    %16 = vector.extract_strided_slice %6 {offsets = [1, 0], sizes = [1, 3], strides = [1, 1]} : vector<3x3xf32> to vector<1x3xf32>
    %17 = vector.broadcast %15 : vector<256x1xf32> to vector<256x3xf32>
    %18 = vector.broadcast %16 : vector<1x3xf32> to vector<256x3xf32>
    %19 = arith.mulf %17, %18 : vector<256x3xf32>
    %20 = arith.addf %14, %19 : vector<256x3xf32>
    %21 = vector.extract_strided_slice %5 {offsets = [0, 2], sizes = [256, 1], strides = [1, 1]} : vector<256x3xf32> to vector<256x1xf32>
    %22 = vector.extract_strided_slice %6 {offsets = [2, 0], sizes = [1, 3], strides = [1, 1]} : vector<3x3xf32> to vector<1x3xf32>
    %23 = vector.broadcast %21 : vector<256x1xf32> to vector<256x3xf32>
    %24 = vector.broadcast %22 : vector<1x3xf32> to vector<256x3xf32>
    %25 = arith.mulf %23, %24 : vector<256x3xf32>
    %26 = arith.addf %20, %25 : vector<256x3xf32>
    %cst_9 = arith.constant 0.000000e+00 : f32
    %27 = vector.broadcast %cst_9 : f32 to vector<256x3xf32>
    %28 = arith.maximumf %26, %27 : vector<256x3xf32>
    %c0_10 = arith.constant 0 : index
    %c0_11 = arith.constant 0 : index
    %29 = vector.load %arg15[%c0_10, %c0_11] : memref<3x15xf32, #tpu.memory_space<vmem>>, vector<3x15xf32>
    %c0_12 = arith.constant 0 : index
    %c0_13 = arith.constant 0 : index
    %30 = vector.load %arg17[%c0_12, %c0_13] : memref<3x15xf32, #tpu.memory_space<vmem>>, vector<3x15xf32>
    %c0_14 = arith.constant 0 : index
    %c0_15 = arith.constant 0 : index
    %31 = vector.load %arg16[%c0_14, %c0_15] : memref<1x15xf32, #tpu.memory_space<vmem>>, vector<1x15xf32>
    %32 = vector.extract_strided_slice %28 {offsets = [0, 0], sizes = [256, 1], strides = [1, 1]} : vector<256x3xf32> to vector<256x1xf32>
    %33 = vector.extract_strided_slice %29 {offsets = [0, 0], sizes = [1, 15], strides = [1, 1]} : vector<3x15xf32> to vector<1x15xf32>
    %34 = vector.broadcast %32 : vector<256x1xf32> to vector<256x15xf32>
    %35 = vector.broadcast %33 : vector<1x15xf32> to vector<256x15xf32>
    %36 = arith.mulf %34, %35 : vector<256x15xf32>
    %37 = vector.broadcast %31 : vector<1x15xf32> to vector<256x15xf32>
    %38 = arith.addf %37, %36 : vector<256x15xf32>
    %39 = vector.extract_strided_slice %26 {offsets = [0, 0], sizes = [256, 1], strides = [1, 1]} : vector<256x3xf32> to vector<256x1xf32>
    %40 = vector.extract_strided_slice %30 {offsets = [0, 0], sizes = [1, 15], strides = [1, 1]} : vector<3x15xf32> to vector<1x15xf32>
    %41 = vector.broadcast %39 : vector<256x1xf32> to vector<256x15xf32>
    %42 = vector.broadcast %40 : vector<1x15xf32> to vector<256x15xf32>
    %43 = arith.mulf %41, %42 : vector<256x15xf32>
    %44 = arith.addf %38, %43 : vector<256x15xf32>
    %45 = vector.extract_strided_slice %28 {offsets = [0, 1], sizes = [256, 1], strides = [1, 1]} : vector<256x3xf32> to vector<256x1xf32>
    %46 = vector.extract_strided_slice %29 {offsets = [1, 0], sizes = [1, 15], strides = [1, 1]} : vector<3x15xf32> to vector<1x15xf32>
    %47 = vector.broadcast %45 : vector<256x1xf32> to vector<256x15xf32>
    %48 = vector.broadcast %46 : vector<1x15xf32> to vector<256x15xf32>
    %49 = arith.mulf %47, %48 : vector<256x15xf32>
    %50 = arith.addf %44, %49 : vector<256x15xf32>
    %51 = vector.extract_strided_slice %26 {offsets = [0, 1], sizes = [256, 1], strides = [1, 1]} : vector<256x3xf32> to vector<256x1xf32>
    %52 = vector.extract_strided_slice %30 {offsets = [1, 0], sizes = [1, 15], strides = [1, 1]} : vector<3x15xf32> to vector<1x15xf32>
    %53 = vector.broadcast %51 : vector<256x1xf32> to vector<256x15xf32>
    %54 = vector.broadcast %52 : vector<1x15xf32> to vector<256x15xf32>
    %55 = arith.mulf %53, %54 : vector<256x15xf32>
    %56 = arith.addf %50, %55 : vector<256x15xf32>
    %57 = vector.extract_strided_slice %28 {offsets = [0, 2], sizes = [256, 1], strides = [1, 1]} : vector<256x3xf32> to vector<256x1xf32>
    %58 = vector.extract_strided_slice %29 {offsets = [2, 0], sizes = [1, 15], strides = [1, 1]} : vector<3x15xf32> to vector<1x15xf32>
    %59 = vector.broadcast %57 : vector<256x1xf32> to vector<256x15xf32>
    %60 = vector.broadcast %58 : vector<1x15xf32> to vector<256x15xf32>
    %61 = arith.mulf %59, %60 : vector<256x15xf32>
    %62 = arith.addf %56, %61 : vector<256x15xf32>
    %63 = vector.extract_strided_slice %26 {offsets = [0, 2], sizes = [256, 1], strides = [1, 1]} : vector<256x3xf32> to vector<256x1xf32>
    %64 = vector.extract_strided_slice %30 {offsets = [2, 0], sizes = [1, 15], strides = [1, 1]} : vector<3x15xf32> to vector<1x15xf32>
    %65 = vector.broadcast %63 : vector<256x1xf32> to vector<256x15xf32>
    %66 = vector.broadcast %64 : vector<1x15xf32> to vector<256x15xf32>
    %67 = arith.mulf %65, %66 : vector<256x15xf32>
    %68 = arith.addf %62, %67 : vector<256x15xf32>
    %cst_16 = arith.constant 0.000000e+00 : f32
    %69 = vector.broadcast %cst_16 : f32 to vector<256x32xf32>
    %70 = arith.maximumf %0, %69 : vector<256x32xf32>
    %c0_17 = arith.constant 0 : index
    %c0_18 = arith.constant 0 : index
    %71 = vector.load %arg6[%c0_17, %c0_18] : memref<32x1536xf32, #tpu.memory_space<vmem>>, vector<32x1536xf32>
    %cst_19 = arith.constant dense<0.000000e+00> : vector<256x1536xf32>
    %72 = tpu.matmul %70, %71, %cst_19 {dimension_numbers = #tpu.dot_dimension_numbers<[1], [0], [0], [1], [0, 0, 1, 1], [], []>} : vector<256x32xf32>, vector<32x1536xf32>, vector<256x1536xf32> -> vector<256x1536xf32>
    %c0_20 = arith.constant 0 : index
    %c0_21 = arith.constant 0 : index
    %73 = vector.load %arg7[%c0_20, %c0_21] : memref<1x1536xf32, #tpu.memory_space<vmem>>, vector<1x1536xf32>
    %74 = vector.broadcast %73 : vector<1x1536xf32> to vector<256x1536xf32>
    %75 = arith.addf %72, %74 : vector<256x1536xf32>
    %cst_22 = arith.constant 0.000000e+00 : f32
    %76 = vector.broadcast %cst_22 : f32 to vector<256x1536xf32>
    %77 = arith.maximumf %75, %76 : vector<256x1536xf32>
    %78 = vector.extract_strided_slice %77 {offsets = [0, 0], sizes = [256, 512], strides = [1, 1]} : vector<256x1536xf32> to vector<256x512xf32>
    %c0_23 = arith.constant 0 : index
    %c0_24 = arith.constant 0 : index
    %c0_25 = arith.constant 0 : index
    %79 = vector.load %arg8[%c0_23, %c0_24, %c0_25] : memref<3x512x256xf32, #tpu.memory_space<vmem>>, vector<1x512x256xf32>
    %80 = vector.shape_cast %79 : vector<1x512x256xf32> to vector<512x256xf32>
    %c0_26 = arith.constant 0 : index
    %c0_27 = arith.constant 0 : index
    %c0_28 = arith.constant 0 : index
    %81 = vector.load %arg9[%c0_26, %c0_27, %c0_28] : memref<3x1x256xf32, #tpu.memory_space<vmem>>, vector<1x1x256xf32>
    %82 = vector.shape_cast %81 : vector<1x1x256xf32> to vector<1x256xf32>
    %cst_29 = arith.constant dense<0.000000e+00> : vector<256x256xf32>
    %83 = tpu.matmul %78, %80, %cst_29 {dimension_numbers = #tpu.dot_dimension_numbers<[1], [0], [0], [1], [0, 0, 1, 1], [], []>} : vector<256x512xf32>, vector<512x256xf32>, vector<256x256xf32> -> vector<256x256xf32>
    %84 = vector.broadcast %82 : vector<1x256xf32> to vector<256x256xf32>
    %85 = arith.addf %83, %84 : vector<256x256xf32>
    %cst_30 = arith.constant 0.000000e+00 : f32
    %86 = vector.broadcast %cst_30 : f32 to vector<256x256xf32>
    %87 = arith.maximumf %85, %86 : vector<256x256xf32>
    %c0_31 = arith.constant 0 : index
    %c0_32 = arith.constant 0 : index
    %c0_33 = arith.constant 0 : index
    %88 = vector.load %arg10[%c0_31, %c0_32, %c0_33] : memref<3x256x128xf32, #tpu.memory_space<vmem>>, vector<1x256x128xf32>
    %89 = vector.shape_cast %88 : vector<1x256x128xf32> to vector<256x128xf32>
    %c0_34 = arith.constant 0 : index
    %c0_35 = arith.constant 0 : index
    %c0_36 = arith.constant 0 : index
    %90 = vector.load %arg11[%c0_34, %c0_35, %c0_36] : memref<3x1x128xf32, #tpu.memory_space<vmem>>, vector<1x1x128xf32>
    %91 = vector.shape_cast %90 : vector<1x1x128xf32> to vector<1x128xf32>
    %cst_37 = arith.constant dense<0.000000e+00> : vector<256x128xf32>
    %92 = tpu.matmul %87, %89, %cst_37 {dimension_numbers = #tpu.dot_dimension_numbers<[1], [0], [0], [1], [0, 0, 1, 1], [], []>} : vector<256x256xf32>, vector<256x128xf32>, vector<256x128xf32> -> vector<256x128xf32>
    %93 = vector.broadcast %91 : vector<1x128xf32> to vector<256x128xf32>
    %94 = arith.addf %92, %93 : vector<256x128xf32>
    %cst_38 = arith.constant 0.000000e+00 : f32
    %95 = vector.broadcast %cst_38 : f32 to vector<256x128xf32>
    %96 = arith.maximumf %94, %95 : vector<256x128xf32>
    %c0_39 = arith.constant 0 : index
    %c0_40 = arith.constant 0 : index
    %c0_41 = arith.constant 0 : index
    %97 = vector.load %arg12[%c0_39, %c0_40, %c0_41] : memref<3x128x56xf32, #tpu.memory_space<vmem>>, vector<1x128x56xf32>
    %98 = vector.shape_cast %97 : vector<1x128x56xf32> to vector<128x56xf32>
    %c0_42 = arith.constant 0 : index
    %c0_43 = arith.constant 0 : index
    %c0_44 = arith.constant 0 : index
    %99 = vector.load %arg13[%c0_42, %c0_43, %c0_44] : memref<3x1x56xf32, #tpu.memory_space<vmem>>, vector<1x1x56xf32>
    %100 = vector.shape_cast %99 : vector<1x1x56xf32> to vector<1x56xf32>
    %cst_45 = arith.constant dense<0.000000e+00> : vector<256x56xf32>
    %101 = tpu.matmul %96, %98, %cst_45 {dimension_numbers = #tpu.dot_dimension_numbers<[1], [0], [0], [1], [0, 0, 1, 1], [], []>} : vector<256x128xf32>, vector<128x56xf32>, vector<256x56xf32> -> vector<256x56xf32>
    %102 = vector.broadcast %100 : vector<1x56xf32> to vector<256x56xf32>
    %103 = arith.addf %101, %102 : vector<256x56xf32>
    %cst_46 = arith.constant 0.000000e+00 : f32
    %104 = vector.broadcast %cst_46 : f32 to vector<256x56xf32>
    %105 = arith.maximumf %103, %104 : vector<256x56xf32>
    %c0_47 = arith.constant 0 : index
    %c0_48 = arith.constant 0 : index
    %c0_49 = arith.constant 0 : index
    %106 = vector.load %arg14[%c0_47, %c0_48, %c0_49] : memref<3x56x15xf32, #tpu.memory_space<vmem>>, vector<1x56x15xf32>
    %107 = vector.shape_cast %106 : vector<1x56x15xf32> to vector<56x15xf32>
    %cst_50 = arith.constant dense<0.000000e+00> : vector<256x15xf32>
    %108 = tpu.matmul %105, %107, %cst_50 {dimension_numbers = #tpu.dot_dimension_numbers<[1], [0], [0], [1], [0, 0, 1, 1], [], []>} : vector<256x56xf32>, vector<56x15xf32>, vector<256x15xf32> -> vector<256x15xf32>
    %109 = arith.addf %68, %108 : vector<256x15xf32>
    %110 = vector.extract_strided_slice %77 {offsets = [0, 512], sizes = [256, 512], strides = [1, 1]} : vector<256x1536xf32> to vector<256x512xf32>
    %c1 = arith.constant 1 : index
    %c0_51 = arith.constant 0 : index
    %c0_52 = arith.constant 0 : index
    %111 = vector.load %arg8[%c1, %c0_51, %c0_52] : memref<3x512x256xf32, #tpu.memory_space<vmem>>, vector<1x512x256xf32>
    %112 = vector.shape_cast %111 : vector<1x512x256xf32> to vector<512x256xf32>
    %c1_53 = arith.constant 1 : index
    %c0_54 = arith.constant 0 : index
    %c0_55 = arith.constant 0 : index
    %113 = vector.load %arg9[%c1_53, %c0_54, %c0_55] : memref<3x1x256xf32, #tpu.memory_space<vmem>>, vector<1x1x256xf32>
    %114 = vector.shape_cast %113 : vector<1x1x256xf32> to vector<1x256xf32>
    %cst_56 = arith.constant dense<0.000000e+00> : vector<256x256xf32>
    %115 = tpu.matmul %110, %112, %cst_56 {dimension_numbers = #tpu.dot_dimension_numbers<[1], [0], [0], [1], [0, 0, 1, 1], [], []>} : vector<256x512xf32>, vector<512x256xf32>, vector<256x256xf32> -> vector<256x256xf32>
    %116 = vector.broadcast %114 : vector<1x256xf32> to vector<256x256xf32>
    %117 = arith.addf %115, %116 : vector<256x256xf32>
    %cst_57 = arith.constant 0.000000e+00 : f32
    %118 = vector.broadcast %cst_57 : f32 to vector<256x256xf32>
    %119 = arith.maximumf %117, %118 : vector<256x256xf32>
    %c1_58 = arith.constant 1 : index
    %c0_59 = arith.constant 0 : index
    %c0_60 = arith.constant 0 : index
    %120 = vector.load %arg10[%c1_58, %c0_59, %c0_60] : memref<3x256x128xf32, #tpu.memory_space<vmem>>, vector<1x256x128xf32>
    %121 = vector.shape_cast %120 : vector<1x256x128xf32> to vector<256x128xf32>
    %c1_61 = arith.constant 1 : index
    %c0_62 = arith.constant 0 : index
    %c0_63 = arith.constant 0 : index
    %122 = vector.load %arg11[%c1_61, %c0_62, %c0_63] : memref<3x1x128xf32, #tpu.memory_space<vmem>>, vector<1x1x128xf32>
    %123 = vector.shape_cast %122 : vector<1x1x128xf32> to vector<1x128xf32>
    %cst_64 = arith.constant dense<0.000000e+00> : vector<256x128xf32>
    %124 = tpu.matmul %119, %121, %cst_64 {dimension_numbers = #tpu.dot_dimension_numbers<[1], [0], [0], [1], [0, 0, 1, 1], [], []>} : vector<256x256xf32>, vector<256x128xf32>, vector<256x128xf32> -> vector<256x128xf32>
    %125 = vector.broadcast %123 : vector<1x128xf32> to vector<256x128xf32>
    %126 = arith.addf %124, %125 : vector<256x128xf32>
    %cst_65 = arith.constant 0.000000e+00 : f32
    %127 = vector.broadcast %cst_65 : f32 to vector<256x128xf32>
    %128 = arith.maximumf %126, %127 : vector<256x128xf32>
    %c1_66 = arith.constant 1 : index
    %c0_67 = arith.constant 0 : index
    %c0_68 = arith.constant 0 : index
    %129 = vector.load %arg12[%c1_66, %c0_67, %c0_68] : memref<3x128x56xf32, #tpu.memory_space<vmem>>, vector<1x128x56xf32>
    %130 = vector.shape_cast %129 : vector<1x128x56xf32> to vector<128x56xf32>
    %c1_69 = arith.constant 1 : index
    %c0_70 = arith.constant 0 : index
    %c0_71 = arith.constant 0 : index
    %131 = vector.load %arg13[%c1_69, %c0_70, %c0_71] : memref<3x1x56xf32, #tpu.memory_space<vmem>>, vector<1x1x56xf32>
    %132 = vector.shape_cast %131 : vector<1x1x56xf32> to vector<1x56xf32>
    %cst_72 = arith.constant dense<0.000000e+00> : vector<256x56xf32>
    %133 = tpu.matmul %128, %130, %cst_72 {dimension_numbers = #tpu.dot_dimension_numbers<[1], [0], [0], [1], [0, 0, 1, 1], [], []>} : vector<256x128xf32>, vector<128x56xf32>, vector<256x56xf32> -> vector<256x56xf32>
    %134 = vector.broadcast %132 : vector<1x56xf32> to vector<256x56xf32>
    %135 = arith.addf %133, %134 : vector<256x56xf32>
    %cst_73 = arith.constant 0.000000e+00 : f32
    %136 = vector.broadcast %cst_73 : f32 to vector<256x56xf32>
    %137 = arith.maximumf %135, %136 : vector<256x56xf32>
    %c1_74 = arith.constant 1 : index
    %c0_75 = arith.constant 0 : index
    %c0_76 = arith.constant 0 : index
    %138 = vector.load %arg14[%c1_74, %c0_75, %c0_76] : memref<3x56x15xf32, #tpu.memory_space<vmem>>, vector<1x56x15xf32>
    %139 = vector.shape_cast %138 : vector<1x56x15xf32> to vector<56x15xf32>
    %cst_77 = arith.constant dense<0.000000e+00> : vector<256x15xf32>
    %140 = tpu.matmul %137, %139, %cst_77 {dimension_numbers = #tpu.dot_dimension_numbers<[1], [0], [0], [1], [0, 0, 1, 1], [], []>} : vector<256x56xf32>, vector<56x15xf32>, vector<256x15xf32> -> vector<256x15xf32>
    %141 = arith.addf %109, %140 : vector<256x15xf32>
    %142 = vector.extract_strided_slice %77 {offsets = [0, 1024], sizes = [256, 512], strides = [1, 1]} : vector<256x1536xf32> to vector<256x512xf32>
    %c2 = arith.constant 2 : index
    %c0_78 = arith.constant 0 : index
    %c0_79 = arith.constant 0 : index
    %143 = vector.load %arg8[%c2, %c0_78, %c0_79] : memref<3x512x256xf32, #tpu.memory_space<vmem>>, vector<1x512x256xf32>
    %144 = vector.shape_cast %143 : vector<1x512x256xf32> to vector<512x256xf32>
    %c2_80 = arith.constant 2 : index
    %c0_81 = arith.constant 0 : index
    %c0_82 = arith.constant 0 : index
    %145 = vector.load %arg9[%c2_80, %c0_81, %c0_82] : memref<3x1x256xf32, #tpu.memory_space<vmem>>, vector<1x1x256xf32>
    %146 = vector.shape_cast %145 : vector<1x1x256xf32> to vector<1x256xf32>
    %cst_83 = arith.constant dense<0.000000e+00> : vector<256x256xf32>
    %147 = tpu.matmul %142, %144, %cst_83 {dimension_numbers = #tpu.dot_dimension_numbers<[1], [0], [0], [1], [0, 0, 1, 1], [], []>} : vector<256x512xf32>, vector<512x256xf32>, vector<256x256xf32> -> vector<256x256xf32>
    %148 = vector.broadcast %146 : vector<1x256xf32> to vector<256x256xf32>
    %149 = arith.addf %147, %148 : vector<256x256xf32>
    %cst_84 = arith.constant 0.000000e+00 : f32
    %150 = vector.broadcast %cst_84 : f32 to vector<256x256xf32>
    %151 = arith.maximumf %149, %150 : vector<256x256xf32>
    %c2_85 = arith.constant 2 : index
    %c0_86 = arith.constant 0 : index
    %c0_87 = arith.constant 0 : index
    %152 = vector.load %arg10[%c2_85, %c0_86, %c0_87] : memref<3x256x128xf32, #tpu.memory_space<vmem>>, vector<1x256x128xf32>
    %153 = vector.shape_cast %152 : vector<1x256x128xf32> to vector<256x128xf32>
    %c2_88 = arith.constant 2 : index
    %c0_89 = arith.constant 0 : index
    %c0_90 = arith.constant 0 : index
    %154 = vector.load %arg11[%c2_88, %c0_89, %c0_90] : memref<3x1x128xf32, #tpu.memory_space<vmem>>, vector<1x1x128xf32>
    %155 = vector.shape_cast %154 : vector<1x1x128xf32> to vector<1x128xf32>
    %cst_91 = arith.constant dense<0.000000e+00> : vector<256x128xf32>
    %156 = tpu.matmul %151, %153, %cst_91 {dimension_numbers = #tpu.dot_dimension_numbers<[1], [0], [0], [1], [0, 0, 1, 1], [], []>} : vector<256x256xf32>, vector<256x128xf32>, vector<256x128xf32> -> vector<256x128xf32>
    %157 = vector.broadcast %155 : vector<1x128xf32> to vector<256x128xf32>
    %158 = arith.addf %156, %157 : vector<256x128xf32>
    %cst_92 = arith.constant 0.000000e+00 : f32
    %159 = vector.broadcast %cst_92 : f32 to vector<256x128xf32>
    %160 = arith.maximumf %158, %159 : vector<256x128xf32>
    %c2_93 = arith.constant 2 : index
    %c0_94 = arith.constant 0 : index
    %c0_95 = arith.constant 0 : index
    %161 = vector.load %arg12[%c2_93, %c0_94, %c0_95] : memref<3x128x56xf32, #tpu.memory_space<vmem>>, vector<1x128x56xf32>
    %162 = vector.shape_cast %161 : vector<1x128x56xf32> to vector<128x56xf32>
    %c2_96 = arith.constant 2 : index
    %c0_97 = arith.constant 0 : index
    %c0_98 = arith.constant 0 : index
    %163 = vector.load %arg13[%c2_96, %c0_97, %c0_98] : memref<3x1x56xf32, #tpu.memory_space<vmem>>, vector<1x1x56xf32>
    %164 = vector.shape_cast %163 : vector<1x1x56xf32> to vector<1x56xf32>
    %cst_99 = arith.constant dense<0.000000e+00> : vector<256x56xf32>
    %165 = tpu.matmul %160, %162, %cst_99 {dimension_numbers = #tpu.dot_dimension_numbers<[1], [0], [0], [1], [0, 0, 1, 1], [], []>} : vector<256x128xf32>, vector<128x56xf32>, vector<256x56xf32> -> vector<256x56xf32>
    %166 = vector.broadcast %164 : vector<1x56xf32> to vector<256x56xf32>
    %167 = arith.addf %165, %166 : vector<256x56xf32>
    %cst_100 = arith.constant 0.000000e+00 : f32
    %168 = vector.broadcast %cst_100 : f32 to vector<256x56xf32>
    %169 = arith.maximumf %167, %168 : vector<256x56xf32>
    %c2_101 = arith.constant 2 : index
    %c0_102 = arith.constant 0 : index
    %c0_103 = arith.constant 0 : index
    %170 = vector.load %arg14[%c2_101, %c0_102, %c0_103] : memref<3x56x15xf32, #tpu.memory_space<vmem>>, vector<1x56x15xf32>
    %171 = vector.shape_cast %170 : vector<1x56x15xf32> to vector<56x15xf32>
    %cst_104 = arith.constant dense<0.000000e+00> : vector<256x15xf32>
    %172 = tpu.matmul %169, %171, %cst_104 {dimension_numbers = #tpu.dot_dimension_numbers<[1], [0], [0], [1], [0, 0, 1, 1], [], []>} : vector<256x56xf32>, vector<56x15xf32>, vector<256x15xf32> -> vector<256x15xf32>
    %173 = arith.addf %141, %172 : vector<256x15xf32>
    %c0_105 = arith.constant 0 : index
    %c0_106 = arith.constant 0 : index
    %174 = vector.load %arg18[%c0_105, %c0_106] : memref<256x15xf32, #tpu.memory_space<vmem>>, vector<256x15xf32>
    tpu.vector_store %arg18[%c0_105, %c0_106], %173 {strides = array<i32>} : memref<256x15xf32, #tpu.memory_space<vmem>>, vector<256x15xf32>,
    return
  }
  func.func @transform_0(%arg0: i32) -> (i32, i32) {
    %c0_i32 = arith.constant 0 : i32
    %c0_i32_0 = arith.constant 0 : i32
    return %arg0, %c0_i32 : i32, i32
  }
  func.func @transform_1(%arg0: i32) -> (i32, i32) {
    %c0_i32 = arith.constant 0 : i32
    %c0_i32_0 = arith.constant 0 : i32
    %c0_i32_1 = arith.constant 0 : i32
    return %c0_i32, %c0_i32_0 : i32, i32
  }
  func.func @transform_2(%arg0: i32) -> (i32, i32) {
    %c0_i32 = arith.constant 0 : i32
    %c0_i32_0 = arith.constant 0 : i32
    %c0_i32_1 = arith.constant 0 : i32
    return %c0_i32, %c0_i32_0 : i32, i32
  }
  func.func @transform_3(%arg0: i32) -> (i32, i32) {
    %c0_i32 = arith.constant 0 : i32
    %c0_i32_0 = arith.constant 0 : i32
    %c0_i32_1 = arith.constant 0 : i32
    return %c0_i32, %c0_i32_0 : i32, i32
  }
  func.func @transform_4(%arg0: i32) -> (i32, i32) {
    %c0_i32 = arith.constant 0 : i32
    %c0_i32_0 = arith.constant 0 : i32
    %c0_i32_1 = arith.constant 0 : i32
    return %c0_i32, %c0_i32_0 : i32, i32
  }
  func.func @transform_5(%arg0: i32) -> (i32, i32) {
    %c0_i32 = arith.constant 0 : i32
    %c0_i32_0 = arith.constant 0 : i32
    %c0_i32_1 = arith.constant 0 : i32
    return %c0_i32, %c0_i32_0 : i32, i32
  }
  func.func @transform_6(%arg0: i32) -> (i32, i32) {
    %c0_i32 = arith.constant 0 : i32
    %c0_i32_0 = arith.constant 0 : i32
    %c0_i32_1 = arith.constant 0 : i32
    return %c0_i32, %c0_i32_0 : i32, i32
  }
  func.func @transform_7(%arg0: i32) -> (i32, i32, i32) {
    %c0_i32 = arith.constant 0 : i32
    %c0_i32_0 = arith.constant 0 : i32
    %c0_i32_1 = arith.constant 0 : i32
    %c0_i32_2 = arith.constant 0 : i32
    return %c0_i32, %c0_i32_0, %c0_i32_1 : i32, i32, i32
  }
  func.func @transform_8(%arg0: i32) -> (i32, i32, i32) {
    %c0_i32 = arith.constant 0 : i32
    %c0_i32_0 = arith.constant 0 : i32
    %c0_i32_1 = arith.constant 0 : i32
    %c0_i32_2 = arith.constant 0 : i32
    return %c0_i32, %c0_i32_0, %c0_i32_1 : i32, i32, i32
  }
  func.func @transform_9(%arg0: i32) -> (i32, i32, i32) {
    %c0_i32 = arith.constant 0 : i32
    %c0_i32_0 = arith.constant 0 : i32
    %c0_i32_1 = arith.constant 0 : i32
    %c0_i32_2 = arith.constant 0 : i32
    return %c0_i32, %c0_i32_0, %c0_i32_1 : i32, i32, i32
  }
  func.func @transform_10(%arg0: i32) -> (i32, i32, i32) {
    %c0_i32 = arith.constant 0 : i32
    %c0_i32_0 = arith.constant 0 : i32
    %c0_i32_1 = arith.constant 0 : i32
    %c0_i32_2 = arith.constant 0 : i32
    return %c0_i32, %c0_i32_0, %c0_i32_1 : i32, i32, i32
  }
  func.func @transform_11(%arg0: i32) -> (i32, i32, i32) {
    %c0_i32 = arith.constant 0 : i32
    %c0_i32_0 = arith.constant 0 : i32
    %c0_i32_1 = arith.constant 0 : i32
    %c0_i32_2 = arith.constant 0 : i32
    return %c0_i32, %c0_i32_0, %c0_i32_1 : i32, i32, i32
  }
  func.func @transform_12(%arg0: i32) -> (i32, i32, i32) {
    %c0_i32 = arith.constant 0 : i32
    %c0_i32_0 = arith.constant 0 : i32
    %c0_i32_1 = arith.constant 0 : i32
    %c0_i32_2 = arith.constant 0 : i32
    return %c0_i32, %c0_i32_0, %c0_i32_1 : i32, i32, i32
  }
  func.func @transform_13(%arg0: i32) -> (i32, i32, i32) {
    %c0_i32 = arith.constant 0 : i32
    %c0_i32_0 = arith.constant 0 : i32
    %c0_i32_1 = arith.constant 0 : i32
    %c0_i32_2 = arith.constant 0 : i32
    return %c0_i32, %c0_i32_0, %c0_i32_1 : i32, i32, i32
  }
  func.func @transform_14(%arg0: i32) -> (i32, i32) {
    %c0_i32 = arith.constant 0 : i32
    %c0_i32_0 = arith.constant 0 : i32
    %c0_i32_1 = arith.constant 0 : i32
    return %c0_i32, %c0_i32_0 : i32, i32
  }
  func.func @transform_15(%arg0: i32) -> (i32, i32) {
    %c0_i32 = arith.constant 0 : i32
    %c0_i32_0 = arith.constant 0 : i32
    %c0_i32_1 = arith.constant 0 : i32
    return %c0_i32, %c0_i32_0 : i32, i32
  }
  func.func @transform_16(%arg0: i32) -> (i32, i32) {
    %c0_i32 = arith.constant 0 : i32
    %c0_i32_0 = arith.constant 0 : i32
    %c0_i32_1 = arith.constant 0 : i32
    return %c0_i32, %c0_i32_0 : i32, i32
  }
  func.func @transform_17(%arg0: i32) -> (i32, i32) {
    %c0_i32 = arith.constant 0 : i32
    %c0_i32_0 = arith.constant 0 : i32
    return %arg0, %c0_i32 : i32, i32
  }
}

</mosaic_0001>

<llo_original>
// kernel: _lambda_.1
$region0: #{_lambda_.1}
  #allocation0 [shape = 'u32[]', space=smem, size = 0x4, offset = 0x4, fixed_abs, tag = 'smem constant byte address 0x4 - core index']
  #allocation1 [shape = 'u32[144,128]{1,0:T(1,128)}', space=vmem, size = 0x12000, scoped, tag = 'internal scratch']
  %s0 = inlined_call_operand.vmem [shape: f32[512,32], index: 0, kind: input, shape index: {}]
  %s1 = inlined_call_operand.hbm [shape: f32[32,3], index: 1, kind: input, shape index: {}]
  %s2 = inlined_call_operand.hbm [shape: f32[1,3], index: 2, kind: input, shape index: {}]
  %s3 = inlined_call_operand.hbm [shape: f32[3,3], index: 3, kind: input, shape index: {}]
  %s4 = inlined_call_operand.hbm [shape: f32[1,3], index: 4, kind: input, shape index: {}]
  %s5 = inlined_call_operand.hbm [shape: f32[32,1536], index: 5, kind: input, shape index: {}]
  %s6 = inlined_call_operand.hbm [shape: f32[1,1536], index: 6, kind: input, shape index: {}]
  %s7 = inlined_call_operand.hbm [shape: f32[3,512,256], index: 7, kind: input, shape index: {}]
  %s8 = inlined_call_operand.hbm [shape: f32[3,1,256], index: 8, kind: input, shape index: {}]
  %s9 = inlined_call_operand.hbm [shape: f32[3,256,128], index: 9, kind: input, shape index: {}]
  %s10 = inlined_call_operand.hbm [shape: f32[3,1,128], index: 10, kind: input, shape index: {}]
  %s11 = inlined_call_operand.hbm [shape: f32[3,128,56], index: 11, kind: input, shape index: {}]
  %s12 = inlined_call_operand.hbm [shape: f32[3,1,56], index: 12, kind: input, shape index: {}]
  %s13 = inlined_call_operand.hbm [shape: f32[3,56,15], index: 13, kind: input, shape index: {}]
  %s14 = inlined_call_operand.hbm [shape: f32[3,15], index: 14, kind: input, shape index: {}]
  %s15 = inlined_call_operand.hbm [shape: f32[1,15], index: 15, kind: input, shape index: {}]
  %s16 = inlined_call_operand.hbm [shape: f32[3,15], index: 16, kind: input, shape index: {}]
  %s17 = inlined_call_operand.vmem [shape: f32[512,15], index: 17, kind: output, shape index: {}]
  %s18 = sld [smem:[#allocation0]]
  $region165: #{_lambda_.1} parent=0
    _
  %s20 = ssub.s32 1, %s18
  %s21 = scalar_select 0, %s20, %s18
  $region1: #{_lambda_.1} parent=0
    #allocation2 [shape = 'u8[16384]{0}', space=vmem, size = 0x4000, scoped, tag = 'input window, operand 1, single buffered']
    #allocation3 [shape = 's32[2]{0}', space=sflag, size = 0x8, scoped, tag = 'scoped memory for _lambda_.1']
    #allocation4 [shape = 'u8[512]{0}', space=vmem, size = 0x400, scoped, tag = 'input window, operand 2, single buffered']
    #allocation5 [shape = 's32[1]{0}', space=sflag, size = 0x4, scoped, tag = 'scoped memory for _lambda_.1']
    #allocation6 [shape = 'u8[2048]{0}', space=vmem, size = 0x800, scoped, tag = 'input window, operand 3, single buffered']
    #allocation7 [shape = 'u8[512]{0}', space=vmem, size = 0x400, scoped, tag = 'input window, operand 4, single buffered']
    #allocation8 [shape = 's32[1]{0}', space=sflag, size = 0x4, scoped, tag = 'scoped memory for _lambda_.1']
    #allocation9 [shape = 'u8[196608]{0}', space=vmem, size = 0x30000, scoped, tag = 'input window, operand 5, single buffered']
    #allocation10 [shape = 'u8[6144]{0}', space=vmem, size = 0x1800, scoped, tag = 'input window, operand 6, single buffered']
    #allocation11 [shape = 's32[1]{0}', space=sflag, size = 0x4, scoped, tag = 'scoped memory for _lambda_.1']
    #allocation12 [shape = 'u8[1572864]{0}', space=vmem, size = 0x180000, scoped, tag = 'input window, operand 7, single buffered']
    #allocation13 [shape = 'u8[3072]{0}', space=vmem, size = 0xc00, scoped, tag = 'input window, operand 8, single buffered']
    #allocation14 [shape = 's32[1]{0}', space=sflag, size = 0x4, scoped, tag = 'scoped memory for _lambda_.1']
    #allocation15 [shape = 'u8[393216]{0}', space=vmem, size = 0x60000, scoped, tag = 'input window, operand 9, single buffered']
    #allocation16 [shape = 'u8[1536]{0}', space=vmem, size = 0x800, scoped, tag = 'input window, operand 10, single buffered']
    #allocation17 [shape = 's32[1]{0}', space=sflag, size = 0x4, scoped, tag = 'scoped memory for _lambda_.1']
    #allocation18 [shape = 'u8[196608]{0}', space=vmem, size = 0x30000, scoped, tag = 'input window, operand 11, single buffered']
    #allocation19 [shape = 'u8[1536]{0}', space=vmem, size = 0x800, scoped, tag = 'input window, operand 12, single buffered']
    #allocation20 [shape = 's32[1]{0}', space=sflag, size = 0x4, scoped, tag = 'scoped memory for _lambda_.1']
    #allocation21 [shape = 'u8[86016]{0}', space=vmem, size = 0x15000, scoped, tag = 'input window, operand 13, single buffered']
    #allocation22 [shape = 'u8[2048]{0}', space=vmem, size = 0x800, scoped, tag = 'input window, operand 14, single buffered']
    #allocation23 [shape = 's32[1]{0}', space=sflag, size = 0x4, scoped, tag = 'scoped memory for _lambda_.1']
    #allocation24 [shape = 'u8[512]{0}', space=vmem, size = 0x400, scoped, tag = 'input window, operand 15, single buffered']
    #allocation25 [shape = 'u8[2048]{0}', space=vmem, size = 0x800, scoped, tag = 'input window, operand 16, single buffered']
    #allocation26 [shape = 's32[1]{0}', space=sflag, size = 0x4, scoped, tag = 'scoped memory for _lambda_.1']
    %22 = vsyncpa [#allocation3], 0
    %23 = vsyncpa [#allocation5], 0
    %24 = vsyncpa [#allocation8], 0
    %25 = vsyncpa [#allocation11], 0
    %26 = vsyncpa [#allocation14], 0
    %27 = vsyncpa [#allocation17], 0
    %28 = vsyncpa [#allocation20], 0
    %29 = vsyncpa [#allocation23], 0
    %30 = vsyncpa [#allocation26], 0
    loop: start=0, step=1, limit=4
    $region2: #{_lambda_.1} parent=1 // loop_pre_header
      _
    $region3: #{_lambda_.1} parent=1 // loop_header
      %s32 = sphi 0, %s36
      %p33 = scmp.ge.s32.totalorder %s32, 4
      %s42 = sphi 0, %s44
      %s45 = sphi 0, %s42
      %s46 = sphi 0, %s45
      %s62 = sphi 0, %s46
      %s66 = sphi 0, %s66
      %s68 = sphi 0, %s66
      %s69 = sphi 0, %s68
      %s83 = sphi 0, %s69
      %s87 = sphi 0, %s87
      %s89 = sphi 0, %s87
      %s90 = sphi 0, %s89
      %s104 = sphi 0, %s90
      %s108 = sphi 0, %s108
      %s110 = sphi 0, %s108
      %s111 = sphi 0, %s110
      %s125 = sphi 0, %s111
      %s129 = sphi 0, %s129
      %s131 = sphi 0, %s129
      %s132 = sphi 0, %s131
      %s146 = sphi 0, %s132
      %s150 = sphi 0, %s150
      %s152 = sphi 0, %s150
      %s153 = sphi 0, %s152
      %s167 = sphi 0, %s153
      %s171 = sphi 0, %s171
      %s173 = sphi 0, %s171
      %s174 = sphi 0, %s173
      %s188 = sphi 0, %s174
      %s192 = sphi 0, %s192
      %s194 = sphi 0, %s192
      %s195 = sphi 0, %s194
      %s209 = sphi 0, %s195
      %s213 = sphi 0, %s213
      %s215 = sphi 0, %s213
      %s216 = sphi 0, %s215
      %s230 = sphi 0, %s216
      %s234 = sphi 0, %s234
      %s236 = sphi 0, %s234
      %s237 = sphi 0, %s236
      %s251 = sphi 0, %s237
      %s255 = sphi 0, %s255
      %s257 = sphi 0, %s255
      %s258 = sphi 0, %s257
      %s272 = sphi 0, %s258
      %s276 = sphi 0, %s276
      %s278 = sphi 0, %s276
      %s279 = sphi 0, %s278
      %s293 = sphi 0, %s279
      %s297 = sphi 0, %s297
      %s299 = sphi 0, %s297
      %s300 = sphi 0, %s299
      %s314 = sphi 0, %s300
      %s318 = sphi 0, %s318
      %s320 = sphi 0, %s318
      %s321 = sphi 0, %s320
      %s335 = sphi 0, %s321
      %s339 = sphi 0, %s339
      %s341 = sphi 0, %s339
      %s342 = sphi 0, %s341
      %s356 = sphi 0, %s342
      %s360 = sphi 0, %s360
      %s362 = sphi 0, %s360
      %s363 = sphi 0, %s362
      %s377 = sphi 0, %s363
      %s381 = sphi 0, %s381
      %s383 = sphi 0, %s381
      %s384 = sphi 0, %s383
      %s398 = sphi 0, %s384
      %s404 = sphi 0, %s406
      %s407 = sphi 0, %s404
      %s408 = sphi 0, %s407
      %s424 = sphi 0, %s408
    $region4: #{_lambda_.1} parent=1 // loop_header_branch
      %35 = sbr.rel (%p33) target = $region8
    $region5: #{_lambda_.1} parent=1 // loop_body
      %s37 = ssub.s32 %s32, 1
      %s38 = ssub.s32 %s32, 2
      %s39 = sadd.s32 %s32, 1
      %s40 = ssub.s32 %s32, %s39
      %p41 = scmp.eq.s32.totalorder %s40, 0
      %s43 = sadd.s32 %s42, 1
      %s44 = scalar_select %p41, %s42, %s43
      %p47 = pneg %p41
      %p48 = scmp.eq.s32.totalorder %s32, 1
      %p49 = por %p47, %p48
      %p50 = scmp.ne.s32.totalorder %s42, %s45
      %p51 = scmp.eq.s32.totalorder %s32, 0
      %p52 = por %p50, %p51
      %p53 = scmp.ne.s32.totalorder %s42, %s45
      %p54 = scmp.eq.s32.totalorder %s37, 1
      %p55 = por %p53, %p54
      %p56 = scmp.ne.s32.totalorder %s45, %s46
      %p57 = scmp.eq.s32.totalorder %s37, 0
      %p58 = por %p56, %p57
      %p59 = scmp.ne.s32.totalorder %s45, %s46
      %p60 = scmp.eq.s32.totalorder %s38, 1
      %p61 = por %p59, %p60
      %p63 = scmp.ne.s32.totalorder %s46, %s62
      %p64 = scmp.eq.s32.totalorder %s38, 0
      %p65 = por %p63, %p64
      %s67 = sadd.s32 %s66, 1
      %p70 = scmp.eq.s32.totalorder %s32, 1
      %p71 = scmp.ne.s32.totalorder %s66, %s68
      %p72 = scmp.eq.s32.totalorder %s32, 0
      %p73 = por %p71, %p72
      %p74 = scmp.ne.s32.totalorder %s66, %s68
      %p75 = scmp.eq.s32.totalorder %s37, 1
      %p76 = por %p74, %p75
      %p77 = scmp.ne.s32.totalorder %s68, %s69
      %p78 = scmp.eq.s32.totalorder %s37, 0
      %p79 = por %p77, %p78
      %p80 = scmp.ne.s32.totalorder %s68, %s69
      %p81 = scmp.eq.s32.totalorder %s38, 1
      %p82 = por %p80, %p81
      %p84 = scmp.ne.s32.totalorder %s69, %s83
      %p85 = scmp.eq.s32.totalorder %s38, 0
      %p86 = por %p84, %p85
      %s88 = sadd.s32 %s87, 1
      %p91 = scmp.eq.s32.totalorder %s32, 1
      %p92 = scmp.ne.s32.totalorder %s87, %s89
      %p93 = scmp.eq.s32.totalorder %s32, 0
      %p94 = por %p92, %p93
      %p95 = scmp.ne.s32.totalorder %s87, %s89
      %p96 = scmp.eq.s32.totalorder %s37, 1
      %p97 = por %p95, %p96
      %p98 = scmp.ne.s32.totalorder %s89, %s90
      %p99 = scmp.eq.s32.totalorder %s37, 0
      %p100 = por %p98, %p99
      %p101 = scmp.ne.s32.totalorder %s89, %s90
      %p102 = scmp.eq.s32.totalorder %s38, 1
      %p103 = por %p101, %p102
      %p105 = scmp.ne.s32.totalorder %s90, %s104
      %p106 = scmp.eq.s32.totalorder %s38, 0
      %p107 = por %p105, %p106
      %s109 = sadd.s32 %s108, 1
      %p112 = scmp.eq.s32.totalorder %s32, 1
      %p113 = scmp.ne.s32.totalorder %s108, %s110
      %p114 = scmp.eq.s32.totalorder %s32, 0
      %p115 = por %p113, %p114
      %p116 = scmp.ne.s32.totalorder %s108, %s110
      %p117 = scmp.eq.s32.totalorder %s37, 1
      %p118 = por %p116, %p117
      %p119 = scmp.ne.s32.totalorder %s110, %s111
      %p120 = scmp.eq.s32.totalorder %s37, 0
      %p121 = por %p119, %p120
      %p122 = scmp.ne.s32.totalorder %s110, %s111
      %p123 = scmp.eq.s32.totalorder %s38, 1
      %p124 = por %p122, %p123
      %p126 = scmp.ne.s32.totalorder %s111, %s125
      %p127 = scmp.eq.s32.totalorder %s38, 0
      %p128 = por %p126, %p127
      %s130 = sadd.s32 %s129, 1
      %p133 = scmp.eq.s32.totalorder %s32, 1
      %p134 = scmp.ne.s32.totalorder %s129, %s131
      %p135 = scmp.eq.s32.totalorder %s32, 0
      %p136 = por %p134, %p135
      %p137 = scmp.ne.s32.totalorder %s129, %s131
      %p138 = scmp.eq.s32.totalorder %s37, 1
      %p139 = por %p137, %p138
      %p140 = scmp.ne.s32.totalorder %s131, %s132
      %p141 = scmp.eq.s32.totalorder %s37, 0
      %p142 = por %p140, %p141
      %p143 = scmp.ne.s32.totalorder %s131, %s132
      %p144 = scmp.eq.s32.totalorder %s38, 1
      %p145 = por %p143, %p144
      %p147 = scmp.ne.s32.totalorder %s132, %s146
      %p148 = scmp.eq.s32.totalorder %s38, 0
      %p149 = por %p147, %p148
      %s151 = sadd.s32 %s150, 1
      %p154 = scmp.eq.s32.totalorder %s32, 1
      %p155 = scmp.ne.s32.totalorder %s150, %s152
      %p156 = scmp.eq.s32.totalorder %s32, 0
      %p157 = por %p155, %p156
      %p158 = scmp.ne.s32.totalorder %s150, %s152
      %p159 = scmp.eq.s32.totalorder %s37, 1
      %p160 = por %p158, %p159
      %p161 = scmp.ne.s32.totalorder %s152, %s153
      %p162 = scmp.eq.s32.totalorder %s37, 0
      %p163 = por %p161, %p162
      %p164 = scmp.ne.s32.totalorder %s152, %s153
      %p165 = scmp.eq.s32.totalorder %s38, 1
      %p166 = por %p164, %p165
      %p168 = scmp.ne.s32.totalorder %s153, %s167
      %p169 = scmp.eq.s32.totalorder %s38, 0
      %p170 = por %p168, %p169
      %s172 = sadd.s32 %s171, 1
      %p175 = scmp.eq.s32.totalorder %s32, 1
      %p176 = scmp.ne.s32.totalorder %s171, %s173
      %p177 = scmp.eq.s32.totalorder %s32, 0
      %p178 = por %p176, %p177
      %p179 = scmp.ne.s32.totalorder %s171, %s173
      %p180 = scmp.eq.s32.totalorder %s37, 1
      %p181 = por %p179, %p180
      %p182 = scmp.ne.s32.totalorder %s173, %s174
      %p183 = scmp.eq.s32.totalorder %s37, 0
      %p184 = por %p182, %p183
      %p185 = scmp.ne.s32.totalorder %s173, %s174
      %p186 = scmp.eq.s32.totalorder %s38, 1
      %p187 = por %p185, %p186
      %p189 = scmp.ne.s32.totalorder %s174, %s188
      %p190 = scmp.eq.s32.totalorder %s38, 0
      %p191 = por %p189, %p190
      %s193 = sadd.s32 %s192, 1
      %p196 = scmp.eq.s32.totalorder %s32, 1
      %p197 = scmp.ne.s32.totalorder %s192, %s194
      %p198 = scmp.eq.s32.totalorder %s32, 0
      %p199 = por %p197, %p198
      %p200 = scmp.ne.s32.totalorder %s192, %s194
      %p201 = scmp.eq.s32.totalorder %s37, 1
      %p202 = por %p200, %p201
      %p203 = scmp.ne.s32.totalorder %s194, %s195
      %p204 = scmp.eq.s32.totalorder %s37, 0
      %p205 = por %p203, %p204
      %p206 = scmp.ne.s32.totalorder %s194, %s195
      %p207 = scmp.eq.s32.totalorder %s38, 1
      %p208 = por %p206, %p207
      %p210 = scmp.ne.s32.totalorder %s195, %s209
      %p211 = scmp.eq.s32.totalorder %s38, 0
      %p212 = por %p210, %p211
      %s214 = sadd.s32 %s213, 1
      %p217 = scmp.eq.s32.totalorder %s32, 1
      %p218 = scmp.ne.s32.totalorder %s213, %s215
      %p219 = scmp.eq.s32.totalorder %s32, 0
      %p220 = por %p218, %p219
      %p221 = scmp.ne.s32.totalorder %s213, %s215
      %p222 = scmp.eq.s32.totalorder %s37, 1
      %p223 = por %p221, %p222
      %p224 = scmp.ne.s32.totalorder %s215, %s216
      %p225 = scmp.eq.s32.totalorder %s37, 0
      %p226 = por %p224, %p225
      %p227 = scmp.ne.s32.totalorder %s215, %s216
      %p228 = scmp.eq.s32.totalorder %s38, 1
      %p229 = por %p227, %p228
      %p231 = scmp.ne.s32.totalorder %s216, %s230
      %p232 = scmp.eq.s32.totalorder %s38, 0
      %p233 = por %p231, %p232
      %s235 = sadd.s32 %s234, 1
      %p238 = scmp.eq.s32.totalorder %s32, 1
      %p239 = scmp.ne.s32.totalorder %s234, %s236
      %p240 = scmp.eq.s32.totalorder %s32, 0
      %p241 = por %p239, %p240
      %p242 = scmp.ne.s32.totalorder %s234, %s236
      %p243 = scmp.eq.s32.totalorder %s37, 1
      %p244 = por %p242, %p243
      %p245 = scmp.ne.s32.totalorder %s236, %s237
      %p246 = scmp.eq.s32.totalorder %s37, 0
      %p247 = por %p245, %p246
      %p248 = scmp.ne.s32.totalorder %s236, %s237
      %p249 = scmp.eq.s32.totalorder %s38, 1
      %p250 = por %p248, %p249
      %p252 = scmp.ne.s32.totalorder %s237, %s251
      %p253 = scmp.eq.s32.totalorder %s38, 0
      %p254 = por %p252, %p253
      %s256 = sadd.s32 %s255, 1
      %p259 = scmp.eq.s32.totalorder %s32, 1
      %p260 = scmp.ne.s32.totalorder %s255, %s257
      %p261 = scmp.eq.s32.totalorder %s32, 0
      %p262 = por %p260, %p261
      %p263 = scmp.ne.s32.totalorder %s255, %s257
      %p264 = scmp.eq.s32.totalorder %s37, 1
      %p265 = por %p263, %p264
      %p266 = scmp.ne.s32.totalorder %s257, %s258
      %p267 = scmp.eq.s32.totalorder %s37, 0
      %p268 = por %p266, %p267
      %p269 = scmp.ne.s32.totalorder %s257, %s258
      %p270 = scmp.eq.s32.totalorder %s38, 1
      %p271 = por %p269, %p270
      %p273 = scmp.ne.s32.totalorder %s258, %s272
      %p274 = scmp.eq.s32.totalorder %s38, 0
      %p275 = por %p273, %p274
      %s277 = sadd.s32 %s276, 1
      %p280 = scmp.eq.s32.totalorder %s32, 1
      %p281 = scmp.ne.s32.totalorder %s276, %s278
      %p282 = scmp.eq.s32.totalorder %s32, 0
      %p283 = por %p281, %p282
      %p284 = scmp.ne.s32.totalorder %s276, %s278
      %p285 = scmp.eq.s32.totalorder %s37, 1
      %p286 = por %p284, %p285
      %p287 = scmp.ne.s32.totalorder %s278, %s279
      %p288 = scmp.eq.s32.totalorder %s37, 0
      %p289 = por %p287, %p288
      %p290 = scmp.ne.s32.totalorder %s278, %s279
      %p291 = scmp.eq.s32.totalorder %s38, 1
      %p292 = por %p290, %p291
      %p294 = scmp.ne.s32.totalorder %s279, %s293
      %p295 = scmp.eq.s32.totalorder %s38, 0
      %p296 = por %p294, %p295
      %s298 = sadd.s32 %s297, 1
      %p301 = scmp.eq.s32.totalorder %s32, 1
      %p302 = scmp.ne.s32.totalorder %s297, %s299
      %p303 = scmp.eq.s32.totalorder %s32, 0
      %p304 = por %p302, %p303
      %p305 = scmp.ne.s32.totalorder %s297, %s299
      %p306 = scmp.eq.s32.totalorder %s37, 1
      %p307 = por %p305, %p306
      %p308 = scmp.ne.s32.totalorder %s299, %s300
      %p309 = scmp.eq.s32.totalorder %s37, 0
      %p310 = por %p308, %p309
      %p311 = scmp.ne.s32.totalorder %s299, %s300
      %p312 = scmp.eq.s32.totalorder %s38, 1
      %p313 = por %p311, %p312
      %p315 = scmp.ne.s32.totalorder %s300, %s314
      %p316 = scmp.eq.s32.totalorder %s38, 0
      %p317 = por %p315, %p316
      %s319 = sadd.s32 %s318, 1
      %p322 = scmp.eq.s32.totalorder %s32, 1
      %p323 = scmp.ne.s32.totalorder %s318, %s320
      %p324 = scmp.eq.s32.totalorder %s32, 0
      %p325 = por %p323, %p324
      %p326 = scmp.ne.s32.totalorder %s318, %s320
      %p327 = scmp.eq.s32.totalorder %s37, 1
      %p328 = por %p326, %p327
      %p329 = scmp.ne.s32.totalorder %s320, %s321
      %p330 = scmp.eq.s32.totalorder %s37, 0
      %p331 = por %p329, %p330
      %p332 = scmp.ne.s32.totalorder %s320, %s321
      %p333 = scmp.eq.s32.totalorder %s38, 1
      %p334 = por %p332, %p333
      %p336 = scmp.ne.s32.totalorder %s321, %s335
      %p337 = scmp.eq.s32.totalorder %s38, 0
      %p338 = por %p336, %p337
      %s340 = sadd.s32 %s339, 1
      %p343 = scmp.eq.s32.totalorder %s32, 1
      %p344 = scmp.ne.s32.totalorder %s339, %s341
      %p345 = scmp.eq.s32.totalorder %s32, 0
      %p346 = por %p344, %p345
      %p347 = scmp.ne.s32.totalorder %s339, %s341
      %p348 = scmp.eq.s32.totalorder %s37, 1
      %p349 = por %p347, %p348
      %p350 = scmp.ne.s32.totalorder %s341, %s342
      %p351 = scmp.eq.s32.totalorder %s37, 0
      %p352 = por %p350, %p351
      %p353 = scmp.ne.s32.totalorder %s341, %s342
      %p354 = scmp.eq.s32.totalorder %s38, 1
      %p355 = por %p353, %p354
      %p357 = scmp.ne.s32.totalorder %s342, %s356
      %p358 = scmp.eq.s32.totalorder %s38, 0
      %p359 = por %p357, %p358
      %s361 = sadd.s32 %s360, 1
      %p364 = scmp.eq.s32.totalorder %s32, 1
      %p365 = scmp.ne.s32.totalorder %s360, %s362
      %p366 = scmp.eq.s32.totalorder %s32, 0
      %p367 = por %p365, %p366
      %p368 = scmp.ne.s32.totalorder %s360, %s362
      %p369 = scmp.eq.s32.totalorder %s37, 1
      %p370 = por %p368, %p369
      %p371 = scmp.ne.s32.totalorder %s362, %s363
      %p372 = scmp.eq.s32.totalorder %s37, 0
      %p373 = por %p371, %p372
      %p374 = scmp.ne.s32.totalorder %s362, %s363
      %p375 = scmp.eq.s32.totalorder %s38, 1
      %p376 = por %p374, %p375
      %p378 = scmp.ne.s32.totalorder %s363, %s377
      %p379 = scmp.eq.s32.totalorder %s38, 0
      %p380 = por %p378, %p379
      %s382 = sadd.s32 %s381, 1
      %p385 = scmp.eq.s32.totalorder %s32, 1
      %p386 = scmp.ne.s32.totalorder %s381, %s383
      %p387 = scmp.eq.s32.totalorder %s32, 0
      %p388 = por %p386, %p387
      %p389 = scmp.ne.s32.totalorder %s381, %s383
      %p390 = scmp.eq.s32.totalorder %s37, 1
      %p391 = por %p389, %p390
      %p392 = scmp.ne.s32.totalorder %s383, %s384
      %p393 = scmp.eq.s32.totalorder %s37, 0
      %p394 = por %p392, %p393
      %p395 = scmp.ne.s32.totalorder %s383, %s384
      %p396 = scmp.eq.s32.totalorder %s38, 1
      %p397 = por %p395, %p396
      %p399 = scmp.ne.s32.totalorder %s384, %s398
      %p400 = scmp.eq.s32.totalorder %s38, 0
      %p401 = por %p399, %p400
      %s402 = ssub.s32 %s32, %s39
      %p403 = scmp.eq.s32.totalorder %s402, 0
      %s405 = sadd.s32 %s404, 1
      %s406 = scalar_select %p403, %s404, %s405
      %p409 = pneg %p403
      %p410 = scmp.eq.s32.totalorder %s32, 1
      %p411 = por %p409, %p410
      %p412 = scmp.ne.s32.totalorder %s404, %s407
      %p413 = scmp.eq.s32.totalorder %s32, 0
      %p414 = por %p412, %p413
      %p415 = scmp.ne.s32.totalorder %s404, %s407
      %p416 = scmp.eq.s32.totalorder %s37, 1
      %p417 = por %p415, %p416
      %p418 = scmp.ne.s32.totalorder %s407, %s408
      %p419 = scmp.eq.s32.totalorder %s37, 0
      %p420 = por %p418, %p419
      %p421 = scmp.ne.s32.totalorder %s407, %s408
      %p422 = scmp.eq.s32.totalorder %s38, 1
      %p423 = por %p421, %p422
      %p425 = scmp.ne.s32.totalorder %s408, %s424
      %p426 = scmp.eq.s32.totalorder %s38, 0
      %p427 = por %p425, %p426
      %p428 = scmp.le.s32.totalorder 1, %s32
      %p429 = scmp.lt.s32.totalorder %s32, 3
      %p430 = pnand %p428, %p429
      %p431 = pneg %p430
      // Predicated region
      $region9: #{_lambda_.1} parent=5 // pred_check
        _
      $region10: #{_lambda_.1} parent=5 // pred_check_branch
        %433 = sbr.rel (%p430) target = $region12
      $region11: #{_lambda_.1} parent=5 // pred_region
        %s434 = ssub.s32 %s32, 1
        // Predicated region
        $region13: #{_lambda_.1} parent=11 // pred_check
          %p435 = pneg %p79
        $region14: #{_lambda_.1} parent=11 // pred_check_branch
          %437 = sbr.rel (%p435) target = $region16
        $region15: #{_lambda_.1} parent=11 // pred_region
          %s439 = ssub.s32 512, 512
          %440 = vsyncadd [#allocation3], %s439
          %s441 = sshll.u32 [#allocation2], 4
          %s442 = int_to_ptr.vmem [resolvable:$true] %s441
          %447 = dma.hbm_to_vmem [thread:$0]  %s1, 512, %s442, [#allocation3], 128, 128, 8
        $region16: #{_lambda_.1} parent=11 // pred_fallthru
          _
        // Predicated region
        $region17: #{_lambda_.1} parent=11 // pred_check
          %p448 = pneg %p100
        $region18: #{_lambda_.1} parent=11 // pred_check_branch
          %450 = sbr.rel (%p448) target = $region20
        $region19: #{_lambda_.1} parent=11 // pred_region
          %s452 = ssub.s32 16, 16
          %453 = vsyncadd [#allocation5], %s452
          %s455 = sshll.u32 [#allocation4], 4
          %s456 = int_to_ptr.vmem [resolvable:$true] %s455
          %458 = dma.hbm_to_vmem [thread:$0]  %s2, 16, %s456, [#allocation5]
        $region20: #{_lambda_.1} parent=11 // pred_fallthru
          _
        // Predicated region
        $region21: #{_lambda_.1} parent=11 // pred_check
          %p459 = pneg %p121
        $region22: #{_lambda_.1} parent=11 // pred_check_branch
          %461 = sbr.rel (%p459) target = $region24
        $region23: #{_lambda_.1} parent=11 // pred_region
          %s463 = ssub.s32 64, 64
          %464 = vsyncadd [#allocation5], %s463
          %s466 = sshll.u32 [#allocation6], 4
          %s467 = int_to_ptr.vmem [resolvable:$true] %s466
          %469 = dma.hbm_to_vmem [thread:$0]  %s3, 64, %s467, [#allocation5]
        $region24: #{_lambda_.1} parent=11 // pred_fallthru
          _
        // Predicated region
        $region25: #{_lambda_.1} parent=11 // pred_check
          %p470 = pneg %p142
        $region26: #{_lambda_.1} parent=11 // pred_check_branch
          %472 = sbr.rel (%p470) target = $region28
        $region27: #{_lambda_.1} parent=11 // pred_region
          %s474 = ssub.s32 16, 16
          %475 = vsyncadd [#allocation8], %s474
          %s477 = sshll.u32 [#allocation7], 4
          %s478 = int_to_ptr.vmem [resolvable:$true] %s477
          %480 = dma.hbm_to_vmem [thread:$0]  %s4, 16, %s478, [#allocation8]
        $region28: #{_lambda_.1} parent=11 // pred_fallthru
          _
        // Predicated region
        $region29: #{_lambda_.1} parent=11 // pred_check
          %p481 = pneg %p163
        $region30: #{_lambda_.1} parent=11 // pred_check_branch
          %483 = sbr.rel (%p481) target = $region32
        $region31: #{_lambda_.1} parent=11 // pred_region
          %s485 = ssub.s32 6144, 6144
          %486 = vsyncadd [#allocation8], %s485
          %s487 = sshll.u32 [#allocation9], 4
          %s488 = int_to_ptr.vmem [resolvable:$true] %s487
          %493 = dma.hbm_to_vmem [thread:$0]  %s5, 6144, %s488, [#allocation8], 1536, 1536, 96
        $region32: #{_lambda_.1} parent=11 // pred_fallthru
          _
        // Predicated region
        $region33: #{_lambda_.1} parent=11 // pred_check
          %p494 = pneg %p184
        $region34: #{_lambda_.1} parent=11 // pred_check_branch
          %496 = sbr.rel (%p494) target = $region36
        $region35: #{_lambda_.1} parent=11 // pred_region
          %s498 = ssub.s32 192, 192
          %499 = vsyncadd [#allocation11], %s498
          %s501 = sshll.u32 [#allocation10], 4
          %s502 = int_to_ptr.vmem [resolvable:$true] %s501
          %504 = dma.hbm_to_vmem [thread:$0]  %s6, 192, %s502, [#allocation11]
        $region36: #{_lambda_.1} parent=11 // pred_fallthru
          _
        // Predicated region
        $region37: #{_lambda_.1} parent=11 // pred_check
          %p505 = pneg %p205
        $region38: #{_lambda_.1} parent=11 // pred_check_branch
          %507 = sbr.rel (%p505) target = $region40
        $region39: #{_lambda_.1} parent=11 // pred_region
          %s509 = ssub.s32 49152, 49152
          %510 = vsyncadd [#allocation11], %s509
          %s511 = sshll.u32 [#allocation12], 4
          %s512 = int_to_ptr.vmem [resolvable:$true] %s511
          %517 = dma.hbm_to_vmem [thread:$0]  %s7, 49152, %s512, [#allocation11], 256, 256, 16
        $region40: #{_lambda_.1} parent=11 // pred_fallthru
          _
        // Predicated region
        $region41: #{_lambda_.1} parent=11 // pred_check
          %p518 = pneg %p226
        $region42: #{_lambda_.1} parent=11 // pred_check_branch
          %520 = sbr.rel (%p518) target = $region44
        $region43: #{_lambda_.1} parent=11 // pred_region
          %s522 = ssub.s32 96, 96
          %523 = vsyncadd [#allocation14], %s522
          %s524 = sshll.u32 [#allocation13], 4
          %s525 = int_to_ptr.vmem [resolvable:$true] %s524
          %530 = dma.hbm_to_vmem [thread:$0]  %s8, 96, %s525, [#allocation14], 32, 32, 2
        $region44: #{_lambda_.1} parent=11 // pred_fallthru
          _
        // Predicated region
        $region45: #{_lambda_.1} parent=11 // pred_check
          %p531 = pneg %p247
        $region46: #{_lambda_.1} parent=11 // pred_check_branch
          %533 = sbr.rel (%p531) target = $region48
        $region47: #{_lambda_.1} parent=11 // pred_region
          %s535 = ssub.s32 12288, 12288
          %536 = vsyncadd [#allocation14], %s535
          %s537 = sshll.u32 [#allocation15], 4
          %s538 = int_to_ptr.vmem [resolvable:$true] %s537
          %543 = dma.hbm_to_vmem [thread:$0]  %s9, 12288, %s538, [#allocation14], 128, 128, 8
        $region48: #{_lambda_.1} parent=11 // pred_fallthru
          _
        // Predicated region
        $region49: #{_lambda_.1} parent=11 // pred_check
          %p544 = pneg %p268
        $region50: #{_lambda_.1} parent=11 // pred_check_branch
          %546 = sbr.rel (%p544) target = $region52
        $region51: #{_lambda_.1} parent=11 // pred_region
          %s548 = ssub.s32 48, 48
          %549 = vsyncadd [#allocation17], %s548
          %s550 = sshll.u32 [#allocation16], 4
          %s551 = int_to_ptr.vmem [resolvable:$true] %s550
          %556 = dma.hbm_to_vmem [thread:$0]  %s10, 48, %s551, [#allocation17], 16, 16, 1
        $region52: #{_lambda_.1} parent=11 // pred_fallthru
          _
        // Predicated region
        $region53: #{_lambda_.1} parent=11 // pred_check
          %p557 = pneg %p289
        $region54: #{_lambda_.1} parent=11 // pred_check_branch
          %559 = sbr.rel (%p557) target = $region56
        $region55: #{_lambda_.1} parent=11 // pred_region
          %s561 = ssub.s32 6144, 6144
          %562 = vsyncadd [#allocation17], %s561
          %s563 = sshll.u32 [#allocation18], 4
          %s564 = int_to_ptr.vmem [resolvable:$true] %s563
          %569 = dma.hbm_to_vmem [thread:$0]  %s11, 6144, %s564, [#allocation17], 128, 128, 8
        $region56: #{_lambda_.1} parent=11 // pred_fallthru
          _
        // Predicated region
        $region57: #{_lambda_.1} parent=11 // pred_check
          %p570 = pneg %p310
        $region58: #{_lambda_.1} parent=11 // pred_check_branch
          %572 = sbr.rel (%p570) target = $region60
        $region59: #{_lambda_.1} parent=11 // pred_region
          %s574 = ssub.s32 48, 48
          %575 = vsyncadd [#allocation20], %s574
          %s576 = sshll.u32 [#allocation19], 4
          %s577 = int_to_ptr.vmem [resolvable:$true] %s576
          %582 = dma.hbm_to_vmem [thread:$0]  %s12, 48, %s577, [#allocation20], 16, 16, 1
        $region60: #{_lambda_.1} parent=11 // pred_fallthru
          _
        // Predicated region
        $region61: #{_lambda_.1} parent=11 // pred_check
          %p583 = pneg %p331
        $region62: #{_lambda_.1} parent=11 // pred_check_branch
          %585 = sbr.rel (%p583) target = $region64
        $region63: #{_lambda_.1} parent=11 // pred_region
          %s587 = ssub.s32 2688, 2688
          %588 = vsyncadd [#allocation20], %s587
          %s589 = sshll.u32 [#allocation21], 4
          %s590 = int_to_ptr.vmem [resolvable:$true] %s589
          %595 = dma.hbm_to_vmem [thread:$0]  %s13, 2688, %s590, [#allocation20], 128, 128, 8
        $region64: #{_lambda_.1} parent=11 // pred_fallthru
          _
        // Predicated region
        $region65: #{_lambda_.1} parent=11 // pred_check
          %p596 = pneg %p352
        $region66: #{_lambda_.1} parent=11 // pred_check_branch
          %598 = sbr.rel (%p596) target = $region68
        $region67: #{_lambda_.1} parent=11 // pred_region
          %s600 = ssub.s32 64, 64
          %601 = vsyncadd [#allocation23], %s600
          %s603 = sshll.u32 [#allocation22], 4
          %s604 = int_to_ptr.vmem [resolvable:$true] %s603
          %606 = dma.hbm_to_vmem [thread:$0]  %s14, 64, %s604, [#allocation23]
        $region68: #{_lambda_.1} parent=11 // pred_fallthru
          _
        // Predicated region
        $region69: #{_lambda_.1} parent=11 // pred_check
          %p607 = pneg %p373
        $region70: #{_lambda_.1} parent=11 // pred_check_branch
          %609 = sbr.rel (%p607) target = $region72
        $region71: #{_lambda_.1} parent=11 // pred_region
          %s611 = ssub.s32 16, 16
          %612 = vsyncadd [#allocation23], %s611
          %s614 = sshll.u32 [#allocation24], 4
          %s615 = int_to_ptr.vmem [resolvable:$true] %s614
          %617 = dma.hbm_to_vmem [thread:$0]  %s15, 16, %s615, [#allocation23]
        $region72: #{_lambda_.1} parent=11 // pred_fallthru
          _
        // Predicated region
        $region73: #{_lambda_.1} parent=11 // pred_check
          %p618 = pneg %p394
        $region74: #{_lambda_.1} parent=11 // pred_check_branch
          %620 = sbr.rel (%p618) target = $region76
        $region75: #{_lambda_.1} parent=11 // pred_region
          %s622 = ssub.s32 64, 64
          %623 = vsyncadd [#allocation26], %s622
          %s625 = sshll.u32 [#allocation25], 4
          %s626 = int_to_ptr.vmem [resolvable:$true] %s625
          %628 = dma.hbm_to_vmem [thread:$0]  %s16, 64, %s626, [#allocation26]
        $region76: #{_lambda_.1} parent=11 // pred_fallthru
          _
      $region12: #{_lambda_.1} parent=5 // pred_fallthru
        _
      %p629 = scmp.lt.s32.totalorder %s32, 2
      // Predicated region
      $region77: #{_lambda_.1} parent=5 // pred_check
        %p630 = pneg %p629
      $region78: #{_lambda_.1} parent=5 // pred_check_branch
        %632 = sbr.rel (%p630) target = $region80
      $region79: #{_lambda_.1} parent=5 // pred_region
        // Predicated region
        $region81: #{_lambda_.1} parent=79 // pred_check
          %p633 = pneg %p52
        $region82: #{_lambda_.1} parent=79 // pred_check_branch
          %635 = sbr.rel (%p633) target = $region84
        $region83: #{_lambda_.1} parent=79 // pred_region
          %s636 = smul.u32 32, %s32
          %p637 = scmp.lt.s32.totalorder %s636, 63
          %s638 = scalar_select %p637, %s636, 63
          %s639 = smul.addr %s638, 8
          %s640 = scalar_lea.vmem %s0, %s639
          %s641 = smul.u32 32, %s32
        $region84: #{_lambda_.1} parent=79 // pred_fallthru
          _
      $region80: #{_lambda_.1} parent=5 // pred_fallthru
        _
      %p642 = scmp.le.s32.totalorder 1, %s32
      %p643 = scmp.lt.s32.totalorder %s32, 3
      %p644 = pnand %p642, %p643
      %p645 = pneg %p644
      // Predicated region
      $region85: #{_lambda_.1} parent=5 // pred_check
        _
      $region86: #{_lambda_.1} parent=5 // pred_check_branch
        %647 = sbr.rel (%p644) target = $region88
      $region87: #{_lambda_.1} parent=5 // pred_region
        %s648 = ssub.s32 %s32, 1
        // Predicated region
        $region89: #{_lambda_.1} parent=87 // pred_check
          %p649 = pneg %p79
        $region90: #{_lambda_.1} parent=87 // pred_check_branch
          %651 = sbr.rel (%p649) target = $region92
        $region91: #{_lambda_.1} parent=87 // pred_region
          %652 = dma.done [#allocation3], 512
        $region92: #{_lambda_.1} parent=87 // pred_fallthru
          _
        // Predicated region
        $region93: #{_lambda_.1} parent=87 // pred_check
          %p653 = pneg %p100
        $region94: #{_lambda_.1} parent=87 // pred_check_branch
          %655 = sbr.rel (%p653) target = $region96
        $region95: #{_lambda_.1} parent=87 // pred_region
          %656 = dma.done [#allocation5], 16
        $region96: #{_lambda_.1} parent=87 // pred_fallthru
          _
        // Predicated region
        $region97: #{_lambda_.1} parent=87 // pred_check
          %p657 = pneg %p121
        $region98: #{_lambda_.1} parent=87 // pred_check_branch
          %659 = sbr.rel (%p657) target = $region100
        $region99: #{_lambda_.1} parent=87 // pred_region
          %660 = dma.done [#allocation5], 64
        $region100: #{_lambda_.1} parent=87 // pred_fallthru
          _
        // Predicated region
        $region101: #{_lambda_.1} parent=87 // pred_check
          %p661 = pneg %p142
        $region102: #{_lambda_.1} parent=87 // pred_check_branch
          %663 = sbr.rel (%p661) target = $region104
        $region103: #{_lambda_.1} parent=87 // pred_region
          %664 = dma.done [#allocation8], 16
        $region104: #{_lambda_.1} parent=87 // pred_fallthru
          _
        // Predicated region
        $region105: #{_lambda_.1} parent=87 // pred_check
          %p665 = pneg %p163
        $region106: #{_lambda_.1} parent=87 // pred_check_branch
          %667 = sbr.rel (%p665) target = $region108
        $region107: #{_lambda_.1} parent=87 // pred_region
          %668 = dma.done [#allocation8], 6144
        $region108: #{_lambda_.1} parent=87 // pred_fallthru
          _
        // Predicated region
        $region109: #{_lambda_.1} parent=87 // pred_check
          %p669 = pneg %p184
        $region110: #{_lambda_.1} parent=87 // pred_check_branch
          %671 = sbr.rel (%p669) target = $region112
        $region111: #{_lambda_.1} parent=87 // pred_region
          %672 = dma.done [#allocation11], 192
        $region112: #{_lambda_.1} parent=87 // pred_fallthru
          _
        // Predicated region
        $region113: #{_lambda_.1} parent=87 // pred_check
          %p673 = pneg %p205
        $region114: #{_lambda_.1} parent=87 // pred_check_branch
          %675 = sbr.rel (%p673) target = $region116
        $region115: #{_lambda_.1} parent=87 // pred_region
          %676 = dma.done [#allocation11], 49152
        $region116: #{_lambda_.1} parent=87 // pred_fallthru
          _
        // Predicated region
        $region117: #{_lambda_.1} parent=87 // pred_check
          %p677 = pneg %p226
        $region118: #{_lambda_.1} parent=87 // pred_check_branch
          %679 = sbr.rel (%p677) target = $region120
        $region119: #{_lambda_.1} parent=87 // pred_region
          %680 = dma.done [#allocation14], 96
        $region120: #{_lambda_.1} parent=87 // pred_fallthru
          _
        // Predicated region
        $region121: #{_lambda_.1} parent=87 // pred_check
          %p681 = pneg %p247
        $region122: #{_lambda_.1} parent=87 // pred_check_branch
          %683 = sbr.rel (%p681) target = $region124
        $region123: #{_lambda_.1} parent=87 // pred_region
          %684 = dma.done [#allocation14], 12288
        $region124: #{_lambda_.1} parent=87 // pred_fallthru
          _
        // Predicated region
        $region125: #{_lambda_.1} parent=87 // pred_check
          %p685 = pneg %p268
        $region126: #{_lambda_.1} parent=87 // pred_check_branch
          %687 = sbr.rel (%p685) target = $region128
        $region127: #{_lambda_.1} parent=87 // pred_region
          %688 = dma.done [#allocation17], 48
        $region128: #{_lambda_.1} parent=87 // pred_fallthru
          _
        // Predicated region
        $region129: #{_lambda_.1} parent=87 // pred_check
          %p689 = pneg %p289
        $region130: #{_lambda_.1} parent=87 // pred_check_branch
          %691 = sbr.rel (%p689) target = $region132
        $region131: #{_lambda_.1} parent=87 // pred_region
          %692 = dma.done [#allocation17], 6144
        $region132: #{_lambda_.1} parent=87 // pred_fallthru
          _
        // Predicated region
        $region133: #{_lambda_.1} parent=87 // pred_check
          %p693 = pneg %p310
        $region134: #{_lambda_.1} parent=87 // pred_check_branch
          %695 = sbr.rel (%p693) target = $region136
        $region135: #{_lambda_.1} parent=87 // pred_region
          %696 = dma.done [#allocation20], 48
        $region136: #{_lambda_.1} parent=87 // pred_fallthru
          _
        // Predicated region
        $region137: #{_lambda_.1} parent=87 // pred_check
          %p697 = pneg %p331
        $region138: #{_lambda_.1} parent=87 // pred_check_branch
          %699 = sbr.rel (%p697) target = $region140
        $region139: #{_lambda_.1} parent=87 // pred_region
          %700 = dma.done [#allocation20], 2688
        $region140: #{_lambda_.1} parent=87 // pred_fallthru
          _
        // Predicated region
        $region141: #{_lambda_.1} parent=87 // pred_check
          %p701 = pneg %p352
        $region142: #{_lambda_.1} parent=87 // pred_check_branch
          %703 = sbr.rel (%p701) target = $region144
        $region143: #{_lambda_.1} parent=87 // pred_region
          %704 = dma.done [#allocation23], 64
        $region144: #{_lambda_.1} parent=87 // pred_fallthru
          _
        // Predicated region
        $region145: #{_lambda_.1} parent=87 // pred_check
          %p705 = pneg %p373
        $region146: #{_lambda_.1} parent=87 // pred_check_branch
          %707 = sbr.rel (%p705) target = $region148
        $region147: #{_lambda_.1} parent=87 // pred_region
          %708 = dma.done [#allocation23], 16
        $region148: #{_lambda_.1} parent=87 // pred_fallthru
          _
        // Predicated region
        $region149: #{_lambda_.1} parent=87 // pred_check
          %p709 = pneg %p394
        $region150: #{_lambda_.1} parent=87 // pred_check_branch
          %711 = sbr.rel (%p709) target = $region152
        $region151: #{_lambda_.1} parent=87 // pred_region
          %712 = dma.done [#allocation26], 64
        $region152: #{_lambda_.1} parent=87 // pred_fallthru
          _
        %s713 = smul.u32 32, %s37
        %p714 = scmp.lt.s32.totalorder %s713, 63
        %s715 = scalar_select %p714, %s713, 63
        %s716 = smul.addr %s715, 8
        %s717 = scalar_lea.vmem %s0, %s716
        %p718 = pneg %p58
        %p719 = pneg %p55
        %p720 = pneg %p79
        %p721 = pneg %p76
        %p722 = pneg %p100
        %p723 = pneg %p97
        %p724 = pneg %p121
        %p725 = pneg %p118
        %p726 = pneg %p142
        %p727 = pneg %p139
        %p728 = pneg %p163
        %p729 = pneg %p160
        %p730 = pneg %p184
        %p731 = pneg %p181
        %p732 = pneg %p205
        %p733 = pneg %p202
        %p734 = pneg %p226
        %p735 = pneg %p223
        %p736 = pneg %p247
        %p737 = pneg %p244
        %p738 = pneg %p268
        %p739 = pneg %p265
        %p740 = pneg %p289
        %p741 = pneg %p286
        %p742 = pneg %p310
        %p743 = pneg %p307
        %p744 = pneg %p331
        %p745 = pneg %p328
        %p746 = pneg %p352
        %p747 = pneg %p349
        %p748 = pneg %p373
        %p749 = pneg %p370
        %p750 = pneg %p394
        %p751 = pneg %p391
        %p752 = pneg %p420
        %p753 = pneg %p417
        %s754 = smul.u32 32, %s37
        %p755 = scmp.lt.s32.totalorder %s754, 63
        %s756 = scalar_select %p755, %s754, 63
        %s757 = smul.addr %s756, 8
        %s758 = scalar_lea.vmem %s17, %s757
        %s759 = smul.u32 32, %s37
        %p760 = scmp.lt.s32.totalorder %s759, 63
        %s761 = scalar_select %p760, %s759, 63
        %s762 = smul.addr %s761, 8
        %s763 = scalar_lea.vmem %s0, %s762
        %s764 = smul.u32 32, %s37
        %s765 = smul.u32 32, %s37
        %p766 = scmp.lt.s32.totalorder %s765, 63
        %s767 = scalar_select %p766, %s765, 63
        %s768 = smul.addr %s767, 8
        %s769 = scalar_lea.vmem %s17, %s768
        %s770 = smul.u32 32, %s37
        %v771 = vld [vmem:[%s763] sm:$0xff]
        %v772 = vld [vmem:[%s763 + $0x8] sm:$0xff]
        %v773 = vld [vmem:[%s763 + $0x10] sm:$0xff]
        %v774 = vld [vmem:[%s763 + $0x18] sm:$0xff]
        %v775 = vld [vmem:[%s763 + $0x20] sm:$0xff]
        %v776 = vld [vmem:[%s763 + $0x28] sm:$0xff]
        %v777 = vld [vmem:[%s763 + $0x30] sm:$0xff]
        %v778 = vld [vmem:[%s763 + $0x38] sm:$0xff]
        %v779 = vld [vmem:[%s763 + $0x40] sm:$0xff]
        %v780 = vld [vmem:[%s763 + $0x48] sm:$0xff]
        %v781 = vld [vmem:[%s763 + $0x50] sm:$0xff]
        %v782 = vld [vmem:[%s763 + $0x58] sm:$0xff]
        %v783 = vld [vmem:[%s763 + $0x60] sm:$0xff]
        %v784 = vld [vmem:[%s763 + $0x68] sm:$0xff]
        %v785 = vld [vmem:[%s763 + $0x70] sm:$0xff]
        %v786 = vld [vmem:[%s763 + $0x78] sm:$0xff]
        %v787 = vld [vmem:[%s763 + $0x80] sm:$0xff]
        %v788 = vld [vmem:[%s763 + $0x88] sm:$0xff]
        %v789 = vld [vmem:[%s763 + $0x90] sm:$0xff]
        %v790 = vld [vmem:[%s763 + $0x98] sm:$0xff]
        %v791 = vld [vmem:[%s763 + $0xa0] sm:$0xff]
        %v792 = vld [vmem:[%s763 + $0xa8] sm:$0xff]
        %v793 = vld [vmem:[%s763 + $0xb0] sm:$0xff]
        %v794 = vld [vmem:[%s763 + $0xb8] sm:$0xff]
        %v795 = vld [vmem:[%s763 + $0xc0] sm:$0xff]
        %v796 = vld [vmem:[%s763 + $0xc8] sm:$0xff]
        %v797 = vld [vmem:[%s763 + $0xd0] sm:$0xff]
        %v798 = vld [vmem:[%s763 + $0xd8] sm:$0xff]
        %v799 = vld [vmem:[%s763 + $0xe0] sm:$0xff]
        %v800 = vld [vmem:[%s763 + $0xe8] sm:$0xff]
        %v801 = vld [vmem:[%s763 + $0xf0] sm:$0xff]
        %v802 = vld [vmem:[%s763 + $0xf8] sm:$0xff]
        %v803 = vld [vmem:[#allocation2] sm:$0xff]
        %v804 = vld [vmem:[#allocation2 + $0x8] sm:$0xff]
        %v805 = vld [vmem:[#allocation2 + $0x10] sm:$0xff]
        %v806 = vld [vmem:[#allocation2 + $0x18] sm:$0xff]
        %v807 = vld [vmem:[#allocation4] sm:$0x1]
        %v809 = vlaneseq
        %v810 = vshrl.u32 %v809, 7
        %v811 = vsub.s32 0, %v810
        %v812 = vrot.slane %v807, %v811
        %vm814 = vcmask 261120
        %v816 = vsel %vm814, %v771, 0
        %v819 = vsel %vm814, %v772, 0
        %v822 = vsel %vm814, %v773, 0
        %v825 = vsel %vm814, %v774, 0
        %v828 = vsel %vm814, %v775, 0
        %v831 = vsel %vm814, %v776, 0
        %v834 = vsel %vm814, %v777, 0
        %v837 = vsel %vm814, %v778, 0
        %v840 = vsel %vm814, %v779, 0
        %v843 = vsel %vm814, %v780, 0
        %v846 = vsel %vm814, %v781, 0
        %v849 = vsel %vm814, %v782, 0
        %v852 = vsel %vm814, %v783, 0
        %v855 = vsel %vm814, %v784, 0
        %v858 = vsel %vm814, %v785, 0
        %v861 = vsel %vm814, %v786, 0
        %v864 = vsel %vm814, %v787, 0
        %v867 = vsel %vm814, %v788, 0
        %v870 = vsel %vm814, %v789, 0
        %v873 = vsel %vm814, %v790, 0
        %v876 = vsel %vm814, %v791, 0
        %v879 = vsel %vm814, %v792, 0
        %v882 = vsel %vm814, %v793, 0
        %v885 = vsel %vm814, %v794, 0
        %v888 = vsel %vm814, %v795, 0
        %v891 = vsel %vm814, %v796, 0
        %v894 = vsel %vm814, %v797, 0
        %v897 = vsel %vm814, %v798, 0
        %v900 = vsel %vm814, %v799, 0
        %v903 = vsel %vm814, %v800, 0
        %v906 = vsel %vm814, %v801, 0
        %v909 = vsel %vm814, %v802, 0
        %911 = vmatprep.subr.mxu0 0.0
        %912 = vmatpush1.msra.mxu0 0.0
        %913 = vmatprep.subr.mxu0 0.0
        %914 = vmatpush1.msra.mxu0 0.0
        %915 = vmatprep.subr.mxu0 0.0
        %916 = vmatpush1.msra.mxu0 0.0
        %917 = vmatprep.subr.mxu0 0.0
        %918 = vmatpush1.msra.mxu0 0.0
        %919 = vmatprep.subr.mxu0 0.0
        %920 = vmatpush1.msra.mxu0 0.0
        %921 = vmatprep.subr.mxu0 0.0
        %922 = vmatpush1.msra.mxu0 0.0
        %923 = vmatprep.subr.mxu0 0.0
        %924 = vmatpush1.msra.mxu0 0.0
        %925 = vmatprep.subr.mxu0 0.0
        %926 = vmatpush1.msra.mxu0 0.0
        %927 = vmatprep.subr.mxu0 0.0
        %928 = vmatpush1.msra.mxu0 0.0
        %929 = vmatprep.subr.mxu0 0.0
        %930 = vmatpush1.msra.mxu0 0.0
        %931 = vmatprep.subr.mxu0 0.0
        %932 = vmatpush1.msra.mxu0 0.0
        %933 = vmatprep.subr.mxu0 0.0
        %934 = vmatpush1.msra.mxu0 0.0
        %935 = vmatprep.subr.mxu0 0.0
        %936 = vmatpush1.msra.mxu0 %v806
        %937 = vmatprep.subr.mxu0 0.0
        %938 = vmatpush1.msra.mxu0 %v805
        %939 = vmatprep.subr.mxu0 0.0
        %940 = vmatpush1.msra.mxu0 %v804
        %941 = vmatprep.subr.mxu0 0.0
        %942 = vmatpush1.msra.mxu0 %v803
        %943 = vmatprep.subr.mxu0 0.0
        %944 = vmatpush2.msra.mxu0 0.0
        %945 = vmatprep.subr.mxu0 0.0
        %946 = vmatpush2.msra.mxu0 0.0
        %947 = vmatprep.subr.mxu0 0.0
        %948 = vmatpush2.msra.mxu0 0.0
        %949 = vmatprep.subr.mxu0 0.0
        %950 = vmatpush2.msra.mxu0 0.0
        %951 = vmatprep.subr.mxu0 0.0
        %952 = vmatpush2.msra.mxu0 0.0
        %953 = vmatprep.subr.mxu0 0.0
        %954 = vmatpush2.msra.mxu0 0.0
        %955 = vmatprep.subr.mxu0 0.0
        %956 = vmatpush2.msra.mxu0 0.0
        %957 = vmatprep.subr.mxu0 0.0
        %958 = vmatpush2.msra.mxu0 0.0
        %959 = vmatprep.subr.mxu0 0.0
        %960 = vmatpush2.msra.mxu0 0.0
        %961 = vmatprep.subr.mxu0 0.0
        %962 = vmatpush2.msra.mxu0 0.0
        %963 = vmatprep.subr.mxu0 0.0
        %964 = vmatpush2.msra.mxu0 0.0
        %965 = vmatprep.subr.mxu0 0.0
        %966 = vmatpush2.msra.mxu0 0.0
        %967 = vmatprep.subr.mxu0 0.0
        %968 = vmatpush2.msra.mxu0 0.0
        %969 = vmatprep.subr.mxu0 0.0
        %970 = vmatpush2.msra.mxu0 0.0
        %971 = vmatprep.subr.mxu0 0.0
        %972 = vmatpush2.msra.mxu0 0.0
        %973 = vmatprep.subr.mxu0 0.0
        %974 = vmatpush2.msra.mxu0 0.0
        %975 = vmatprep.mubr.f32.mxu0 0.0
        %976 = vmatmul.mubr.f32.gmra.mxu0 %v816
        %v977 = vpop.f32.mrf.mxu0
        %v978 = vadd.f32 %v812, %v977
        %v979 = vpop.f32.mrf.mxu0
        %980 = vmatprep.mubr.f32.mxu0 0.0
        %981 = vmatmul.mubr.f32.gmra.mxu0 %v819
        %v982 = vpop.f32.mrf.mxu0
        %v983 = vadd.f32 %v812, %v982
        %v984 = vpop.f32.mrf.mxu0
        %985 = vmatprep.mubr.f32.mxu0 0.0
        %986 = vmatmul.mubr.f32.gmra.mxu0 %v822
        %v987 = vpop.f32.mrf.mxu0
        %v988 = vadd.f32 %v812, %v987
        %v989 = vpop.f32.mrf.mxu0
        %990 = vmatprep.mubr.f32.mxu0 0.0
        %991 = vmatmul.mubr.f32.gmra.mxu0 %v825
        %v992 = vpop.f32.mrf.mxu0
        %v993 = vadd.f32 %v812, %v992
        %v994 = vpop.f32.mrf.mxu0
        %995 = vmatprep.mubr.f32.mxu0 0.0
        %996 = vmatmul.mubr.f32.gmra.mxu0 %v828
        %v997 = vpop.f32.mrf.mxu0
        %v998 = vadd.f32 %v812, %v997
        %v999 = vpop.f32.mrf.mxu0
        %1000 = vmatprep.mubr.f32.mxu0 0.0
        %1001 = vmatmul.mubr.f32.gmra.mxu0 %v831
        %v1002 = vpop.f32.mrf.mxu0
        %v1003 = vadd.f32 %v812, %v1002
        %v1004 = vpop.f32.mrf.mxu0
        %1005 = vmatprep.mubr.f32.mxu0 0.0
        %1006 = vmatmul.mubr.f32.gmra.mxu0 %v834
        %v1007 = vpop.f32.mrf.mxu0
        %v1008 = vadd.f32 %v812, %v1007
        %v1009 = vpop.f32.mrf.mxu0
        %1010 = vmatprep.mubr.f32.mxu0 0.0
        %1011 = vmatmul.mubr.f32.gmra.mxu0 %v837
        %v1012 = vpop.f32.mrf.mxu0
        %v1013 = vadd.f32 %v812, %v1012
        %v1014 = vpop.f32.mrf.mxu0
        %1015 = vmatprep.mubr.f32.mxu0 0.0
        %1016 = vmatmul.mubr.f32.gmra.mxu0 %v840
        %v1017 = vpop.f32.mrf.mxu0
        %v1018 = vadd.f32 %v812, %v1017
        %v1019 = vpop.f32.mrf.mxu0
        %1020 = vmatprep.mubr.f32.mxu0 0.0
        %1021 = vmatmul.mubr.f32.gmra.mxu0 %v843
        %v1022 = vpop.f32.mrf.mxu0
        %v1023 = vadd.f32 %v812, %v1022
        %v1024 = vpop.f32.mrf.mxu0
        %1025 = vmatprep.mubr.f32.mxu0 0.0
        %1026 = vmatmul.mubr.f32.gmra.mxu0 %v846
        %v1027 = vpop.f32.mrf.mxu0
        %v1028 = vadd.f32 %v812, %v1027
        %v1029 = vpop.f32.mrf.mxu0
        %1030 = vmatprep.mubr.f32.mxu0 0.0
        %1031 = vmatmul.mubr.f32.gmra.mxu0 %v849
        %v1032 = vpop.f32.mrf.mxu0
        %v1033 = vadd.f32 %v812, %v1032
        %v1034 = vpop.f32.mrf.mxu0
        %1035 = vmatprep.mubr.f32.mxu0 0.0
        %1036 = vmatmul.mubr.f32.gmra.mxu0 %v852
        %v1037 = vpop.f32.mrf.mxu0
        %v1038 = vadd.f32 %v812, %v1037
        %v1039 = vpop.f32.mrf.mxu0
        %1040 = vmatprep.mubr.f32.mxu0 0.0
        %1041 = vmatmul.mubr.f32.gmra.mxu0 %v855
        %v1042 = vpop.f32.mrf.mxu0
        %v1043 = vadd.f32 %v812, %v1042
        %v1044 = vpop.f32.mrf.mxu0
        %1045 = vmatprep.mubr.f32.mxu0 0.0
        %1046 = vmatmul.mubr.f32.gmra.mxu0 %v858
        %v1047 = vpop.f32.mrf.mxu0
        %v1048 = vadd.f32 %v812, %v1047
        %v1049 = vpop.f32.mrf.mxu0
        %1050 = vmatprep.mubr.f32.mxu0 0.0
        %1051 = vmatmul.mubr.f32.gmra.mxu0 %v861
        %v1052 = vpop.f32.mrf.mxu0
        %v1053 = vadd.f32 %v812, %v1052
        %v1054 = vpop.f32.mrf.mxu0
        %1055 = vmatprep.mubr.f32.mxu0 0.0
        %1056 = vmatmul.mubr.f32.gmra.mxu0 %v864
        %v1057 = vpop.f32.mrf.mxu0
        %v1058 = vadd.f32 %v812, %v1057
        %v1059 = vpop.f32.mrf.mxu0
        %1060 = vmatprep.mubr.f32.mxu0 0.0
        %1061 = vmatmul.mubr.f32.gmra.mxu0 %v867
        %v1062 = vpop.f32.mrf.mxu0
        %v1063 = vadd.f32 %v812, %v1062
        %v1064 = vpop.f32.mrf.mxu0
        %1065 = vmatprep.mubr.f32.mxu0 0.0
        %1066 = vmatmul.mubr.f32.gmra.mxu0 %v870
        %v1067 = vpop.f32.mrf.mxu0
        %v1068 = vadd.f32 %v812, %v1067
        %v1069 = vpop.f32.mrf.mxu0
        %1070 = vmatprep.mubr.f32.mxu0 0.0
        %1071 = vmatmul.mubr.f32.gmra.mxu0 %v873
        %v1072 = vpop.f32.mrf.mxu0
        %v1073 = vadd.f32 %v812, %v1072
        %v1074 = vpop.f32.mrf.mxu0
        %1075 = vmatprep.mubr.f32.mxu0 0.0
        %1076 = vmatmul.mubr.f32.gmra.mxu0 %v876
        %v1077 = vpop.f32.mrf.mxu0
        %v1078 = vadd.f32 %v812, %v1077
        %v1079 = vpop.f32.mrf.mxu0
        %1080 = vmatprep.mubr.f32.mxu0 0.0
        %1081 = vmatmul.mubr.f32.gmra.mxu0 %v879
        %v1082 = vpop.f32.mrf.mxu0
        %v1083 = vadd.f32 %v812, %v1082
        %v1084 = vpop.f32.mrf.mxu0
        %1085 = vmatprep.mubr.f32.mxu0 0.0
        %1086 = vmatmul.mubr.f32.gmra.mxu0 %v882
        %v1087 = vpop.f32.mrf.mxu0
        %v1088 = vadd.f32 %v812, %v1087
        %v1089 = vpop.f32.mrf.mxu0
        %1090 = vmatprep.mubr.f32.mxu0 0.0
        %1091 = vmatmul.mubr.f32.gmra.mxu0 %v885
        %v1092 = vpop.f32.mrf.mxu0
        %v1093 = vadd.f32 %v812, %v1092
        %v1094 = vpop.f32.mrf.mxu0
        %1095 = vmatprep.mubr.f32.mxu0 0.0
        %1096 = vmatmul.mubr.f32.gmra.mxu0 %v888
        %v1097 = vpop.f32.mrf.mxu0
        %v1098 = vadd.f32 %v812, %v1097
        %v1099 = vpop.f32.mrf.mxu0
        %1100 = vmatprep.mubr.f32.mxu0 0.0
        %1101 = vmatmul.mubr.f32.gmra.mxu0 %v891
        %v1102 = vpop.f32.mrf.mxu0
        %v1103 = vadd.f32 %v812, %v1102
        %v1104 = vpop.f32.mrf.mxu0
        %1105 = vmatprep.mubr.f32.mxu0 0.0
        %1106 = vmatmul.mubr.f32.gmra.mxu0 %v894
        %v1107 = vpop.f32.mrf.mxu0
        %v1108 = vadd.f32 %v812, %v1107
        %v1109 = vpop.f32.mrf.mxu0
        %1110 = vmatprep.mubr.f32.mxu0 0.0
        %1111 = vmatmul.mubr.f32.gmra.mxu0 %v897
        %v1112 = vpop.f32.mrf.mxu0
        %v1113 = vadd.f32 %v812, %v1112
        %v1114 = vpop.f32.mrf.mxu0
        %1115 = vmatprep.mubr.f32.mxu0 0.0
        %1116 = vmatmul.mubr.f32.gmra.mxu0 %v900
        %v1117 = vpop.f32.mrf.mxu0
        %v1118 = vadd.f32 %v812, %v1117
        %v1119 = vpop.f32.mrf.mxu0
        %1120 = vmatprep.mubr.f32.mxu0 0.0
        %1121 = vmatmul.mubr.f32.gmra.mxu0 %v903
        %v1122 = vpop.f32.mrf.mxu0
        %v1123 = vadd.f32 %v812, %v1122
        %v1124 = vpop.f32.mrf.mxu0
        %1125 = vmatprep.mubr.f32.mxu0 0.0
        %1126 = vmatmul.mubr.f32.gmra.mxu0 %v906
        %v1127 = vpop.f32.mrf.mxu0
        %v1128 = vadd.f32 %v812, %v1127
        %v1129 = vpop.f32.mrf.mxu0
        %1130 = vmatprep.mubr.f32.mxu0 0.0
        %1131 = vmatmul.mubr.f32.gmra.mxu0 %v909
        %v1132 = vpop.f32.mrf.mxu0
        %v1133 = vadd.f32 %v812, %v1132
        %v1134 = vpop.f32.mrf.mxu0
        %1135 = vdwg.mxu0
        %v1136 = vld [vmem:[#allocation6] sm:$0x7]
        %v1137 = vld [vmem:[#allocation7] sm:$0x1]
        %1139 = vset.pattern.permute.xlu0 0
        %1140 = vperm.xlu0 %1139, %v978
        %v1141 = vpop.permute.xlu0 %1140
        %1144 = vset.pattern.permute.xlu0 0
        %1145 = vperm.xlu0 %1144, %v983
        %v1146 = vpop.permute.xlu0 %1145
        %1149 = vset.pattern.permute.xlu0 0
        %1150 = vperm.xlu0 %1149, %v988
        %v1151 = vpop.permute.xlu0 %1150
        %1154 = vset.pattern.permute.xlu0 0
        %1155 = vperm.xlu0 %1154, %v993
        %v1156 = vpop.permute.xlu0 %1155
        %1159 = vset.pattern.permute.xlu0 0
        %1160 = vperm.xlu0 %1159, %v998
        %v1161 = vpop.permute.xlu0 %1160
        %1164 = vset.pattern.permute.xlu0 0
        %1165 = vperm.xlu0 %1164, %v1003
        %v1166 = vpop.permute.xlu0 %1165
        %1169 = vset.pattern.permute.xlu0 0
        %1170 = vperm.xlu0 %1169, %v1008
        %v1171 = vpop.permute.xlu0 %1170
        %1174 = vset.pattern.permute.xlu0 0
        %1175 = vperm.xlu0 %1174, %v1013
        %v1176 = vpop.permute.xlu0 %1175
        %1179 = vset.pattern.permute.xlu0 0
        %1180 = vperm.xlu0 %1179, %v1018
        %v1181 = vpop.permute.xlu0 %1180
        %1184 = vset.pattern.permute.xlu0 0
        %1185 = vperm.xlu0 %1184, %v1023
        %v1186 = vpop.permute.xlu0 %1185
        %1189 = vset.pattern.permute.xlu0 0
        %1190 = vperm.xlu0 %1189, %v1028
        %v1191 = vpop.permute.xlu0 %1190
        %1194 = vset.pattern.permute.xlu0 0
        %1195 = vperm.xlu0 %1194, %v1033
        %v1196 = vpop.permute.xlu0 %1195
        %1199 = vset.pattern.permute.xlu0 0
        %1200 = vperm.xlu0 %1199, %v1038
        %v1201 = vpop.permute.xlu0 %1200
        %1204 = vset.pattern.permute.xlu0 0
        %1205 = vperm.xlu0 %1204, %v1043
        %v1206 = vpop.permute.xlu0 %1205
        %1209 = vset.pattern.permute.xlu0 0
        %1210 = vperm.xlu0 %1209, %v1048
        %v1211 = vpop.permute.xlu0 %1210
        %1214 = vset.pattern.permute.xlu0 0
        %1215 = vperm.xlu0 %1214, %v1053
        %v1216 = vpop.permute.xlu0 %1215
        %1219 = vset.pattern.permute.xlu0 0
        %1220 = vperm.xlu0 %1219, %v1058
        %v1221 = vpop.permute.xlu0 %1220
        %1224 = vset.pattern.permute.xlu0 0
        %1225 = vperm.xlu0 %1224, %v1063
        %v1226 = vpop.permute.xlu0 %1225
        %1229 = vset.pattern.permute.xlu0 0
        %1230 = vperm.xlu0 %1229, %v1068
        %v1231 = vpop.permute.xlu0 %1230
        %1234 = vset.pattern.permute.xlu0 0
        %1235 = vperm.xlu0 %1234, %v1073
        %v1236 = vpop.permute.xlu0 %1235
        %1239 = vset.pattern.permute.xlu0 0
        %1240 = vperm.xlu0 %1239, %v1078
        %v1241 = vpop.permute.xlu0 %1240
        %1244 = vset.pattern.permute.xlu0 0
        %1245 = vperm.xlu0 %1244, %v1083
        %v1246 = vpop.permute.xlu0 %1245
        %1249 = vset.pattern.permute.xlu0 0
        %1250 = vperm.xlu0 %1249, %v1088
        %v1251 = vpop.permute.xlu0 %1250
        %1254 = vset.pattern.permute.xlu0 0
        %1255 = vperm.xlu0 %1254, %v1093
        %v1256 = vpop.permute.xlu0 %1255
        %1259 = vset.pattern.permute.xlu0 0
        %1260 = vperm.xlu0 %1259, %v1098
        %v1261 = vpop.permute.xlu0 %1260
        %1264 = vset.pattern.permute.xlu0 0
        %1265 = vperm.xlu0 %1264, %v1103
        %v1266 = vpop.permute.xlu0 %1265
        %1269 = vset.pattern.permute.xlu0 0
        %1270 = vperm.xlu0 %1269, %v1108
        %v1271 = vpop.permute.xlu0 %1270
        %1274 = vset.pattern.permute.xlu0 0
        %1275 = vperm.xlu0 %1274, %v1113
        %v1276 = vpop.permute.xlu0 %1275
        %1279 = vset.pattern.permute.xlu0 0
        %1280 = vperm.xlu0 %1279, %v1118
        %v1281 = vpop.permute.xlu0 %1280
        %1284 = vset.pattern.permute.xlu0 0
        %1285 = vperm.xlu0 %1284, %v1123
        %v1286 = vpop.permute.xlu0 %1285
        %1289 = vset.pattern.permute.xlu0 0
        %1290 = vperm.xlu0 %1289, %v1128
        %v1291 = vpop.permute.xlu0 %1290
        %1294 = vset.pattern.permute.xlu0 0
        %1295 = vperm.xlu0 %1294, %v1133
        %v1296 = vpop.permute.xlu0 %1295
        %v1298 = vlaneseq
        %v1299 = vshrl.u32 %v1298, 7
        %v1300 = vsub.s32 0, %v1299
        %v1301 = vrot.slane %v1136, %v1300
        %v1302 = vmul.f32 %v1141, %v1301
        %v1303 = vmul.f32 %v1146, %v1301
        %v1304 = vmul.f32 %v1151, %v1301
        %v1305 = vmul.f32 %v1156, %v1301
        %v1306 = vmul.f32 %v1161, %v1301
        %v1307 = vmul.f32 %v1166, %v1301
        %v1308 = vmul.f32 %v1171, %v1301
        %v1309 = vmul.f32 %v1176, %v1301
        %v1310 = vmul.f32 %v1181, %v1301
        %v1311 = vmul.f32 %v1186, %v1301
        %v1312 = vmul.f32 %v1191, %v1301
        %v1313 = vmul.f32 %v1196, %v1301
        %v1314 = vmul.f32 %v1201, %v1301
        %v1315 = vmul.f32 %v1206, %v1301
        %v1316 = vmul.f32 %v1211, %v1301
        %v1317 = vmul.f32 %v1216, %v1301
        %v1318 = vmul.f32 %v1221, %v1301
        %v1319 = vmul.f32 %v1226, %v1301
        %v1320 = vmul.f32 %v1231, %v1301
        %v1321 = vmul.f32 %v1236, %v1301
        %v1322 = vmul.f32 %v1241, %v1301
        %v1323 = vmul.f32 %v1246, %v1301
        %v1324 = vmul.f32 %v1251, %v1301
        %v1325 = vmul.f32 %v1256, %v1301
        %v1326 = vmul.f32 %v1261, %v1301
        %v1327 = vmul.f32 %v1266, %v1301
        %v1328 = vmul.f32 %v1271, %v1301
        %v1329 = vmul.f32 %v1276, %v1301
        %v1330 = vmul.f32 %v1281, %v1301
        %v1331 = vmul.f32 %v1286, %v1301
        %v1332 = vmul.f32 %v1291, %v1301
        %v1333 = vmul.f32 %v1296, %v1301
        %v1335 = vlaneseq
        %v1336 = vshrl.u32 %v1335, 7
        %v1337 = vsub.s32 0, %v1336
        %v1338 = vrot.slane %v1137, %v1337
        %v1340 = vadd.f32 %v1338, %v1302
        %v1341 = vadd.f32 %v1338, %v1303
        %v1342 = vadd.f32 %v1338, %v1304
        %v1343 = vadd.f32 %v1338, %v1305
        %v1344 = vadd.f32 %v1338, %v1306
        %v1345 = vadd.f32 %v1338, %v1307
        %v1346 = vadd.f32 %v1338, %v1308
        %v1347 = vadd.f32 %v1338, %v1309
        %v1348 = vadd.f32 %v1338, %v1310
        %v1349 = vadd.f32 %v1338, %v1311
        %v1350 = vadd.f32 %v1338, %v1312
        %v1351 = vadd.f32 %v1338, %v1313
        %v1352 = vadd.f32 %v1338, %v1314
        %v1353 = vadd.f32 %v1338, %v1315
        %v1354 = vadd.f32 %v1338, %v1316
        %v1355 = vadd.f32 %v1338, %v1317
        %v1356 = vadd.f32 %v1338, %v1318
        %v1357 = vadd.f32 %v1338, %v1319
        %v1358 = vadd.f32 %v1338, %v1320
        %v1359 = vadd.f32 %v1338, %v1321
        %v1360 = vadd.f32 %v1338, %v1322
        %v1361 = vadd.f32 %v1338, %v1323
        %v1362 = vadd.f32 %v1338, %v1324
        %v1363 = vadd.f32 %v1338, %v1325
        %v1364 = vadd.f32 %v1338, %v1326
        %v1365 = vadd.f32 %v1338, %v1327
        %v1366 = vadd.f32 %v1338, %v1328
        %v1367 = vadd.f32 %v1338, %v1329
        %v1368 = vadd.f32 %v1338, %v1330
        %v1369 = vadd.f32 %v1338, %v1331
        %v1370 = vadd.f32 %v1338, %v1332
        %v1371 = vadd.f32 %v1338, %v1333
        %1372 = vset.pattern.permute.xlu0 1
        %1373 = vperm.xlu0 %1372, %v978
        %v1374 = vpop.permute.xlu0 %1373
        %1376 = vset.pattern.permute.xlu0 1
        %1377 = vperm.xlu0 %1376, %v983
        %v1378 = vpop.permute.xlu0 %1377
        %1380 = vset.pattern.permute.xlu0 1
        %1381 = vperm.xlu0 %1380, %v988
        %v1382 = vpop.permute.xlu0 %1381
        %1384 = vset.pattern.permute.xlu0 1
        %1385 = vperm.xlu0 %1384, %v993
        %v1386 = vpop.permute.xlu0 %1385
        %1388 = vset.pattern.permute.xlu0 1
        %1389 = vperm.xlu0 %1388, %v998
        %v1390 = vpop.permute.xlu0 %1389
        %1392 = vset.pattern.permute.xlu0 1
        %1393 = vperm.xlu0 %1392, %v1003
        %v1394 = vpop.permute.xlu0 %1393
        %1396 = vset.pattern.permute.xlu0 1
        %1397 = vperm.xlu0 %1396, %v1008
        %v1398 = vpop.permute.xlu0 %1397
        %1400 = vset.pattern.permute.xlu0 1
        %1401 = vperm.xlu0 %1400, %v1013
        %v1402 = vpop.permute.xlu0 %1401
        %1404 = vset.pattern.permute.xlu0 1
        %1405 = vperm.xlu0 %1404, %v1018
        %v1406 = vpop.permute.xlu0 %1405
        %1408 = vset.pattern.permute.xlu0 1
        %1409 = vperm.xlu0 %1408, %v1023
        %v1410 = vpop.permute.xlu0 %1409
        %1412 = vset.pattern.permute.xlu0 1
        %1413 = vperm.xlu0 %1412, %v1028
        %v1414 = vpop.permute.xlu0 %1413
        %1416 = vset.pattern.permute.xlu0 1
        %1417 = vperm.xlu0 %1416, %v1033
        %v1418 = vpop.permute.xlu0 %1417
        %1420 = vset.pattern.permute.xlu0 1
        %1421 = vperm.xlu0 %1420, %v1038
        %v1422 = vpop.permute.xlu0 %1421
        %1424 = vset.pattern.permute.xlu0 1
        %1425 = vperm.xlu0 %1424, %v1043
        %v1426 = vpop.permute.xlu0 %1425
        %1428 = vset.pattern.permute.xlu0 1
        %1429 = vperm.xlu0 %1428, %v1048
        %v1430 = vpop.permute.xlu0 %1429
        %1432 = vset.pattern.permute.xlu0 1
        %1433 = vperm.xlu0 %1432, %v1053
        %v1434 = vpop.permute.xlu0 %1433
        %1436 = vset.pattern.permute.xlu0 1
        %1437 = vperm.xlu0 %1436, %v1058
        %v1438 = vpop.permute.xlu0 %1437
        %1440 = vset.pattern.permute.xlu0 1
        %1441 = vperm.xlu0 %1440, %v1063
        %v1442 = vpop.permute.xlu0 %1441
        %1444 = vset.pattern.permute.xlu0 1
        %1445 = vperm.xlu0 %1444, %v1068
        %v1446 = vpop.permute.xlu0 %1445
        %1448 = vset.pattern.permute.xlu0 1
        %1449 = vperm.xlu0 %1448, %v1073
        %v1450 = vpop.permute.xlu0 %1449
        %1452 = vset.pattern.permute.xlu0 1
        %1453 = vperm.xlu0 %1452, %v1078
        %v1454 = vpop.permute.xlu0 %1453
        %1456 = vset.pattern.permute.xlu0 1
        %1457 = vperm.xlu0 %1456, %v1083
        %v1458 = vpop.permute.xlu0 %1457
        %1460 = vset.pattern.permute.xlu0 1
        %1461 = vperm.xlu0 %1460, %v1088
        %v1462 = vpop.permute.xlu0 %1461
        %1464 = vset.pattern.permute.xlu0 1
        %1465 = vperm.xlu0 %1464, %v1093
        %v1466 = vpop.permute.xlu0 %1465
        %1468 = vset.pattern.permute.xlu0 1
        %1469 = vperm.xlu0 %1468, %v1098
        %v1470 = vpop.permute.xlu0 %1469
        %1472 = vset.pattern.permute.xlu0 1
        %1473 = vperm.xlu0 %1472, %v1103
        %v1474 = vpop.permute.xlu0 %1473
        %1476 = vset.pattern.permute.xlu0 1
        %1477 = vperm.xlu0 %1476, %v1108
        %v1478 = vpop.permute.xlu0 %1477
        %1480 = vset.pattern.permute.xlu0 1
        %1481 = vperm.xlu0 %1480, %v1113
        %v1482 = vpop.permute.xlu0 %1481
        %1484 = vset.pattern.permute.xlu0 1
        %1485 = vperm.xlu0 %1484, %v1118
        %v1486 = vpop.permute.xlu0 %1485
        %1488 = vset.pattern.permute.xlu0 1
        %1489 = vperm.xlu0 %1488, %v1123
        %v1490 = vpop.permute.xlu0 %1489
        %1492 = vset.pattern.permute.xlu0 1
        %1493 = vperm.xlu0 %1492, %v1128
        %v1494 = vpop.permute.xlu0 %1493
        %1496 = vset.pattern.permute.xlu0 1
        %1497 = vperm.xlu0 %1496, %v1133
        %v1498 = vpop.permute.xlu0 %1497
        %v1500 = vlaneseq
        %v1501 = vshrl.u32 %v1500, 7
        %v1502 = vsub.s32 1, %v1501
        %v1503 = vrot.slane %v1136, %v1502
        %v1504 = vmul.f32 %v1374, %v1503
        %v1505 = vmul.f32 %v1378, %v1503
        %v1506 = vmul.f32 %v1382, %v1503
        %v1507 = vmul.f32 %v1386, %v1503
        %v1508 = vmul.f32 %v1390, %v1503
        %v1509 = vmul.f32 %v1394, %v1503
        %v1510 = vmul.f32 %v1398, %v1503
        %v1511 = vmul.f32 %v1402, %v1503
        %v1512 = vmul.f32 %v1406, %v1503
        %v1513 = vmul.f32 %v1410, %v1503
        %v1514 = vmul.f32 %v1414, %v1503
        %v1515 = vmul.f32 %v1418, %v1503
        %v1516 = vmul.f32 %v1422, %v1503
        %v1517 = vmul.f32 %v1426, %v1503
        %v1518 = vmul.f32 %v1430, %v1503
        %v1519 = vmul.f32 %v1434, %v1503
        %v1520 = vmul.f32 %v1438, %v1503
        %v1521 = vmul.f32 %v1442, %v1503
        %v1522 = vmul.f32 %v1446, %v1503
        %v1523 = vmul.f32 %v1450, %v1503
        %v1524 = vmul.f32 %v1454, %v1503
        %v1525 = vmul.f32 %v1458, %v1503
        %v1526 = vmul.f32 %v1462, %v1503
        %v1527 = vmul.f32 %v1466, %v1503
        %v1528 = vmul.f32 %v1470, %v1503
        %v1529 = vmul.f32 %v1474, %v1503
        %v1530 = vmul.f32 %v1478, %v1503
        %v1531 = vmul.f32 %v1482, %v1503
        %v1532 = vmul.f32 %v1486, %v1503
        %v1533 = vmul.f32 %v1490, %v1503
        %v1534 = vmul.f32 %v1494, %v1503
        %v1535 = vmul.f32 %v1498, %v1503
        %v1536 = vadd.f32 %v1340, %v1504
        %v1537 = vadd.f32 %v1341, %v1505
        %v1538 = vadd.f32 %v1342, %v1506
        %v1539 = vadd.f32 %v1343, %v1507
        %v1540 = vadd.f32 %v1344, %v1508
        %v1541 = vadd.f32 %v1345, %v1509
        %v1542 = vadd.f32 %v1346, %v1510
        %v1543 = vadd.f32 %v1347, %v1511
        %v1544 = vadd.f32 %v1348, %v1512
        %v1545 = vadd.f32 %v1349, %v1513
        %v1546 = vadd.f32 %v1350, %v1514
        %v1547 = vadd.f32 %v1351, %v1515
        %v1548 = vadd.f32 %v1352, %v1516
        %v1549 = vadd.f32 %v1353, %v1517
        %v1550 = vadd.f32 %v1354, %v1518
        %v1551 = vadd.f32 %v1355, %v1519
        %v1552 = vadd.f32 %v1356, %v1520
        %v1553 = vadd.f32 %v1357, %v1521
        %v1554 = vadd.f32 %v1358, %v1522
        %v1555 = vadd.f32 %v1359, %v1523
        %v1556 = vadd.f32 %v1360, %v1524
        %v1557 = vadd.f32 %v1361, %v1525
        %v1558 = vadd.f32 %v1362, %v1526
        %v1559 = vadd.f32 %v1363, %v1527
        %v1560 = vadd.f32 %v1364, %v1528
        %v1561 = vadd.f32 %v1365, %v1529
        %v1562 = vadd.f32 %v1366, %v1530
        %v1563 = vadd.f32 %v1367, %v1531
        %v1564 = vadd.f32 %v1368, %v1532
        %v1565 = vadd.f32 %v1369, %v1533
        %v1566 = vadd.f32 %v1370, %v1534
        %v1567 = vadd.f32 %v1371, %v1535
        %1568 = vset.pattern.permute.xlu0 2
        %1569 = vperm.xlu0 %1568, %v978
        %v1570 = vpop.permute.xlu0 %1569
        %1572 = vset.pattern.permute.xlu0 2
        %1573 = vperm.xlu0 %1572, %v983
        %v1574 = vpop.permute.xlu0 %1573
        %1576 = vset.pattern.permute.xlu0 2
        %1577 = vperm.xlu0 %1576, %v988
        %v1578 = vpop.permute.xlu0 %1577
        %1580 = vset.pattern.permute.xlu0 2
        %1581 = vperm.xlu0 %1580, %v993
        %v1582 = vpop.permute.xlu0 %1581
        %1584 = vset.pattern.permute.xlu0 2
        %1585 = vperm.xlu0 %1584, %v998
        %v1586 = vpop.permute.xlu0 %1585
        %1588 = vset.pattern.permute.xlu0 2
        %1589 = vperm.xlu0 %1588, %v1003
        %v1590 = vpop.permute.xlu0 %1589
        %1592 = vset.pattern.permute.xlu0 2
        %1593 = vperm.xlu0 %1592, %v1008
        %v1594 = vpop.permute.xlu0 %1593
        %1596 = vset.pattern.permute.xlu0 2
        %1597 = vperm.xlu0 %1596, %v1013
        %v1598 = vpop.permute.xlu0 %1597
        %1600 = vset.pattern.permute.xlu0 2
        %1601 = vperm.xlu0 %1600, %v1018
        %v1602 = vpop.permute.xlu0 %1601
        %1604 = vset.pattern.permute.xlu0 2
        %1605 = vperm.xlu0 %1604, %v1023
        %v1606 = vpop.permute.xlu0 %1605
        %1608 = vset.pattern.permute.xlu0 2
        %1609 = vperm.xlu0 %1608, %v1028
        %v1610 = vpop.permute.xlu0 %1609
        %1612 = vset.pattern.permute.xlu0 2
        %1613 = vperm.xlu0 %1612, %v1033
        %v1614 = vpop.permute.xlu0 %1613
        %1616 = vset.pattern.permute.xlu0 2
        %1617 = vperm.xlu0 %1616, %v1038
        %v1618 = vpop.permute.xlu0 %1617
        %1620 = vset.pattern.permute.xlu0 2
        %1621 = vperm.xlu0 %1620, %v1043
        %v1622 = vpop.permute.xlu0 %1621
        %1624 = vset.pattern.permute.xlu0 2
        %1625 = vperm.xlu0 %1624, %v1048
        %v1626 = vpop.permute.xlu0 %1625
        %1628 = vset.pattern.permute.xlu0 2
        %1629 = vperm.xlu0 %1628, %v1053
        %v1630 = vpop.permute.xlu0 %1629
        %1632 = vset.pattern.permute.xlu0 2
        %1633 = vperm.xlu0 %1632, %v1058
        %v1634 = vpop.permute.xlu0 %1633
        %1636 = vset.pattern.permute.xlu0 2
        %1637 = vperm.xlu0 %1636, %v1063
        %v1638 = vpop.permute.xlu0 %1637
        %1640 = vset.pattern.permute.xlu0 2
        %1641 = vperm.xlu0 %1640, %v1068
        %v1642 = vpop.permute.xlu0 %1641
        %1644 = vset.pattern.permute.xlu0 2
        %1645 = vperm.xlu0 %1644, %v1073
        %v1646 = vpop.permute.xlu0 %1645
        %1648 = vset.pattern.permute.xlu0 2
        %1649 = vperm.xlu0 %1648, %v1078
        %v1650 = vpop.permute.xlu0 %1649
        %1652 = vset.pattern.permute.xlu0 2
        %1653 = vperm.xlu0 %1652, %v1083
        %v1654 = vpop.permute.xlu0 %1653
        %1656 = vset.pattern.permute.xlu0 2
        %1657 = vperm.xlu0 %1656, %v1088
        %v1658 = vpop.permute.xlu0 %1657
        %1660 = vset.pattern.permute.xlu0 2
        %1661 = vperm.xlu0 %1660, %v1093
        %v1662 = vpop.permute.xlu0 %1661
        %1664 = vset.pattern.permute.xlu0 2
        %1665 = vperm.xlu0 %1664, %v1098
        %v1666 = vpop.permute.xlu0 %1665
        %1668 = vset.pattern.permute.xlu0 2
        %1669 = vperm.xlu0 %1668, %v1103
        %v1670 = vpop.permute.xlu0 %1669
        %1672 = vset.pattern.permute.xlu0 2
        %1673 = vperm.xlu0 %1672, %v1108
        %v1674 = vpop.permute.xlu0 %1673
        %1676 = vset.pattern.permute.xlu0 2
        %1677 = vperm.xlu0 %1676, %v1113
        %v1678 = vpop.permute.xlu0 %1677
        %1680 = vset.pattern.permute.xlu0 2
        %1681 = vperm.xlu0 %1680, %v1118
        %v1682 = vpop.permute.xlu0 %1681
        %1684 = vset.pattern.permute.xlu0 2
        %1685 = vperm.xlu0 %1684, %v1123
        %v1686 = vpop.permute.xlu0 %1685
        %1688 = vset.pattern.permute.xlu0 2
        %1689 = vperm.xlu0 %1688, %v1128
        %v1690 = vpop.permute.xlu0 %1689
        %1692 = vset.pattern.permute.xlu0 2
        %1693 = vperm.xlu0 %1692, %v1133
        %v1694 = vpop.permute.xlu0 %1693
        %v1696 = vlaneseq
        %v1697 = vshrl.u32 %v1696, 7
        %v1698 = vsub.s32 2, %v1697
        %v1699 = vrot.slane %v1136, %v1698
        %v1700 = vmul.f32 %v1570, %v1699
        %v1701 = vmul.f32 %v1574, %v1699
        %v1702 = vmul.f32 %v1578, %v1699
        %v1703 = vmul.f32 %v1582, %v1699
        %v1704 = vmul.f32 %v1586, %v1699
        %v1705 = vmul.f32 %v1590, %v1699
        %v1706 = vmul.f32 %v1594, %v1699
        %v1707 = vmul.f32 %v1598, %v1699
        %v1708 = vmul.f32 %v1602, %v1699
        %v1709 = vmul.f32 %v1606, %v1699
        %v1710 = vmul.f32 %v1610, %v1699
        %v1711 = vmul.f32 %v1614, %v1699
        %v1712 = vmul.f32 %v1618, %v1699
        %v1713 = vmul.f32 %v1622, %v1699
        %v1714 = vmul.f32 %v1626, %v1699
        %v1715 = vmul.f32 %v1630, %v1699
        %v1716 = vmul.f32 %v1634, %v1699
        %v1717 = vmul.f32 %v1638, %v1699
        %v1718 = vmul.f32 %v1642, %v1699
        %v1719 = vmul.f32 %v1646, %v1699
        %v1720 = vmul.f32 %v1650, %v1699
        %v1721 = vmul.f32 %v1654, %v1699
        %v1722 = vmul.f32 %v1658, %v1699
        %v1723 = vmul.f32 %v1662, %v1699
        %v1724 = vmul.f32 %v1666, %v1699
        %v1725 = vmul.f32 %v1670, %v1699
        %v1726 = vmul.f32 %v1674, %v1699
        %v1727 = vmul.f32 %v1678, %v1699
        %v1728 = vmul.f32 %v1682, %v1699
        %v1729 = vmul.f32 %v1686, %v1699
        %v1730 = vmul.f32 %v1690, %v1699
        %v1731 = vmul.f32 %v1694, %v1699
        %v1732 = vadd.f32 %v1536, %v1700
        %v1733 = vadd.f32 %v1537, %v1701
        %v1734 = vadd.f32 %v1538, %v1702
        %v1735 = vadd.f32 %v1539, %v1703
        %v1736 = vadd.f32 %v1540, %v1704
        %v1737 = vadd.f32 %v1541, %v1705
        %v1738 = vadd.f32 %v1542, %v1706
        %v1739 = vadd.f32 %v1543, %v1707
        %v1740 = vadd.f32 %v1544, %v1708
        %v1741 = vadd.f32 %v1545, %v1709
        %v1742 = vadd.f32 %v1546, %v1710
        %v1743 = vadd.f32 %v1547, %v1711
        %v1744 = vadd.f32 %v1548, %v1712
        %v1745 = vadd.f32 %v1549, %v1713
        %v1746 = vadd.f32 %v1550, %v1714
        %v1747 = vadd.f32 %v1551, %v1715
        %v1748 = vadd.f32 %v1552, %v1716
        %v1749 = vadd.f32 %v1553, %v1717
        %v1750 = vadd.f32 %v1554, %v1718
        %v1751 = vadd.f32 %v1555, %v1719
        %v1752 = vadd.f32 %v1556, %v1720
        %v1753 = vadd.f32 %v1557, %v1721
        %v1754 = vadd.f32 %v1558, %v1722
        %v1755 = vadd.f32 %v1559, %v1723
        %v1756 = vadd.f32 %v1560, %v1724
        %v1757 = vadd.f32 %v1561, %v1725
        %v1758 = vadd.f32 %v1562, %v1726
        %v1759 = vadd.f32 %v1563, %v1727
        %v1760 = vadd.f32 %v1564, %v1728
        %v1761 = vadd.f32 %v1565, %v1729
        %v1762 = vadd.f32 %v1566, %v1730
        %v1763 = vadd.f32 %v1567, %v1731
        %v1764 = vmax.f32 %v1732, 0.0
        %v1765 = vmax.f32 %v1733, 0.0
        %v1766 = vmax.f32 %v1734, 0.0
        %v1767 = vmax.f32 %v1735, 0.0
        %v1768 = vmax.f32 %v1736, 0.0
        %v1769 = vmax.f32 %v1737, 0.0
        %v1770 = vmax.f32 %v1738, 0.0
        %v1771 = vmax.f32 %v1739, 0.0
        %v1772 = vmax.f32 %v1740, 0.0
        %v1773 = vmax.f32 %v1741, 0.0
        %v1774 = vmax.f32 %v1742, 0.0
        %v1775 = vmax.f32 %v1743, 0.0
        %v1776 = vmax.f32 %v1744, 0.0
        %v1777 = vmax.f32 %v1745, 0.0
        %v1778 = vmax.f32 %v1746, 0.0
        %v1779 = vmax.f32 %v1747, 0.0
        %v1780 = vmax.f32 %v1748, 0.0
        %v1781 = vmax.f32 %v1749, 0.0
        %v1782 = vmax.f32 %v1750, 0.0
        %v1783 = vmax.f32 %v1751, 0.0
        %v1784 = vmax.f32 %v1752, 0.0
        %v1785 = vmax.f32 %v1753, 0.0
        %v1786 = vmax.f32 %v1754, 0.0
        %v1787 = vmax.f32 %v1755, 0.0
        %v1788 = vmax.f32 %v1756, 0.0
        %v1789 = vmax.f32 %v1757, 0.0
        %v1790 = vmax.f32 %v1758, 0.0
        %v1791 = vmax.f32 %v1759, 0.0
        %v1792 = vmax.f32 %v1760, 0.0
        %v1793 = vmax.f32 %v1761, 0.0
        %v1794 = vmax.f32 %v1762, 0.0
        %v1795 = vmax.f32 %v1763, 0.0
        %v1796 = vld [vmem:[#allocation22] sm:$0x7]
        %v1797 = vld [vmem:[#allocation25] sm:$0x7]
        %v1798 = vld [vmem:[#allocation24] sm:$0x1]
        %1800 = vset.pattern.permute.xlu0 0
        %1801 = vperm.xlu0 %1800, %v1764
        %v1802 = vpop.permute.xlu0 %1801
        %1805 = vset.pattern.permute.xlu0 0
        %1806 = vperm.xlu0 %1805, %v1765
        %v1807 = vpop.permute.xlu0 %1806
        %1810 = vset.pattern.permute.xlu0 0
        %1811 = vperm.xlu0 %1810, %v1766
        %v1812 = vpop.permute.xlu0 %1811
        %1815 = vset.pattern.permute.xlu0 0
        %1816 = vperm.xlu0 %1815, %v1767
        %v1817 = vpop.permute.xlu0 %1816
        %1820 = vset.pattern.permute.xlu0 0
        %1821 = vperm.xlu0 %1820, %v1768
        %v1822 = vpop.permute.xlu0 %1821
        %1825 = vset.pattern.permute.xlu0 0
        %1826 = vperm.xlu0 %1825, %v1769
        %v1827 = vpop.permute.xlu0 %1826
        %1830 = vset.pattern.permute.xlu0 0
        %1831 = vperm.xlu0 %1830, %v1770
        %v1832 = vpop.permute.xlu0 %1831
        %1835 = vset.pattern.permute.xlu0 0
        %1836 = vperm.xlu0 %1835, %v1771
        %v1837 = vpop.permute.xlu0 %1836
        %1840 = vset.pattern.permute.xlu0 0
        %1841 = vperm.xlu0 %1840, %v1772
        %v1842 = vpop.permute.xlu0 %1841
        %1845 = vset.pattern.permute.xlu0 0
        %1846 = vperm.xlu0 %1845, %v1773
        %v1847 = vpop.permute.xlu0 %1846
        %1850 = vset.pattern.permute.xlu0 0
        %1851 = vperm.xlu0 %1850, %v1774
        %v1852 = vpop.permute.xlu0 %1851
        %1855 = vset.pattern.permute.xlu0 0
        %1856 = vperm.xlu0 %1855, %v1775
        %v1857 = vpop.permute.xlu0 %1856
        %1860 = vset.pattern.permute.xlu0 0
        %1861 = vperm.xlu0 %1860, %v1776
        %v1862 = vpop.permute.xlu0 %1861
        %1865 = vset.pattern.permute.xlu0 0
        %1866 = vperm.xlu0 %1865, %v1777
        %v1867 = vpop.permute.xlu0 %1866
        %1870 = vset.pattern.permute.xlu0 0
        %1871 = vperm.xlu0 %1870, %v1778
        %v1872 = vpop.permute.xlu0 %1871
        %1875 = vset.pattern.permute.xlu0 0
        %1876 = vperm.xlu0 %1875, %v1779
        %v1877 = vpop.permute.xlu0 %1876
        %1880 = vset.pattern.permute.xlu0 0
        %1881 = vperm.xlu0 %1880, %v1780
        %v1882 = vpop.permute.xlu0 %1881
        %1885 = vset.pattern.permute.xlu0 0
        %1886 = vperm.xlu0 %1885, %v1781
        %v1887 = vpop.permute.xlu0 %1886
        %1890 = vset.pattern.permute.xlu0 0
        %1891 = vperm.xlu0 %1890, %v1782
        %v1892 = vpop.permute.xlu0 %1891
        %1895 = vset.pattern.permute.xlu0 0
        %1896 = vperm.xlu0 %1895, %v1783
        %v1897 = vpop.permute.xlu0 %1896
        %1900 = vset.pattern.permute.xlu0 0
        %1901 = vperm.xlu0 %1900, %v1784
        %v1902 = vpop.permute.xlu0 %1901
        %1905 = vset.pattern.permute.xlu0 0
        %1906 = vperm.xlu0 %1905, %v1785
        %v1907 = vpop.permute.xlu0 %1906
        %1910 = vset.pattern.permute.xlu0 0
        %1911 = vperm.xlu0 %1910, %v1786
        %v1912 = vpop.permute.xlu0 %1911
        %1915 = vset.pattern.permute.xlu0 0
        %1916 = vperm.xlu0 %1915, %v1787
        %v1917 = vpop.permute.xlu0 %1916
        %1920 = vset.pattern.permute.xlu0 0
        %1921 = vperm.xlu0 %1920, %v1788
        %v1922 = vpop.permute.xlu0 %1921
        %1925 = vset.pattern.permute.xlu0 0
        %1926 = vperm.xlu0 %1925, %v1789
        %v1927 = vpop.permute.xlu0 %1926
        %1930 = vset.pattern.permute.xlu0 0
        %1931 = vperm.xlu0 %1930, %v1790
        %v1932 = vpop.permute.xlu0 %1931
        %1935 = vset.pattern.permute.xlu0 0
        %1936 = vperm.xlu0 %1935, %v1791
        %v1937 = vpop.permute.xlu0 %1936
        %1940 = vset.pattern.permute.xlu0 0
        %1941 = vperm.xlu0 %1940, %v1792
        %v1942 = vpop.permute.xlu0 %1941
        %1945 = vset.pattern.permute.xlu0 0
        %1946 = vperm.xlu0 %1945, %v1793
        %v1947 = vpop.permute.xlu0 %1946
        %1950 = vset.pattern.permute.xlu0 0
        %1951 = vperm.xlu0 %1950, %v1794
        %v1952 = vpop.permute.xlu0 %1951
        %1955 = vset.pattern.permute.xlu0 0
        %1956 = vperm.xlu0 %1955, %v1795
        %v1957 = vpop.permute.xlu0 %1956
        %v1959 = vlaneseq
        %v1960 = vshrl.u32 %v1959, 7
        %v1961 = vsub.s32 0, %v1960
        %v1962 = vrot.slane %v1796, %v1961
        %v1963 = vmul.f32 %v1802, %v1962
        %v1964 = vmul.f32 %v1807, %v1962
        %v1965 = vmul.f32 %v1812, %v1962
        %v1966 = vmul.f32 %v1817, %v1962
        %v1967 = vmul.f32 %v1822, %v1962
        %v1968 = vmul.f32 %v1827, %v1962
        %v1969 = vmul.f32 %v1832, %v1962
        %v1970 = vmul.f32 %v1837, %v1962
        %v1971 = vmul.f32 %v1842, %v1962
        %v1972 = vmul.f32 %v1847, %v1962
        %v1973 = vmul.f32 %v1852, %v1962
        %v1974 = vmul.f32 %v1857, %v1962
        %v1975 = vmul.f32 %v1862, %v1962
        %v1976 = vmul.f32 %v1867, %v1962
        %v1977 = vmul.f32 %v1872, %v1962
        %v1978 = vmul.f32 %v1877, %v1962
        %v1979 = vmul.f32 %v1882, %v1962
        %v1980 = vmul.f32 %v1887, %v1962
        %v1981 = vmul.f32 %v1892, %v1962
        %v1982 = vmul.f32 %v1897, %v1962
        %v1983 = vmul.f32 %v1902, %v1962
        %v1984 = vmul.f32 %v1907, %v1962
        %v1985 = vmul.f32 %v1912, %v1962
        %v1986 = vmul.f32 %v1917, %v1962
        %v1987 = vmul.f32 %v1922, %v1962
        %v1988 = vmul.f32 %v1927, %v1962
        %v1989 = vmul.f32 %v1932, %v1962
        %v1990 = vmul.f32 %v1937, %v1962
        %v1991 = vmul.f32 %v1942, %v1962
        %v1992 = vmul.f32 %v1947, %v1962
        %v1993 = vmul.f32 %v1952, %v1962
        %v1994 = vmul.f32 %v1957, %v1962
        %v1996 = vlaneseq
        %v1997 = vshrl.u32 %v1996, 7
        %v1998 = vsub.s32 0, %v1997
        %v1999 = vrot.slane %v1798, %v1998
        %v2001 = vadd.f32 %v1999, %v1963
        %v2002 = vadd.f32 %v1999, %v1964
        %v2003 = vadd.f32 %v1999, %v1965
        %v2004 = vadd.f32 %v1999, %v1966
        %v2005 = vadd.f32 %v1999, %v1967
        %v2006 = vadd.f32 %v1999, %v1968
        %v2007 = vadd.f32 %v1999, %v1969
        %v2008 = vadd.f32 %v1999, %v1970
        %v2009 = vadd.f32 %v1999, %v1971
        %v2010 = vadd.f32 %v1999, %v1972
        %v2011 = vadd.f32 %v1999, %v1973
        %v2012 = vadd.f32 %v1999, %v1974
        %v2013 = vadd.f32 %v1999, %v1975
        %v2014 = vadd.f32 %v1999, %v1976
        %v2015 = vadd.f32 %v1999, %v1977
        %v2016 = vadd.f32 %v1999, %v1978
        %v2017 = vadd.f32 %v1999, %v1979
        %v2018 = vadd.f32 %v1999, %v1980
        %v2019 = vadd.f32 %v1999, %v1981
        %v2020 = vadd.f32 %v1999, %v1982
        %v2021 = vadd.f32 %v1999, %v1983
        %v2022 = vadd.f32 %v1999, %v1984
        %v2023 = vadd.f32 %v1999, %v1985
        %v2024 = vadd.f32 %v1999, %v1986
        %v2025 = vadd.f32 %v1999, %v1987
        %v2026 = vadd.f32 %v1999, %v1988
        %v2027 = vadd.f32 %v1999, %v1989
        %v2028 = vadd.f32 %v1999, %v1990
        %v2029 = vadd.f32 %v1999, %v1991
        %v2030 = vadd.f32 %v1999, %v1992
        %v2031 = vadd.f32 %v1999, %v1993
        %v2032 = vadd.f32 %v1999, %v1994
        %2034 = vset.pattern.permute.xlu0 0
        %2035 = vperm.xlu0 %2034, %v1732
        %v2036 = vpop.permute.xlu0 %2035
        %2039 = vset.pattern.permute.xlu0 0
        %2040 = vperm.xlu0 %2039, %v1733
        %v2041 = vpop.permute.xlu0 %2040
        %2044 = vset.pattern.permute.xlu0 0
        %2045 = vperm.xlu0 %2044, %v1734
        %v2046 = vpop.permute.xlu0 %2045
        %2049 = vset.pattern.permute.xlu0 0
        %2050 = vperm.xlu0 %2049, %v1735
        %v2051 = vpop.permute.xlu0 %2050
        %2054 = vset.pattern.permute.xlu0 0
        %2055 = vperm.xlu0 %2054, %v1736
        %v2056 = vpop.permute.xlu0 %2055
        %2059 = vset.pattern.permute.xlu0 0
        %2060 = vperm.xlu0 %2059, %v1737
        %v2061 = vpop.permute.xlu0 %2060
        %2064 = vset.pattern.permute.xlu0 0
        %2065 = vperm.xlu0 %2064, %v1738
        %v2066 = vpop.permute.xlu0 %2065
        %2069 = vset.pattern.permute.xlu0 0
        %2070 = vperm.xlu0 %2069, %v1739
        %v2071 = vpop.permute.xlu0 %2070
        %2074 = vset.pattern.permute.xlu0 0
        %2075 = vperm.xlu0 %2074, %v1740
        %v2076 = vpop.permute.xlu0 %2075
        %2079 = vset.pattern.permute.xlu0 0
        %2080 = vperm.xlu0 %2079, %v1741
        %v2081 = vpop.permute.xlu0 %2080
        %2084 = vset.pattern.permute.xlu0 0
        %2085 = vperm.xlu0 %2084, %v1742
        %v2086 = vpop.permute.xlu0 %2085
        %2089 = vset.pattern.permute.xlu0 0
        %2090 = vperm.xlu0 %2089, %v1743
        %v2091 = vpop.permute.xlu0 %2090
        %2094 = vset.pattern.permute.xlu0 0
        %2095 = vperm.xlu0 %2094, %v1744
        %v2096 = vpop.permute.xlu0 %2095
        %2099 = vset.pattern.permute.xlu0 0
        %2100 = vperm.xlu0 %2099, %v1745
        %v2101 = vpop.permute.xlu0 %2100
        %2104 = vset.pattern.permute.xlu0 0
        %2105 = vperm.xlu0 %2104, %v1746
        %v2106 = vpop.permute.xlu0 %2105
        %2109 = vset.pattern.permute.xlu0 0
        %2110 = vperm.xlu0 %2109, %v1747
        %v2111 = vpop.permute.xlu0 %2110
        %2114 = vset.pattern.permute.xlu0 0
        %2115 = vperm.xlu0 %2114, %v1748
        %v2116 = vpop.permute.xlu0 %2115
        %2119 = vset.pattern.permute.xlu0 0
        %2120 = vperm.xlu0 %2119, %v1749
        %v2121 = vpop.permute.xlu0 %2120
        %2124 = vset.pattern.permute.xlu0 0
        %2125 = vperm.xlu0 %2124, %v1750
        %v2126 = vpop.permute.xlu0 %2125
        %2129 = vset.pattern.permute.xlu0 0
        %2130 = vperm.xlu0 %2129, %v1751
        %v2131 = vpop.permute.xlu0 %2130
        %2134 = vset.pattern.permute.xlu0 0
        %2135 = vperm.xlu0 %2134, %v1752
        %v2136 = vpop.permute.xlu0 %2135
        %2139 = vset.pattern.permute.xlu0 0
        %2140 = vperm.xlu0 %2139, %v1753
        %v2141 = vpop.permute.xlu0 %2140
        %2144 = vset.pattern.permute.xlu0 0
        %2145 = vperm.xlu0 %2144, %v1754
        %v2146 = vpop.permute.xlu0 %2145
        %2149 = vset.pattern.permute.xlu0 0
        %2150 = vperm.xlu0 %2149, %v1755
        %v2151 = vpop.permute.xlu0 %2150
        %2154 = vset.pattern.permute.xlu0 0
        %2155 = vperm.xlu0 %2154, %v1756
        %v2156 = vpop.permute.xlu0 %2155
        %2159 = vset.pattern.permute.xlu0 0
        %2160 = vperm.xlu0 %2159, %v1757
        %v2161 = vpop.permute.xlu0 %2160
        %2164 = vset.pattern.permute.xlu0 0
        %2165 = vperm.xlu0 %2164, %v1758
        %v2166 = vpop.permute.xlu0 %2165
        %2169 = vset.pattern.permute.xlu0 0
        %2170 = vperm.xlu0 %2169, %v1759
        %v2171 = vpop.permute.xlu0 %2170
        %2174 = vset.pattern.permute.xlu0 0
        %2175 = vperm.xlu0 %2174, %v1760
        %v2176 = vpop.permute.xlu0 %2175
        %2179 = vset.pattern.permute.xlu0 0
        %2180 = vperm.xlu0 %2179, %v1761
        %v2181 = vpop.permute.xlu0 %2180
        %2184 = vset.pattern.permute.xlu0 0
        %2185 = vperm.xlu0 %2184, %v1762
        %v2186 = vpop.permute.xlu0 %2185
        %2189 = vset.pattern.permute.xlu0 0
        %2190 = vperm.xlu0 %2189, %v1763
        %v2191 = vpop.permute.xlu0 %2190
        %v2193 = vlaneseq
        %v2194 = vshrl.u32 %v2193, 7
        %v2195 = vsub.s32 0, %v2194
        %v2196 = vrot.slane %v1797, %v2195
        %v2197 = vmul.f32 %v2036, %v2196
        %v2198 = vmul.f32 %v2041, %v2196
        %v2199 = vmul.f32 %v2046, %v2196
        %v2200 = vmul.f32 %v2051, %v2196
        %v2201 = vmul.f32 %v2056, %v2196
        %v2202 = vmul.f32 %v2061, %v2196
        %v2203 = vmul.f32 %v2066, %v2196
        %v2204 = vmul.f32 %v2071, %v2196
        %v2205 = vmul.f32 %v2076, %v2196
        %v2206 = vmul.f32 %v2081, %v2196
        %v2207 = vmul.f32 %v2086, %v2196
        %v2208 = vmul.f32 %v2091, %v2196
        %v2209 = vmul.f32 %v2096, %v2196
        %v2210 = vmul.f32 %v2101, %v2196
        %v2211 = vmul.f32 %v2106, %v2196
        %v2212 = vmul.f32 %v2111, %v2196
        %v2213 = vmul.f32 %v2116, %v2196
        %v2214 = vmul.f32 %v2121, %v2196
        %v2215 = vmul.f32 %v2126, %v2196
        %v2216 = vmul.f32 %v2131, %v2196
        %v2217 = vmul.f32 %v2136, %v2196
        %v2218 = vmul.f32 %v2141, %v2196
        %v2219 = vmul.f32 %v2146, %v2196
        %v2220 = vmul.f32 %v2151, %v2196
        %v2221 = vmul.f32 %v2156, %v2196
        %v2222 = vmul.f32 %v2161, %v2196
        %v2223 = vmul.f32 %v2166, %v2196
        %v2224 = vmul.f32 %v2171, %v2196
        %v2225 = vmul.f32 %v2176, %v2196
        %v2226 = vmul.f32 %v2181, %v2196
        %v2227 = vmul.f32 %v2186, %v2196
        %v2228 = vmul.f32 %v2191, %v2196
        %v2229 = vadd.f32 %v2001, %v2197
        %v2230 = vadd.f32 %v2002, %v2198
        %v2231 = vadd.f32 %v2003, %v2199
        %v2232 = vadd.f32 %v2004, %v2200
        %v2233 = vadd.f32 %v2005, %v2201
        %v2234 = vadd.f32 %v2006, %v2202
        %v2235 = vadd.f32 %v2007, %v2203
        %v2236 = vadd.f32 %v2008, %v2204
        %v2237 = vadd.f32 %v2009, %v2205
        %v2238 = vadd.f32 %v2010, %v2206
        %v2239 = vadd.f32 %v2011, %v2207
        %v2240 = vadd.f32 %v2012, %v2208
        %v2241 = vadd.f32 %v2013, %v2209
        %v2242 = vadd.f32 %v2014, %v2210
        %v2243 = vadd.f32 %v2015, %v2211
        %v2244 = vadd.f32 %v2016, %v2212
        %v2245 = vadd.f32 %v2017, %v2213
        %v2246 = vadd.f32 %v2018, %v2214
        %v2247 = vadd.f32 %v2019, %v2215
        %v2248 = vadd.f32 %v2020, %v2216
        %v2249 = vadd.f32 %v2021, %v2217
        %v2250 = vadd.f32 %v2022, %v2218
        %v2251 = vadd.f32 %v2023, %v2219
        %v2252 = vadd.f32 %v2024, %v2220
        %v2253 = vadd.f32 %v2025, %v2221
        %v2254 = vadd.f32 %v2026, %v2222
        %v2255 = vadd.f32 %v2027, %v2223
        %v2256 = vadd.f32 %v2028, %v2224
        %v2257 = vadd.f32 %v2029, %v2225
        %v2258 = vadd.f32 %v2030, %v2226
        %v2259 = vadd.f32 %v2031, %v2227
        %v2260 = vadd.f32 %v2032, %v2228
        %2261 = vset.pattern.permute.xlu0 1
        %2262 = vperm.xlu0 %2261, %v1764
        %v2263 = vpop.permute.xlu0 %2262
        %2265 = vset.pattern.permute.xlu0 1
        %2266 = vperm.xlu0 %2265, %v1765
        %v2267 = vpop.permute.xlu0 %2266
        %2269 = vset.pattern.permute.xlu0 1
        %2270 = vperm.xlu0 %2269, %v1766
        %v2271 = vpop.permute.xlu0 %2270
        %2273 = vset.pattern.permute.xlu0 1
        %2274 = vperm.xlu0 %2273, %v1767
        %v2275 = vpop.permute.xlu0 %2274
        %2277 = vset.pattern.permute.xlu0 1
        %2278 = vperm.xlu0 %2277, %v1768
        %v2279 = vpop.permute.xlu0 %2278
        %2281 = vset.pattern.permute.xlu0 1
        %2282 = vperm.xlu0 %2281, %v1769
        %v2283 = vpop.permute.xlu0 %2282
        %2285 = vset.pattern.permute.xlu0 1
        %2286 = vperm.xlu0 %2285, %v1770
        %v2287 = vpop.permute.xlu0 %2286
        %2289 = vset.pattern.permute.xlu0 1
        %2290 = vperm.xlu0 %2289, %v1771
        %v2291 = vpop.permute.xlu0 %2290
        %2293 = vset.pattern.permute.xlu0 1
        %2294 = vperm.xlu0 %2293, %v1772
        %v2295 = vpop.permute.xlu0 %2294
        %2297 = vset.pattern.permute.xlu0 1
        %2298 = vperm.xlu0 %2297, %v1773
        %v2299 = vpop.permute.xlu0 %2298
        %2301 = vset.pattern.permute.xlu0 1
        %2302 = vperm.xlu0 %2301, %v1774
        %v2303 = vpop.permute.xlu0 %2302
        %2305 = vset.pattern.permute.xlu0 1
        %2306 = vperm.xlu0 %2305, %v1775
        %v2307 = vpop.permute.xlu0 %2306
        %2309 = vset.pattern.permute.xlu0 1
        %2310 = vperm.xlu0 %2309, %v1776
        %v2311 = vpop.permute.xlu0 %2310
        %2313 = vset.pattern.permute.xlu0 1
        %2314 = vperm.xlu0 %2313, %v1777
        %v2315 = vpop.permute.xlu0 %2314
        %2317 = vset.pattern.permute.xlu0 1
        %2318 = vperm.xlu0 %2317, %v1778
        %v2319 = vpop.permute.xlu0 %2318
        %2321 = vset.pattern.permute.xlu0 1
        %2322 = vperm.xlu0 %2321, %v1779
        %v2323 = vpop.permute.xlu0 %2322
        %2325 = vset.pattern.permute.xlu0 1
        %2326 = vperm.xlu0 %2325, %v1780
        %v2327 = vpop.permute.xlu0 %2326
        %2329 = vset.pattern.permute.xlu0 1
        %2330 = vperm.xlu0 %2329, %v1781
        %v2331 = vpop.permute.xlu0 %2330
        %2333 = vset.pattern.permute.xlu0 1
        %2334 = vperm.xlu0 %2333, %v1782
        %v2335 = vpop.permute.xlu0 %2334
        %2337 = vset.pattern.permute.xlu0 1
        %2338 = vperm.xlu0 %2337, %v1783
        %v2339 = vpop.permute.xlu0 %2338
        %2341 = vset.pattern.permute.xlu0 1
        %2342 = vperm.xlu0 %2341, %v1784
        %v2343 = vpop.permute.xlu0 %2342
        %2345 = vset.pattern.permute.xlu0 1
        %2346 = vperm.xlu0 %2345, %v1785
        %v2347 = vpop.permute.xlu0 %2346
        %2349 = vset.pattern.permute.xlu0 1
        %2350 = vperm.xlu0 %2349, %v1786
        %v2351 = vpop.permute.xlu0 %2350
        %2353 = vset.pattern.permute.xlu0 1
        %2354 = vperm.xlu0 %2353, %v1787
        %v2355 = vpop.permute.xlu0 %2354
        %2357 = vset.pattern.permute.xlu0 1
        %2358 = vperm.xlu0 %2357, %v1788
        %v2359 = vpop.permute.xlu0 %2358
        %2361 = vset.pattern.permute.xlu0 1
        %2362 = vperm.xlu0 %2361, %v1789
        %v2363 = vpop.permute.xlu0 %2362
        %2365 = vset.pattern.permute.xlu0 1
        %2366 = vperm.xlu0 %2365, %v1790
        %v2367 = vpop.permute.xlu0 %2366
        %2369 = vset.pattern.permute.xlu0 1
        %2370 = vperm.xlu0 %2369, %v1791
        %v2371 = vpop.permute.xlu0 %2370
        %2373 = vset.pattern.permute.xlu0 1
        %2374 = vperm.xlu0 %2373, %v1792
        %v2375 = vpop.permute.xlu0 %2374
        %2377 = vset.pattern.permute.xlu0 1
        %2378 = vperm.xlu0 %2377, %v1793
        %v2379 = vpop.permute.xlu0 %2378
        %2381 = vset.pattern.permute.xlu0 1
        %2382 = vperm.xlu0 %2381, %v1794
        %v2383 = vpop.permute.xlu0 %2382
        %2385 = vset.pattern.permute.xlu0 1
        %2386 = vperm.xlu0 %2385, %v1795
        %v2387 = vpop.permute.xlu0 %2386
        %v2389 = vlaneseq
        %v2390 = vshrl.u32 %v2389, 7
        %v2391 = vsub.s32 1, %v2390
        %v2392 = vrot.slane %v1796, %v2391
        %v2393 = vmul.f32 %v2263, %v2392
        %v2394 = vmul.f32 %v2267, %v2392
        %v2395 = vmul.f32 %v2271, %v2392
        %v2396 = vmul.f32 %v2275, %v2392
        %v2397 = vmul.f32 %v2279, %v2392
        %v2398 = vmul.f32 %v2283, %v2392
        %v2399 = vmul.f32 %v2287, %v2392
        %v2400 = vmul.f32 %v2291, %v2392
        %v2401 = vmul.f32 %v2295, %v2392
        %v2402 = vmul.f32 %v2299, %v2392
        %v2403 = vmul.f32 %v2303, %v2392
        %v2404 = vmul.f32 %v2307, %v2392
        %v2405 = vmul.f32 %v2311, %v2392
        %v2406 = vmul.f32 %v2315, %v2392
        %v2407 = vmul.f32 %v2319, %v2392
        %v2408 = vmul.f32 %v2323, %v2392
        %v2409 = vmul.f32 %v2327, %v2392
        %v2410 = vmul.f32 %v2331, %v2392
        %v2411 = vmul.f32 %v2335, %v2392
        %v2412 = vmul.f32 %v2339, %v2392
        %v2413 = vmul.f32 %v2343, %v2392
        %v2414 = vmul.f32 %v2347, %v2392
        %v2415 = vmul.f32 %v2351, %v2392
        %v2416 = vmul.f32 %v2355, %v2392
        %v2417 = vmul.f32 %v2359, %v2392
        %v2418 = vmul.f32 %v2363, %v2392
        %v2419 = vmul.f32 %v2367, %v2392
        %v2420 = vmul.f32 %v2371, %v2392
        %v2421 = vmul.f32 %v2375, %v2392
        %v2422 = vmul.f32 %v2379, %v2392
        %v2423 = vmul.f32 %v2383, %v2392
        %v2424 = vmul.f32 %v2387, %v2392
        %v2425 = vadd.f32 %v2229, %v2393
        %v2426 = vadd.f32 %v2230, %v2394
        %v2427 = vadd.f32 %v2231, %v2395
        %v2428 = vadd.f32 %v2232, %v2396
        %v2429 = vadd.f32 %v2233, %v2397
        %v2430 = vadd.f32 %v2234, %v2398
        %v2431 = vadd.f32 %v2235, %v2399
        %v2432 = vadd.f32 %v2236, %v2400
        %v2433 = vadd.f32 %v2237, %v2401
        %v2434 = vadd.f32 %v2238, %v2402
        %v2435 = vadd.f32 %v2239, %v2403
        %v2436 = vadd.f32 %v2240, %v2404
        %v2437 = vadd.f32 %v2241, %v2405
        %v2438 = vadd.f32 %v2242, %v2406
        %v2439 = vadd.f32 %v2243, %v2407
        %v2440 = vadd.f32 %v2244, %v2408
        %v2441 = vadd.f32 %v2245, %v2409
        %v2442 = vadd.f32 %v2246, %v2410
        %v2443 = vadd.f32 %v2247, %v2411
        %v2444 = vadd.f32 %v2248, %v2412
        %v2445 = vadd.f32 %v2249, %v2413
        %v2446 = vadd.f32 %v2250, %v2414
        %v2447 = vadd.f32 %v2251, %v2415
        %v2448 = vadd.f32 %v2252, %v2416
        %v2449 = vadd.f32 %v2253, %v2417
        %v2450 = vadd.f32 %v2254, %v2418
        %v2451 = vadd.f32 %v2255, %v2419
        %v2452 = vadd.f32 %v2256, %v2420
        %v2453 = vadd.f32 %v2257, %v2421
        %v2454 = vadd.f32 %v2258, %v2422
        %v2455 = vadd.f32 %v2259, %v2423
        %v2456 = vadd.f32 %v2260, %v2424
        %2457 = vset.pattern.permute.xlu0 1
        %2458 = vperm.xlu0 %2457, %v1732
        %v2459 = vpop.permute.xlu0 %2458
        %2461 = vset.pattern.permute.xlu0 1
        %2462 = vperm.xlu0 %2461, %v1733
        %v2463 = vpop.permute.xlu0 %2462
        %2465 = vset.pattern.permute.xlu0 1
        %2466 = vperm.xlu0 %2465, %v1734
        %v2467 = vpop.permute.xlu0 %2466
        %2469 = vset.pattern.permute.xlu0 1
        %2470 = vperm.xlu0 %2469, %v1735
        %v2471 = vpop.permute.xlu0 %2470
        %2473 = vset.pattern.permute.xlu0 1
        %2474 = vperm.xlu0 %2473, %v1736
        %v2475 = vpop.permute.xlu0 %2474
        %2477 = vset.pattern.permute.xlu0 1
        %2478 = vperm.xlu0 %2477, %v1737
        %v2479 = vpop.permute.xlu0 %2478
        %2481 = vset.pattern.permute.xlu0 1
        %2482 = vperm.xlu0 %2481, %v1738
        %v2483 = vpop.permute.xlu0 %2482
        %2485 = vset.pattern.permute.xlu0 1
        %2486 = vperm.xlu0 %2485, %v1739
        %v2487 = vpop.permute.xlu0 %2486
        %2489 = vset.pattern.permute.xlu0 1
        %2490 = vperm.xlu0 %2489, %v1740
        %v2491 = vpop.permute.xlu0 %2490
        %2493 = vset.pattern.permute.xlu0 1
        %2494 = vperm.xlu0 %2493, %v1741
        %v2495 = vpop.permute.xlu0 %2494
        %2497 = vset.pattern.permute.xlu0 1
        %2498 = vperm.xlu0 %2497, %v1742
        %v2499 = vpop.permute.xlu0 %2498
        %2501 = vset.pattern.permute.xlu0 1
        %2502 = vperm.xlu0 %2501, %v1743
        %v2503 = vpop.permute.xlu0 %2502
        %2505 = vset.pattern.permute.xlu0 1
        %2506 = vperm.xlu0 %2505, %v1744
        %v2507 = vpop.permute.xlu0 %2506
        %2509 = vset.pattern.permute.xlu0 1
        %2510 = vperm.xlu0 %2509, %v1745
        %v2511 = vpop.permute.xlu0 %2510
        %2513 = vset.pattern.permute.xlu0 1
        %2514 = vperm.xlu0 %2513, %v1746
        %v2515 = vpop.permute.xlu0 %2514
        %2517 = vset.pattern.permute.xlu0 1
        %2518 = vperm.xlu0 %2517, %v1747
        %v2519 = vpop.permute.xlu0 %2518
        %2521 = vset.pattern.permute.xlu0 1
        %2522 = vperm.xlu0 %2521, %v1748
        %v2523 = vpop.permute.xlu0 %2522
        %2525 = vset.pattern.permute.xlu0 1
        %2526 = vperm.xlu0 %2525, %v1749
        %v2527 = vpop.permute.xlu0 %2526
        %2529 = vset.pattern.permute.xlu0 1
        %2530 = vperm.xlu0 %2529, %v1750
        %v2531 = vpop.permute.xlu0 %2530
        %2533 = vset.pattern.permute.xlu0 1
        %2534 = vperm.xlu0 %2533, %v1751
        %v2535 = vpop.permute.xlu0 %2534
        %2537 = vset.pattern.permute.xlu0 1
        %2538 = vperm.xlu0 %2537, %v1752
        %v2539 = vpop.permute.xlu0 %2538
        %2541 = vset.pattern.permute.xlu0 1
        %2542 = vperm.xlu0 %2541, %v1753
        %v2543 = vpop.permute.xlu0 %2542
        %2545 = vset.pattern.permute.xlu0 1
        %2546 = vperm.xlu0 %2545, %v1754
        %v2547 = vpop.permute.xlu0 %2546
        %2549 = vset.pattern.permute.xlu0 1
        %2550 = vperm.xlu0 %2549, %v1755
        %v2551 = vpop.permute.xlu0 %2550
        %2553 = vset.pattern.permute.xlu0 1
        %2554 = vperm.xlu0 %2553, %v1756
        %v2555 = vpop.permute.xlu0 %2554
        %2557 = vset.pattern.permute.xlu0 1
        %2558 = vperm.xlu0 %2557, %v1757
        %v2559 = vpop.permute.xlu0 %2558
        %2561 = vset.pattern.permute.xlu0 1
        %2562 = vperm.xlu0 %2561, %v1758
        %v2563 = vpop.permute.xlu0 %2562
        %2565 = vset.pattern.permute.xlu0 1
        %2566 = vperm.xlu0 %2565, %v1759
        %v2567 = vpop.permute.xlu0 %2566
        %2569 = vset.pattern.permute.xlu0 1
        %2570 = vperm.xlu0 %2569, %v1760
        %v2571 = vpop.permute.xlu0 %2570
        %2573 = vset.pattern.permute.xlu0 1
        %2574 = vperm.xlu0 %2573, %v1761
        %v2575 = vpop.permute.xlu0 %2574
        %2577 = vset.pattern.permute.xlu0 1
        %2578 = vperm.xlu0 %2577, %v1762
        %v2579 = vpop.permute.xlu0 %2578
        %2581 = vset.pattern.permute.xlu0 1
        %2582 = vperm.xlu0 %2581, %v1763
        %v2583 = vpop.permute.xlu0 %2582
        %v2585 = vlaneseq
        %v2586 = vshrl.u32 %v2585, 7
        %v2587 = vsub.s32 1, %v2586
        %v2588 = vrot.slane %v1797, %v2587
        %v2589 = vmul.f32 %v2459, %v2588
        %v2590 = vmul.f32 %v2463, %v2588
        %v2591 = vmul.f32 %v2467, %v2588
        %v2592 = vmul.f32 %v2471, %v2588
        %v2593 = vmul.f32 %v2475, %v2588
        %v2594 = vmul.f32 %v2479, %v2588
        %v2595 = vmul.f32 %v2483, %v2588
        %v2596 = vmul.f32 %v2487, %v2588
        %v2597 = vmul.f32 %v2491, %v2588
        %v2598 = vmul.f32 %v2495, %v2588
        %v2599 = vmul.f32 %v2499, %v2588
        %v2600 = vmul.f32 %v2503, %v2588
        %v2601 = vmul.f32 %v2507, %v2588
        %v2602 = vmul.f32 %v2511, %v2588
        %v2603 = vmul.f32 %v2515, %v2588
        %v2604 = vmul.f32 %v2519, %v2588
        %v2605 = vmul.f32 %v2523, %v2588
        %v2606 = vmul.f32 %v2527, %v2588
        %v2607 = vmul.f32 %v2531, %v2588
        %v2608 = vmul.f32 %v2535, %v2588
        %v2609 = vmul.f32 %v2539, %v2588
        %v2610 = vmul.f32 %v2543, %v2588
        %v2611 = vmul.f32 %v2547, %v2588
        %v2612 = vmul.f32 %v2551, %v2588
        %v2613 = vmul.f32 %v2555, %v2588
        %v2614 = vmul.f32 %v2559, %v2588
        %v2615 = vmul.f32 %v2563, %v2588
        %v2616 = vmul.f32 %v2567, %v2588
        %v2617 = vmul.f32 %v2571, %v2588
        %v2618 = vmul.f32 %v2575, %v2588
        %v2619 = vmul.f32 %v2579, %v2588
        %v2620 = vmul.f32 %v2583, %v2588
        %v2621 = vadd.f32 %v2425, %v2589
        %v2622 = vadd.f32 %v2426, %v2590
        %v2623 = vadd.f32 %v2427, %v2591
        %v2624 = vadd.f32 %v2428, %v2592
        %v2625 = vadd.f32 %v2429, %v2593
        %v2626 = vadd.f32 %v2430, %v2594
        %v2627 = vadd.f32 %v2431, %v2595
        %v2628 = vadd.f32 %v2432, %v2596
        %v2629 = vadd.f32 %v2433, %v2597
        %v2630 = vadd.f32 %v2434, %v2598
        %v2631 = vadd.f32 %v2435, %v2599
        %v2632 = vadd.f32 %v2436, %v2600
        %v2633 = vadd.f32 %v2437, %v2601
        %v2634 = vadd.f32 %v2438, %v2602
        %v2635 = vadd.f32 %v2439, %v2603
        %v2636 = vadd.f32 %v2440, %v2604
        %v2637 = vadd.f32 %v2441, %v2605
        %v2638 = vadd.f32 %v2442, %v2606
        %v2639 = vadd.f32 %v2443, %v2607
        %v2640 = vadd.f32 %v2444, %v2608
        %v2641 = vadd.f32 %v2445, %v2609
        %v2642 = vadd.f32 %v2446, %v2610
        %v2643 = vadd.f32 %v2447, %v2611
        %v2644 = vadd.f32 %v2448, %v2612
        %v2645 = vadd.f32 %v2449, %v2613
        %v2646 = vadd.f32 %v2450, %v2614
        %v2647 = vadd.f32 %v2451, %v2615
        %v2648 = vadd.f32 %v2452, %v2616
        %v2649 = vadd.f32 %v2453, %v2617
        %v2650 = vadd.f32 %v2454, %v2618
        %v2651 = vadd.f32 %v2455, %v2619
        %v2652 = vadd.f32 %v2456, %v2620
        %2653 = vset.pattern.permute.xlu0 2
        %2654 = vperm.xlu0 %2653, %v1764
        %v2655 = vpop.permute.xlu0 %2654
        %2657 = vset.pattern.permute.xlu0 2
        %2658 = vperm.xlu0 %2657, %v1765
        %v2659 = vpop.permute.xlu0 %2658
        %2661 = vset.pattern.permute.xlu0 2
        %2662 = vperm.xlu0 %2661, %v1766
        %v2663 = vpop.permute.xlu0 %2662
        %2665 = vset.pattern.permute.xlu0 2
        %2666 = vperm.xlu0 %2665, %v1767
        %v2667 = vpop.permute.xlu0 %2666
        %2669 = vset.pattern.permute.xlu0 2
        %2670 = vperm.xlu0 %2669, %v1768
        %v2671 = vpop.permute.xlu0 %2670
        %2673 = vset.pattern.permute.xlu0 2
        %2674 = vperm.xlu0 %2673, %v1769
        %v2675 = vpop.permute.xlu0 %2674
        %2677 = vset.pattern.permute.xlu0 2
        %2678 = vperm.xlu0 %2677, %v1770
        %v2679 = vpop.permute.xlu0 %2678
        %2681 = vset.pattern.permute.xlu0 2
        %2682 = vperm.xlu0 %2681, %v1771
        %v2683 = vpop.permute.xlu0 %2682
        %2685 = vset.pattern.permute.xlu0 2
        %2686 = vperm.xlu0 %2685, %v1772
        %v2687 = vpop.permute.xlu0 %2686
        %2689 = vset.pattern.permute.xlu0 2
        %2690 = vperm.xlu0 %2689, %v1773
        %v2691 = vpop.permute.xlu0 %2690
        %2693 = vset.pattern.permute.xlu0 2
        %2694 = vperm.xlu0 %2693, %v1774
        %v2695 = vpop.permute.xlu0 %2694
        %2697 = vset.pattern.permute.xlu0 2
        %2698 = vperm.xlu0 %2697, %v1775
        %v2699 = vpop.permute.xlu0 %2698
        %2701 = vset.pattern.permute.xlu0 2
        %2702 = vperm.xlu0 %2701, %v1776
        %v2703 = vpop.permute.xlu0 %2702
        %2705 = vset.pattern.permute.xlu0 2
        %2706 = vperm.xlu0 %2705, %v1777
        %v2707 = vpop.permute.xlu0 %2706
        %2709 = vset.pattern.permute.xlu0 2
        %2710 = vperm.xlu0 %2709, %v1778
        %v2711 = vpop.permute.xlu0 %2710
        %2713 = vset.pattern.permute.xlu0 2
        %2714 = vperm.xlu0 %2713, %v1779
        %v2715 = vpop.permute.xlu0 %2714
        %2717 = vset.pattern.permute.xlu0 2
        %2718 = vperm.xlu0 %2717, %v1780
        %v2719 = vpop.permute.xlu0 %2718
        %2721 = vset.pattern.permute.xlu0 2
        %2722 = vperm.xlu0 %2721, %v1781
        %v2723 = vpop.permute.xlu0 %2722
        %2725 = vset.pattern.permute.xlu0 2
        %2726 = vperm.xlu0 %2725, %v1782
        %v2727 = vpop.permute.xlu0 %2726
        %2729 = vset.pattern.permute.xlu0 2
        %2730 = vperm.xlu0 %2729, %v1783
        %v2731 = vpop.permute.xlu0 %2730
        %2733 = vset.pattern.permute.xlu0 2
        %2734 = vperm.xlu0 %2733, %v1784
        %v2735 = vpop.permute.xlu0 %2734
        %2737 = vset.pattern.permute.xlu0 2
        %2738 = vperm.xlu0 %2737, %v1785
        %v2739 = vpop.permute.xlu0 %2738
        %2741 = vset.pattern.permute.xlu0 2
        %2742 = vperm.xlu0 %2741, %v1786
        %v2743 = vpop.permute.xlu0 %2742
        %2745 = vset.pattern.permute.xlu0 2
        %2746 = vperm.xlu0 %2745, %v1787
        %v2747 = vpop.permute.xlu0 %2746
        %2749 = vset.pattern.permute.xlu0 2
        %2750 = vperm.xlu0 %2749, %v1788
        %v2751 = vpop.permute.xlu0 %2750
        %2753 = vset.pattern.permute.xlu0 2
        %2754 = vperm.xlu0 %2753, %v1789
        %v2755 = vpop.permute.xlu0 %2754
        %2757 = vset.pattern.permute.xlu0 2
        %2758 = vperm.xlu0 %2757, %v1790
        %v2759 = vpop.permute.xlu0 %2758
        %2761 = vset.pattern.permute.xlu0 2
        %2762 = vperm.xlu0 %2761, %v1791
        %v2763 = vpop.permute.xlu0 %2762
        %2765 = vset.pattern.permute.xlu0 2
        %2766 = vperm.xlu0 %2765, %v1792
        %v2767 = vpop.permute.xlu0 %2766
        %2769 = vset.pattern.permute.xlu0 2
        %2770 = vperm.xlu0 %2769, %v1793
        %v2771 = vpop.permute.xlu0 %2770
        %2773 = vset.pattern.permute.xlu0 2
        %2774 = vperm.xlu0 %2773, %v1794
        %v2775 = vpop.permute.xlu0 %2774
        %2777 = vset.pattern.permute.xlu0 2
        %2778 = vperm.xlu0 %2777, %v1795
        %v2779 = vpop.permute.xlu0 %2778
        %v2781 = vlaneseq
        %v2782 = vshrl.u32 %v2781, 7
        %v2783 = vsub.s32 2, %v2782
        %v2784 = vrot.slane %v1796, %v2783
        %v2785 = vmul.f32 %v2655, %v2784
        %v2786 = vmul.f32 %v2659, %v2784
        %v2787 = vmul.f32 %v2663, %v2784
        %v2788 = vmul.f32 %v2667, %v2784
        %v2789 = vmul.f32 %v2671, %v2784
        %v2790 = vmul.f32 %v2675, %v2784
        %v2791 = vmul.f32 %v2679, %v2784
        %v2792 = vmul.f32 %v2683, %v2784
        %v2793 = vmul.f32 %v2687, %v2784
        %v2794 = vmul.f32 %v2691, %v2784
        %v2795 = vmul.f32 %v2695, %v2784
        %v2796 = vmul.f32 %v2699, %v2784
        %v2797 = vmul.f32 %v2703, %v2784
        %v2798 = vmul.f32 %v2707, %v2784
        %v2799 = vmul.f32 %v2711, %v2784
        %v2800 = vmul.f32 %v2715, %v2784
        %v2801 = vmul.f32 %v2719, %v2784
        %v2802 = vmul.f32 %v2723, %v2784
        %v2803 = vmul.f32 %v2727, %v2784
        %v2804 = vmul.f32 %v2731, %v2784
        %v2805 = vmul.f32 %v2735, %v2784
        %v2806 = vmul.f32 %v2739, %v2784
        %v2807 = vmul.f32 %v2743, %v2784
        %v2808 = vmul.f32 %v2747, %v2784
        %v2809 = vmul.f32 %v2751, %v2784
        %v2810 = vmul.f32 %v2755, %v2784
        %v2811 = vmul.f32 %v2759, %v2784
        %v2812 = vmul.f32 %v2763, %v2784
        %v2813 = vmul.f32 %v2767, %v2784
        %v2814 = vmul.f32 %v2771, %v2784
        %v2815 = vmul.f32 %v2775, %v2784
        %v2816 = vmul.f32 %v2779, %v2784
        %v2817 = vadd.f32 %v2621, %v2785
        %v2818 = vadd.f32 %v2622, %v2786
        %v2819 = vadd.f32 %v2623, %v2787
        %v2820 = vadd.f32 %v2624, %v2788
        %v2821 = vadd.f32 %v2625, %v2789
        %v2822 = vadd.f32 %v2626, %v2790
        %v2823 = vadd.f32 %v2627, %v2791
        %v2824 = vadd.f32 %v2628, %v2792
        %v2825 = vadd.f32 %v2629, %v2793
        %v2826 = vadd.f32 %v2630, %v2794
        %v2827 = vadd.f32 %v2631, %v2795
        %v2828 = vadd.f32 %v2632, %v2796
        %v2829 = vadd.f32 %v2633, %v2797
        %v2830 = vadd.f32 %v2634, %v2798
        %v2831 = vadd.f32 %v2635, %v2799
        %v2832 = vadd.f32 %v2636, %v2800
        %v2833 = vadd.f32 %v2637, %v2801
        %v2834 = vadd.f32 %v2638, %v2802
        %v2835 = vadd.f32 %v2639, %v2803
        %v2836 = vadd.f32 %v2640, %v2804
        %v2837 = vadd.f32 %v2641, %v2805
        %v2838 = vadd.f32 %v2642, %v2806
        %v2839 = vadd.f32 %v2643, %v2807
        %v2840 = vadd.f32 %v2644, %v2808
        %v2841 = vadd.f32 %v2645, %v2809
        %v2842 = vadd.f32 %v2646, %v2810
        %v2843 = vadd.f32 %v2647, %v2811
        %v2844 = vadd.f32 %v2648, %v2812
        %v2845 = vadd.f32 %v2649, %v2813
        %v2846 = vadd.f32 %v2650, %v2814
        %v2847 = vadd.f32 %v2651, %v2815
        %v2848 = vadd.f32 %v2652, %v2816
        %2849 = vset.pattern.permute.xlu0 2
        %2850 = vperm.xlu0 %2849, %v1732
        %v2851 = vpop.permute.xlu0 %2850
        %2853 = vset.pattern.permute.xlu0 2
        %2854 = vperm.xlu0 %2853, %v1733
        %v2855 = vpop.permute.xlu0 %2854
        %2857 = vset.pattern.permute.xlu0 2
        %2858 = vperm.xlu0 %2857, %v1734
        %v2859 = vpop.permute.xlu0 %2858
        %2861 = vset.pattern.permute.xlu0 2
        %2862 = vperm.xlu0 %2861, %v1735
        %v2863 = vpop.permute.xlu0 %2862
        %2865 = vset.pattern.permute.xlu0 2
        %2866 = vperm.xlu0 %2865, %v1736
        %v2867 = vpop.permute.xlu0 %2866
        %2869 = vset.pattern.permute.xlu0 2
        %2870 = vperm.xlu0 %2869, %v1737
        %v2871 = vpop.permute.xlu0 %2870
        %2873 = vset.pattern.permute.xlu0 2
        %2874 = vperm.xlu0 %2873, %v1738
        %v2875 = vpop.permute.xlu0 %2874
        %2877 = vset.pattern.permute.xlu0 2
        %2878 = vperm.xlu0 %2877, %v1739
        %v2879 = vpop.permute.xlu0 %2878
        %2881 = vset.pattern.permute.xlu0 2
        %2882 = vperm.xlu0 %2881, %v1740
        %v2883 = vpop.permute.xlu0 %2882
        %2885 = vset.pattern.permute.xlu0 2
        %2886 = vperm.xlu0 %2885, %v1741
        %v2887 = vpop.permute.xlu0 %2886
        %2889 = vset.pattern.permute.xlu0 2
        %2890 = vperm.xlu0 %2889, %v1742
        %v2891 = vpop.permute.xlu0 %2890
        %2893 = vset.pattern.permute.xlu0 2
        %2894 = vperm.xlu0 %2893, %v1743
        %v2895 = vpop.permute.xlu0 %2894
        %2897 = vset.pattern.permute.xlu0 2
        %2898 = vperm.xlu0 %2897, %v1744
        %v2899 = vpop.permute.xlu0 %2898
        %2901 = vset.pattern.permute.xlu0 2
        %2902 = vperm.xlu0 %2901, %v1745
        %v2903 = vpop.permute.xlu0 %2902
        %2905 = vset.pattern.permute.xlu0 2
        %2906 = vperm.xlu0 %2905, %v1746
        %v2907 = vpop.permute.xlu0 %2906
        %2909 = vset.pattern.permute.xlu0 2
        %2910 = vperm.xlu0 %2909, %v1747
        %v2911 = vpop.permute.xlu0 %2910
        %2913 = vset.pattern.permute.xlu0 2
        %2914 = vperm.xlu0 %2913, %v1748
        %v2915 = vpop.permute.xlu0 %2914
        %2917 = vset.pattern.permute.xlu0 2
        %2918 = vperm.xlu0 %2917, %v1749
        %v2919 = vpop.permute.xlu0 %2918
        %2921 = vset.pattern.permute.xlu0 2
        %2922 = vperm.xlu0 %2921, %v1750
        %v2923 = vpop.permute.xlu0 %2922
        %2925 = vset.pattern.permute.xlu0 2
        %2926 = vperm.xlu0 %2925, %v1751
        %v2927 = vpop.permute.xlu0 %2926
        %2929 = vset.pattern.permute.xlu0 2
        %2930 = vperm.xlu0 %2929, %v1752
        %v2931 = vpop.permute.xlu0 %2930
        %2933 = vset.pattern.permute.xlu0 2
        %2934 = vperm.xlu0 %2933, %v1753
        %v2935 = vpop.permute.xlu0 %2934
        %2937 = vset.pattern.permute.xlu0 2
        %2938 = vperm.xlu0 %2937, %v1754
        %v2939 = vpop.permute.xlu0 %2938
        %2941 = vset.pattern.permute.xlu0 2
        %2942 = vperm.xlu0 %2941, %v1755
        %v2943 = vpop.permute.xlu0 %2942
        %2945 = vset.pattern.permute.xlu0 2
        %2946 = vperm.xlu0 %2945, %v1756
        %v2947 = vpop.permute.xlu0 %2946
        %2949 = vset.pattern.permute.xlu0 2
        %2950 = vperm.xlu0 %2949, %v1757
        %v2951 = vpop.permute.xlu0 %2950
        %2953 = vset.pattern.permute.xlu0 2
        %2954 = vperm.xlu0 %2953, %v1758
        %v2955 = vpop.permute.xlu0 %2954
        %2957 = vset.pattern.permute.xlu0 2
        %2958 = vperm.xlu0 %2957, %v1759
        %v2959 = vpop.permute.xlu0 %2958
        %2961 = vset.pattern.permute.xlu0 2
        %2962 = vperm.xlu0 %2961, %v1760
        %v2963 = vpop.permute.xlu0 %2962
        %2965 = vset.pattern.permute.xlu0 2
        %2966 = vperm.xlu0 %2965, %v1761
        %v2967 = vpop.permute.xlu0 %2966
        %2969 = vset.pattern.permute.xlu0 2
        %2970 = vperm.xlu0 %2969, %v1762
        %v2971 = vpop.permute.xlu0 %2970
        %2973 = vset.pattern.permute.xlu0 2
        %2974 = vperm.xlu0 %2973, %v1763
        %v2975 = vpop.permute.xlu0 %2974
        %v2977 = vlaneseq
        %v2978 = vshrl.u32 %v2977, 7
        %v2979 = vsub.s32 2, %v2978
        %v2980 = vrot.slane %v1797, %v2979
        %v2981 = vmul.f32 %v2851, %v2980
        %v2982 = vmul.f32 %v2855, %v2980
        %v2983 = vmul.f32 %v2859, %v2980
        %v2984 = vmul.f32 %v2863, %v2980
        %v2985 = vmul.f32 %v2867, %v2980
        %v2986 = vmul.f32 %v2871, %v2980
        %v2987 = vmul.f32 %v2875, %v2980
        %v2988 = vmul.f32 %v2879, %v2980
        %v2989 = vmul.f32 %v2883, %v2980
        %v2990 = vmul.f32 %v2887, %v2980
        %v2991 = vmul.f32 %v2891, %v2980
        %v2992 = vmul.f32 %v2895, %v2980
        %v2993 = vmul.f32 %v2899, %v2980
        %v2994 = vmul.f32 %v2903, %v2980
        %v2995 = vmul.f32 %v2907, %v2980
        %v2996 = vmul.f32 %v2911, %v2980
        %v2997 = vmul.f32 %v2915, %v2980
        %v2998 = vmul.f32 %v2919, %v2980
        %v2999 = vmul.f32 %v2923, %v2980
        %v3000 = vmul.f32 %v2927, %v2980
        %v3001 = vmul.f32 %v2931, %v2980
        %v3002 = vmul.f32 %v2935, %v2980
        %v3003 = vmul.f32 %v2939, %v2980
        %v3004 = vmul.f32 %v2943, %v2980
        %v3005 = vmul.f32 %v2947, %v2980
        %v3006 = vmul.f32 %v2951, %v2980
        %v3007 = vmul.f32 %v2955, %v2980
        %v3008 = vmul.f32 %v2959, %v2980
        %v3009 = vmul.f32 %v2963, %v2980
        %v3010 = vmul.f32 %v2967, %v2980
        %v3011 = vmul.f32 %v2971, %v2980
        %v3012 = vmul.f32 %v2975, %v2980
        %v3013 = vadd.f32 %v2817, %v2981
        %v3014 = vadd.f32 %v2818, %v2982
        %v3015 = vadd.f32 %v2819, %v2983
        %v3016 = vadd.f32 %v2820, %v2984
        %v3017 = vadd.f32 %v2821, %v2985
        %v3018 = vadd.f32 %v2822, %v2986
        %v3019 = vadd.f32 %v2823, %v2987
        %v3020 = vadd.f32 %v2824, %v2988
        %v3021 = vadd.f32 %v2825, %v2989
        %v3022 = vadd.f32 %v2826, %v2990
        %v3023 = vadd.f32 %v2827, %v2991
        %v3024 = vadd.f32 %v2828, %v2992
        %v3025 = vadd.f32 %v2829, %v2993
        %v3026 = vadd.f32 %v2830, %v2994
        %v3027 = vadd.f32 %v2831, %v2995
        %v3028 = vadd.f32 %v2832, %v2996
        %v3029 = vadd.f32 %v2833, %v2997
        %v3030 = vadd.f32 %v2834, %v2998
        %v3031 = vadd.f32 %v2835, %v2999
        %v3032 = vadd.f32 %v2836, %v3000
        %v3033 = vadd.f32 %v2837, %v3001
        %v3034 = vadd.f32 %v2838, %v3002
        %v3035 = vadd.f32 %v2839, %v3003
        %v3036 = vadd.f32 %v2840, %v3004
        %v3037 = vadd.f32 %v2841, %v3005
        %v3038 = vadd.f32 %v2842, %v3006
        %v3039 = vadd.f32 %v2843, %v3007
        %v3040 = vadd.f32 %v2844, %v3008
        %v3041 = vadd.f32 %v2845, %v3009
        %v3042 = vadd.f32 %v2846, %v3010
        %v3043 = vadd.f32 %v2847, %v3011
        %v3044 = vadd.f32 %v2848, %v3012
        %v3045 = vmax.f32 %v771, 0.0
        %v3046 = vmax.f32 %v772, 0.0
        %v3047 = vmax.f32 %v773, 0.0
        %v3048 = vmax.f32 %v774, 0.0
        %v3049 = vmax.f32 %v775, 0.0
        %v3050 = vmax.f32 %v776, 0.0
        %v3051 = vmax.f32 %v777, 0.0
        %v3052 = vmax.f32 %v778, 0.0
        %v3053 = vmax.f32 %v779, 0.0
        %v3054 = vmax.f32 %v780, 0.0
        %v3055 = vmax.f32 %v781, 0.0
        %v3056 = vmax.f32 %v782, 0.0
        %v3057 = vmax.f32 %v783, 0.0
        %v3058 = vmax.f32 %v784, 0.0
        %v3059 = vmax.f32 %v785, 0.0
        %v3060 = vmax.f32 %v786, 0.0
        %v3061 = vmax.f32 %v787, 0.0
        %v3062 = vmax.f32 %v788, 0.0
        %v3063 = vmax.f32 %v789, 0.0
        %v3064 = vmax.f32 %v790, 0.0
        %v3065 = vmax.f32 %v791, 0.0
        %v3066 = vmax.f32 %v792, 0.0
        %v3067 = vmax.f32 %v793, 0.0
        %v3068 = vmax.f32 %v794, 0.0
        %v3069 = vmax.f32 %v795, 0.0
        %v3070 = vmax.f32 %v796, 0.0
        %v3071 = vmax.f32 %v797, 0.0
        %v3072 = vmax.f32 %v798, 0.0
        %v3073 = vmax.f32 %v799, 0.0
        %v3074 = vmax.f32 %v800, 0.0
        %v3075 = vmax.f32 %v801, 0.0
        %v3076 = vmax.f32 %v802, 0.0
        %v3077 = vld [vmem:[#allocation9] sm:$0xff]
        %v3078 = vld [vmem:[#allocation9 + $0x8] sm:$0xff]
        %v3079 = vld [vmem:[#allocation9 + $0x10] sm:$0xff]
        %v3080 = vld [vmem:[#allocation9 + $0x18] sm:$0xff]
        %v3081 = vld [vmem:[#allocation9 + $0x20] sm:$0xff]
        %v3082 = vld [vmem:[#allocation9 + $0x28] sm:$0xff]
        %v3083 = vld [vmem:[#allocation9 + $0x30] sm:$0xff]
        %v3084 = vld [vmem:[#allocation9 + $0x38] sm:$0xff]
        %v3085 = vld [vmem:[#allocation9 + $0x40] sm:$0xff]
        %v3086 = vld [vmem:[#allocation9 + $0x48] sm:$0xff]
        %v3087 = vld [vmem:[#allocation9 + $0x50] sm:$0xff]
        %v3088 = vld [vmem:[#allocation9 + $0x58] sm:$0xff]
        %v3089 = vld [vmem:[#allocation9 + $0x60] sm:$0xff]
        %v3090 = vld [vmem:[#allocation9 + $0x68] sm:$0xff]
        %v3091 = vld [vmem:[#allocation9 + $0x70] sm:$0xff]
        %v3092 = vld [vmem:[#allocation9 + $0x78] sm:$0xff]
        %v3093 = vld [vmem:[#allocation9 + $0x80] sm:$0xff]
        %v3094 = vld [vmem:[#allocation9 + $0x88] sm:$0xff]
        %v3095 = vld [vmem:[#allocation9 + $0x90] sm:$0xff]
        %v3096 = vld [vmem:[#allocation9 + $0x98] sm:$0xff]
        %v3097 = vld [vmem:[#allocation9 + $0xa0] sm:$0xff]
        %v3098 = vld [vmem:[#allocation9 + $0xa8] sm:$0xff]
        %v3099 = vld [vmem:[#allocation9 + $0xb0] sm:$0xff]
        %v3100 = vld [vmem:[#allocation9 + $0xb8] sm:$0xff]
        %v3101 = vld [vmem:[#allocation9 + $0xc0] sm:$0xff]
        %v3102 = vld [vmem:[#allocation9 + $0xc8] sm:$0xff]
        %v3103 = vld [vmem:[#allocation9 + $0xd0] sm:$0xff]
        %v3104 = vld [vmem:[#allocation9 + $0xd8] sm:$0xff]
        %v3105 = vld [vmem:[#allocation9 + $0xe0] sm:$0xff]
        %v3106 = vld [vmem:[#allocation9 + $0xe8] sm:$0xff]
        %v3107 = vld [vmem:[#allocation9 + $0xf0] sm:$0xff]
        %v3108 = vld [vmem:[#allocation9 + $0xf8] sm:$0xff]
        %v3109 = vld [vmem:[#allocation9 + $0x100] sm:$0xff]
        %v3110 = vld [vmem:[#allocation9 + $0x108] sm:$0xff]
        %v3111 = vld [vmem:[#allocation9 + $0x110] sm:$0xff]
        %v3112 = vld [vmem:[#allocation9 + $0x118] sm:$0xff]
        %v3113 = vld [vmem:[#allocation9 + $0x120] sm:$0xff]
        %v3114 = vld [vmem:[#allocation9 + $0x128] sm:$0xff]
        %v3115 = vld [vmem:[#allocation9 + $0x130] sm:$0xff]
        %v3116 = vld [vmem:[#allocation9 + $0x138] sm:$0xff]
        %v3117 = vld [vmem:[#allocation9 + $0x140] sm:$0xff]
        %v3118 = vld [vmem:[#allocation9 + $0x148] sm:$0xff]
        %v3119 = vld [vmem:[#allocation9 + $0x150] sm:$0xff]
        %v3120 = vld [vmem:[#allocation9 + $0x158] sm:$0xff]
        %v3121 = vld [vmem:[#allocation9 + $0x160] sm:$0xff]
        %v3122 = vld [vmem:[#allocation9 + $0x168] sm:$0xff]
        %v3123 = vld [vmem:[#allocation9 + $0x170] sm:$0xff]
        %v3124 = vld [vmem:[#allocation9 + $0x178] sm:$0xff]
        %v3125 = vld [vmem:[#allocation10] sm:$0xff]
        %v3126 = vld [vmem:[#allocation10 + $0x8] sm:$0xf]
        %v3129 = vlaneseq
        %v3130 = vshrl.u32 %v3129, 7
        %v3131 = vsub.s32 0, %v3130
        %v3132 = vrot.slane %v3125, %v3131
        %v3133 = vlaneseq
        %v3134 = vshrl.u32 %v3133, 7
        %v3135 = vsub.s32 1, %v3134
        %v3136 = vrot.slane %v3125, %v3135
        %v3137 = vlaneseq
        %v3138 = vshrl.u32 %v3137, 7
        %v3139 = vsub.s32 2, %v3138
        %v3140 = vrot.slane %v3125, %v3139
        %v3141 = vlaneseq
        %v3142 = vshrl.u32 %v3141, 7
        %v3143 = vsub.s32 3, %v3142
        %v3144 = vrot.slane %v3125, %v3143
        %v3145 = vlaneseq
        %v3146 = vshrl.u32 %v3145, 7
        %v3147 = vsub.s32 4, %v3146
        %v3148 = vrot.slane %v3125, %v3147
        %v3149 = vlaneseq
        %v3150 = vshrl.u32 %v3149, 7
        %v3151 = vsub.s32 5, %v3150
        %v3152 = vrot.slane %v3125, %v3151
        %v3153 = vlaneseq
        %v3154 = vshrl.u32 %v3153, 7
        %v3155 = vsub.s32 6, %v3154
        %v3156 = vrot.slane %v3125, %v3155
        %v3157 = vlaneseq
        %v3158 = vshrl.u32 %v3157, 7
        %v3159 = vsub.s32 7, %v3158
        %v3160 = vrot.slane %v3125, %v3159
        %v3161 = vlaneseq
        %v3162 = vshrl.u32 %v3161, 7
        %v3163 = vsub.s32 0, %v3162
        %v3164 = vrot.slane %v3126, %v3163
        %v3165 = vlaneseq
        %v3166 = vshrl.u32 %v3165, 7
        %v3167 = vsub.s32 1, %v3166
        %v3168 = vrot.slane %v3126, %v3167
        %v3169 = vlaneseq
        %v3170 = vshrl.u32 %v3169, 7
        %v3171 = vsub.s32 2, %v3170
        %v3172 = vrot.slane %v3126, %v3171
        %v3173 = vlaneseq
        %v3174 = vshrl.u32 %v3173, 7
        %v3175 = vsub.s32 3, %v3174
        %v3176 = vrot.slane %v3126, %v3175
        %v3190 = vsel %vm814, %v3045, 0
        %v3193 = vsel %vm814, %v3046, 0
        %v3196 = vsel %vm814, %v3047, 0
        %v3199 = vsel %vm814, %v3048, 0
        %v3202 = vsel %vm814, %v3049, 0
        %v3205 = vsel %vm814, %v3050, 0
        %v3208 = vsel %vm814, %v3051, 0
        %v3211 = vsel %vm814, %v3052, 0
        %v3214 = vsel %vm814, %v3053, 0
        %v3217 = vsel %vm814, %v3054, 0
        %v3220 = vsel %vm814, %v3055, 0
        %v3223 = vsel %vm814, %v3056, 0
        %v3226 = vsel %vm814, %v3057, 0
        %v3229 = vsel %vm814, %v3058, 0
        %v3232 = vsel %vm814, %v3059, 0
        %v3235 = vsel %vm814, %v3060, 0
        %v3238 = vsel %vm814, %v3061, 0
        %v3241 = vsel %vm814, %v3062, 0
        %v3244 = vsel %vm814, %v3063, 0
        %v3247 = vsel %vm814, %v3064, 0
        %v3250 = vsel %vm814, %v3065, 0
        %v3253 = vsel %vm814, %v3066, 0
        %v3256 = vsel %vm814, %v3067, 0
        %v3259 = vsel %vm814, %v3068, 0
        %v3262 = vsel %vm814, %v3069, 0
        %v3265 = vsel %vm814, %v3070, 0
        %v3268 = vsel %vm814, %v3071, 0
        %v3271 = vsel %vm814, %v3072, 0
        %v3274 = vsel %vm814, %v3073, 0
        %v3277 = vsel %vm814, %v3074, 0
        %v3280 = vsel %vm814, %v3075, 0
        %v3283 = vsel %vm814, %v3076, 0
        %3285 = vmatprep.subr.mxu0 0.0
        %3286 = vmatpush1.msra.mxu0 0.0
        %3287 = vmatprep.subr.mxu0 0.0
        %3288 = vmatpush1.msra.mxu0 0.0
        %3289 = vmatprep.subr.mxu0 0.0
        %3290 = vmatpush1.msra.mxu0 0.0
        %3291 = vmatprep.subr.mxu0 0.0
        %3292 = vmatpush1.msra.mxu0 0.0
        %3293 = vmatprep.subr.mxu0 0.0
        %3294 = vmatpush1.msra.mxu0 0.0
        %3295 = vmatprep.subr.mxu0 0.0
        %3296 = vmatpush1.msra.mxu0 0.0
        %3297 = vmatprep.subr.mxu0 0.0
        %3298 = vmatpush1.msra.mxu0 0.0
        %3299 = vmatprep.subr.mxu0 0.0
        %3300 = vmatpush1.msra.mxu0 0.0
        %3301 = vmatprep.subr.mxu0 0.0
        %3302 = vmatpush1.msra.mxu0 0.0
        %3303 = vmatprep.subr.mxu0 0.0
        %3304 = vmatpush1.msra.mxu0 0.0
        %3305 = vmatprep.subr.mxu0 0.0
        %3306 = vmatpush1.msra.mxu0 0.0
        %3307 = vmatprep.subr.mxu0 0.0
        %3308 = vmatpush1.msra.mxu0 0.0
        %3309 = vmatprep.subr.mxu0 %v3114
        %3310 = vmatpush1.msra.mxu0 %v3113
        %3311 = vmatprep.subr.mxu0 %v3102
        %3312 = vmatpush1.msra.mxu0 %v3101
        %3313 = vmatprep.subr.mxu0 %v3090
        %3314 = vmatpush1.msra.mxu0 %v3089
        %3315 = vmatprep.subr.mxu0 %v3078
        %3316 = vmatpush1.msra.mxu0 %v3077
        %3317 = vmatprep.subr.mxu0 0.0
        %3318 = vmatpush2.msra.mxu0 0.0
        %3319 = vmatprep.subr.mxu0 0.0
        %3320 = vmatpush2.msra.mxu0 0.0
        %3321 = vmatprep.subr.mxu0 0.0
        %3322 = vmatpush2.msra.mxu0 0.0
        %3323 = vmatprep.subr.mxu0 0.0
        %3324 = vmatpush2.msra.mxu0 0.0
        %3325 = vmatprep.subr.mxu0 0.0
        %3326 = vmatpush2.msra.mxu0 0.0
        %3327 = vmatprep.subr.mxu0 0.0
        %3328 = vmatpush2.msra.mxu0 0.0
        %3329 = vmatprep.subr.mxu0 0.0
        %3330 = vmatpush2.msra.mxu0 0.0
        %3331 = vmatprep.subr.mxu0 0.0
        %3332 = vmatpush2.msra.mxu0 0.0
        %3333 = vmatprep.subr.mxu0 0.0
        %3334 = vmatpush2.msra.mxu0 0.0
        %3335 = vmatprep.subr.mxu0 0.0
        %3336 = vmatpush2.msra.mxu0 0.0
        %3337 = vmatprep.subr.mxu0 0.0
        %3338 = vmatpush2.msra.mxu0 0.0
        %3339 = vmatprep.subr.mxu0 0.0
        %3340 = vmatpush2.msra.mxu0 0.0
        %3341 = vmatprep.subr.mxu0 0.0
        %3342 = vmatpush2.msra.mxu0 0.0
        %3343 = vmatprep.subr.mxu0 0.0
        %3344 = vmatpush2.msra.mxu0 0.0
        %3345 = vmatprep.subr.mxu0 0.0
        %3346 = vmatpush2.msra.mxu0 0.0
        %3347 = vmatprep.subr.mxu0 0.0
        %3348 = vmatpush2.msra.mxu0 0.0
        %3349 = vmatprep.mubr.f32.mxu0 0.0
        %3350 = vmatmul.mubr.f32.gmra.mxu0 %v3190
        %v3351 = vpop.f32.mrf.mxu0
        %v3352 = vadd.f32 %v3132, %v3351
        %v3353 = vpop.f32.mrf.mxu0
        %v3354 = vadd.f32 %v3136, %v3353
        %3355 = vmatprep.mubr.f32.mxu0 0.0
        %3356 = vmatmul.mubr.f32.gmra.mxu0 %v3193
        %v3357 = vpop.f32.mrf.mxu0
        %v3358 = vadd.f32 %v3132, %v3357
        %v3359 = vpop.f32.mrf.mxu0
        %v3360 = vadd.f32 %v3136, %v3359
        %3361 = vmatprep.mubr.f32.mxu0 0.0
        %3362 = vmatmul.mubr.f32.gmra.mxu0 %v3196
        %v3363 = vpop.f32.mrf.mxu0
        %v3364 = vadd.f32 %v3132, %v3363
        %v3365 = vpop.f32.mrf.mxu0
        %v3366 = vadd.f32 %v3136, %v3365
        %3367 = vmatprep.mubr.f32.mxu0 0.0
        %3368 = vmatmul.mubr.f32.gmra.mxu0 %v3199
        %v3369 = vpop.f32.mrf.mxu0
        %v3370 = vadd.f32 %v3132, %v3369
        %v3371 = vpop.f32.mrf.mxu0
        %v3372 = vadd.f32 %v3136, %v3371
        %3373 = vmatprep.mubr.f32.mxu0 0.0
        %3374 = vmatmul.mubr.f32.gmra.mxu0 %v3202
        %v3375 = vpop.f32.mrf.mxu0
        %v3376 = vadd.f32 %v3132, %v3375
        %v3377 = vpop.f32.mrf.mxu0
        %v3378 = vadd.f32 %v3136, %v3377
        %3379 = vmatprep.mubr.f32.mxu0 0.0
        %3380 = vmatmul.mubr.f32.gmra.mxu0 %v3205
        %v3381 = vpop.f32.mrf.mxu0
        %v3382 = vadd.f32 %v3132, %v3381
        %v3383 = vpop.f32.mrf.mxu0
        %v3384 = vadd.f32 %v3136, %v3383
        %3385 = vmatprep.mubr.f32.mxu0 0.0
        %3386 = vmatmul.mubr.f32.gmra.mxu0 %v3208
        %v3387 = vpop.f32.mrf.mxu0
        %v3388 = vadd.f32 %v3132, %v3387
        %v3389 = vpop.f32.mrf.mxu0
        %v3390 = vadd.f32 %v3136, %v3389
        %3391 = vmatprep.mubr.f32.mxu0 0.0
        %3392 = vmatmul.mubr.f32.gmra.mxu0 %v3211
        %v3393 = vpop.f32.mrf.mxu0
        %v3394 = vadd.f32 %v3132, %v3393
        %v3395 = vpop.f32.mrf.mxu0
        %v3396 = vadd.f32 %v3136, %v3395
        %3397 = vmatprep.mubr.f32.mxu0 0.0
        %3398 = vmatmul.mubr.f32.gmra.mxu0 %v3214
        %v3399 = vpop.f32.mrf.mxu0
        %v3400 = vadd.f32 %v3132, %v3399
        %v3401 = vpop.f32.mrf.mxu0
        %v3402 = vadd.f32 %v3136, %v3401
        %3403 = vmatprep.mubr.f32.mxu0 0.0
        %3404 = vmatmul.mubr.f32.gmra.mxu0 %v3217
        %v3405 = vpop.f32.mrf.mxu0
        %v3406 = vadd.f32 %v3132, %v3405
        %v3407 = vpop.f32.mrf.mxu0
        %v3408 = vadd.f32 %v3136, %v3407
        %3409 = vmatprep.mubr.f32.mxu0 0.0
        %3410 = vmatmul.mubr.f32.gmra.mxu0 %v3220
        %v3411 = vpop.f32.mrf.mxu0
        %v3412 = vadd.f32 %v3132, %v3411
        %v3413 = vpop.f32.mrf.mxu0
        %v3414 = vadd.f32 %v3136, %v3413
        %3415 = vmatprep.mubr.f32.mxu0 0.0
        %3416 = vmatmul.mubr.f32.gmra.mxu0 %v3223
        %v3417 = vpop.f32.mrf.mxu0
        %v3418 = vadd.f32 %v3132, %v3417
        %v3419 = vpop.f32.mrf.mxu0
        %v3420 = vadd.f32 %v3136, %v3419
        %3421 = vmatprep.mubr.f32.mxu0 0.0
        %3422 = vmatmul.mubr.f32.gmra.mxu0 %v3226
        %v3423 = vpop.f32.mrf.mxu0
        %v3424 = vadd.f32 %v3132, %v3423
        %v3425 = vpop.f32.mrf.mxu0
        %v3426 = vadd.f32 %v3136, %v3425
        %3427 = vmatprep.mubr.f32.mxu0 0.0
        %3428 = vmatmul.mubr.f32.gmra.mxu0 %v3229
        %v3429 = vpop.f32.mrf.mxu0
        %v3430 = vadd.f32 %v3132, %v3429
        %v3431 = vpop.f32.mrf.mxu0
        %v3432 = vadd.f32 %v3136, %v3431
        %3433 = vmatprep.mubr.f32.mxu0 0.0
        %3434 = vmatmul.mubr.f32.gmra.mxu0 %v3232
        %v3435 = vpop.f32.mrf.mxu0
        %v3436 = vadd.f32 %v3132, %v3435
        %v3437 = vpop.f32.mrf.mxu0
        %v3438 = vadd.f32 %v3136, %v3437
        %3439 = vmatprep.mubr.f32.mxu0 0.0
        %3440 = vmatmul.mubr.f32.gmra.mxu0 %v3235
        %v3441 = vpop.f32.mrf.mxu0
        %v3442 = vadd.f32 %v3132, %v3441
        %v3443 = vpop.f32.mrf.mxu0
        %v3444 = vadd.f32 %v3136, %v3443
        %3445 = vmatprep.mubr.f32.mxu0 0.0
        %3446 = vmatmul.mubr.f32.gmra.mxu0 %v3238
        %v3447 = vpop.f32.mrf.mxu0
        %v3448 = vadd.f32 %v3132, %v3447
        %v3449 = vpop.f32.mrf.mxu0
        %v3450 = vadd.f32 %v3136, %v3449
        %3451 = vmatprep.mubr.f32.mxu0 0.0
        %3452 = vmatmul.mubr.f32.gmra.mxu0 %v3241
        %v3453 = vpop.f32.mrf.mxu0
        %v3454 = vadd.f32 %v3132, %v3453
        %v3455 = vpop.f32.mrf.mxu0
        %v3456 = vadd.f32 %v3136, %v3455
        %3457 = vmatprep.mubr.f32.mxu0 0.0
        %3458 = vmatmul.mubr.f32.gmra.mxu0 %v3244
        %v3459 = vpop.f32.mrf.mxu0
        %v3460 = vadd.f32 %v3132, %v3459
        %v3461 = vpop.f32.mrf.mxu0
        %v3462 = vadd.f32 %v3136, %v3461
        %3463 = vmatprep.mubr.f32.mxu0 0.0
        %3464 = vmatmul.mubr.f32.gmra.mxu0 %v3247
        %v3465 = vpop.f32.mrf.mxu0
        %v3466 = vadd.f32 %v3132, %v3465
        %v3467 = vpop.f32.mrf.mxu0
        %v3468 = vadd.f32 %v3136, %v3467
        %3469 = vmatprep.mubr.f32.mxu0 0.0
        %3470 = vmatmul.mubr.f32.gmra.mxu0 %v3250
        %v3471 = vpop.f32.mrf.mxu0
        %v3472 = vadd.f32 %v3132, %v3471
        %v3473 = vpop.f32.mrf.mxu0
        %v3474 = vadd.f32 %v3136, %v3473
        %3475 = vmatprep.mubr.f32.mxu0 0.0
        %3476 = vmatmul.mubr.f32.gmra.mxu0 %v3253
        %v3477 = vpop.f32.mrf.mxu0
        %v3478 = vadd.f32 %v3132, %v3477
        %v3479 = vpop.f32.mrf.mxu0
        %v3480 = vadd.f32 %v3136, %v3479
        %3481 = vmatprep.mubr.f32.mxu0 0.0
        %3482 = vmatmul.mubr.f32.gmra.mxu0 %v3256
        %v3483 = vpop.f32.mrf.mxu0
        %v3484 = vadd.f32 %v3132, %v3483
        %v3485 = vpop.f32.mrf.mxu0
        %v3486 = vadd.f32 %v3136, %v3485
        %3487 = vmatprep.mubr.f32.mxu0 0.0
        %3488 = vmatmul.mubr.f32.gmra.mxu0 %v3259
        %v3489 = vpop.f32.mrf.mxu0
        %v3490 = vadd.f32 %v3132, %v3489
        %v3491 = vpop.f32.mrf.mxu0
        %v3492 = vadd.f32 %v3136, %v3491
        %3493 = vmatprep.mubr.f32.mxu0 0.0
        %3494 = vmatmul.mubr.f32.gmra.mxu0 %v3262
        %v3495 = vpop.f32.mrf.mxu0
        %v3496 = vadd.f32 %v3132, %v3495
        %v3497 = vpop.f32.mrf.mxu0
        %v3498 = vadd.f32 %v3136, %v3497
        %3499 = vmatprep.mubr.f32.mxu0 0.0
        %3500 = vmatmul.mubr.f32.gmra.mxu0 %v3265
        %v3501 = vpop.f32.mrf.mxu0
        %v3502 = vadd.f32 %v3132, %v3501
        %v3503 = vpop.f32.mrf.mxu0
        %v3504 = vadd.f32 %v3136, %v3503
        %3505 = vmatprep.mubr.f32.mxu0 0.0
        %3506 = vmatmul.mubr.f32.gmra.mxu0 %v3268
        %v3507 = vpop.f32.mrf.mxu0
        %v3508 = vadd.f32 %v3132, %v3507
        %v3509 = vpop.f32.mrf.mxu0
        %v3510 = vadd.f32 %v3136, %v3509
        %3511 = vmatprep.mubr.f32.mxu0 0.0
        %3512 = vmatmul.mubr.f32.gmra.mxu0 %v3271
        %v3513 = vpop.f32.mrf.mxu0
        %v3514 = vadd.f32 %v3132, %v3513
        %v3515 = vpop.f32.mrf.mxu0
        %v3516 = vadd.f32 %v3136, %v3515
        %3517 = vmatprep.mubr.f32.mxu0 0.0
        %3518 = vmatmul.mubr.f32.gmra.mxu0 %v3274
        %v3519 = vpop.f32.mrf.mxu0
        %v3520 = vadd.f32 %v3132, %v3519
        %v3521 = vpop.f32.mrf.mxu0
        %v3522 = vadd.f32 %v3136, %v3521
        %3523 = vmatprep.mubr.f32.mxu0 0.0
        %3524 = vmatmul.mubr.f32.gmra.mxu0 %v3277
        %v3525 = vpop.f32.mrf.mxu0
        %v3526 = vadd.f32 %v3132, %v3525
        %v3527 = vpop.f32.mrf.mxu0
        %v3528 = vadd.f32 %v3136, %v3527
        %3529 = vmatprep.mubr.f32.mxu0 0.0
        %3530 = vmatmul.mubr.f32.gmra.mxu0 %v3280
        %v3531 = vpop.f32.mrf.mxu0
        %v3532 = vadd.f32 %v3132, %v3531
        %v3533 = vpop.f32.mrf.mxu0
        %v3534 = vadd.f32 %v3136, %v3533
        %3535 = vmatprep.mubr.f32.mxu0 0.0
        %3536 = vmatmul.mubr.f32.gmra.mxu0 %v3283
        %v3537 = vpop.f32.mrf.mxu0
        %v3538 = vadd.f32 %v3132, %v3537
        %v3539 = vpop.f32.mrf.mxu0
        %v3540 = vadd.f32 %v3136, %v3539
        %3541 = vdwg.mxu0
        %3542 = vmatprep.subr.mxu0 0.0
        %3543 = vmatpush1.msra.mxu0 0.0
        %3544 = vmatprep.subr.mxu0 0.0
        %3545 = vmatpush1.msra.mxu0 0.0
        %3546 = vmatprep.subr.mxu0 0.0
        %3547 = vmatpush1.msra.mxu0 0.0
        %3548 = vmatprep.subr.mxu0 0.0
        %3549 = vmatpush1.msra.mxu0 0.0
        %3550 = vmatprep.subr.mxu0 0.0
        %3551 = vmatpush1.msra.mxu0 0.0
        %3552 = vmatprep.subr.mxu0 0.0
        %3553 = vmatpush1.msra.mxu0 0.0
        %3554 = vmatprep.subr.mxu0 0.0
        %3555 = vmatpush1.msra.mxu0 0.0
        %3556 = vmatprep.subr.mxu0 0.0
        %3557 = vmatpush1.msra.mxu0 0.0
        %3558 = vmatprep.subr.mxu0 0.0
        %3559 = vmatpush1.msra.mxu0 0.0
        %3560 = vmatprep.subr.mxu0 0.0
        %3561 = vmatpush1.msra.mxu0 0.0
        %3562 = vmatprep.subr.mxu0 0.0
        %3563 = vmatpush1.msra.mxu0 0.0
        %3564 = vmatprep.subr.mxu0 0.0
        %3565 = vmatpush1.msra.mxu0 0.0
        %3566 = vmatprep.subr.mxu0 %v3116
        %3567 = vmatpush1.msra.mxu0 %v3115
        %3568 = vmatprep.subr.mxu0 %v3104
        %3569 = vmatpush1.msra.mxu0 %v3103
        %3570 = vmatprep.subr.mxu0 %v3092
        %3571 = vmatpush1.msra.mxu0 %v3091
        %3572 = vmatprep.subr.mxu0 %v3080
        %3573 = vmatpush1.msra.mxu0 %v3079
        %3574 = vmatprep.subr.mxu0 0.0
        %3575 = vmatpush2.msra.mxu0 0.0
        %3576 = vmatprep.subr.mxu0 0.0
        %3577 = vmatpush2.msra.mxu0 0.0
        %3578 = vmatprep.subr.mxu0 0.0
        %3579 = vmatpush2.msra.mxu0 0.0
        %3580 = vmatprep.subr.mxu0 0.0
        %3581 = vmatpush2.msra.mxu0 0.0
        %3582 = vmatprep.subr.mxu0 0.0
        %3583 = vmatpush2.msra.mxu0 0.0
        %3584 = vmatprep.subr.mxu0 0.0
        %3585 = vmatpush2.msra.mxu0 0.0
        %3586 = vmatprep.subr.mxu0 0.0
        %3587 = vmatpush2.msra.mxu0 0.0
        %3588 = vmatprep.subr.mxu0 0.0
        %3589 = vmatpush2.msra.mxu0 0.0
        %3590 = vmatprep.subr.mxu0 0.0
        %3591 = vmatpush2.msra.mxu0 0.0
        %3592 = vmatprep.subr.mxu0 0.0
        %3593 = vmatpush2.msra.mxu0 0.0
        %3594 = vmatprep.subr.mxu0 0.0
        %3595 = vmatpush2.msra.mxu0 0.0
        %3596 = vmatprep.subr.mxu0 0.0
        %3597 = vmatpush2.msra.mxu0 0.0
        %3598 = vmatprep.subr.mxu0 0.0
        %3599 = vmatpush2.msra.mxu0 0.0
        %3600 = vmatprep.subr.mxu0 0.0
        %3601 = vmatpush2.msra.mxu0 0.0
        %3602 = vmatprep.subr.mxu0 0.0
        %3603 = vmatpush2.msra.mxu0 0.0
        %3604 = vmatprep.subr.mxu0 0.0
        %3605 = vmatpush2.msra.mxu0 0.0
        %3606 = vmatprep.mubr.f32.mxu0 0.0
        %3607 = vmatmul.mubr.f32.gmra.mxu0 %v3190
        %v3608 = vpop.f32.mrf.mxu0
        %v3609 = vadd.f32 %v3140, %v3608
        %v3610 = vpop.f32.mrf.mxu0
        %v3611 = vadd.f32 %v3144, %v3610
        %3612 = vmatprep.mubr.f32.mxu0 0.0
        %3613 = vmatmul.mubr.f32.gmra.mxu0 %v3193
        %v3614 = vpop.f32.mrf.mxu0
        %v3615 = vadd.f32 %v3140, %v3614
        %v3616 = vpop.f32.mrf.mxu0
        %v3617 = vadd.f32 %v3144, %v3616
        %3618 = vmatprep.mubr.f32.mxu0 0.0
        %3619 = vmatmul.mubr.f32.gmra.mxu0 %v3196
        %v3620 = vpop.f32.mrf.mxu0
        %v3621 = vadd.f32 %v3140, %v3620
        %v3622 = vpop.f32.mrf.mxu0
        %v3623 = vadd.f32 %v3144, %v3622
        %3624 = vmatprep.mubr.f32.mxu0 0.0
        %3625 = vmatmul.mubr.f32.gmra.mxu0 %v3199
        %v3626 = vpop.f32.mrf.mxu0
        %v3627 = vadd.f32 %v3140, %v3626
        %v3628 = vpop.f32.mrf.mxu0
        %v3629 = vadd.f32 %v3144, %v3628
        %3630 = vmatprep.mubr.f32.mxu0 0.0
        %3631 = vmatmul.mubr.f32.gmra.mxu0 %v3202
        %v3632 = vpop.f32.mrf.mxu0
        %v3633 = vadd.f32 %v3140, %v3632
        %v3634 = vpop.f32.mrf.mxu0
        %v3635 = vadd.f32 %v3144, %v3634
        %3636 = vmatprep.mubr.f32.mxu0 0.0
        %3637 = vmatmul.mubr.f32.gmra.mxu0 %v3205
        %v3638 = vpop.f32.mrf.mxu0
        %v3639 = vadd.f32 %v3140, %v3638
        %v3640 = vpop.f32.mrf.mxu0
        %v3641 = vadd.f32 %v3144, %v3640
        %3642 = vmatprep.mubr.f32.mxu0 0.0
        %3643 = vmatmul.mubr.f32.gmra.mxu0 %v3208
        %v3644 = vpop.f32.mrf.mxu0
        %v3645 = vadd.f32 %v3140, %v3644
        %v3646 = vpop.f32.mrf.mxu0
        %v3647 = vadd.f32 %v3144, %v3646
        %3648 = vmatprep.mubr.f32.mxu0 0.0
        %3649 = vmatmul.mubr.f32.gmra.mxu0 %v3211
        %v3650 = vpop.f32.mrf.mxu0
        %v3651 = vadd.f32 %v3140, %v3650
        %v3652 = vpop.f32.mrf.mxu0
        %v3653 = vadd.f32 %v3144, %v3652
        %3654 = vmatprep.mubr.f32.mxu0 0.0
        %3655 = vmatmul.mubr.f32.gmra.mxu0 %v3214
        %v3656 = vpop.f32.mrf.mxu0
        %v3657 = vadd.f32 %v3140, %v3656
        %v3658 = vpop.f32.mrf.mxu0
        %v3659 = vadd.f32 %v3144, %v3658
        %3660 = vmatprep.mubr.f32.mxu0 0.0
        %3661 = vmatmul.mubr.f32.gmra.mxu0 %v3217
        %v3662 = vpop.f32.mrf.mxu0
        %v3663 = vadd.f32 %v3140, %v3662
        %v3664 = vpop.f32.mrf.mxu0
        %v3665 = vadd.f32 %v3144, %v3664
        %3666 = vmatprep.mubr.f32.mxu0 0.0
        %3667 = vmatmul.mubr.f32.gmra.mxu0 %v3220
        %v3668 = vpop.f32.mrf.mxu0
        %v3669 = vadd.f32 %v3140, %v3668
        %v3670 = vpop.f32.mrf.mxu0
        %v3671 = vadd.f32 %v3144, %v3670
        %3672 = vmatprep.mubr.f32.mxu0 0.0
        %3673 = vmatmul.mubr.f32.gmra.mxu0 %v3223
        %v3674 = vpop.f32.mrf.mxu0
        %v3675 = vadd.f32 %v3140, %v3674
        %v3676 = vpop.f32.mrf.mxu0
        %v3677 = vadd.f32 %v3144, %v3676
        %3678 = vmatprep.mubr.f32.mxu0 0.0
        %3679 = vmatmul.mubr.f32.gmra.mxu0 %v3226
        %v3680 = vpop.f32.mrf.mxu0
        %v3681 = vadd.f32 %v3140, %v3680
        %v3682 = vpop.f32.mrf.mxu0
        %v3683 = vadd.f32 %v3144, %v3682
        %3684 = vmatprep.mubr.f32.mxu0 0.0
        %3685 = vmatmul.mubr.f32.gmra.mxu0 %v3229
        %v3686 = vpop.f32.mrf.mxu0
        %v3687 = vadd.f32 %v3140, %v3686
        %v3688 = vpop.f32.mrf.mxu0
        %v3689 = vadd.f32 %v3144, %v3688
        %3690 = vmatprep.mubr.f32.mxu0 0.0
        %3691 = vmatmul.mubr.f32.gmra.mxu0 %v3232
        %v3692 = vpop.f32.mrf.mxu0
        %v3693 = vadd.f32 %v3140, %v3692
        %v3694 = vpop.f32.mrf.mxu0
        %v3695 = vadd.f32 %v3144, %v3694
        %3696 = vmatprep.mubr.f32.mxu0 0.0
        %3697 = vmatmul.mubr.f32.gmra.mxu0 %v3235
        %v3698 = vpop.f32.mrf.mxu0
        %v3699 = vadd.f32 %v3140, %v3698
        %v3700 = vpop.f32.mrf.mxu0
        %v3701 = vadd.f32 %v3144, %v3700
        %3702 = vmatprep.mubr.f32.mxu0 0.0
        %3703 = vmatmul.mubr.f32.gmra.mxu0 %v3238
        %v3704 = vpop.f32.mrf.mxu0
        %v3705 = vadd.f32 %v3140, %v3704
        %v3706 = vpop.f32.mrf.mxu0
        %v3707 = vadd.f32 %v3144, %v3706
        %3708 = vmatprep.mubr.f32.mxu0 0.0
        %3709 = vmatmul.mubr.f32.gmra.mxu0 %v3241
        %v3710 = vpop.f32.mrf.mxu0
        %v3711 = vadd.f32 %v3140, %v3710
        %v3712 = vpop.f32.mrf.mxu0
        %v3713 = vadd.f32 %v3144, %v3712
        %3714 = vmatprep.mubr.f32.mxu0 0.0
        %3715 = vmatmul.mubr.f32.gmra.mxu0 %v3244
        %v3716 = vpop.f32.mrf.mxu0
        %v3717 = vadd.f32 %v3140, %v3716
        %v3718 = vpop.f32.mrf.mxu0
        %v3719 = vadd.f32 %v3144, %v3718
        %3720 = vmatprep.mubr.f32.mxu0 0.0
        %3721 = vmatmul.mubr.f32.gmra.mxu0 %v3247
        %v3722 = vpop.f32.mrf.mxu0
        %v3723 = vadd.f32 %v3140, %v3722
        %v3724 = vpop.f32.mrf.mxu0
        %v3725 = vadd.f32 %v3144, %v3724
        %3726 = vmatprep.mubr.f32.mxu0 0.0
        %3727 = vmatmul.mubr.f32.gmra.mxu0 %v3250
        %v3728 = vpop.f32.mrf.mxu0
        %v3729 = vadd.f32 %v3140, %v3728
        %v3730 = vpop.f32.mrf.mxu0
        %v3731 = vadd.f32 %v3144, %v3730
        %3732 = vmatprep.mubr.f32.mxu0 0.0
        %3733 = vmatmul.mubr.f32.gmra.mxu0 %v3253
        %v3734 = vpop.f32.mrf.mxu0
        %v3735 = vadd.f32 %v3140, %v3734
        %v3736 = vpop.f32.mrf.mxu0
        %v3737 = vadd.f32 %v3144, %v3736
        %3738 = vmatprep.mubr.f32.mxu0 0.0
        %3739 = vmatmul.mubr.f32.gmra.mxu0 %v3256
        %v3740 = vpop.f32.mrf.mxu0
        %v3741 = vadd.f32 %v3140, %v3740
        %v3742 = vpop.f32.mrf.mxu0
        %v3743 = vadd.f32 %v3144, %v3742
        %3744 = vmatprep.mubr.f32.mxu0 0.0
        %3745 = vmatmul.mubr.f32.gmra.mxu0 %v3259
        %v3746 = vpop.f32.mrf.mxu0
        %v3747 = vadd.f32 %v3140, %v3746
        %v3748 = vpop.f32.mrf.mxu0
        %v3749 = vadd.f32 %v3144, %v3748
        %3750 = vmatprep.mubr.f32.mxu0 0.0
        %3751 = vmatmul.mubr.f32.gmra.mxu0 %v3262
        %v3752 = vpop.f32.mrf.mxu0
        %v3753 = vadd.f32 %v3140, %v3752
        %v3754 = vpop.f32.mrf.mxu0
        %v3755 = vadd.f32 %v3144, %v3754
        %3756 = vmatprep.mubr.f32.mxu0 0.0
        %3757 = vmatmul.mubr.f32.gmra.mxu0 %v3265
        %v3758 = vpop.f32.mrf.mxu0
        %v3759 = vadd.f32 %v3140, %v3758
        %v3760 = vpop.f32.mrf.mxu0
        %v3761 = vadd.f32 %v3144, %v3760
        %3762 = vmatprep.mubr.f32.mxu0 0.0
        %3763 = vmatmul.mubr.f32.gmra.mxu0 %v3268
        %v3764 = vpop.f32.mrf.mxu0
        %v3765 = vadd.f32 %v3140, %v3764
        %v3766 = vpop.f32.mrf.mxu0
        %v3767 = vadd.f32 %v3144, %v3766
        %3768 = vmatprep.mubr.f32.mxu0 0.0
        %3769 = vmatmul.mubr.f32.gmra.mxu0 %v3271
        %v3770 = vpop.f32.mrf.mxu0
        %v3771 = vadd.f32 %v3140, %v3770
        %v3772 = vpop.f32.mrf.mxu0
        %v3773 = vadd.f32 %v3144, %v3772
        %3774 = vmatprep.mubr.f32.mxu0 0.0
        %3775 = vmatmul.mubr.f32.gmra.mxu0 %v3274
        %v3776 = vpop.f32.mrf.mxu0
        %v3777 = vadd.f32 %v3140, %v3776
        %v3778 = vpop.f32.mrf.mxu0
        %v3779 = vadd.f32 %v3144, %v3778
        %3780 = vmatprep.mubr.f32.mxu0 0.0
        %3781 = vmatmul.mubr.f32.gmra.mxu0 %v3277
        %v3782 = vpop.f32.mrf.mxu0
        %v3783 = vadd.f32 %v3140, %v3782
        %v3784 = vpop.f32.mrf.mxu0
        %v3785 = vadd.f32 %v3144, %v3784
        %3786 = vmatprep.mubr.f32.mxu0 0.0
        %3787 = vmatmul.mubr.f32.gmra.mxu0 %v3280
        %v3788 = vpop.f32.mrf.mxu0
        %v3789 = vadd.f32 %v3140, %v3788
        %v3790 = vpop.f32.mrf.mxu0
        %v3791 = vadd.f32 %v3144, %v3790
        %3792 = vmatprep.mubr.f32.mxu0 0.0
        %3793 = vmatmul.mubr.f32.gmra.mxu0 %v3283
        %v3794 = vpop.f32.mrf.mxu0
        %v3795 = vadd.f32 %v3140, %v3794
        %v3796 = vpop.f32.mrf.mxu0
        %v3797 = vadd.f32 %v3144, %v3796
        %3798 = vdwg.mxu0
        %3799 = vmatprep.subr.mxu0 0.0
        %3800 = vmatpush1.msra.mxu0 0.0
        %3801 = vmatprep.subr.mxu0 0.0
        %3802 = vmatpush1.msra.mxu0 0.0
        %3803 = vmatprep.subr.mxu0 0.0
        %3804 = vmatpush1.msra.mxu0 0.0
        %3805 = vmatprep.subr.mxu0 0.0
        %3806 = vmatpush1.msra.mxu0 0.0
        %3807 = vmatprep.subr.mxu0 0.0
        %3808 = vmatpush1.msra.mxu0 0.0
        %3809 = vmatprep.subr.mxu0 0.0
        %3810 = vmatpush1.msra.mxu0 0.0
        %3811 = vmatprep.subr.mxu0 0.0
        %3812 = vmatpush1.msra.mxu0 0.0
        %3813 = vmatprep.subr.mxu0 0.0
        %3814 = vmatpush1.msra.mxu0 0.0
        %3815 = vmatprep.subr.mxu0 0.0
        %3816 = vmatpush1.msra.mxu0 0.0
        %3817 = vmatprep.subr.mxu0 0.0
        %3818 = vmatpush1.msra.mxu0 0.0
        %3819 = vmatprep.subr.mxu0 0.0
        %3820 = vmatpush1.msra.mxu0 0.0
        %3821 = vmatprep.subr.mxu0 0.0
        %3822 = vmatpush1.msra.mxu0 0.0
        %3823 = vmatprep.subr.mxu0 %v3118
        %3824 = vmatpush1.msra.mxu0 %v3117
        %3825 = vmatprep.subr.mxu0 %v3106
        %3826 = vmatpush1.msra.mxu0 %v3105
        %3827 = vmatprep.subr.mxu0 %v3094
        %3828 = vmatpush1.msra.mxu0 %v3093
        %3829 = vmatprep.subr.mxu0 %v3082
        %3830 = vmatpush1.msra.mxu0 %v3081
        %3831 = vmatprep.subr.mxu0 0.0
        %3832 = vmatpush2.msra.mxu0 0.0
        %3833 = vmatprep.subr.mxu0 0.0
        %3834 = vmatpush2.msra.mxu0 0.0
        %3835 = vmatprep.subr.mxu0 0.0
        %3836 = vmatpush2.msra.mxu0 0.0
        %3837 = vmatprep.subr.mxu0 0.0
        %3838 = vmatpush2.msra.mxu0 0.0
        %3839 = vmatprep.subr.mxu0 0.0
        %3840 = vmatpush2.msra.mxu0 0.0
        %3841 = vmatprep.subr.mxu0 0.0
        %3842 = vmatpush2.msra.mxu0 0.0
        %3843 = vmatprep.subr.mxu0 0.0
        %3844 = vmatpush2.msra.mxu0 0.0
        %3845 = vmatprep.subr.mxu0 0.0
        %3846 = vmatpush2.msra.mxu0 0.0
        %3847 = vmatprep.subr.mxu0 0.0
        %3848 = vmatpush2.msra.mxu0 0.0
        %3849 = vmatprep.subr.mxu0 0.0
        %3850 = vmatpush2.msra.mxu0 0.0
        %3851 = vmatprep.subr.mxu0 0.0
        %3852 = vmatpush2.msra.mxu0 0.0
        %3853 = vmatprep.subr.mxu0 0.0
        %3854 = vmatpush2.msra.mxu0 0.0
        %3855 = vmatprep.subr.mxu0 0.0
        %3856 = vmatpush2.msra.mxu0 0.0
        %3857 = vmatprep.subr.mxu0 0.0
        %3858 = vmatpush2.msra.mxu0 0.0
        %3859 = vmatprep.subr.mxu0 0.0
        %3860 = vmatpush2.msra.mxu0 0.0
        %3861 = vmatprep.subr.mxu0 0.0
        %3862 = vmatpush2.msra.mxu0 0.0
        %3863 = vmatprep.mubr.f32.mxu0 0.0
        %3864 = vmatmul.mubr.f32.gmra.mxu0 %v3190
        %v3865 = vpop.f32.mrf.mxu0
        %v3866 = vadd.f32 %v3148, %v3865
        %v3867 = vpop.f32.mrf.mxu0
        %v3868 = vadd.f32 %v3152, %v3867
        %3869 = vmatprep.mubr.f32.mxu0 0.0
        %3870 = vmatmul.mubr.f32.gmra.mxu0 %v3193
        %v3871 = vpop.f32.mrf.mxu0
        %v3872 = vadd.f32 %v3148, %v3871
        %v3873 = vpop.f32.mrf.mxu0
        %v3874 = vadd.f32 %v3152, %v3873
        %3875 = vmatprep.mubr.f32.mxu0 0.0
        %3876 = vmatmul.mubr.f32.gmra.mxu0 %v3196
        %v3877 = vpop.f32.mrf.mxu0
        %v3878 = vadd.f32 %v3148, %v3877
        %v3879 = vpop.f32.mrf.mxu0
        %v3880 = vadd.f32 %v3152, %v3879
        %3881 = vmatprep.mubr.f32.mxu0 0.0
        %3882 = vmatmul.mubr.f32.gmra.mxu0 %v3199
        %v3883 = vpop.f32.mrf.mxu0
        %v3884 = vadd.f32 %v3148, %v3883
        %v3885 = vpop.f32.mrf.mxu0
        %v3886 = vadd.f32 %v3152, %v3885
        %3887 = vmatprep.mubr.f32.mxu0 0.0
        %3888 = vmatmul.mubr.f32.gmra.mxu0 %v3202
        %v3889 = vpop.f32.mrf.mxu0
        %v3890 = vadd.f32 %v3148, %v3889
        %v3891 = vpop.f32.mrf.mxu0
        %v3892 = vadd.f32 %v3152, %v3891
        %3893 = vmatprep.mubr.f32.mxu0 0.0
        %3894 = vmatmul.mubr.f32.gmra.mxu0 %v3205
        %v3895 = vpop.f32.mrf.mxu0
        %v3896 = vadd.f32 %v3148, %v3895
        %v3897 = vpop.f32.mrf.mxu0
        %v3898 = vadd.f32 %v3152, %v3897
        %3899 = vmatprep.mubr.f32.mxu0 0.0
        %3900 = vmatmul.mubr.f32.gmra.mxu0 %v3208
        %v3901 = vpop.f32.mrf.mxu0
        %v3902 = vadd.f32 %v3148, %v3901
        %v3903 = vpop.f32.mrf.mxu0
        %v3904 = vadd.f32 %v3152, %v3903
        %3905 = vmatprep.mubr.f32.mxu0 0.0
        %3906 = vmatmul.mubr.f32.gmra.mxu0 %v3211
        %v3907 = vpop.f32.mrf.mxu0
        %v3908 = vadd.f32 %v3148, %v3907
        %v3909 = vpop.f32.mrf.mxu0
        %v3910 = vadd.f32 %v3152, %v3909
        %3911 = vmatprep.mubr.f32.mxu0 0.0
        %3912 = vmatmul.mubr.f32.gmra.mxu0 %v3214
        %v3913 = vpop.f32.mrf.mxu0
        %v3914 = vadd.f32 %v3148, %v3913
        %v3915 = vpop.f32.mrf.mxu0
        %v3916 = vadd.f32 %v3152, %v3915
        %3917 = vmatprep.mubr.f32.mxu0 0.0
        %3918 = vmatmul.mubr.f32.gmra.mxu0 %v3217
        %v3919 = vpop.f32.mrf.mxu0
        %v3920 = vadd.f32 %v3148, %v3919
        %v3921 = vpop.f32.mrf.mxu0
        %v3922 = vadd.f32 %v3152, %v3921
        %3923 = vmatprep.mubr.f32.mxu0 0.0
        %3924 = vmatmul.mubr.f32.gmra.mxu0 %v3220
        %v3925 = vpop.f32.mrf.mxu0
        %v3926 = vadd.f32 %v3148, %v3925
        %v3927 = vpop.f32.mrf.mxu0
        %v3928 = vadd.f32 %v3152, %v3927
        %3929 = vmatprep.mubr.f32.mxu0 0.0
        %3930 = vmatmul.mubr.f32.gmra.mxu0 %v3223
        %v3931 = vpop.f32.mrf.mxu0
        %v3932 = vadd.f32 %v3148, %v3931
        %v3933 = vpop.f32.mrf.mxu0
        %v3934 = vadd.f32 %v3152, %v3933
        %3935 = vmatprep.mubr.f32.mxu0 0.0
        %3936 = vmatmul.mubr.f32.gmra.mxu0 %v3226
        %v3937 = vpop.f32.mrf.mxu0
        %v3938 = vadd.f32 %v3148, %v3937
        %v3939 = vpop.f32.mrf.mxu0
        %v3940 = vadd.f32 %v3152, %v3939
        %3941 = vmatprep.mubr.f32.mxu0 0.0
        %3942 = vmatmul.mubr.f32.gmra.mxu0 %v3229
        %v3943 = vpop.f32.mrf.mxu0
        %v3944 = vadd.f32 %v3148, %v3943
        %v3945 = vpop.f32.mrf.mxu0
        %v3946 = vadd.f32 %v3152, %v3945
        %3947 = vmatprep.mubr.f32.mxu0 0.0
        %3948 = vmatmul.mubr.f32.gmra.mxu0 %v3232
        %v3949 = vpop.f32.mrf.mxu0
        %v3950 = vadd.f32 %v3148, %v3949
        %v3951 = vpop.f32.mrf.mxu0
        %v3952 = vadd.f32 %v3152, %v3951
        %3953 = vmatprep.mubr.f32.mxu0 0.0
        %3954 = vmatmul.mubr.f32.gmra.mxu0 %v3235
        %v3955 = vpop.f32.mrf.mxu0
        %v3956 = vadd.f32 %v3148, %v3955
        %v3957 = vpop.f32.mrf.mxu0
        %v3958 = vadd.f32 %v3152, %v3957
        %3959 = vmatprep.mubr.f32.mxu0 0.0
        %3960 = vmatmul.mubr.f32.gmra.mxu0 %v3238
        %v3961 = vpop.f32.mrf.mxu0
        %v3962 = vadd.f32 %v3148, %v3961
        %v3963 = vpop.f32.mrf.mxu0
        %v3964 = vadd.f32 %v3152, %v3963
        %3965 = vmatprep.mubr.f32.mxu0 0.0
        %3966 = vmatmul.mubr.f32.gmra.mxu0 %v3241
        %v3967 = vpop.f32.mrf.mxu0
        %v3968 = vadd.f32 %v3148, %v3967
        %v3969 = vpop.f32.mrf.mxu0
        %v3970 = vadd.f32 %v3152, %v3969
        %3971 = vmatprep.mubr.f32.mxu0 0.0
        %3972 = vmatmul.mubr.f32.gmra.mxu0 %v3244
        %v3973 = vpop.f32.mrf.mxu0
        %v3974 = vadd.f32 %v3148, %v3973
        %v3975 = vpop.f32.mrf.mxu0
        %v3976 = vadd.f32 %v3152, %v3975
        %3977 = vmatprep.mubr.f32.mxu0 0.0
        %3978 = vmatmul.mubr.f32.gmra.mxu0 %v3247
        %v3979 = vpop.f32.mrf.mxu0
        %v3980 = vadd.f32 %v3148, %v3979
        %v3981 = vpop.f32.mrf.mxu0
        %v3982 = vadd.f32 %v3152, %v3981
        %3983 = vmatprep.mubr.f32.mxu0 0.0
        %3984 = vmatmul.mubr.f32.gmra.mxu0 %v3250
        %v3985 = vpop.f32.mrf.mxu0
        %v3986 = vadd.f32 %v3148, %v3985
        %v3987 = vpop.f32.mrf.mxu0
        %v3988 = vadd.f32 %v3152, %v3987
        %3989 = vmatprep.mubr.f32.mxu0 0.0
        %3990 = vmatmul.mubr.f32.gmra.mxu0 %v3253
        %v3991 = vpop.f32.mrf.mxu0
        %v3992 = vadd.f32 %v3148, %v3991
        %v3993 = vpop.f32.mrf.mxu0
        %v3994 = vadd.f32 %v3152, %v3993
        %3995 = vmatprep.mubr.f32.mxu0 0.0
        %3996 = vmatmul.mubr.f32.gmra.mxu0 %v3256
        %v3997 = vpop.f32.mrf.mxu0
        %v3998 = vadd.f32 %v3148, %v3997
        %v3999 = vpop.f32.mrf.mxu0
        %v4000 = vadd.f32 %v3152, %v3999
        %4001 = vmatprep.mubr.f32.mxu0 0.0
        %4002 = vmatmul.mubr.f32.gmra.mxu0 %v3259
        %v4003 = vpop.f32.mrf.mxu0
        %v4004 = vadd.f32 %v3148, %v4003
        %v4005 = vpop.f32.mrf.mxu0
        %v4006 = vadd.f32 %v3152, %v4005
        %4007 = vmatprep.mubr.f32.mxu0 0.0
        %4008 = vmatmul.mubr.f32.gmra.mxu0 %v3262
        %v4009 = vpop.f32.mrf.mxu0
        %v4010 = vadd.f32 %v3148, %v4009
        %v4011 = vpop.f32.mrf.mxu0
        %v4012 = vadd.f32 %v3152, %v4011
        %4013 = vmatprep.mubr.f32.mxu0 0.0
        %4014 = vmatmul.mubr.f32.gmra.mxu0 %v3265
        %v4015 = vpop.f32.mrf.mxu0
        %v4016 = vadd.f32 %v3148, %v4015
        %v4017 = vpop.f32.mrf.mxu0
        %v4018 = vadd.f32 %v3152, %v4017
        %4019 = vmatprep.mubr.f32.mxu0 0.0
        %4020 = vmatmul.mubr.f32.gmra.mxu0 %v3268
        %v4021 = vpop.f32.mrf.mxu0
        %v4022 = vadd.f32 %v3148, %v4021
        %v4023 = vpop.f32.mrf.mxu0
        %v4024 = vadd.f32 %v3152, %v4023
        %4025 = vmatprep.mubr.f32.mxu0 0.0
        %4026 = vmatmul.mubr.f32.gmra.mxu0 %v3271
        %v4027 = vpop.f32.mrf.mxu0
        %v4028 = vadd.f32 %v3148, %v4027
        %v4029 = vpop.f32.mrf.mxu0
        %v4030 = vadd.f32 %v3152, %v4029
        %4031 = vmatprep.mubr.f32.mxu0 0.0
        %4032 = vmatmul.mubr.f32.gmra.mxu0 %v3274
        %v4033 = vpop.f32.mrf.mxu0
        %v4034 = vadd.f32 %v3148, %v4033
        %v4035 = vpop.f32.mrf.mxu0
        %v4036 = vadd.f32 %v3152, %v4035
        %4037 = vmatprep.mubr.f32.mxu0 0.0
        %4038 = vmatmul.mubr.f32.gmra.mxu0 %v3277
        %v4039 = vpop.f32.mrf.mxu0
        %v4040 = vadd.f32 %v3148, %v4039
        %v4041 = vpop.f32.mrf.mxu0
        %v4042 = vadd.f32 %v3152, %v4041
        %4043 = vmatprep.mubr.f32.mxu0 0.0
        %4044 = vmatmul.mubr.f32.gmra.mxu0 %v3280
        %v4045 = vpop.f32.mrf.mxu0
        %v4046 = vadd.f32 %v3148, %v4045
        %v4047 = vpop.f32.mrf.mxu0
        %v4048 = vadd.f32 %v3152, %v4047
        %4049 = vmatprep.mubr.f32.mxu0 0.0
        %4050 = vmatmul.mubr.f32.gmra.mxu0 %v3283
        %v4051 = vpop.f32.mrf.mxu0
        %v4052 = vadd.f32 %v3148, %v4051
        %v4053 = vpop.f32.mrf.mxu0
        %v4054 = vadd.f32 %v3152, %v4053
        %4055 = vdwg.mxu0
        %4056 = vmatprep.subr.mxu0 0.0
        %4057 = vmatpush1.msra.mxu0 0.0
        %4058 = vmatprep.subr.mxu0 0.0
        %4059 = vmatpush1.msra.mxu0 0.0
        %4060 = vmatprep.subr.mxu0 0.0
        %4061 = vmatpush1.msra.mxu0 0.0
        %4062 = vmatprep.subr.mxu0 0.0
        %4063 = vmatpush1.msra.mxu0 0.0
        %4064 = vmatprep.subr.mxu0 0.0
        %4065 = vmatpush1.msra.mxu0 0.0
        %4066 = vmatprep.subr.mxu0 0.0
        %4067 = vmatpush1.msra.mxu0 0.0
        %4068 = vmatprep.subr.mxu0 0.0
        %4069 = vmatpush1.msra.mxu0 0.0
        %4070 = vmatprep.subr.mxu0 0.0
        %4071 = vmatpush1.msra.mxu0 0.0
        %4072 = vmatprep.subr.mxu0 0.0
        %4073 = vmatpush1.msra.mxu0 0.0
        %4074 = vmatprep.subr.mxu0 0.0
        %4075 = vmatpush1.msra.mxu0 0.0
        %4076 = vmatprep.subr.mxu0 0.0
        %4077 = vmatpush1.msra.mxu0 0.0
        %4078 = vmatprep.subr.mxu0 0.0
        %4079 = vmatpush1.msra.mxu0 0.0
        %4080 = vmatprep.subr.mxu0 %v3120
        %4081 = vmatpush1.msra.mxu0 %v3119
        %4082 = vmatprep.subr.mxu0 %v3108
        %4083 = vmatpush1.msra.mxu0 %v3107
        %4084 = vmatprep.subr.mxu0 %v3096
        %4085 = vmatpush1.msra.mxu0 %v3095
        %4086 = vmatprep.subr.mxu0 %v3084
        %4087 = vmatpush1.msra.mxu0 %v3083
        %4088 = vmatprep.subr.mxu0 0.0
        %4089 = vmatpush2.msra.mxu0 0.0
        %4090 = vmatprep.subr.mxu0 0.0
        %4091 = vmatpush2.msra.mxu0 0.0
        %4092 = vmatprep.subr.mxu0 0.0
        %4093 = vmatpush2.msra.mxu0 0.0
        %4094 = vmatprep.subr.mxu0 0.0
        %4095 = vmatpush2.msra.mxu0 0.0
        %4096 = vmatprep.subr.mxu0 0.0
        %4097 = vmatpush2.msra.mxu0 0.0
        %4098 = vmatprep.subr.mxu0 0.0
        %4099 = vmatpush2.msra.mxu0 0.0
        %4100 = vmatprep.subr.mxu0 0.0
        %4101 = vmatpush2.msra.mxu0 0.0
        %4102 = vmatprep.subr.mxu0 0.0
        %4103 = vmatpush2.msra.mxu0 0.0
        %4104 = vmatprep.subr.mxu0 0.0
        %4105 = vmatpush2.msra.mxu0 0.0
        %4106 = vmatprep.subr.mxu0 0.0
        %4107 = vmatpush2.msra.mxu0 0.0
        %4108 = vmatprep.subr.mxu0 0.0
        %4109 = vmatpush2.msra.mxu0 0.0
        %4110 = vmatprep.subr.mxu0 0.0
        %4111 = vmatpush2.msra.mxu0 0.0
        %4112 = vmatprep.subr.mxu0 0.0
        %4113 = vmatpush2.msra.mxu0 0.0
        %4114 = vmatprep.subr.mxu0 0.0
        %4115 = vmatpush2.msra.mxu0 0.0
        %4116 = vmatprep.subr.mxu0 0.0
        %4117 = vmatpush2.msra.mxu0 0.0
        %4118 = vmatprep.subr.mxu0 0.0
        %4119 = vmatpush2.msra.mxu0 0.0
        %4120 = vmatprep.mubr.f32.mxu0 0.0
        %4121 = vmatmul.mubr.f32.gmra.mxu0 %v3190
        %v4122 = vpop.f32.mrf.mxu0
        %v4123 = vadd.f32 %v3156, %v4122
        %v4124 = vpop.f32.mrf.mxu0
        %v4125 = vadd.f32 %v3160, %v4124
        %4126 = vmatprep.mubr.f32.mxu0 0.0
        %4127 = vmatmul.mubr.f32.gmra.mxu0 %v3193
        %v4128 = vpop.f32.mrf.mxu0
        %v4129 = vadd.f32 %v3156, %v4128
        %v4130 = vpop.f32.mrf.mxu0
        %v4131 = vadd.f32 %v3160, %v4130
        %4132 = vmatprep.mubr.f32.mxu0 0.0
        %4133 = vmatmul.mubr.f32.gmra.mxu0 %v3196
        %v4134 = vpop.f32.mrf.mxu0
        %v4135 = vadd.f32 %v3156, %v4134
        %v4136 = vpop.f32.mrf.mxu0
        %v4137 = vadd.f32 %v3160, %v4136
        %4138 = vmatprep.mubr.f32.mxu0 0.0
        %4139 = vmatmul.mubr.f32.gmra.mxu0 %v3199
        %v4140 = vpop.f32.mrf.mxu0
        %v4141 = vadd.f32 %v3156, %v4140
        %v4142 = vpop.f32.mrf.mxu0
        %v4143 = vadd.f32 %v3160, %v4142
        %4144 = vmatprep.mubr.f32.mxu0 0.0
        %4145 = vmatmul.mubr.f32.gmra.mxu0 %v3202
        %v4146 = vpop.f32.mrf.mxu0
        %v4147 = vadd.f32 %v3156, %v4146
        %v4148 = vpop.f32.mrf.mxu0
        %v4149 = vadd.f32 %v3160, %v4148
        %4150 = vmatprep.mubr.f32.mxu0 0.0
        %4151 = vmatmul.mubr.f32.gmra.mxu0 %v3205
        %v4152 = vpop.f32.mrf.mxu0
        %v4153 = vadd.f32 %v3156, %v4152
        %v4154 = vpop.f32.mrf.mxu0
        %v4155 = vadd.f32 %v3160, %v4154
        %4156 = vmatprep.mubr.f32.mxu0 0.0
        %4157 = vmatmul.mubr.f32.gmra.mxu0 %v3208
        %v4158 = vpop.f32.mrf.mxu0
        %v4159 = vadd.f32 %v3156, %v4158
        %v4160 = vpop.f32.mrf.mxu0
        %v4161 = vadd.f32 %v3160, %v4160
        %4162 = vmatprep.mubr.f32.mxu0 0.0
        %4163 = vmatmul.mubr.f32.gmra.mxu0 %v3211
        %v4164 = vpop.f32.mrf.mxu0
        %v4165 = vadd.f32 %v3156, %v4164
        %v4166 = vpop.f32.mrf.mxu0
        %v4167 = vadd.f32 %v3160, %v4166
        %4168 = vmatprep.mubr.f32.mxu0 0.0
        %4169 = vmatmul.mubr.f32.gmra.mxu0 %v3214
        %v4170 = vpop.f32.mrf.mxu0
        %v4171 = vadd.f32 %v3156, %v4170
        %v4172 = vpop.f32.mrf.mxu0
        %v4173 = vadd.f32 %v3160, %v4172
        %4174 = vmatprep.mubr.f32.mxu0 0.0
        %4175 = vmatmul.mubr.f32.gmra.mxu0 %v3217
        %v4176 = vpop.f32.mrf.mxu0
        %v4177 = vadd.f32 %v3156, %v4176
        %v4178 = vpop.f32.mrf.mxu0
        %v4179 = vadd.f32 %v3160, %v4178
        %4180 = vmatprep.mubr.f32.mxu0 0.0
        %4181 = vmatmul.mubr.f32.gmra.mxu0 %v3220
        %v4182 = vpop.f32.mrf.mxu0
        %v4183 = vadd.f32 %v3156, %v4182
        %v4184 = vpop.f32.mrf.mxu0
        %v4185 = vadd.f32 %v3160, %v4184
        %4186 = vmatprep.mubr.f32.mxu0 0.0
        %4187 = vmatmul.mubr.f32.gmra.mxu0 %v3223
        %v4188 = vpop.f32.mrf.mxu0
        %v4189 = vadd.f32 %v3156, %v4188
        %v4190 = vpop.f32.mrf.mxu0
        %v4191 = vadd.f32 %v3160, %v4190
        %4192 = vmatprep.mubr.f32.mxu0 0.0
        %4193 = vmatmul.mubr.f32.gmra.mxu0 %v3226
        %v4194 = vpop.f32.mrf.mxu0
        %v4195 = vadd.f32 %v3156, %v4194
        %v4196 = vpop.f32.mrf.mxu0
        %v4197 = vadd.f32 %v3160, %v4196
        %4198 = vmatprep.mubr.f32.mxu0 0.0
        %4199 = vmatmul.mubr.f32.gmra.mxu0 %v3229
        %v4200 = vpop.f32.mrf.mxu0
        %v4201 = vadd.f32 %v3156, %v4200
        %v4202 = vpop.f32.mrf.mxu0
        %v4203 = vadd.f32 %v3160, %v4202
        %4204 = vmatprep.mubr.f32.mxu0 0.0
        %4205 = vmatmul.mubr.f32.gmra.mxu0 %v3232
        %v4206 = vpop.f32.mrf.mxu0
        %v4207 = vadd.f32 %v3156, %v4206
        %v4208 = vpop.f32.mrf.mxu0
        %v4209 = vadd.f32 %v3160, %v4208
        %4210 = vmatprep.mubr.f32.mxu0 0.0
        %4211 = vmatmul.mubr.f32.gmra.mxu0 %v3235
        %v4212 = vpop.f32.mrf.mxu0
        %v4213 = vadd.f32 %v3156, %v4212
        %v4214 = vpop.f32.mrf.mxu0
        %v4215 = vadd.f32 %v3160, %v4214
        %4216 = vmatprep.mubr.f32.mxu0 0.0
        %4217 = vmatmul.mubr.f32.gmra.mxu0 %v3238
        %v4218 = vpop.f32.mrf.mxu0
        %v4219 = vadd.f32 %v3156, %v4218
        %v4220 = vpop.f32.mrf.mxu0
        %v4221 = vadd.f32 %v3160, %v4220
        %4222 = vmatprep.mubr.f32.mxu0 0.0
        %4223 = vmatmul.mubr.f32.gmra.mxu0 %v3241
        %v4224 = vpop.f32.mrf.mxu0
        %v4225 = vadd.f32 %v3156, %v4224
        %v4226 = vpop.f32.mrf.mxu0
        %v4227 = vadd.f32 %v3160, %v4226
        %4228 = vmatprep.mubr.f32.mxu0 0.0
        %4229 = vmatmul.mubr.f32.gmra.mxu0 %v3244
        %v4230 = vpop.f32.mrf.mxu0
        %v4231 = vadd.f32 %v3156, %v4230
        %v4232 = vpop.f32.mrf.mxu0
        %v4233 = vadd.f32 %v3160, %v4232
        %4234 = vmatprep.mubr.f32.mxu0 0.0
        %4235 = vmatmul.mubr.f32.gmra.mxu0 %v3247
        %v4236 = vpop.f32.mrf.mxu0
        %v4237 = vadd.f32 %v3156, %v4236
        %v4238 = vpop.f32.mrf.mxu0
        %v4239 = vadd.f32 %v3160, %v4238
        %4240 = vmatprep.mubr.f32.mxu0 0.0
        %4241 = vmatmul.mubr.f32.gmra.mxu0 %v3250
        %v4242 = vpop.f32.mrf.mxu0
        %v4243 = vadd.f32 %v3156, %v4242
        %v4244 = vpop.f32.mrf.mxu0
        %v4245 = vadd.f32 %v3160, %v4244
        %4246 = vmatprep.mubr.f32.mxu0 0.0
        %4247 = vmatmul.mubr.f32.gmra.mxu0 %v3253
        %v4248 = vpop.f32.mrf.mxu0
        %v4249 = vadd.f32 %v3156, %v4248
        %v4250 = vpop.f32.mrf.mxu0
        %v4251 = vadd.f32 %v3160, %v4250
        %4252 = vmatprep.mubr.f32.mxu0 0.0
        %4253 = vmatmul.mubr.f32.gmra.mxu0 %v3256
        %v4254 = vpop.f32.mrf.mxu0
        %v4255 = vadd.f32 %v3156, %v4254
        %v4256 = vpop.f32.mrf.mxu0
        %v4257 = vadd.f32 %v3160, %v4256
        %4258 = vmatprep.mubr.f32.mxu0 0.0
        %4259 = vmatmul.mubr.f32.gmra.mxu0 %v3259
        %v4260 = vpop.f32.mrf.mxu0
        %v4261 = vadd.f32 %v3156, %v4260
        %v4262 = vpop.f32.mrf.mxu0
        %v4263 = vadd.f32 %v3160, %v4262
        %4264 = vmatprep.mubr.f32.mxu0 0.0
        %4265 = vmatmul.mubr.f32.gmra.mxu0 %v3262
        %v4266 = vpop.f32.mrf.mxu0
        %v4267 = vadd.f32 %v3156, %v4266
        %v4268 = vpop.f32.mrf.mxu0
        %v4269 = vadd.f32 %v3160, %v4268
        %4270 = vmatprep.mubr.f32.mxu0 0.0
        %4271 = vmatmul.mubr.f32.gmra.mxu0 %v3265
        %v4272 = vpop.f32.mrf.mxu0
        %v4273 = vadd.f32 %v3156, %v4272
        %v4274 = vpop.f32.mrf.mxu0
        %v4275 = vadd.f32 %v3160, %v4274
        %4276 = vmatprep.mubr.f32.mxu0 0.0
        %4277 = vmatmul.mubr.f32.gmra.mxu0 %v3268
        %v4278 = vpop.f32.mrf.mxu0
        %v4279 = vadd.f32 %v3156, %v4278
        %v4280 = vpop.f32.mrf.mxu0
        %v4281 = vadd.f32 %v3160, %v4280
        %4282 = vmatprep.mubr.f32.mxu0 0.0
        %4283 = vmatmul.mubr.f32.gmra.mxu0 %v3271
        %v4284 = vpop.f32.mrf.mxu0
        %v4285 = vadd.f32 %v3156, %v4284
        %v4286 = vpop.f32.mrf.mxu0
        %v4287 = vadd.f32 %v3160, %v4286
        %4288 = vmatprep.mubr.f32.mxu0 0.0
        %4289 = vmatmul.mubr.f32.gmra.mxu0 %v3274
        %v4290 = vpop.f32.mrf.mxu0
        %v4291 = vadd.f32 %v3156, %v4290
        %v4292 = vpop.f32.mrf.mxu0
        %v4293 = vadd.f32 %v3160, %v4292
        %4294 = vmatprep.mubr.f32.mxu0 0.0
        %4295 = vmatmul.mubr.f32.gmra.mxu0 %v3277
        %v4296 = vpop.f32.mrf.mxu0
        %v4297 = vadd.f32 %v3156, %v4296
        %v4298 = vpop.f32.mrf.mxu0
        %v4299 = vadd.f32 %v3160, %v4298
        %4300 = vmatprep.mubr.f32.mxu0 0.0
        %4301 = vmatmul.mubr.f32.gmra.mxu0 %v3280
        %v4302 = vpop.f32.mrf.mxu0
        %v4303 = vadd.f32 %v3156, %v4302
        %v4304 = vpop.f32.mrf.mxu0
        %v4305 = vadd.f32 %v3160, %v4304
        %4306 = vmatprep.mubr.f32.mxu0 0.0
        %4307 = vmatmul.mubr.f32.gmra.mxu0 %v3283
        %v4308 = vpop.f32.mrf.mxu0
        %v4309 = vadd.f32 %v3156, %v4308
        %v4310 = vpop.f32.mrf.mxu0
        %v4311 = vadd.f32 %v3160, %v4310
        %4312 = vdwg.mxu0
        %4313 = vmatprep.subr.mxu0 0.0
        %4314 = vmatpush1.msra.mxu0 0.0
        %4315 = vmatprep.subr.mxu0 0.0
        %4316 = vmatpush1.msra.mxu0 0.0
        %4317 = vmatprep.subr.mxu0 0.0
        %4318 = vmatpush1.msra.mxu0 0.0
        %4319 = vmatprep.subr.mxu0 0.0
        %4320 = vmatpush1.msra.mxu0 0.0
        %4321 = vmatprep.subr.mxu0 0.0
        %4322 = vmatpush1.msra.mxu0 0.0
        %4323 = vmatprep.subr.mxu0 0.0
        %4324 = vmatpush1.msra.mxu0 0.0
        %4325 = vmatprep.subr.mxu0 0.0
        %4326 = vmatpush1.msra.mxu0 0.0
        %4327 = vmatprep.subr.mxu0 0.0
        %4328 = vmatpush1.msra.mxu0 0.0
        %4329 = vmatprep.subr.mxu0 0.0
        %4330 = vmatpush1.msra.mxu0 0.0
        %4331 = vmatprep.subr.mxu0 0.0
        %4332 = vmatpush1.msra.mxu0 0.0
        %4333 = vmatprep.subr.mxu0 0.0
        %4334 = vmatpush1.msra.mxu0 0.0
        %4335 = vmatprep.subr.mxu0 0.0
        %4336 = vmatpush1.msra.mxu0 0.0
        %4337 = vmatprep.subr.mxu0 %v3122
        %4338 = vmatpush1.msra.mxu0 %v3121
        %4339 = vmatprep.subr.mxu0 %v3110
        %4340 = vmatpush1.msra.mxu0 %v3109
        %4341 = vmatprep.subr.mxu0 %v3098
        %4342 = vmatpush1.msra.mxu0 %v3097
        %4343 = vmatprep.subr.mxu0 %v3086
        %4344 = vmatpush1.msra.mxu0 %v3085
        %4345 = vmatprep.subr.mxu0 0.0
        %4346 = vmatpush2.msra.mxu0 0.0
        %4347 = vmatprep.subr.mxu0 0.0
        %4348 = vmatpush2.msra.mxu0 0.0
        %4349 = vmatprep.subr.mxu0 0.0
        %4350 = vmatpush2.msra.mxu0 0.0
        %4351 = vmatprep.subr.mxu0 0.0
        %4352 = vmatpush2.msra.mxu0 0.0
        %4353 = vmatprep.subr.mxu0 0.0
        %4354 = vmatpush2.msra.mxu0 0.0
        %4355 = vmatprep.subr.mxu0 0.0
        %4356 = vmatpush2.msra.mxu0 0.0
        %4357 = vmatprep.subr.mxu0 0.0
        %4358 = vmatpush2.msra.mxu0 0.0
        %4359 = vmatprep.subr.mxu0 0.0
        %4360 = vmatpush2.msra.mxu0 0.0
        %4361 = vmatprep.subr.mxu0 0.0
        %4362 = vmatpush2.msra.mxu0 0.0
        %4363 = vmatprep.subr.mxu0 0.0
        %4364 = vmatpush2.msra.mxu0 0.0
        %4365 = vmatprep.subr.mxu0 0.0
        %4366 = vmatpush2.msra.mxu0 0.0
        %4367 = vmatprep.subr.mxu0 0.0
        %4368 = vmatpush2.msra.mxu0 0.0
        %4369 = vmatprep.subr.mxu0 0.0
        %4370 = vmatpush2.msra.mxu0 0.0
        %4371 = vmatprep.subr.mxu0 0.0
        %4372 = vmatpush2.msra.mxu0 0.0
        %4373 = vmatprep.subr.mxu0 0.0
        %4374 = vmatpush2.msra.mxu0 0.0
        %4375 = vmatprep.subr.mxu0 0.0
        %4376 = vmatpush2.msra.mxu0 0.0
        %4377 = vmatprep.mubr.f32.mxu0 0.0
        %4378 = vmatmul.mubr.f32.gmra.mxu0 %v3190
        %v4379 = vpop.f32.mrf.mxu0
        %v4380 = vadd.f32 %v3164, %v4379
        %v4381 = vpop.f32.mrf.mxu0
        %v4382 = vadd.f32 %v3168, %v4381
        %4383 = vmatprep.mubr.f32.mxu0 0.0
        %4384 = vmatmul.mubr.f32.gmra.mxu0 %v3193
        %v4385 = vpop.f32.mrf.mxu0
        %v4386 = vadd.f32 %v3164, %v4385
        %v4387 = vpop.f32.mrf.mxu0
        %v4388 = vadd.f32 %v3168, %v4387
        %4389 = vmatprep.mubr.f32.mxu0 0.0
        %4390 = vmatmul.mubr.f32.gmra.mxu0 %v3196
        %v4391 = vpop.f32.mrf.mxu0
        %v4392 = vadd.f32 %v3164, %v4391
        %v4393 = vpop.f32.mrf.mxu0
        %v4394 = vadd.f32 %v3168, %v4393
        %4395 = vmatprep.mubr.f32.mxu0 0.0
        %4396 = vmatmul.mubr.f32.gmra.mxu0 %v3199
        %v4397 = vpop.f32.mrf.mxu0
        %v4398 = vadd.f32 %v3164, %v4397
        %v4399 = vpop.f32.mrf.mxu0
        %v4400 = vadd.f32 %v3168, %v4399
        %4401 = vmatprep.mubr.f32.mxu0 0.0
        %4402 = vmatmul.mubr.f32.gmra.mxu0 %v3202
        %v4403 = vpop.f32.mrf.mxu0
        %v4404 = vadd.f32 %v3164, %v4403
        %v4405 = vpop.f32.mrf.mxu0
        %v4406 = vadd.f32 %v3168, %v4405
        %4407 = vmatprep.mubr.f32.mxu0 0.0
        %4408 = vmatmul.mubr.f32.gmra.mxu0 %v3205
        %v4409 = vpop.f32.mrf.mxu0
        %v4410 = vadd.f32 %v3164, %v4409
        %v4411 = vpop.f32.mrf.mxu0
        %v4412 = vadd.f32 %v3168, %v4411
        %4413 = vmatprep.mubr.f32.mxu0 0.0
        %4414 = vmatmul.mubr.f32.gmra.mxu0 %v3208
        %v4415 = vpop.f32.mrf.mxu0
        %v4416 = vadd.f32 %v3164, %v4415
        %v4417 = vpop.f32.mrf.mxu0
        %v4418 = vadd.f32 %v3168, %v4417
        %4419 = vmatprep.mubr.f32.mxu0 0.0
        %4420 = vmatmul.mubr.f32.gmra.mxu0 %v3211
        %v4421 = vpop.f32.mrf.mxu0
        %v4422 = vadd.f32 %v3164, %v4421
        %v4423 = vpop.f32.mrf.mxu0
        %v4424 = vadd.f32 %v3168, %v4423
        %4425 = vmatprep.mubr.f32.mxu0 0.0
        %4426 = vmatmul.mubr.f32.gmra.mxu0 %v3214
        %v4427 = vpop.f32.mrf.mxu0
        %v4428 = vadd.f32 %v3164, %v4427
        %v4429 = vpop.f32.mrf.mxu0
        %v4430 = vadd.f32 %v3168, %v4429
        %4431 = vmatprep.mubr.f32.mxu0 0.0
        %4432 = vmatmul.mubr.f32.gmra.mxu0 %v3217
        %v4433 = vpop.f32.mrf.mxu0
        %v4434 = vadd.f32 %v3164, %v4433
        %v4435 = vpop.f32.mrf.mxu0
        %v4436 = vadd.f32 %v3168, %v4435
        %4437 = vmatprep.mubr.f32.mxu0 0.0
        %4438 = vmatmul.mubr.f32.gmra.mxu0 %v3220
        %v4439 = vpop.f32.mrf.mxu0
        %v4440 = vadd.f32 %v3164, %v4439
        %v4441 = vpop.f32.mrf.mxu0
        %v4442 = vadd.f32 %v3168, %v4441
        %4443 = vmatprep.mubr.f32.mxu0 0.0
        %4444 = vmatmul.mubr.f32.gmra.mxu0 %v3223
        %v4445 = vpop.f32.mrf.mxu0
        %v4446 = vadd.f32 %v3164, %v4445
        %v4447 = vpop.f32.mrf.mxu0
        %v4448 = vadd.f32 %v3168, %v4447
        %4449 = vmatprep.mubr.f32.mxu0 0.0
        %4450 = vmatmul.mubr.f32.gmra.mxu0 %v3226
        %v4451 = vpop.f32.mrf.mxu0
        %v4452 = vadd.f32 %v3164, %v4451
        %v4453 = vpop.f32.mrf.mxu0
        %v4454 = vadd.f32 %v3168, %v4453
        %4455 = vmatprep.mubr.f32.mxu0 0.0
        %4456 = vmatmul.mubr.f32.gmra.mxu0 %v3229
        %v4457 = vpop.f32.mrf.mxu0
        %v4458 = vadd.f32 %v3164, %v4457
        %v4459 = vpop.f32.mrf.mxu0
        %v4460 = vadd.f32 %v3168, %v4459
        %4461 = vmatprep.mubr.f32.mxu0 0.0
        %4462 = vmatmul.mubr.f32.gmra.mxu0 %v3232
        %v4463 = vpop.f32.mrf.mxu0
        %v4464 = vadd.f32 %v3164, %v4463
        %v4465 = vpop.f32.mrf.mxu0
        %v4466 = vadd.f32 %v3168, %v4465
        %4467 = vmatprep.mubr.f32.mxu0 0.0
        %4468 = vmatmul.mubr.f32.gmra.mxu0 %v3235
        %v4469 = vpop.f32.mrf.mxu0
        %v4470 = vadd.f32 %v3164, %v4469
        %v4471 = vpop.f32.mrf.mxu0
        %v4472 = vadd.f32 %v3168, %v4471
        %4473 = vmatprep.mubr.f32.mxu0 0.0
        %4474 = vmatmul.mubr.f32.gmra.mxu0 %v3238
        %v4475 = vpop.f32.mrf.mxu0
        %v4476 = vadd.f32 %v3164, %v4475
        %v4477 = vpop.f32.mrf.mxu0
        %v4478 = vadd.f32 %v3168, %v4477
        %4479 = vmatprep.mubr.f32.mxu0 0.0
        %4480 = vmatmul.mubr.f32.gmra.mxu0 %v3241
        %v4481 = vpop.f32.mrf.mxu0
        %v4482 = vadd.f32 %v3164, %v4481
        %v4483 = vpop.f32.mrf.mxu0
        %v4484 = vadd.f32 %v3168, %v4483
        %4485 = vmatprep.mubr.f32.mxu0 0.0
        %4486 = vmatmul.mubr.f32.gmra.mxu0 %v3244
        %v4487 = vpop.f32.mrf.mxu0
        %v4488 = vadd.f32 %v3164, %v4487
        %v4489 = vpop.f32.mrf.mxu0
        %v4490 = vadd.f32 %v3168, %v4489
        %4491 = vmatprep.mubr.f32.mxu0 0.0
        %4492 = vmatmul.mubr.f32.gmra.mxu0 %v3247
        %v4493 = vpop.f32.mrf.mxu0
        %v4494 = vadd.f32 %v3164, %v4493
        %v4495 = vpop.f32.mrf.mxu0
        %v4496 = vadd.f32 %v3168, %v4495
        %4497 = vmatprep.mubr.f32.mxu0 0.0
        %4498 = vmatmul.mubr.f32.gmra.mxu0 %v3250
        %v4499 = vpop.f32.mrf.mxu0
        %v4500 = vadd.f32 %v3164, %v4499
        %v4501 = vpop.f32.mrf.mxu0
        %v4502 = vadd.f32 %v3168, %v4501
        %4503 = vmatprep.mubr.f32.mxu0 0.0
        %4504 = vmatmul.mubr.f32.gmra.mxu0 %v3253
        %v4505 = vpop.f32.mrf.mxu0
        %v4506 = vadd.f32 %v3164, %v4505
        %v4507 = vpop.f32.mrf.mxu0
        %v4508 = vadd.f32 %v3168, %v4507
        %4509 = vmatprep.mubr.f32.mxu0 0.0
        %4510 = vmatmul.mubr.f32.gmra.mxu0 %v3256
        %v4511 = vpop.f32.mrf.mxu0
        %v4512 = vadd.f32 %v3164, %v4511
        %v4513 = vpop.f32.mrf.mxu0
        %v4514 = vadd.f32 %v3168, %v4513
        %4515 = vmatprep.mubr.f32.mxu0 0.0
        %4516 = vmatmul.mubr.f32.gmra.mxu0 %v3259
        %v4517 = vpop.f32.mrf.mxu0
        %v4518 = vadd.f32 %v3164, %v4517
        %v4519 = vpop.f32.mrf.mxu0
        %v4520 = vadd.f32 %v3168, %v4519
        %4521 = vmatprep.mubr.f32.mxu0 0.0
        %4522 = vmatmul.mubr.f32.gmra.mxu0 %v3262
        %v4523 = vpop.f32.mrf.mxu0
        %v4524 = vadd.f32 %v3164, %v4523
        %v4525 = vpop.f32.mrf.mxu0
        %v4526 = vadd.f32 %v3168, %v4525
        %4527 = vmatprep.mubr.f32.mxu0 0.0
        %4528 = vmatmul.mubr.f32.gmra.mxu0 %v3265
        %v4529 = vpop.f32.mrf.mxu0
        %v4530 = vadd.f32 %v3164, %v4529
        %v4531 = vpop.f32.mrf.mxu0
        %v4532 = vadd.f32 %v3168, %v4531
        %4533 = vmatprep.mubr.f32.mxu0 0.0
        %4534 = vmatmul.mubr.f32.gmra.mxu0 %v3268
        %v4535 = vpop.f32.mrf.mxu0
        %v4536 = vadd.f32 %v3164, %v4535
        %v4537 = vpop.f32.mrf.mxu0
        %v4538 = vadd.f32 %v3168, %v4537
        %4539 = vmatprep.mubr.f32.mxu0 0.0
        %4540 = vmatmul.mubr.f32.gmra.mxu0 %v3271
        %v4541 = vpop.f32.mrf.mxu0
        %v4542 = vadd.f32 %v3164, %v4541
        %v4543 = vpop.f32.mrf.mxu0
        %v4544 = vadd.f32 %v3168, %v4543
        %4545 = vmatprep.mubr.f32.mxu0 0.0
        %4546 = vmatmul.mubr.f32.gmra.mxu0 %v3274
        %v4547 = vpop.f32.mrf.mxu0
        %v4548 = vadd.f32 %v3164, %v4547
        %v4549 = vpop.f32.mrf.mxu0
        %v4550 = vadd.f32 %v3168, %v4549
        %4551 = vmatprep.mubr.f32.mxu0 0.0
        %4552 = vmatmul.mubr.f32.gmra.mxu0 %v3277
        %v4553 = vpop.f32.mrf.mxu0
        %v4554 = vadd.f32 %v3164, %v4553
        %v4555 = vpop.f32.mrf.mxu0
        %v4556 = vadd.f32 %v3168, %v4555
        %4557 = vmatprep.mubr.f32.mxu0 0.0
        %4558 = vmatmul.mubr.f32.gmra.mxu0 %v3280
        %v4559 = vpop.f32.mrf.mxu0
        %v4560 = vadd.f32 %v3164, %v4559
        %v4561 = vpop.f32.mrf.mxu0
        %v4562 = vadd.f32 %v3168, %v4561
        %4563 = vmatprep.mubr.f32.mxu0 0.0
        %4564 = vmatmul.mubr.f32.gmra.mxu0 %v3283
        %v4565 = vpop.f32.mrf.mxu0
        %v4566 = vadd.f32 %v3164, %v4565
        %v4567 = vpop.f32.mrf.mxu0
        %v4568 = vadd.f32 %v3168, %v4567
        %4569 = vdwg.mxu0
        %4570 = vmatprep.subr.mxu0 0.0
        %4571 = vmatpush1.msra.mxu0 0.0
        %4572 = vmatprep.subr.mxu0 0.0
        %4573 = vmatpush1.msra.mxu0 0.0
        %4574 = vmatprep.subr.mxu0 0.0
        %4575 = vmatpush1.msra.mxu0 0.0
        %4576 = vmatprep.subr.mxu0 0.0
        %4577 = vmatpush1.msra.mxu0 0.0
        %4578 = vmatprep.subr.mxu0 0.0
        %4579 = vmatpush1.msra.mxu0 0.0
        %4580 = vmatprep.subr.mxu0 0.0
        %4581 = vmatpush1.msra.mxu0 0.0
        %4582 = vmatprep.subr.mxu0 0.0
        %4583 = vmatpush1.msra.mxu0 0.0
        %4584 = vmatprep.subr.mxu0 0.0
        %4585 = vmatpush1.msra.mxu0 0.0
        %4586 = vmatprep.subr.mxu0 0.0
        %4587 = vmatpush1.msra.mxu0 0.0
        %4588 = vmatprep.subr.mxu0 0.0
        %4589 = vmatpush1.msra.mxu0 0.0
        %4590 = vmatprep.subr.mxu0 0.0
        %4591 = vmatpush1.msra.mxu0 0.0
        %4592 = vmatprep.subr.mxu0 0.0
        %4593 = vmatpush1.msra.mxu0 0.0
        %4594 = vmatprep.subr.mxu0 %v3124
        %4595 = vmatpush1.msra.mxu0 %v3123
        %4596 = vmatprep.subr.mxu0 %v3112
        %4597 = vmatpush1.msra.mxu0 %v3111
        %4598 = vmatprep.subr.mxu0 %v3100
        %4599 = vmatpush1.msra.mxu0 %v3099
        %4600 = vmatprep.subr.mxu0 %v3088
        %4601 = vmatpush1.msra.mxu0 %v3087
        %4602 = vmatprep.subr.mxu0 0.0
        %4603 = vmatpush2.msra.mxu0 0.0
        %4604 = vmatprep.subr.mxu0 0.0
        %4605 = vmatpush2.msra.mxu0 0.0
        %4606 = vmatprep.subr.mxu0 0.0
        %4607 = vmatpush2.msra.mxu0 0.0
        %4608 = vmatprep.subr.mxu0 0.0
        %4609 = vmatpush2.msra.mxu0 0.0
        %4610 = vmatprep.subr.mxu0 0.0
        %4611 = vmatpush2.msra.mxu0 0.0
        %4612 = vmatprep.subr.mxu0 0.0
        %4613 = vmatpush2.msra.mxu0 0.0
        %4614 = vmatprep.subr.mxu0 0.0
        %4615 = vmatpush2.msra.mxu0 0.0
        %4616 = vmatprep.subr.mxu0 0.0
        %4617 = vmatpush2.msra.mxu0 0.0
        %4618 = vmatprep.subr.mxu0 0.0
        %4619 = vmatpush2.msra.mxu0 0.0
        %4620 = vmatprep.subr.mxu0 0.0
        %4621 = vmatpush2.msra.mxu0 0.0
        %4622 = vmatprep.subr.mxu0 0.0
        %4623 = vmatpush2.msra.mxu0 0.0
        %4624 = vmatprep.subr.mxu0 0.0
        %4625 = vmatpush2.msra.mxu0 0.0
        %4626 = vmatprep.subr.mxu0 0.0
        %4627 = vmatpush2.msra.mxu0 0.0
        %4628 = vmatprep.subr.mxu0 0.0
        %4629 = vmatpush2.msra.mxu0 0.0
        %4630 = vmatprep.subr.mxu0 0.0
        %4631 = vmatpush2.msra.mxu0 0.0
        %4632 = vmatprep.subr.mxu0 0.0
        %4633 = vmatpush2.msra.mxu0 0.0
        %4634 = vmatprep.mubr.f32.mxu0 0.0
        %4635 = vmatmul.mubr.f32.gmra.mxu0 %v3190
        %v4636 = vpop.f32.mrf.mxu0
        %v4637 = vadd.f32 %v3172, %v4636
        %v4638 = vpop.f32.mrf.mxu0
        %v4639 = vadd.f32 %v3176, %v4638
        %4640 = vmatprep.mubr.f32.mxu0 0.0
        %4641 = vmatmul.mubr.f32.gmra.mxu0 %v3193
        %v4642 = vpop.f32.mrf.mxu0
        %v4643 = vadd.f32 %v3172, %v4642
        %v4644 = vpop.f32.mrf.mxu0
        %v4645 = vadd.f32 %v3176, %v4644
        %4646 = vmatprep.mubr.f32.mxu0 0.0
        %4647 = vmatmul.mubr.f32.gmra.mxu0 %v3196
        %v4648 = vpop.f32.mrf.mxu0
        %v4649 = vadd.f32 %v3172, %v4648
        %v4650 = vpop.f32.mrf.mxu0
        %v4651 = vadd.f32 %v3176, %v4650
        %4652 = vmatprep.mubr.f32.mxu0 0.0
        %4653 = vmatmul.mubr.f32.gmra.mxu0 %v3199
        %v4654 = vpop.f32.mrf.mxu0
        %v4655 = vadd.f32 %v3172, %v4654
        %v4656 = vpop.f32.mrf.mxu0
        %v4657 = vadd.f32 %v3176, %v4656
        %4658 = vmatprep.mubr.f32.mxu0 0.0
        %4659 = vmatmul.mubr.f32.gmra.mxu0 %v3202
        %v4660 = vpop.f32.mrf.mxu0
        %v4661 = vadd.f32 %v3172, %v4660
        %v4662 = vpop.f32.mrf.mxu0
        %v4663 = vadd.f32 %v3176, %v4662
        %4664 = vmatprep.mubr.f32.mxu0 0.0
        %4665 = vmatmul.mubr.f32.gmra.mxu0 %v3205
        %v4666 = vpop.f32.mrf.mxu0
        %v4667 = vadd.f32 %v3172, %v4666
        %v4668 = vpop.f32.mrf.mxu0
        %v4669 = vadd.f32 %v3176, %v4668
        %4670 = vmatprep.mubr.f32.mxu0 0.0
        %4671 = vmatmul.mubr.f32.gmra.mxu0 %v3208
        %v4672 = vpop.f32.mrf.mxu0
        %v4673 = vadd.f32 %v3172, %v4672
        %v4674 = vpop.f32.mrf.mxu0
        %v4675 = vadd.f32 %v3176, %v4674
        %4676 = vmatprep.mubr.f32.mxu0 0.0
        %4677 = vmatmul.mubr.f32.gmra.mxu0 %v3211
        %v4678 = vpop.f32.mrf.mxu0
        %v4679 = vadd.f32 %v3172, %v4678
        %v4680 = vpop.f32.mrf.mxu0
        %v4681 = vadd.f32 %v3176, %v4680
        %4682 = vmatprep.mubr.f32.mxu0 0.0
        %4683 = vmatmul.mubr.f32.gmra.mxu0 %v3214
        %v4684 = vpop.f32.mrf.mxu0
        %v4685 = vadd.f32 %v3172, %v4684
        %v4686 = vpop.f32.mrf.mxu0
        %v4687 = vadd.f32 %v3176, %v4686
        %4688 = vmatprep.mubr.f32.mxu0 0.0
        %4689 = vmatmul.mubr.f32.gmra.mxu0 %v3217
        %v4690 = vpop.f32.mrf.mxu0
        %v4691 = vadd.f32 %v3172, %v4690
        %v4692 = vpop.f32.mrf.mxu0
        %v4693 = vadd.f32 %v3176, %v4692
        %4694 = vmatprep.mubr.f32.mxu0 0.0
        %4695 = vmatmul.mubr.f32.gmra.mxu0 %v3220
        %v4696 = vpop.f32.mrf.mxu0
        %v4697 = vadd.f32 %v3172, %v4696
        %v4698 = vpop.f32.mrf.mxu0
        %v4699 = vadd.f32 %v3176, %v4698
        %4700 = vmatprep.mubr.f32.mxu0 0.0
        %4701 = vmatmul.mubr.f32.gmra.mxu0 %v3223
        %v4702 = vpop.f32.mrf.mxu0
        %v4703 = vadd.f32 %v3172, %v4702
        %v4704 = vpop.f32.mrf.mxu0
        %v4705 = vadd.f32 %v3176, %v4704
        %4706 = vmatprep.mubr.f32.mxu0 0.0
        %4707 = vmatmul.mubr.f32.gmra.mxu0 %v3226
        %v4708 = vpop.f32.mrf.mxu0
        %v4709 = vadd.f32 %v3172, %v4708
        %v4710 = vpop.f32.mrf.mxu0
        %v4711 = vadd.f32 %v3176, %v4710
        %4712 = vmatprep.mubr.f32.mxu0 0.0
        %4713 = vmatmul.mubr.f32.gmra.mxu0 %v3229
        %v4714 = vpop.f32.mrf.mxu0
        %v4715 = vadd.f32 %v3172, %v4714
        %v4716 = vpop.f32.mrf.mxu0
        %v4717 = vadd.f32 %v3176, %v4716
        %4718 = vmatprep.mubr.f32.mxu0 0.0
        %4719 = vmatmul.mubr.f32.gmra.mxu0 %v3232
        %v4720 = vpop.f32.mrf.mxu0
        %v4721 = vadd.f32 %v3172, %v4720
        %v4722 = vpop.f32.mrf.mxu0
        %v4723 = vadd.f32 %v3176, %v4722
        %4724 = vmatprep.mubr.f32.mxu0 0.0
        %4725 = vmatmul.mubr.f32.gmra.mxu0 %v3235
        %v4726 = vpop.f32.mrf.mxu0
        %v4727 = vadd.f32 %v3172, %v4726
        %v4728 = vpop.f32.mrf.mxu0
        %v4729 = vadd.f32 %v3176, %v4728
        %4730 = vmatprep.mubr.f32.mxu0 0.0
        %4731 = vmatmul.mubr.f32.gmra.mxu0 %v3238
        %v4732 = vpop.f32.mrf.mxu0
        %v4733 = vadd.f32 %v3172, %v4732
        %v4734 = vpop.f32.mrf.mxu0
        %v4735 = vadd.f32 %v3176, %v4734
        %4736 = vmatprep.mubr.f32.mxu0 0.0
        %4737 = vmatmul.mubr.f32.gmra.mxu0 %v3241
        %v4738 = vpop.f32.mrf.mxu0
        %v4739 = vadd.f32 %v3172, %v4738
        %v4740 = vpop.f32.mrf.mxu0
        %v4741 = vadd.f32 %v3176, %v4740
        %4742 = vmatprep.mubr.f32.mxu0 0.0
        %4743 = vmatmul.mubr.f32.gmra.mxu0 %v3244
        %v4744 = vpop.f32.mrf.mxu0
        %v4745 = vadd.f32 %v3172, %v4744
        %v4746 = vpop.f32.mrf.mxu0
        %v4747 = vadd.f32 %v3176, %v4746
        %4748 = vmatprep.mubr.f32.mxu0 0.0
        %4749 = vmatmul.mubr.f32.gmra.mxu0 %v3247
        %v4750 = vpop.f32.mrf.mxu0
        %v4751 = vadd.f32 %v3172, %v4750
        %v4752 = vpop.f32.mrf.mxu0
        %v4753 = vadd.f32 %v3176, %v4752
        %4754 = vmatprep.mubr.f32.mxu0 0.0
        %4755 = vmatmul.mubr.f32.gmra.mxu0 %v3250
        %v4756 = vpop.f32.mrf.mxu0
        %v4757 = vadd.f32 %v3172, %v4756
        %v4758 = vpop.f32.mrf.mxu0
        %v4759 = vadd.f32 %v3176, %v4758
        %4760 = vmatprep.mubr.f32.mxu0 0.0
        %4761 = vmatmul.mubr.f32.gmra.mxu0 %v3253
        %v4762 = vpop.f32.mrf.mxu0
        %v4763 = vadd.f32 %v3172, %v4762
        %v4764 = vpop.f32.mrf.mxu0
        %v4765 = vadd.f32 %v3176, %v4764
        %4766 = vmatprep.mubr.f32.mxu0 0.0
        %4767 = vmatmul.mubr.f32.gmra.mxu0 %v3256
        %v4768 = vpop.f32.mrf.mxu0
        %v4769 = vadd.f32 %v3172, %v4768
        %v4770 = vpop.f32.mrf.mxu0
        %v4771 = vadd.f32 %v3176, %v4770
        %4772 = vmatprep.mubr.f32.mxu0 0.0
        %4773 = vmatmul.mubr.f32.gmra.mxu0 %v3259
        %v4774 = vpop.f32.mrf.mxu0
        %v4775 = vadd.f32 %v3172, %v4774
        %v4776 = vpop.f32.mrf.mxu0
        %v4777 = vadd.f32 %v3176, %v4776
        %4778 = vmatprep.mubr.f32.mxu0 0.0
        %4779 = vmatmul.mubr.f32.gmra.mxu0 %v3262
        %v4780 = vpop.f32.mrf.mxu0
        %v4781 = vadd.f32 %v3172, %v4780
        %v4782 = vpop.f32.mrf.mxu0
        %v4783 = vadd.f32 %v3176, %v4782
        %4784 = vmatprep.mubr.f32.mxu0 0.0
        %4785 = vmatmul.mubr.f32.gmra.mxu0 %v3265
        %v4786 = vpop.f32.mrf.mxu0
        %v4787 = vadd.f32 %v3172, %v4786
        %v4788 = vpop.f32.mrf.mxu0
        %v4789 = vadd.f32 %v3176, %v4788
        %4790 = vmatprep.mubr.f32.mxu0 0.0
        %4791 = vmatmul.mubr.f32.gmra.mxu0 %v3268
        %v4792 = vpop.f32.mrf.mxu0
        %v4793 = vadd.f32 %v3172, %v4792
        %v4794 = vpop.f32.mrf.mxu0
        %v4795 = vadd.f32 %v3176, %v4794
        %4796 = vmatprep.mubr.f32.mxu0 0.0
        %4797 = vmatmul.mubr.f32.gmra.mxu0 %v3271
        %v4798 = vpop.f32.mrf.mxu0
        %v4799 = vadd.f32 %v3172, %v4798
        %v4800 = vpop.f32.mrf.mxu0
        %v4801 = vadd.f32 %v3176, %v4800
        %4802 = vmatprep.mubr.f32.mxu0 0.0
        %4803 = vmatmul.mubr.f32.gmra.mxu0 %v3274
        %v4804 = vpop.f32.mrf.mxu0
        %v4805 = vadd.f32 %v3172, %v4804
        %v4806 = vpop.f32.mrf.mxu0
        %v4807 = vadd.f32 %v3176, %v4806
        %4808 = vmatprep.mubr.f32.mxu0 0.0
        %4809 = vmatmul.mubr.f32.gmra.mxu0 %v3277
        %v4810 = vpop.f32.mrf.mxu0
        %v4811 = vadd.f32 %v3172, %v4810
        %v4812 = vpop.f32.mrf.mxu0
        %v4813 = vadd.f32 %v3176, %v4812
        %4814 = vmatprep.mubr.f32.mxu0 0.0
        %4815 = vmatmul.mubr.f32.gmra.mxu0 %v3280
        %v4816 = vpop.f32.mrf.mxu0
        %v4817 = vadd.f32 %v3172, %v4816
        %v4818 = vpop.f32.mrf.mxu0
        %v4819 = vadd.f32 %v3176, %v4818
        %4820 = vmatprep.mubr.f32.mxu0 0.0
        %4821 = vmatmul.mubr.f32.gmra.mxu0 %v3283
        %v4822 = vpop.f32.mrf.mxu0
        %v4823 = vadd.f32 %v3172, %v4822
        %v4824 = vpop.f32.mrf.mxu0
        %v4825 = vadd.f32 %v3176, %v4824
        %4826 = vdwg.mxu0
        %v4827 = vmax.f32 %v3352, 0.0
        %v4828 = vmax.f32 %v3354, 0.0
        %v4829 = vmax.f32 %v3609, 0.0
        %v4830 = vmax.f32 %v3611, 0.0
        %v4831 = vmax.f32 %v3866, 0.0
        %v4832 = vmax.f32 %v3868, 0.0
        %v4833 = vmax.f32 %v4123, 0.0
        %v4834 = vmax.f32 %v4125, 0.0
        %v4835 = vmax.f32 %v4380, 0.0
        %v4836 = vmax.f32 %v4382, 0.0
        %v4837 = vmax.f32 %v4637, 0.0
        %v4838 = vmax.f32 %v4639, 0.0
        %v4839 = vmax.f32 %v3358, 0.0
        %v4840 = vmax.f32 %v3360, 0.0
        %v4841 = vmax.f32 %v3615, 0.0
        %v4842 = vmax.f32 %v3617, 0.0
        %v4843 = vmax.f32 %v3872, 0.0
        %v4844 = vmax.f32 %v3874, 0.0
        %v4845 = vmax.f32 %v4129, 0.0
        %v4846 = vmax.f32 %v4131, 0.0
        %v4847 = vmax.f32 %v4386, 0.0
        %v4848 = vmax.f32 %v4388, 0.0
        %v4849 = vmax.f32 %v4643, 0.0
        %v4850 = vmax.f32 %v4645, 0.0
        %v4851 = vmax.f32 %v3364, 0.0
        %v4852 = vmax.f32 %v3366, 0.0
        %v4853 = vmax.f32 %v3621, 0.0
        %v4854 = vmax.f32 %v3623, 0.0
        %v4855 = vmax.f32 %v3878, 0.0
        %v4856 = vmax.f32 %v3880, 0.0
        %v4857 = vmax.f32 %v4135, 0.0
        %v4858 = vmax.f32 %v4137, 0.0
        %v4859 = vmax.f32 %v4392, 0.0
        %v4860 = vmax.f32 %v4394, 0.0
        %v4861 = vmax.f32 %v4649, 0.0
        %v4862 = vmax.f32 %v4651, 0.0
        %v4863 = vmax.f32 %v3370, 0.0
        %v4864 = vmax.f32 %v3372, 0.0
        %v4865 = vmax.f32 %v3627, 0.0
        %v4866 = vmax.f32 %v3629, 0.0
        %v4867 = vmax.f32 %v3884, 0.0
        %v4868 = vmax.f32 %v3886, 0.0
        %v4869 = vmax.f32 %v4141, 0.0
        %v4870 = vmax.f32 %v4143, 0.0
        %v4871 = vmax.f32 %v4398, 0.0
        %v4872 = vmax.f32 %v4400, 0.0
        %v4873 = vmax.f32 %v4655, 0.0
        %v4874 = vmax.f32 %v4657, 0.0
        %v4875 = vmax.f32 %v3376, 0.0
        %v4876 = vmax.f32 %v3378, 0.0
        %v4877 = vmax.f32 %v3633, 0.0
        %v4878 = vmax.f32 %v3635, 0.0
        %v4879 = vmax.f32 %v3890, 0.0
        %v4880 = vmax.f32 %v3892, 0.0
        %v4881 = vmax.f32 %v4147, 0.0
        %v4882 = vmax.f32 %v4149, 0.0
        %v4883 = vmax.f32 %v4404, 0.0
        %v4884 = vmax.f32 %v4406, 0.0
        %v4885 = vmax.f32 %v4661, 0.0
        %v4886 = vmax.f32 %v4663, 0.0
        %v4887 = vmax.f32 %v3382, 0.0
        %v4888 = vmax.f32 %v3384, 0.0
        %v4889 = vmax.f32 %v3639, 0.0
        %v4890 = vmax.f32 %v3641, 0.0
        %v4891 = vmax.f32 %v3896, 0.0
        %v4892 = vmax.f32 %v3898, 0.0
        %v4893 = vmax.f32 %v4153, 0.0
        %v4894 = vmax.f32 %v4155, 0.0
        %v4895 = vmax.f32 %v4410, 0.0
        %v4896 = vmax.f32 %v4412, 0.0
        %v4897 = vmax.f32 %v4667, 0.0
        %v4898 = vmax.f32 %v4669, 0.0
        %v4899 = vmax.f32 %v3388, 0.0
        %v4900 = vmax.f32 %v3390, 0.0
        %v4901 = vmax.f32 %v3645, 0.0
        %v4902 = vmax.f32 %v3647, 0.0
        %v4903 = vmax.f32 %v3902, 0.0
        %v4904 = vmax.f32 %v3904, 0.0
        %v4905 = vmax.f32 %v4159, 0.0
        %v4906 = vmax.f32 %v4161, 0.0
        %v4907 = vmax.f32 %v4416, 0.0
        %v4908 = vmax.f32 %v4418, 0.0
        %v4909 = vmax.f32 %v4673, 0.0
        %v4910 = vmax.f32 %v4675, 0.0
        %v4911 = vmax.f32 %v3394, 0.0
        %v4912 = vmax.f32 %v3396, 0.0
        %v4913 = vmax.f32 %v3651, 0.0
        %v4914 = vmax.f32 %v3653, 0.0
        %v4915 = vmax.f32 %v3908, 0.0
        %v4916 = vmax.f32 %v3910, 0.0
        %v4917 = vmax.f32 %v4165, 0.0
        %v4918 = vmax.f32 %v4167, 0.0
        %v4919 = vmax.f32 %v4422, 0.0
        %v4920 = vmax.f32 %v4424, 0.0
        %v4921 = vmax.f32 %v4679, 0.0
        %v4922 = vmax.f32 %v4681, 0.0
        %v4923 = vmax.f32 %v3400, 0.0
        %v4924 = vmax.f32 %v3402, 0.0
        %v4925 = vmax.f32 %v3657, 0.0
        %v4926 = vmax.f32 %v3659, 0.0
        %v4927 = vmax.f32 %v3914, 0.0
        %v4928 = vmax.f32 %v3916, 0.0
        %v4929 = vmax.f32 %v4171, 0.0
        %v4930 = vmax.f32 %v4173, 0.0
        %v4931 = vmax.f32 %v4428, 0.0
        %v4932 = vmax.f32 %v4430, 0.0
        %v4933 = vmax.f32 %v4685, 0.0
        %v4934 = vmax.f32 %v4687, 0.0
        %v4935 = vmax.f32 %v3406, 0.0
        %v4936 = vmax.f32 %v3408, 0.0
        %v4937 = vmax.f32 %v3663, 0.0
        %v4938 = vmax.f32 %v3665, 0.0
        %v4939 = vmax.f32 %v3920, 0.0
        %v4940 = vmax.f32 %v3922, 0.0
        %v4941 = vmax.f32 %v4177, 0.0
        %v4942 = vmax.f32 %v4179, 0.0
        %v4943 = vmax.f32 %v4434, 0.0
        %v4944 = vmax.f32 %v4436, 0.0
        %v4945 = vmax.f32 %v4691, 0.0
        %v4946 = vmax.f32 %v4693, 0.0
        %v4947 = vmax.f32 %v3412, 0.0
        %v4948 = vmax.f32 %v3414, 0.0
        %v4949 = vmax.f32 %v3669, 0.0
        %v4950 = vmax.f32 %v3671, 0.0
        %v4951 = vmax.f32 %v3926, 0.0
        %v4952 = vmax.f32 %v3928, 0.0
        %v4953 = vmax.f32 %v4183, 0.0
        %v4954 = vmax.f32 %v4185, 0.0
        %v4955 = vmax.f32 %v4440, 0.0
        %v4956 = vmax.f32 %v4442, 0.0
        %v4957 = vmax.f32 %v4697, 0.0
        %v4958 = vmax.f32 %v4699, 0.0
        %v4959 = vmax.f32 %v3418, 0.0
        %v4960 = vmax.f32 %v3420, 0.0
        %v4961 = vmax.f32 %v3675, 0.0
        %v4962 = vmax.f32 %v3677, 0.0
        %v4963 = vmax.f32 %v3932, 0.0
        %v4964 = vmax.f32 %v3934, 0.0
        %v4965 = vmax.f32 %v4189, 0.0
        %v4966 = vmax.f32 %v4191, 0.0
        %v4967 = vmax.f32 %v4446, 0.0
        %v4968 = vmax.f32 %v4448, 0.0
        %v4969 = vmax.f32 %v4703, 0.0
        %v4970 = vmax.f32 %v4705, 0.0
        %v4971 = vmax.f32 %v3424, 0.0
        %v4972 = vmax.f32 %v3426, 0.0
        %v4973 = vmax.f32 %v3681, 0.0
        %v4974 = vmax.f32 %v3683, 0.0
        %v4975 = vmax.f32 %v3938, 0.0
        %v4976 = vmax.f32 %v3940, 0.0
        %v4977 = vmax.f32 %v4195, 0.0
        %v4978 = vmax.f32 %v4197, 0.0
        %v4979 = vmax.f32 %v4452, 0.0
        %v4980 = vmax.f32 %v4454, 0.0
        %v4981 = vmax.f32 %v4709, 0.0
        %v4982 = vmax.f32 %v4711, 0.0
        %v4983 = vmax.f32 %v3430, 0.0
        %v4984 = vmax.f32 %v3432, 0.0
        %v4985 = vmax.f32 %v3687, 0.0
        %v4986 = vmax.f32 %v3689, 0.0
        %v4987 = vmax.f32 %v3944, 0.0
        %v4988 = vmax.f32 %v3946, 0.0
        %v4989 = vmax.f32 %v4201, 0.0
        %v4990 = vmax.f32 %v4203, 0.0
        %v4991 = vmax.f32 %v4458, 0.0
        %v4992 = vmax.f32 %v4460, 0.0
        %v4993 = vmax.f32 %v4715, 0.0
        %v4994 = vmax.f32 %v4717, 0.0
        %v4995 = vmax.f32 %v3436, 0.0
        %v4996 = vmax.f32 %v3438, 0.0
        %v4997 = vmax.f32 %v3693, 0.0
        %v4998 = vmax.f32 %v3695, 0.0
        %v4999 = vmax.f32 %v3950, 0.0
        %v5000 = vmax.f32 %v3952, 0.0
        %v5001 = vmax.f32 %v4207, 0.0
        %v5002 = vmax.f32 %v4209, 0.0
        %v5003 = vmax.f32 %v4464, 0.0
        %v5004 = vmax.f32 %v4466, 0.0
        %v5005 = vmax.f32 %v4721, 0.0
        %v5006 = vmax.f32 %v4723, 0.0
        %v5007 = vmax.f32 %v3442, 0.0
        %v5008 = vmax.f32 %v3444, 0.0
        %v5009 = vmax.f32 %v3699, 0.0
        %v5010 = vmax.f32 %v3701, 0.0
        %v5011 = vmax.f32 %v3956, 0.0
        %v5012 = vmax.f32 %v3958, 0.0
        %v5013 = vmax.f32 %v4213, 0.0
        %v5014 = vmax.f32 %v4215, 0.0
        %v5015 = vmax.f32 %v4470, 0.0
        %v5016 = vmax.f32 %v4472, 0.0
        %v5017 = vmax.f32 %v4727, 0.0
        %v5018 = vmax.f32 %v4729, 0.0
        %v5019 = vmax.f32 %v3448, 0.0
        %v5020 = vmax.f32 %v3450, 0.0
        %v5021 = vmax.f32 %v3705, 0.0
        %v5022 = vmax.f32 %v3707, 0.0
        %v5023 = vmax.f32 %v3962, 0.0
        %v5024 = vmax.f32 %v3964, 0.0
        %v5025 = vmax.f32 %v4219, 0.0
        %v5026 = vmax.f32 %v4221, 0.0
        %v5027 = vmax.f32 %v4476, 0.0
        %v5028 = vmax.f32 %v4478, 0.0
        %v5029 = vmax.f32 %v4733, 0.0
        %v5030 = vmax.f32 %v4735, 0.0
        %v5031 = vmax.f32 %v3454, 0.0
        %v5032 = vmax.f32 %v3456, 0.0
        %v5033 = vmax.f32 %v3711, 0.0
        %v5034 = vmax.f32 %v3713, 0.0
        %v5035 = vmax.f32 %v3968, 0.0
        %v5036 = vmax.f32 %v3970, 0.0
        %v5037 = vmax.f32 %v4225, 0.0
        %v5038 = vmax.f32 %v4227, 0.0
        %v5039 = vmax.f32 %v4482, 0.0
        %v5040 = vmax.f32 %v4484, 0.0
        %v5041 = vmax.f32 %v4739, 0.0
        %v5042 = vmax.f32 %v4741, 0.0
        %v5043 = vmax.f32 %v3460, 0.0
        %v5044 = vmax.f32 %v3462, 0.0
        %v5045 = vmax.f32 %v3717, 0.0
        %v5046 = vmax.f32 %v3719, 0.0
        %v5047 = vmax.f32 %v3974, 0.0
        %v5048 = vmax.f32 %v3976, 0.0
        %v5049 = vmax.f32 %v4231, 0.0
        %v5050 = vmax.f32 %v4233, 0.0
        %v5051 = vmax.f32 %v4488, 0.0
        %v5052 = vmax.f32 %v4490, 0.0
        %v5053 = vmax.f32 %v4745, 0.0
        %v5054 = vmax.f32 %v4747, 0.0
        %v5055 = vmax.f32 %v3466, 0.0
        %v5056 = vmax.f32 %v3468, 0.0
        %v5057 = vmax.f32 %v3723, 0.0
        %v5058 = vmax.f32 %v3725, 0.0
        %v5059 = vmax.f32 %v3980, 0.0
        %v5060 = vmax.f32 %v3982, 0.0
        %v5061 = vmax.f32 %v4237, 0.0
        %v5062 = vmax.f32 %v4239, 0.0
        %v5063 = vmax.f32 %v4494, 0.0
        %v5064 = vmax.f32 %v4496, 0.0
        %v5065 = vmax.f32 %v4751, 0.0
        %v5066 = vmax.f32 %v4753, 0.0
        %v5067 = vmax.f32 %v3472, 0.0
        %v5068 = vmax.f32 %v3474, 0.0
        %v5069 = vmax.f32 %v3729, 0.0
        %v5070 = vmax.f32 %v3731, 0.0
        %v5071 = vmax.f32 %v3986, 0.0
        %v5072 = vmax.f32 %v3988, 0.0
        %v5073 = vmax.f32 %v4243, 0.0
        %v5074 = vmax.f32 %v4245, 0.0
        %v5075 = vmax.f32 %v4500, 0.0
        %v5076 = vmax.f32 %v4502, 0.0
        %v5077 = vmax.f32 %v4757, 0.0
        %v5078 = vmax.f32 %v4759, 0.0
        %v5079 = vmax.f32 %v3478, 0.0
        %v5080 = vmax.f32 %v3480, 0.0
        %v5081 = vmax.f32 %v3735, 0.0
        %v5082 = vmax.f32 %v3737, 0.0
        %v5083 = vmax.f32 %v3992, 0.0
        %v5084 = vmax.f32 %v3994, 0.0
        %v5085 = vmax.f32 %v4249, 0.0
        %v5086 = vmax.f32 %v4251, 0.0
        %v5087 = vmax.f32 %v4506, 0.0
        %v5088 = vmax.f32 %v4508, 0.0
        %v5089 = vmax.f32 %v4763, 0.0
        %v5090 = vmax.f32 %v4765, 0.0
        %v5091 = vmax.f32 %v3484, 0.0
        %v5092 = vmax.f32 %v3486, 0.0
        %v5093 = vmax.f32 %v3741, 0.0
        %v5094 = vmax.f32 %v3743, 0.0
        %v5095 = vmax.f32 %v3998, 0.0
        %v5096 = vmax.f32 %v4000, 0.0
        %v5097 = vmax.f32 %v4255, 0.0
        %v5098 = vmax.f32 %v4257, 0.0
        %v5099 = vmax.f32 %v4512, 0.0
        %v5100 = vmax.f32 %v4514, 0.0
        %v5101 = vmax.f32 %v4769, 0.0
        %v5102 = vmax.f32 %v4771, 0.0
        %v5103 = vmax.f32 %v3490, 0.0
        %v5104 = vmax.f32 %v3492, 0.0
        %v5105 = vmax.f32 %v3747, 0.0
        %v5106 = vmax.f32 %v3749, 0.0
        %v5107 = vmax.f32 %v4004, 0.0
        %v5108 = vmax.f32 %v4006, 0.0
        %v5109 = vmax.f32 %v4261, 0.0
        %v5110 = vmax.f32 %v4263, 0.0
        %v5111 = vmax.f32 %v4518, 0.0
        %v5112 = vmax.f32 %v4520, 0.0
        %v5113 = vmax.f32 %v4775, 0.0
        %v5114 = vmax.f32 %v4777, 0.0
        %v5115 = vmax.f32 %v3496, 0.0
        %v5116 = vmax.f32 %v3498, 0.0
        %v5117 = vmax.f32 %v3753, 0.0
        %v5118 = vmax.f32 %v3755, 0.0
        %v5119 = vmax.f32 %v4010, 0.0
        %v5120 = vmax.f32 %v4012, 0.0
        %v5121 = vmax.f32 %v4267, 0.0
        %v5122 = vmax.f32 %v4269, 0.0
        %v5123 = vmax.f32 %v4524, 0.0
        %v5124 = vmax.f32 %v4526, 0.0
        %v5125 = vmax.f32 %v4781, 0.0
        %v5126 = vmax.f32 %v4783, 0.0
        %v5127 = vmax.f32 %v3502, 0.0
        %v5128 = vmax.f32 %v3504, 0.0
        %v5129 = vmax.f32 %v3759, 0.0
        %v5130 = vmax.f32 %v3761, 0.0
        %v5131 = vmax.f32 %v4016, 0.0
        %v5132 = vmax.f32 %v4018, 0.0
        %v5133 = vmax.f32 %v4273, 0.0
        %v5134 = vmax.f32 %v4275, 0.0
        %v5135 = vmax.f32 %v4530, 0.0
        %v5136 = vmax.f32 %v4532, 0.0
        %v5137 = vmax.f32 %v4787, 0.0
        %v5138 = vmax.f32 %v4789, 0.0
        %v5139 = vmax.f32 %v3508, 0.0
        %v5140 = vmax.f32 %v3510, 0.0
        %v5141 = vmax.f32 %v3765, 0.0
        %v5142 = vmax.f32 %v3767, 0.0
        %v5143 = vmax.f32 %v4022, 0.0
        %v5144 = vmax.f32 %v4024, 0.0
        %v5145 = vmax.f32 %v4279, 0.0
        %v5146 = vmax.f32 %v4281, 0.0
        %v5147 = vmax.f32 %v4536, 0.0
        %v5148 = vmax.f32 %v4538, 0.0
        %v5149 = vmax.f32 %v4793, 0.0
        %v5150 = vmax.f32 %v4795, 0.0
        %v5151 = vmax.f32 %v3514, 0.0
        %v5152 = vmax.f32 %v3516, 0.0
        %v5153 = vmax.f32 %v3771, 0.0
        %v5154 = vmax.f32 %v3773, 0.0
        %v5155 = vmax.f32 %v4028, 0.0
        %v5156 = vmax.f32 %v4030, 0.0
        %v5157 = vmax.f32 %v4285, 0.0
        %v5158 = vmax.f32 %v4287, 0.0
        %v5159 = vmax.f32 %v4542, 0.0
        %v5160 = vmax.f32 %v4544, 0.0
        %v5161 = vmax.f32 %v4799, 0.0
        %v5162 = vmax.f32 %v4801, 0.0
        %v5163 = vmax.f32 %v3520, 0.0
        %v5164 = vmax.f32 %v3522, 0.0
        %v5165 = vmax.f32 %v3777, 0.0
        %v5166 = vmax.f32 %v3779, 0.0
        %v5167 = vmax.f32 %v4034, 0.0
        %v5168 = vmax.f32 %v4036, 0.0
        %v5169 = vmax.f32 %v4291, 0.0
        %v5170 = vmax.f32 %v4293, 0.0
        %v5171 = vmax.f32 %v4548, 0.0
        %v5172 = vmax.f32 %v4550, 0.0
        %v5173 = vmax.f32 %v4805, 0.0
        %v5174 = vmax.f32 %v4807, 0.0
        %v5175 = vmax.f32 %v3526, 0.0
        %v5176 = vmax.f32 %v3528, 0.0
        %v5177 = vmax.f32 %v3783, 0.0
        %v5178 = vmax.f32 %v3785, 0.0
        %v5179 = vmax.f32 %v4040, 0.0
        %v5180 = vmax.f32 %v4042, 0.0
        %v5181 = vmax.f32 %v4297, 0.0
        %v5182 = vmax.f32 %v4299, 0.0
        %v5183 = vmax.f32 %v4554, 0.0
        %v5184 = vmax.f32 %v4556, 0.0
        %v5185 = vmax.f32 %v4811, 0.0
        %v5186 = vmax.f32 %v4813, 0.0
        %v5187 = vmax.f32 %v3532, 0.0
        %v5188 = vmax.f32 %v3534, 0.0
        %v5189 = vmax.f32 %v3789, 0.0
        %v5190 = vmax.f32 %v3791, 0.0
        %v5191 = vmax.f32 %v4046, 0.0
        %v5192 = vmax.f32 %v4048, 0.0
        %v5193 = vmax.f32 %v4303, 0.0
        %v5194 = vmax.f32 %v4305, 0.0
        %v5195 = vmax.f32 %v4560, 0.0
        %v5196 = vmax.f32 %v4562, 0.0
        %v5197 = vmax.f32 %v4817, 0.0
        %v5198 = vmax.f32 %v4819, 0.0
        %v5199 = vmax.f32 %v3538, 0.0
        %v5200 = vmax.f32 %v3540, 0.0
        %v5201 = vmax.f32 %v3795, 0.0
        %v5202 = vmax.f32 %v3797, 0.0
        %v5203 = vmax.f32 %v4052, 0.0
        %v5204 = vmax.f32 %v4054, 0.0
        %v5205 = vmax.f32 %v4309, 0.0
        %v5206 = vmax.f32 %v4311, 0.0
        %v5207 = vmax.f32 %v4566, 0.0
        %v5208 = vmax.f32 %v4568, 0.0
        %v5209 = vmax.f32 %v4823, 0.0
        %v5210 = vmax.f32 %v4825, 0.0
        %v5211 = vld [vmem:[#allocation12] sm:$0xff]
        %v5212 = vld [vmem:[#allocation12 + $0x8] sm:$0xff]
        %v5213 = vld [vmem:[#allocation12 + $0x10] sm:$0xff]
        %v5214 = vld [vmem:[#allocation12 + $0x18] sm:$0xff]
        %v5215 = vld [vmem:[#allocation12 + $0x20] sm:$0xff]
        %v5216 = vld [vmem:[#allocation12 + $0x28] sm:$0xff]
        %v5217 = vld [vmem:[#allocation12 + $0x30] sm:$0xff]
        %v5218 = vld [vmem:[#allocation12 + $0x38] sm:$0xff]
        %v5219 = vld [vmem:[#allocation12 + $0x40] sm:$0xff]
        %v5220 = vld [vmem:[#allocation12 + $0x48] sm:$0xff]
        %v5221 = vld [vmem:[#allocation12 + $0x50] sm:$0xff]
        %v5222 = vld [vmem:[#allocation12 + $0x58] sm:$0xff]
        %v5223 = vld [vmem:[#allocation12 + $0x60] sm:$0xff]
        %v5224 = vld [vmem:[#allocation12 + $0x68] sm:$0xff]
        %v5225 = vld [vmem:[#allocation12 + $0x70] sm:$0xff]
        %v5226 = vld [vmem:[#allocation12 + $0x78] sm:$0xff]
        %v5227 = vld [vmem:[#allocation12 + $0x80] sm:$0xff]
        %v5228 = vld [vmem:[#allocation12 + $0x88] sm:$0xff]
        %v5229 = vld [vmem:[#allocation12 + $0x90] sm:$0xff]
        %v5230 = vld [vmem:[#allocation12 + $0x98] sm:$0xff]
        %v5231 = vld [vmem:[#allocation12 + $0xa0] sm:$0xff]
        %v5232 = vld [vmem:[#allocation12 + $0xa8] sm:$0xff]
        %v5233 = vld [vmem:[#allocation12 + $0xb0] sm:$0xff]
        %v5234 = vld [vmem:[#allocation12 + $0xb8] sm:$0xff]
        %v5235 = vld [vmem:[#allocation12 + $0xc0] sm:$0xff]
        %v5236 = vld [vmem:[#allocation12 + $0xc8] sm:$0xff]
        %v5237 = vld [vmem:[#allocation12 + $0xd0] sm:$0xff]
        %v5238 = vld [vmem:[#allocation12 + $0xd8] sm:$0xff]
        %v5239 = vld [vmem:[#allocation12 + $0xe0] sm:$0xff]
        %v5240 = vld [vmem:[#allocation12 + $0xe8] sm:$0xff]
        %v5241 = vld [vmem:[#allocation12 + $0xf0] sm:$0xff]
        %v5242 = vld [vmem:[#allocation12 + $0xf8] sm:$0xff]
        %v5243 = vld [vmem:[#allocation12 + $0x100] sm:$0xff]
        %v5244 = vld [vmem:[#allocation12 + $0x108] sm:$0xff]
        %v5245 = vld [vmem:[#allocation12 + $0x110] sm:$0xff]
        %v5246 = vld [vmem:[#allocation12 + $0x118] sm:$0xff]
        %v5247 = vld [vmem:[#allocation12 + $0x120] sm:$0xff]
        %v5248 = vld [vmem:[#allocation12 + $0x128] sm:$0xff]
        %v5249 = vld [vmem:[#allocation12 + $0x130] sm:$0xff]
        %v5250 = vld [vmem:[#allocation12 + $0x138] sm:$0xff]
        %v5251 = vld [vmem:[#allocation12 + $0x140] sm:$0xff]
        %v5252 = vld [vmem:[#allocation12 + $0x148] sm:$0xff]
        %v5253 = vld [vmem:[#allocation12 + $0x150] sm:$0xff]
        %v5254 = vld [vmem:[#allocation12 + $0x158] sm:$0xff]
        %v5255 = vld [vmem:[#allocation12 + $0x160] sm:$0xff]
        %v5256 = vld [vmem:[#allocation12 + $0x168] sm:$0xff]
        %v5257 = vld [vmem:[#allocation12 + $0x170] sm:$0xff]
        %v5258 = vld [vmem:[#allocation12 + $0x178] sm:$0xff]
        %v5259 = vld [vmem:[#allocation12 + $0x180] sm:$0xff]
        %v5260 = vld [vmem:[#allocation12 + $0x188] sm:$0xff]
        %v5261 = vld [vmem:[#allocation12 + $0x190] sm:$0xff]
        %v5262 = vld [vmem:[#allocation12 + $0x198] sm:$0xff]
        %v5263 = vld [vmem:[#allocation12 + $0x1a0] sm:$0xff]
        %v5264 = vld [vmem:[#allocation12 + $0x1a8] sm:$0xff]
        %v5265 = vld [vmem:[#allocation12 + $0x1b0] sm:$0xff]
        %v5266 = vld [vmem:[#allocation12 + $0x1b8] sm:$0xff]
        %v5267 = vld [vmem:[#allocation12 + $0x1c0] sm:$0xff]
        %v5268 = vld [vmem:[#allocation12 + $0x1c8] sm:$0xff]
        %v5269 = vld [vmem:[#allocation12 + $0x1d0] sm:$0xff]
        %v5270 = vld [vmem:[#allocation12 + $0x1d8] sm:$0xff]
        %v5271 = vld [vmem:[#allocation12 + $0x1e0] sm:$0xff]
        %v5272 = vld [vmem:[#allocation12 + $0x1e8] sm:$0xff]
        %v5273 = vld [vmem:[#allocation12 + $0x1f0] sm:$0xff]
        %v5274 = vld [vmem:[#allocation12 + $0x1f8] sm:$0xff]
        %v5275 = vld [vmem:[#allocation12 + $0x200] sm:$0xff]
        %v5276 = vld [vmem:[#allocation12 + $0x208] sm:$0xff]
        %v5277 = vld [vmem:[#allocation12 + $0x210] sm:$0xff]
        %v5278 = vld [vmem:[#allocation12 + $0x218] sm:$0xff]
        %v5279 = vld [vmem:[#allocation12 + $0x220] sm:$0xff]
        %v5280 = vld [vmem:[#allocation12 + $0x228] sm:$0xff]
        %v5281 = vld [vmem:[#allocation12 + $0x230] sm:$0xff]
        %v5282 = vld [vmem:[#allocation12 + $0x238] sm:$0xff]
        %v5283 = vld [vmem:[#allocation12 + $0x240] sm:$0xff]
        %v5284 = vld [vmem:[#allocation12 + $0x248] sm:$0xff]
        %v5285 = vld [vmem:[#allocation12 + $0x250] sm:$0xff]
        %v5286 = vld [vmem:[#allocation12 + $0x258] sm:$0xff]
        %v5287 = vld [vmem:[#allocation12 + $0x260] sm:$0xff]
        %v5288 = vld [vmem:[#allocation12 + $0x268] sm:$0xff]
        %v5289 = vld [vmem:[#allocation12 + $0x270] sm:$0xff]
        %v5290 = vld [vmem:[#allocation12 + $0x278] sm:$0xff]
        %v5291 = vld [vmem:[#allocation12 + $0x280] sm:$0xff]
        %v5292 = vld [vmem:[#allocation12 + $0x288] sm:$0xff]
        %v5293 = vld [vmem:[#allocation12 + $0x290] sm:$0xff]
        %v5294 = vld [vmem:[#allocation12 + $0x298] sm:$0xff]
        %v5295 = vld [vmem:[#allocation12 + $0x2a0] sm:$0xff]
        %v5296 = vld [vmem:[#allocation12 + $0x2a8] sm:$0xff]
        %v5297 = vld [vmem:[#allocation12 + $0x2b0] sm:$0xff]
        %v5298 = vld [vmem:[#allocation12 + $0x2b8] sm:$0xff]
        %v5299 = vld [vmem:[#allocation12 + $0x2c0] sm:$0xff]
        %v5300 = vld [vmem:[#allocation12 + $0x2c8] sm:$0xff]
        %v5301 = vld [vmem:[#allocation12 + $0x2d0] sm:$0xff]
        %v5302 = vld [vmem:[#allocation12 + $0x2d8] sm:$0xff]
        %v5303 = vld [vmem:[#allocation12 + $0x2e0] sm:$0xff]
        %v5304 = vld [vmem:[#allocation12 + $0x2e8] sm:$0xff]
        %v5305 = vld [vmem:[#allocation12 + $0x2f0] sm:$0xff]
        %v5306 = vld [vmem:[#allocation12 + $0x2f8] sm:$0xff]
        %v5307 = vld [vmem:[#allocation12 + $0x300] sm:$0xff]
        %v5308 = vld [vmem:[#allocation12 + $0x308] sm:$0xff]
        %v5309 = vld [vmem:[#allocation12 + $0x310] sm:$0xff]
        %v5310 = vld [vmem:[#allocation12 + $0x318] sm:$0xff]
        %v5311 = vld [vmem:[#allocation12 + $0x320] sm:$0xff]
        %v5312 = vld [vmem:[#allocation12 + $0x328] sm:$0xff]
        %v5313 = vld [vmem:[#allocation12 + $0x330] sm:$0xff]
        %v5314 = vld [vmem:[#allocation12 + $0x338] sm:$0xff]
        %v5315 = vld [vmem:[#allocation12 + $0x340] sm:$0xff]
        %v5316 = vld [vmem:[#allocation12 + $0x348] sm:$0xff]
        %v5317 = vld [vmem:[#allocation12 + $0x350] sm:$0xff]
        %v5318 = vld [vmem:[#allocation12 + $0x358] sm:$0xff]
        %v5319 = vld [vmem:[#allocation12 + $0x360] sm:$0xff]
        %v5320 = vld [vmem:[#allocation12 + $0x368] sm:$0xff]
        %v5321 = vld [vmem:[#allocation12 + $0x370] sm:$0xff]
        %v5322 = vld [vmem:[#allocation12 + $0x378] sm:$0xff]
        %v5323 = vld [vmem:[#allocation12 + $0x380] sm:$0xff]
        %v5324 = vld [vmem:[#allocation12 + $0x388] sm:$0xff]
        %v5325 = vld [vmem:[#allocation12 + $0x390] sm:$0xff]
        %v5326 = vld [vmem:[#allocation12 + $0x398] sm:$0xff]
        %v5327 = vld [vmem:[#allocation12 + $0x3a0] sm:$0xff]
        %v5328 = vld [vmem:[#allocation12 + $0x3a8] sm:$0xff]
        %v5329 = vld [vmem:[#allocation12 + $0x3b0] sm:$0xff]
        %v5330 = vld [vmem:[#allocation12 + $0x3b8] sm:$0xff]
        %v5331 = vld [vmem:[#allocation12 + $0x3c0] sm:$0xff]
        %v5332 = vld [vmem:[#allocation12 + $0x3c8] sm:$0xff]
        %v5333 = vld [vmem:[#allocation12 + $0x3d0] sm:$0xff]
        %v5334 = vld [vmem:[#allocation12 + $0x3d8] sm:$0xff]
        %v5335 = vld [vmem:[#allocation12 + $0x3e0] sm:$0xff]
        %v5336 = vld [vmem:[#allocation12 + $0x3e8] sm:$0xff]
        %v5337 = vld [vmem:[#allocation12 + $0x3f0] sm:$0xff]
        %v5338 = vld [vmem:[#allocation12 + $0x3f8] sm:$0xff]
        %v5339 = vld [vmem:[#allocation13] sm:$0x3]
        %v5341 = vlaneseq
        %v5342 = vshrl.u32 %v5341, 7
        %v5343 = vsub.s32 0, %v5342
        %v5344 = vrot.slane %v5339, %v5343
        %v5345 = vlaneseq
        %v5346 = vshrl.u32 %v5345, 7
        %v5347 = vsub.s32 1, %v5346
        %v5348 = vrot.slane %v5339, %v5347
        %5351 = vmatprep.subr.mxu0 %v5242
        %5352 = vmatpush1.msra.mxu0 %v5241
        %5353 = vmatprep.subr.mxu0 %v5240
        %5354 = vmatpush1.msra.mxu0 %v5239
        %5355 = vmatprep.subr.mxu0 %v5238
        %5356 = vmatpush1.msra.mxu0 %v5237
        %5357 = vmatprep.subr.mxu0 %v5236
        %5358 = vmatpush1.msra.mxu0 %v5235
        %5359 = vmatprep.subr.mxu0 %v5234
        %5360 = vmatpush1.msra.mxu0 %v5233
        %5361 = vmatprep.subr.mxu0 %v5232
        %5362 = vmatpush1.msra.mxu0 %v5231
        %5363 = vmatprep.subr.mxu0 %v5230
        %5364 = vmatpush1.msra.mxu0 %v5229
        %5365 = vmatprep.subr.mxu0 %v5228
        %5366 = vmatpush1.msra.mxu0 %v5227
        %5367 = vmatprep.subr.mxu0 %v5226
        %5368 = vmatpush1.msra.mxu0 %v5225
        %5369 = vmatprep.subr.mxu0 %v5224
        %5370 = vmatpush1.msra.mxu0 %v5223
        %5371 = vmatprep.subr.mxu0 %v5222
        %5372 = vmatpush1.msra.mxu0 %v5221
        %5373 = vmatprep.subr.mxu0 %v5220
        %5374 = vmatpush1.msra.mxu0 %v5219
        %5375 = vmatprep.subr.mxu0 %v5218
        %5376 = vmatpush1.msra.mxu0 %v5217
        %5377 = vmatprep.subr.mxu0 %v5216
        %5378 = vmatpush1.msra.mxu0 %v5215
        %5379 = vmatprep.subr.mxu0 %v5214
        %5380 = vmatpush1.msra.mxu0 %v5213
        %5381 = vmatprep.subr.mxu0 %v5212
        %5382 = vmatpush1.msra.mxu0 %v5211
        %5383 = vmatprep.subr.mxu0 %v5274
        %5384 = vmatpush2.msra.mxu0 %v5273
        %5385 = vmatprep.subr.mxu0 %v5272
        %5386 = vmatpush2.msra.mxu0 %v5271
        %5387 = vmatprep.subr.mxu0 %v5270
        %5388 = vmatpush2.msra.mxu0 %v5269
        %5389 = vmatprep.subr.mxu0 %v5268
        %5390 = vmatpush2.msra.mxu0 %v5267
        %5391 = vmatprep.subr.mxu0 %v5266
        %5392 = vmatpush2.msra.mxu0 %v5265
        %5393 = vmatprep.subr.mxu0 %v5264
        %5394 = vmatpush2.msra.mxu0 %v5263
        %5395 = vmatprep.subr.mxu0 %v5262
        %5396 = vmatpush2.msra.mxu0 %v5261
        %5397 = vmatprep.subr.mxu0 %v5260
        %5398 = vmatpush2.msra.mxu0 %v5259
        %5399 = vmatprep.subr.mxu0 %v5258
        %5400 = vmatpush2.msra.mxu0 %v5257
        %5401 = vmatprep.subr.mxu0 %v5256
        %5402 = vmatpush2.msra.mxu0 %v5255
        %5403 = vmatprep.subr.mxu0 %v5254
        %5404 = vmatpush2.msra.mxu0 %v5253
        %5405 = vmatprep.subr.mxu0 %v5252
        %5406 = vmatpush2.msra.mxu0 %v5251
        %5407 = vmatprep.subr.mxu0 %v5250
        %5408 = vmatpush2.msra.mxu0 %v5249
        %5409 = vmatprep.subr.mxu0 %v5248
        %5410 = vmatpush2.msra.mxu0 %v5247
        %5411 = vmatprep.subr.mxu0 %v5246
        %5412 = vmatpush2.msra.mxu0 %v5245
        %5413 = vmatprep.subr.mxu0 %v5244
        %5414 = vmatpush2.msra.mxu0 %v5243
        %5415 = vmatprep.mubr.f32.mxu0 %v4828
        %5416 = vmatmul.mubr.f32.gmra.mxu0 %v4827
        %v5417 = vpop.f32.mrf.mxu0
        %v5418 = vadd.f32 %v5344, %v5417
        %v5419 = vpop.f32.mrf.mxu0
        %v5420 = vadd.f32 %v5348, %v5419
        %5421 = vmatprep.mubr.f32.mxu0 %v4840
        %5422 = vmatmul.mubr.f32.gmra.mxu0 %v4839
        %v5423 = vpop.f32.mrf.mxu0
        %v5424 = vadd.f32 %v5344, %v5423
        %v5425 = vpop.f32.mrf.mxu0
        %v5426 = vadd.f32 %v5348, %v5425
        %5427 = vmatprep.mubr.f32.mxu0 %v4852
        %5428 = vmatmul.mubr.f32.gmra.mxu0 %v4851
        %v5429 = vpop.f32.mrf.mxu0
        %v5430 = vadd.f32 %v5344, %v5429
        %v5431 = vpop.f32.mrf.mxu0
        %v5432 = vadd.f32 %v5348, %v5431
        %5433 = vmatprep.mubr.f32.mxu0 %v4864
        %5434 = vmatmul.mubr.f32.gmra.mxu0 %v4863
        %v5435 = vpop.f32.mrf.mxu0
        %v5436 = vadd.f32 %v5344, %v5435
        %v5437 = vpop.f32.mrf.mxu0
        %v5438 = vadd.f32 %v5348, %v5437
        %5439 = vmatprep.mubr.f32.mxu0 %v4876
        %5440 = vmatmul.mubr.f32.gmra.mxu0 %v4875
        %v5441 = vpop.f32.mrf.mxu0
        %v5442 = vadd.f32 %v5344, %v5441
        %v5443 = vpop.f32.mrf.mxu0
        %v5444 = vadd.f32 %v5348, %v5443
        %5445 = vmatprep.mubr.f32.mxu0 %v4888
        %5446 = vmatmul.mubr.f32.gmra.mxu0 %v4887
        %v5447 = vpop.f32.mrf.mxu0
        %v5448 = vadd.f32 %v5344, %v5447
        %v5449 = vpop.f32.mrf.mxu0
        %v5450 = vadd.f32 %v5348, %v5449
        %5451 = vmatprep.mubr.f32.mxu0 %v4900
        %5452 = vmatmul.mubr.f32.gmra.mxu0 %v4899
        %v5453 = vpop.f32.mrf.mxu0
        %v5454 = vadd.f32 %v5344, %v5453
        %v5455 = vpop.f32.mrf.mxu0
        %v5456 = vadd.f32 %v5348, %v5455
        %5457 = vmatprep.mubr.f32.mxu0 %v4912
        %5458 = vmatmul.mubr.f32.gmra.mxu0 %v4911
        %v5459 = vpop.f32.mrf.mxu0
        %v5460 = vadd.f32 %v5344, %v5459
        %v5461 = vpop.f32.mrf.mxu0
        %v5462 = vadd.f32 %v5348, %v5461
        %5463 = vmatprep.mubr.f32.mxu0 %v4924
        %5464 = vmatmul.mubr.f32.gmra.mxu0 %v4923
        %v5465 = vpop.f32.mrf.mxu0
        %v5466 = vadd.f32 %v5344, %v5465
        %v5467 = vpop.f32.mrf.mxu0
        %v5468 = vadd.f32 %v5348, %v5467
        %5469 = vmatprep.mubr.f32.mxu0 %v4936
        %5470 = vmatmul.mubr.f32.gmra.mxu0 %v4935
        %v5471 = vpop.f32.mrf.mxu0
        %v5472 = vadd.f32 %v5344, %v5471
        %v5473 = vpop.f32.mrf.mxu0
        %v5474 = vadd.f32 %v5348, %v5473
        %5475 = vmatprep.mubr.f32.mxu0 %v4948
        %5476 = vmatmul.mubr.f32.gmra.mxu0 %v4947
        %v5477 = vpop.f32.mrf.mxu0
        %v5478 = vadd.f32 %v5344, %v5477
        %v5479 = vpop.f32.mrf.mxu0
        %v5480 = vadd.f32 %v5348, %v5479
        %5481 = vmatprep.mubr.f32.mxu0 %v4960
        %5482 = vmatmul.mubr.f32.gmra.mxu0 %v4959
        %v5483 = vpop.f32.mrf.mxu0
        %v5484 = vadd.f32 %v5344, %v5483
        %v5485 = vpop.f32.mrf.mxu0
        %v5486 = vadd.f32 %v5348, %v5485
        %5487 = vmatprep.mubr.f32.mxu0 %v4972
        %5488 = vmatmul.mubr.f32.gmra.mxu0 %v4971
        %v5489 = vpop.f32.mrf.mxu0
        %v5490 = vadd.f32 %v5344, %v5489
        %v5491 = vpop.f32.mrf.mxu0
        %v5492 = vadd.f32 %v5348, %v5491
        %5493 = vmatprep.mubr.f32.mxu0 %v4984
        %5494 = vmatmul.mubr.f32.gmra.mxu0 %v4983
        %v5495 = vpop.f32.mrf.mxu0
        %v5496 = vadd.f32 %v5344, %v5495
        %v5497 = vpop.f32.mrf.mxu0
        %v5498 = vadd.f32 %v5348, %v5497
        %5499 = vmatprep.mubr.f32.mxu0 %v4996
        %5500 = vmatmul.mubr.f32.gmra.mxu0 %v4995
        %v5501 = vpop.f32.mrf.mxu0
        %v5502 = vadd.f32 %v5344, %v5501
        %v5503 = vpop.f32.mrf.mxu0
        %v5504 = vadd.f32 %v5348, %v5503
        %5505 = vmatprep.mubr.f32.mxu0 %v5008
        %5506 = vmatmul.mubr.f32.gmra.mxu0 %v5007
        %v5507 = vpop.f32.mrf.mxu0
        %v5508 = vadd.f32 %v5344, %v5507
        %v5509 = vpop.f32.mrf.mxu0
        %v5510 = vadd.f32 %v5348, %v5509
        %5511 = vmatprep.mubr.f32.mxu0 %v5020
        %5512 = vmatmul.mubr.f32.gmra.mxu0 %v5019
        %v5513 = vpop.f32.mrf.mxu0
        %v5514 = vadd.f32 %v5344, %v5513
        %v5515 = vpop.f32.mrf.mxu0
        %v5516 = vadd.f32 %v5348, %v5515
        %5517 = vmatprep.mubr.f32.mxu0 %v5032
        %5518 = vmatmul.mubr.f32.gmra.mxu0 %v5031
        %v5519 = vpop.f32.mrf.mxu0
        %v5520 = vadd.f32 %v5344, %v5519
        %v5521 = vpop.f32.mrf.mxu0
        %v5522 = vadd.f32 %v5348, %v5521
        %5523 = vmatprep.mubr.f32.mxu0 %v5044
        %5524 = vmatmul.mubr.f32.gmra.mxu0 %v5043
        %v5525 = vpop.f32.mrf.mxu0
        %v5526 = vadd.f32 %v5344, %v5525
        %v5527 = vpop.f32.mrf.mxu0
        %v5528 = vadd.f32 %v5348, %v5527
        %5529 = vmatprep.mubr.f32.mxu0 %v5056
        %5530 = vmatmul.mubr.f32.gmra.mxu0 %v5055
        %v5531 = vpop.f32.mrf.mxu0
        %v5532 = vadd.f32 %v5344, %v5531
        %v5533 = vpop.f32.mrf.mxu0
        %v5534 = vadd.f32 %v5348, %v5533
        %5535 = vmatprep.mubr.f32.mxu0 %v5068
        %5536 = vmatmul.mubr.f32.gmra.mxu0 %v5067
        %v5537 = vpop.f32.mrf.mxu0
        %v5538 = vadd.f32 %v5344, %v5537
        %v5539 = vpop.f32.mrf.mxu0
        %v5540 = vadd.f32 %v5348, %v5539
        %5541 = vmatprep.mubr.f32.mxu0 %v5080
        %5542 = vmatmul.mubr.f32.gmra.mxu0 %v5079
        %v5543 = vpop.f32.mrf.mxu0
        %v5544 = vadd.f32 %v5344, %v5543
        %v5545 = vpop.f32.mrf.mxu0
        %v5546 = vadd.f32 %v5348, %v5545
        %5547 = vmatprep.mubr.f32.mxu0 %v5092
        %5548 = vmatmul.mubr.f32.gmra.mxu0 %v5091
        %v5549 = vpop.f32.mrf.mxu0
        %v5550 = vadd.f32 %v5344, %v5549
        %v5551 = vpop.f32.mrf.mxu0
        %v5552 = vadd.f32 %v5348, %v5551
        %5553 = vmatprep.mubr.f32.mxu0 %v5104
        %5554 = vmatmul.mubr.f32.gmra.mxu0 %v5103
        %v5555 = vpop.f32.mrf.mxu0
        %v5556 = vadd.f32 %v5344, %v5555
        %v5557 = vpop.f32.mrf.mxu0
        %v5558 = vadd.f32 %v5348, %v5557
        %5559 = vmatprep.mubr.f32.mxu0 %v5116
        %5560 = vmatmul.mubr.f32.gmra.mxu0 %v5115
        %v5561 = vpop.f32.mrf.mxu0
        %v5562 = vadd.f32 %v5344, %v5561
        %v5563 = vpop.f32.mrf.mxu0
        %v5564 = vadd.f32 %v5348, %v5563
        %5565 = vmatprep.mubr.f32.mxu0 %v5128
        %5566 = vmatmul.mubr.f32.gmra.mxu0 %v5127
        %v5567 = vpop.f32.mrf.mxu0
        %v5568 = vadd.f32 %v5344, %v5567
        %v5569 = vpop.f32.mrf.mxu0
        %v5570 = vadd.f32 %v5348, %v5569
        %5571 = vmatprep.mubr.f32.mxu0 %v5140
        %5572 = vmatmul.mubr.f32.gmra.mxu0 %v5139
        %v5573 = vpop.f32.mrf.mxu0
        %v5574 = vadd.f32 %v5344, %v5573
        %v5575 = vpop.f32.mrf.mxu0
        %v5576 = vadd.f32 %v5348, %v5575
        %5577 = vmatprep.mubr.f32.mxu0 %v5152
        %5578 = vmatmul.mubr.f32.gmra.mxu0 %v5151
        %v5579 = vpop.f32.mrf.mxu0
        %v5580 = vadd.f32 %v5344, %v5579
        %v5581 = vpop.f32.mrf.mxu0
        %v5582 = vadd.f32 %v5348, %v5581
        %5583 = vmatprep.mubr.f32.mxu0 %v5164
        %5584 = vmatmul.mubr.f32.gmra.mxu0 %v5163
        %v5585 = vpop.f32.mrf.mxu0
        %v5586 = vadd.f32 %v5344, %v5585
        %v5587 = vpop.f32.mrf.mxu0
        %v5588 = vadd.f32 %v5348, %v5587
        %5589 = vmatprep.mubr.f32.mxu0 %v5176
        %5590 = vmatmul.mubr.f32.gmra.mxu0 %v5175
        %v5591 = vpop.f32.mrf.mxu0
        %v5592 = vadd.f32 %v5344, %v5591
        %v5593 = vpop.f32.mrf.mxu0
        %v5594 = vadd.f32 %v5348, %v5593
        %5595 = vmatprep.mubr.f32.mxu0 %v5188
        %5596 = vmatmul.mubr.f32.gmra.mxu0 %v5187
        %v5597 = vpop.f32.mrf.mxu0
        %v5598 = vadd.f32 %v5344, %v5597
        %v5599 = vpop.f32.mrf.mxu0
        %v5600 = vadd.f32 %v5348, %v5599
        %5601 = vmatprep.mubr.f32.mxu0 %v5200
        %5602 = vmatmul.mubr.f32.gmra.mxu0 %v5199
        %v5603 = vpop.f32.mrf.mxu0
        %v5604 = vadd.f32 %v5344, %v5603
        %v5605 = vpop.f32.mrf.mxu0
        %v5606 = vadd.f32 %v5348, %v5605
        %5607 = vdwg.mxu0
        %5608 = vmatprep.subr.mxu0 %v5306
        %5609 = vmatpush1.msra.mxu0 %v5305
        %5610 = vmatprep.subr.mxu0 %v5304
        %5611 = vmatpush1.msra.mxu0 %v5303
        %5612 = vmatprep.subr.mxu0 %v5302
        %5613 = vmatpush1.msra.mxu0 %v5301
        %5614 = vmatprep.subr.mxu0 %v5300
        %5615 = vmatpush1.msra.mxu0 %v5299
        %5616 = vmatprep.subr.mxu0 %v5298
        %5617 = vmatpush1.msra.mxu0 %v5297
        %5618 = vmatprep.subr.mxu0 %v5296
        %5619 = vmatpush1.msra.mxu0 %v5295
        %5620 = vmatprep.subr.mxu0 %v5294
        %5621 = vmatpush1.msra.mxu0 %v5293
        %5622 = vmatprep.subr.mxu0 %v5292
        %5623 = vmatpush1.msra.mxu0 %v5291
        %5624 = vmatprep.subr.mxu0 %v5290
        %5625 = vmatpush1.msra.mxu0 %v5289
        %5626 = vmatprep.subr.mxu0 %v5288
        %5627 = vmatpush1.msra.mxu0 %v5287
        %5628 = vmatprep.subr.mxu0 %v5286
        %5629 = vmatpush1.msra.mxu0 %v5285
        %5630 = vmatprep.subr.mxu0 %v5284
        %5631 = vmatpush1.msra.mxu0 %v5283
        %5632 = vmatprep.subr.mxu0 %v5282
        %5633 = vmatpush1.msra.mxu0 %v5281
        %5634 = vmatprep.subr.mxu0 %v5280
        %5635 = vmatpush1.msra.mxu0 %v5279
        %5636 = vmatprep.subr.mxu0 %v5278
        %5637 = vmatpush1.msra.mxu0 %v5277
        %5638 = vmatprep.subr.mxu0 %v5276
        %5639 = vmatpush1.msra.mxu0 %v5275
        %5640 = vmatprep.subr.mxu0 %v5338
        %5641 = vmatpush2.msra.mxu0 %v5337
        %5642 = vmatprep.subr.mxu0 %v5336
        %5643 = vmatpush2.msra.mxu0 %v5335
        %5644 = vmatprep.subr.mxu0 %v5334
        %5645 = vmatpush2.msra.mxu0 %v5333
        %5646 = vmatprep.subr.mxu0 %v5332
        %5647 = vmatpush2.msra.mxu0 %v5331
        %5648 = vmatprep.subr.mxu0 %v5330
        %5649 = vmatpush2.msra.mxu0 %v5329
        %5650 = vmatprep.subr.mxu0 %v5328
        %5651 = vmatpush2.msra.mxu0 %v5327
        %5652 = vmatprep.subr.mxu0 %v5326
        %5653 = vmatpush2.msra.mxu0 %v5325
        %5654 = vmatprep.subr.mxu0 %v5324
        %5655 = vmatpush2.msra.mxu0 %v5323
        %5656 = vmatprep.subr.mxu0 %v5322
        %5657 = vmatpush2.msra.mxu0 %v5321
        %5658 = vmatprep.subr.mxu0 %v5320
        %5659 = vmatpush2.msra.mxu0 %v5319
        %5660 = vmatprep.subr.mxu0 %v5318
        %5661 = vmatpush2.msra.mxu0 %v5317
        %5662 = vmatprep.subr.mxu0 %v5316
        %5663 = vmatpush2.msra.mxu0 %v5315
        %5664 = vmatprep.subr.mxu0 %v5314
        %5665 = vmatpush2.msra.mxu0 %v5313
        %5666 = vmatprep.subr.mxu0 %v5312
        %5667 = vmatpush2.msra.mxu0 %v5311
        %5668 = vmatprep.subr.mxu0 %v5310
        %5669 = vmatpush2.msra.mxu0 %v5309
        %5670 = vmatprep.subr.mxu0 %v5308
        %5671 = vmatpush2.msra.mxu0 %v5307
        %5672 = vmatprep.mubr.f32.mxu0 %v4830
        %5673 = vmatmul.mubr.f32.gmra.mxu0 %v4829
        %v5674 = vpop.f32.mrf.mxu0
        %v5675 = vadd.f32 %v5418, %v5674
        %v5676 = vpop.f32.mrf.mxu0
        %v5677 = vadd.f32 %v5420, %v5676
        %5678 = vmatprep.mubr.f32.mxu0 %v4842
        %5679 = vmatmul.mubr.f32.gmra.mxu0 %v4841
        %v5680 = vpop.f32.mrf.mxu0
        %v5681 = vadd.f32 %v5424, %v5680
        %v5682 = vpop.f32.mrf.mxu0
        %v5683 = vadd.f32 %v5426, %v5682
        %5684 = vmatprep.mubr.f32.mxu0 %v4854
        %5685 = vmatmul.mubr.f32.gmra.mxu0 %v4853
        %v5686 = vpop.f32.mrf.mxu0
        %v5687 = vadd.f32 %v5430, %v5686
        %v5688 = vpop.f32.mrf.mxu0
        %v5689 = vadd.f32 %v5432, %v5688
        %5690 = vmatprep.mubr.f32.mxu0 %v4866
        %5691 = vmatmul.mubr.f32.gmra.mxu0 %v4865
        %v5692 = vpop.f32.mrf.mxu0
        %v5693 = vadd.f32 %v5436, %v5692
        %v5694 = vpop.f32.mrf.mxu0
        %v5695 = vadd.f32 %v5438, %v5694
        %5696 = vmatprep.mubr.f32.mxu0 %v4878
        %5697 = vmatmul.mubr.f32.gmra.mxu0 %v4877
        %v5698 = vpop.f32.mrf.mxu0
        %v5699 = vadd.f32 %v5442, %v5698
        %v5700 = vpop.f32.mrf.mxu0
        %v5701 = vadd.f32 %v5444, %v5700
        %5702 = vmatprep.mubr.f32.mxu0 %v4890
        %5703 = vmatmul.mubr.f32.gmra.mxu0 %v4889
        %v5704 = vpop.f32.mrf.mxu0
        %v5705 = vadd.f32 %v5448, %v5704
        %v5706 = vpop.f32.mrf.mxu0
        %v5707 = vadd.f32 %v5450, %v5706
        %5708 = vmatprep.mubr.f32.mxu0 %v4902
        %5709 = vmatmul.mubr.f32.gmra.mxu0 %v4901
        %v5710 = vpop.f32.mrf.mxu0
        %v5711 = vadd.f32 %v5454, %v5710
        %v5712 = vpop.f32.mrf.mxu0
        %v5713 = vadd.f32 %v5456, %v5712
        %5714 = vmatprep.mubr.f32.mxu0 %v4914
        %5715 = vmatmul.mubr.f32.gmra.mxu0 %v4913
        %v5716 = vpop.f32.mrf.mxu0
        %v5717 = vadd.f32 %v5460, %v5716
        %v5718 = vpop.f32.mrf.mxu0
        %v5719 = vadd.f32 %v5462, %v5718
        %5720 = vmatprep.mubr.f32.mxu0 %v4926
        %5721 = vmatmul.mubr.f32.gmra.mxu0 %v4925
        %v5722 = vpop.f32.mrf.mxu0
        %v5723 = vadd.f32 %v5466, %v5722
        %v5724 = vpop.f32.mrf.mxu0
        %v5725 = vadd.f32 %v5468, %v5724
        %5726 = vmatprep.mubr.f32.mxu0 %v4938
        %5727 = vmatmul.mubr.f32.gmra.mxu0 %v4937
        %v5728 = vpop.f32.mrf.mxu0
        %v5729 = vadd.f32 %v5472, %v5728
        %v5730 = vpop.f32.mrf.mxu0
        %v5731 = vadd.f32 %v5474, %v5730
        %5732 = vmatprep.mubr.f32.mxu0 %v4950
        %5733 = vmatmul.mubr.f32.gmra.mxu0 %v4949
        %v5734 = vpop.f32.mrf.mxu0
        %v5735 = vadd.f32 %v5478, %v5734
        %v5736 = vpop.f32.mrf.mxu0
        %v5737 = vadd.f32 %v5480, %v5736
        %5738 = vmatprep.mubr.f32.mxu0 %v4962
        %5739 = vmatmul.mubr.f32.gmra.mxu0 %v4961
        %v5740 = vpop.f32.mrf.mxu0
        %v5741 = vadd.f32 %v5484, %v5740
        %v5742 = vpop.f32.mrf.mxu0
        %v5743 = vadd.f32 %v5486, %v5742
        %5744 = vmatprep.mubr.f32.mxu0 %v4974
        %5745 = vmatmul.mubr.f32.gmra.mxu0 %v4973
        %v5746 = vpop.f32.mrf.mxu0
        %v5747 = vadd.f32 %v5490, %v5746
        %v5748 = vpop.f32.mrf.mxu0
        %v5749 = vadd.f32 %v5492, %v5748
        %5750 = vmatprep.mubr.f32.mxu0 %v4986
        %5751 = vmatmul.mubr.f32.gmra.mxu0 %v4985
        %v5752 = vpop.f32.mrf.mxu0
        %v5753 = vadd.f32 %v5496, %v5752
        %v5754 = vpop.f32.mrf.mxu0
        %v5755 = vadd.f32 %v5498, %v5754
        %5756 = vmatprep.mubr.f32.mxu0 %v4998
        %5757 = vmatmul.mubr.f32.gmra.mxu0 %v4997
        %v5758 = vpop.f32.mrf.mxu0
        %v5759 = vadd.f32 %v5502, %v5758
        %v5760 = vpop.f32.mrf.mxu0
        %v5761 = vadd.f32 %v5504, %v5760
        %5762 = vmatprep.mubr.f32.mxu0 %v5010
        %5763 = vmatmul.mubr.f32.gmra.mxu0 %v5009
        %v5764 = vpop.f32.mrf.mxu0
        %v5765 = vadd.f32 %v5508, %v5764
        %v5766 = vpop.f32.mrf.mxu0
        %v5767 = vadd.f32 %v5510, %v5766
        %5768 = vmatprep.mubr.f32.mxu0 %v5022
        %5769 = vmatmul.mubr.f32.gmra.mxu0 %v5021
        %v5770 = vpop.f32.mrf.mxu0
        %v5771 = vadd.f32 %v5514, %v5770
        %v5772 = vpop.f32.mrf.mxu0
        %v5773 = vadd.f32 %v5516, %v5772
        %5774 = vmatprep.mubr.f32.mxu0 %v5034
        %5775 = vmatmul.mubr.f32.gmra.mxu0 %v5033
        %v5776 = vpop.f32.mrf.mxu0
        %v5777 = vadd.f32 %v5520, %v5776
        %v5778 = vpop.f32.mrf.mxu0
        %v5779 = vadd.f32 %v5522, %v5778
        %5780 = vmatprep.mubr.f32.mxu0 %v5046
        %5781 = vmatmul.mubr.f32.gmra.mxu0 %v5045
        %v5782 = vpop.f32.mrf.mxu0
        %v5783 = vadd.f32 %v5526, %v5782
        %v5784 = vpop.f32.mrf.mxu0
        %v5785 = vadd.f32 %v5528, %v5784
        %5786 = vmatprep.mubr.f32.mxu0 %v5058
        %5787 = vmatmul.mubr.f32.gmra.mxu0 %v5057
        %v5788 = vpop.f32.mrf.mxu0
        %v5789 = vadd.f32 %v5532, %v5788
        %v5790 = vpop.f32.mrf.mxu0
        %v5791 = vadd.f32 %v5534, %v5790
        %5792 = vmatprep.mubr.f32.mxu0 %v5070
        %5793 = vmatmul.mubr.f32.gmra.mxu0 %v5069
        %v5794 = vpop.f32.mrf.mxu0
        %v5795 = vadd.f32 %v5538, %v5794
        %v5796 = vpop.f32.mrf.mxu0
        %v5797 = vadd.f32 %v5540, %v5796
        %5798 = vmatprep.mubr.f32.mxu0 %v5082
        %5799 = vmatmul.mubr.f32.gmra.mxu0 %v5081
        %v5800 = vpop.f32.mrf.mxu0
        %v5801 = vadd.f32 %v5544, %v5800
        %v5802 = vpop.f32.mrf.mxu0
        %v5803 = vadd.f32 %v5546, %v5802
        %5804 = vmatprep.mubr.f32.mxu0 %v5094
        %5805 = vmatmul.mubr.f32.gmra.mxu0 %v5093
        %v5806 = vpop.f32.mrf.mxu0
        %v5807 = vadd.f32 %v5550, %v5806
        %v5808 = vpop.f32.mrf.mxu0
        %v5809 = vadd.f32 %v5552, %v5808
        %5810 = vmatprep.mubr.f32.mxu0 %v5106
        %5811 = vmatmul.mubr.f32.gmra.mxu0 %v5105
        %v5812 = vpop.f32.mrf.mxu0
        %v5813 = vadd.f32 %v5556, %v5812
        %v5814 = vpop.f32.mrf.mxu0
        %v5815 = vadd.f32 %v5558, %v5814
        %5816 = vmatprep.mubr.f32.mxu0 %v5118
        %5817 = vmatmul.mubr.f32.gmra.mxu0 %v5117
        %v5818 = vpop.f32.mrf.mxu0
        %v5819 = vadd.f32 %v5562, %v5818
        %v5820 = vpop.f32.mrf.mxu0
        %v5821 = vadd.f32 %v5564, %v5820
        %5822 = vmatprep.mubr.f32.mxu0 %v5130
        %5823 = vmatmul.mubr.f32.gmra.mxu0 %v5129
        %v5824 = vpop.f32.mrf.mxu0
        %v5825 = vadd.f32 %v5568, %v5824
        %v5826 = vpop.f32.mrf.mxu0
        %v5827 = vadd.f32 %v5570, %v5826
        %5828 = vmatprep.mubr.f32.mxu0 %v5142
        %5829 = vmatmul.mubr.f32.gmra.mxu0 %v5141
        %v5830 = vpop.f32.mrf.mxu0
        %v5831 = vadd.f32 %v5574, %v5830
        %v5832 = vpop.f32.mrf.mxu0
        %v5833 = vadd.f32 %v5576, %v5832
        %5834 = vmatprep.mubr.f32.mxu0 %v5154
        %5835 = vmatmul.mubr.f32.gmra.mxu0 %v5153
        %v5836 = vpop.f32.mrf.mxu0
        %v5837 = vadd.f32 %v5580, %v5836
        %v5838 = vpop.f32.mrf.mxu0
        %v5839 = vadd.f32 %v5582, %v5838
        %5840 = vmatprep.mubr.f32.mxu0 %v5166
        %5841 = vmatmul.mubr.f32.gmra.mxu0 %v5165
        %v5842 = vpop.f32.mrf.mxu0
        %v5843 = vadd.f32 %v5586, %v5842
        %v5844 = vpop.f32.mrf.mxu0
        %v5845 = vadd.f32 %v5588, %v5844
        %5846 = vmatprep.mubr.f32.mxu0 %v5178
        %5847 = vmatmul.mubr.f32.gmra.mxu0 %v5177
        %v5848 = vpop.f32.mrf.mxu0
        %v5849 = vadd.f32 %v5592, %v5848
        %v5850 = vpop.f32.mrf.mxu0
        %v5851 = vadd.f32 %v5594, %v5850
        %5852 = vmatprep.mubr.f32.mxu0 %v5190
        %5853 = vmatmul.mubr.f32.gmra.mxu0 %v5189
        %v5854 = vpop.f32.mrf.mxu0
        %v5855 = vadd.f32 %v5598, %v5854
        %v5856 = vpop.f32.mrf.mxu0
        %v5857 = vadd.f32 %v5600, %v5856
        %5858 = vmatprep.mubr.f32.mxu0 %v5202
        %5859 = vmatmul.mubr.f32.gmra.mxu0 %v5201
        %v5860 = vpop.f32.mrf.mxu0
        %v5861 = vadd.f32 %v5604, %v5860
        %v5862 = vpop.f32.mrf.mxu0
        %v5863 = vadd.f32 %v5606, %v5862
        %5864 = vdwg.mxu0
        %v5865 = vmax.f32 %v5675, 0.0
        %v5866 = vmax.f32 %v5677, 0.0
        %v5867 = vmax.f32 %v5681, 0.0
        %v5868 = vmax.f32 %v5683, 0.0
        %v5869 = vmax.f32 %v5687, 0.0
        %v5870 = vmax.f32 %v5689, 0.0
        %v5871 = vmax.f32 %v5693, 0.0
        %v5872 = vmax.f32 %v5695, 0.0
        %v5873 = vmax.f32 %v5699, 0.0
        %v5874 = vmax.f32 %v5701, 0.0
        %v5875 = vmax.f32 %v5705, 0.0
        %v5876 = vmax.f32 %v5707, 0.0
        %v5877 = vmax.f32 %v5711, 0.0
        %v5878 = vmax.f32 %v5713, 0.0
        %v5879 = vmax.f32 %v5717, 0.0
        %v5880 = vmax.f32 %v5719, 0.0
        %v5881 = vmax.f32 %v5723, 0.0
        %v5882 = vmax.f32 %v5725, 0.0
        %v5883 = vmax.f32 %v5729, 0.0
        %v5884 = vmax.f32 %v5731, 0.0
        %v5885 = vmax.f32 %v5735, 0.0
        %v5886 = vmax.f32 %v5737, 0.0
        %v5887 = vmax.f32 %v5741, 0.0
        %v5888 = vmax.f32 %v5743, 0.0
        %v5889 = vmax.f32 %v5747, 0.0
        %v5890 = vmax.f32 %v5749, 0.0
        %v5891 = vmax.f32 %v5753, 0.0
        %v5892 = vmax.f32 %v5755, 0.0
        %v5893 = vmax.f32 %v5759, 0.0
        %v5894 = vmax.f32 %v5761, 0.0
        %v5895 = vmax.f32 %v5765, 0.0
        %v5896 = vmax.f32 %v5767, 0.0
        %v5897 = vmax.f32 %v5771, 0.0
        %v5898 = vmax.f32 %v5773, 0.0
        %v5899 = vmax.f32 %v5777, 0.0
        %v5900 = vmax.f32 %v5779, 0.0
        %v5901 = vmax.f32 %v5783, 0.0
        %v5902 = vmax.f32 %v5785, 0.0
        %v5903 = vmax.f32 %v5789, 0.0
        %v5904 = vmax.f32 %v5791, 0.0
        %v5905 = vmax.f32 %v5795, 0.0
        %v5906 = vmax.f32 %v5797, 0.0
        %v5907 = vmax.f32 %v5801, 0.0
        %v5908 = vmax.f32 %v5803, 0.0
        %v5909 = vmax.f32 %v5807, 0.0
        %v5910 = vmax.f32 %v5809, 0.0
        %v5911 = vmax.f32 %v5813, 0.0
        %v5912 = vmax.f32 %v5815, 0.0
        %v5913 = vmax.f32 %v5819, 0.0
        %v5914 = vmax.f32 %v5821, 0.0
        %v5915 = vmax.f32 %v5825, 0.0
        %v5916 = vmax.f32 %v5827, 0.0
        %v5917 = vmax.f32 %v5831, 0.0
        %v5918 = vmax.f32 %v5833, 0.0
        %v5919 = vmax.f32 %v5837, 0.0
        %v5920 = vmax.f32 %v5839, 0.0
        %v5921 = vmax.f32 %v5843, 0.0
        %v5922 = vmax.f32 %v5845, 0.0
        %v5923 = vmax.f32 %v5849, 0.0
        %v5924 = vmax.f32 %v5851, 0.0
        %v5925 = vmax.f32 %v5855, 0.0
        %v5926 = vmax.f32 %v5857, 0.0
        %v5927 = vmax.f32 %v5861, 0.0
        %v5928 = vmax.f32 %v5863, 0.0
        %v5929 = vld [vmem:[#allocation15] sm:$0xff]
        %v5930 = vld [vmem:[#allocation15 + $0x8] sm:$0xff]
        %v5931 = vld [vmem:[#allocation15 + $0x10] sm:$0xff]
        %v5932 = vld [vmem:[#allocation15 + $0x18] sm:$0xff]
        %v5933 = vld [vmem:[#allocation15 + $0x20] sm:$0xff]
        %v5934 = vld [vmem:[#allocation15 + $0x28] sm:$0xff]
        %v5935 = vld [vmem:[#allocation15 + $0x30] sm:$0xff]
        %v5936 = vld [vmem:[#allocation15 + $0x38] sm:$0xff]
        %v5937 = vld [vmem:[#allocation15 + $0x40] sm:$0xff]
        %v5938 = vld [vmem:[#allocation15 + $0x48] sm:$0xff]
        %v5939 = vld [vmem:[#allocation15 + $0x50] sm:$0xff]
        %v5940 = vld [vmem:[#allocation15 + $0x58] sm:$0xff]
        %v5941 = vld [vmem:[#allocation15 + $0x60] sm:$0xff]
        %v5942 = vld [vmem:[#allocation15 + $0x68] sm:$0xff]
        %v5943 = vld [vmem:[#allocation15 + $0x70] sm:$0xff]
        %v5944 = vld [vmem:[#allocation15 + $0x78] sm:$0xff]
        %v5945 = vld [vmem:[#allocation15 + $0x80] sm:$0xff]
        %v5946 = vld [vmem:[#allocation15 + $0x88] sm:$0xff]
        %v5947 = vld [vmem:[#allocation15 + $0x90] sm:$0xff]
        %v5948 = vld [vmem:[#allocation15 + $0x98] sm:$0xff]
        %v5949 = vld [vmem:[#allocation15 + $0xa0] sm:$0xff]
        %v5950 = vld [vmem:[#allocation15 + $0xa8] sm:$0xff]
        %v5951 = vld [vmem:[#allocation15 + $0xb0] sm:$0xff]
        %v5952 = vld [vmem:[#allocation15 + $0xb8] sm:$0xff]
        %v5953 = vld [vmem:[#allocation15 + $0xc0] sm:$0xff]
        %v5954 = vld [vmem:[#allocation15 + $0xc8] sm:$0xff]
        %v5955 = vld [vmem:[#allocation15 + $0xd0] sm:$0xff]
        %v5956 = vld [vmem:[#allocation15 + $0xd8] sm:$0xff]
        %v5957 = vld [vmem:[#allocation15 + $0xe0] sm:$0xff]
        %v5958 = vld [vmem:[#allocation15 + $0xe8] sm:$0xff]
        %v5959 = vld [vmem:[#allocation15 + $0xf0] sm:$0xff]
        %v5960 = vld [vmem:[#allocation15 + $0xf8] sm:$0xff]
        %v5961 = vld [vmem:[#allocation16] sm:$0x1]
        %v5963 = vlaneseq
        %v5964 = vshrl.u32 %v5963, 7
        %v5965 = vsub.s32 0, %v5964
        %v5966 = vrot.slane %v5961, %v5965
        %5968 = vmatprep.subr.mxu0 0.0
        %5969 = vmatpush1.msra.mxu0 %v5944
        %5970 = vmatprep.subr.mxu0 0.0
        %5971 = vmatpush1.msra.mxu0 %v5943
        %5972 = vmatprep.subr.mxu0 0.0
        %5973 = vmatpush1.msra.mxu0 %v5942
        %5974 = vmatprep.subr.mxu0 0.0
        %5975 = vmatpush1.msra.mxu0 %v5941
        %5976 = vmatprep.subr.mxu0 0.0
        %5977 = vmatpush1.msra.mxu0 %v5940
        %5978 = vmatprep.subr.mxu0 0.0
        %5979 = vmatpush1.msra.mxu0 %v5939
        %5980 = vmatprep.subr.mxu0 0.0
        %5981 = vmatpush1.msra.mxu0 %v5938
        %5982 = vmatprep.subr.mxu0 0.0
        %5983 = vmatpush1.msra.mxu0 %v5937
        %5984 = vmatprep.subr.mxu0 0.0
        %5985 = vmatpush1.msra.mxu0 %v5936
        %5986 = vmatprep.subr.mxu0 0.0
        %5987 = vmatpush1.msra.mxu0 %v5935
        %5988 = vmatprep.subr.mxu0 0.0
        %5989 = vmatpush1.msra.mxu0 %v5934
        %5990 = vmatprep.subr.mxu0 0.0
        %5991 = vmatpush1.msra.mxu0 %v5933
        %5992 = vmatprep.subr.mxu0 0.0
        %5993 = vmatpush1.msra.mxu0 %v5932
        %5994 = vmatprep.subr.mxu0 0.0
        %5995 = vmatpush1.msra.mxu0 %v5931
        %5996 = vmatprep.subr.mxu0 0.0
        %5997 = vmatpush1.msra.mxu0 %v5930
        %5998 = vmatprep.subr.mxu0 0.0
        %5999 = vmatpush1.msra.mxu0 %v5929
        %6000 = vmatprep.subr.mxu0 0.0
        %6001 = vmatpush2.msra.mxu0 %v5960
        %6002 = vmatprep.subr.mxu0 0.0
        %6003 = vmatpush2.msra.mxu0 %v5959
        %6004 = vmatprep.subr.mxu0 0.0
        %6005 = vmatpush2.msra.mxu0 %v5958
        %6006 = vmatprep.subr.mxu0 0.0
        %6007 = vmatpush2.msra.mxu0 %v5957
        %6008 = vmatprep.subr.mxu0 0.0
        %6009 = vmatpush2.msra.mxu0 %v5956
        %6010 = vmatprep.subr.mxu0 0.0
        %6011 = vmatpush2.msra.mxu0 %v5955
        %6012 = vmatprep.subr.mxu0 0.0
        %6013 = vmatpush2.msra.mxu0 %v5954
        %6014 = vmatprep.subr.mxu0 0.0
        %6015 = vmatpush2.msra.mxu0 %v5953
        %6016 = vmatprep.subr.mxu0 0.0
        %6017 = vmatpush2.msra.mxu0 %v5952
        %6018 = vmatprep.subr.mxu0 0.0
        %6019 = vmatpush2.msra.mxu0 %v5951
        %6020 = vmatprep.subr.mxu0 0.0
        %6021 = vmatpush2.msra.mxu0 %v5950
        %6022 = vmatprep.subr.mxu0 0.0
        %6023 = vmatpush2.msra.mxu0 %v5949
        %6024 = vmatprep.subr.mxu0 0.0
        %6025 = vmatpush2.msra.mxu0 %v5948
        %6026 = vmatprep.subr.mxu0 0.0
        %6027 = vmatpush2.msra.mxu0 %v5947
        %6028 = vmatprep.subr.mxu0 0.0
        %6029 = vmatpush2.msra.mxu0 %v5946
        %6030 = vmatprep.subr.mxu0 0.0
        %6031 = vmatpush2.msra.mxu0 %v5945
        %6032 = vmatprep.mubr.f32.mxu0 %v5866
        %6033 = vmatmul.mubr.f32.gmra.mxu0 %v5865
        %v6034 = vpop.f32.mrf.mxu0
        %v6035 = vadd.f32 %v5966, %v6034
        %v6036 = vpop.f32.mrf.mxu0
        %6037 = vmatprep.mubr.f32.mxu0 %v5868
        %6038 = vmatmul.mubr.f32.gmra.mxu0 %v5867
        %v6039 = vpop.f32.mrf.mxu0
        %v6040 = vadd.f32 %v5966, %v6039
        %v6041 = vpop.f32.mrf.mxu0
        %6042 = vmatprep.mubr.f32.mxu0 %v5870
        %6043 = vmatmul.mubr.f32.gmra.mxu0 %v5869
        %v6044 = vpop.f32.mrf.mxu0
        %v6045 = vadd.f32 %v5966, %v6044
        %v6046 = vpop.f32.mrf.mxu0
        %6047 = vmatprep.mubr.f32.mxu0 %v5872
        %6048 = vmatmul.mubr.f32.gmra.mxu0 %v5871
        %v6049 = vpop.f32.mrf.mxu0
        %v6050 = vadd.f32 %v5966, %v6049
        %v6051 = vpop.f32.mrf.mxu0
        %6052 = vmatprep.mubr.f32.mxu0 %v5874
        %6053 = vmatmul.mubr.f32.gmra.mxu0 %v5873
        %v6054 = vpop.f32.mrf.mxu0
        %v6055 = vadd.f32 %v5966, %v6054
        %v6056 = vpop.f32.mrf.mxu0
        %6057 = vmatprep.mubr.f32.mxu0 %v5876
        %6058 = vmatmul.mubr.f32.gmra.mxu0 %v5875
        %v6059 = vpop.f32.mrf.mxu0
        %v6060 = vadd.f32 %v5966, %v6059
        %v6061 = vpop.f32.mrf.mxu0
        %6062 = vmatprep.mubr.f32.mxu0 %v5878
        %6063 = vmatmul.mubr.f32.gmra.mxu0 %v5877
        %v6064 = vpop.f32.mrf.mxu0
        %v6065 = vadd.f32 %v5966, %v6064
        %v6066 = vpop.f32.mrf.mxu0
        %6067 = vmatprep.mubr.f32.mxu0 %v5880
        %6068 = vmatmul.mubr.f32.gmra.mxu0 %v5879
        %v6069 = vpop.f32.mrf.mxu0
        %v6070 = vadd.f32 %v5966, %v6069
        %v6071 = vpop.f32.mrf.mxu0
        %6072 = vmatprep.mubr.f32.mxu0 %v5882
        %6073 = vmatmul.mubr.f32.gmra.mxu0 %v5881
        %v6074 = vpop.f32.mrf.mxu0
        %v6075 = vadd.f32 %v5966, %v6074
        %v6076 = vpop.f32.mrf.mxu0
        %6077 = vmatprep.mubr.f32.mxu0 %v5884
        %6078 = vmatmul.mubr.f32.gmra.mxu0 %v5883
        %v6079 = vpop.f32.mrf.mxu0
        %v6080 = vadd.f32 %v5966, %v6079
        %v6081 = vpop.f32.mrf.mxu0
        %6082 = vmatprep.mubr.f32.mxu0 %v5886
        %6083 = vmatmul.mubr.f32.gmra.mxu0 %v5885
        %v6084 = vpop.f32.mrf.mxu0
        %v6085 = vadd.f32 %v5966, %v6084
        %v6086 = vpop.f32.mrf.mxu0
        %6087 = vmatprep.mubr.f32.mxu0 %v5888
        %6088 = vmatmul.mubr.f32.gmra.mxu0 %v5887
        %v6089 = vpop.f32.mrf.mxu0
        %v6090 = vadd.f32 %v5966, %v6089
        %v6091 = vpop.f32.mrf.mxu0
        %6092 = vmatprep.mubr.f32.mxu0 %v5890
        %6093 = vmatmul.mubr.f32.gmra.mxu0 %v5889
        %v6094 = vpop.f32.mrf.mxu0
        %v6095 = vadd.f32 %v5966, %v6094
        %v6096 = vpop.f32.mrf.mxu0
        %6097 = vmatprep.mubr.f32.mxu0 %v5892
        %6098 = vmatmul.mubr.f32.gmra.mxu0 %v5891
        %v6099 = vpop.f32.mrf.mxu0
        %v6100 = vadd.f32 %v5966, %v6099
        %v6101 = vpop.f32.mrf.mxu0
        %6102 = vmatprep.mubr.f32.mxu0 %v5894
        %6103 = vmatmul.mubr.f32.gmra.mxu0 %v5893
        %v6104 = vpop.f32.mrf.mxu0
        %v6105 = vadd.f32 %v5966, %v6104
        %v6106 = vpop.f32.mrf.mxu0
        %6107 = vmatprep.mubr.f32.mxu0 %v5896
        %6108 = vmatmul.mubr.f32.gmra.mxu0 %v5895
        %v6109 = vpop.f32.mrf.mxu0
        %v6110 = vadd.f32 %v5966, %v6109
        %v6111 = vpop.f32.mrf.mxu0
        %6112 = vmatprep.mubr.f32.mxu0 %v5898
        %6113 = vmatmul.mubr.f32.gmra.mxu0 %v5897
        %v6114 = vpop.f32.mrf.mxu0
        %v6115 = vadd.f32 %v5966, %v6114
        %v6116 = vpop.f32.mrf.mxu0
        %6117 = vmatprep.mubr.f32.mxu0 %v5900
        %6118 = vmatmul.mubr.f32.gmra.mxu0 %v5899
        %v6119 = vpop.f32.mrf.mxu0
        %v6120 = vadd.f32 %v5966, %v6119
        %v6121 = vpop.f32.mrf.mxu0
        %6122 = vmatprep.mubr.f32.mxu0 %v5902
        %6123 = vmatmul.mubr.f32.gmra.mxu0 %v5901
        %v6124 = vpop.f32.mrf.mxu0
        %v6125 = vadd.f32 %v5966, %v6124
        %v6126 = vpop.f32.mrf.mxu0
        %6127 = vmatprep.mubr.f32.mxu0 %v5904
        %6128 = vmatmul.mubr.f32.gmra.mxu0 %v5903
        %v6129 = vpop.f32.mrf.mxu0
        %v6130 = vadd.f32 %v5966, %v6129
        %v6131 = vpop.f32.mrf.mxu0
        %6132 = vmatprep.mubr.f32.mxu0 %v5906
        %6133 = vmatmul.mubr.f32.gmra.mxu0 %v5905
        %v6134 = vpop.f32.mrf.mxu0
        %v6135 = vadd.f32 %v5966, %v6134
        %v6136 = vpop.f32.mrf.mxu0
        %6137 = vmatprep.mubr.f32.mxu0 %v5908
        %6138 = vmatmul.mubr.f32.gmra.mxu0 %v5907
        %v6139 = vpop.f32.mrf.mxu0
        %v6140 = vadd.f32 %v5966, %v6139
        %v6141 = vpop.f32.mrf.mxu0
        %6142 = vmatprep.mubr.f32.mxu0 %v5910
        %6143 = vmatmul.mubr.f32.gmra.mxu0 %v5909
        %v6144 = vpop.f32.mrf.mxu0
        %v6145 = vadd.f32 %v5966, %v6144
        %v6146 = vpop.f32.mrf.mxu0
        %6147 = vmatprep.mubr.f32.mxu0 %v5912
        %6148 = vmatmul.mubr.f32.gmra.mxu0 %v5911
        %v6149 = vpop.f32.mrf.mxu0
        %v6150 = vadd.f32 %v5966, %v6149
        %v6151 = vpop.f32.mrf.mxu0
        %6152 = vmatprep.mubr.f32.mxu0 %v5914
        %6153 = vmatmul.mubr.f32.gmra.mxu0 %v5913
        %v6154 = vpop.f32.mrf.mxu0
        %v6155 = vadd.f32 %v5966, %v6154
        %v6156 = vpop.f32.mrf.mxu0
        %6157 = vmatprep.mubr.f32.mxu0 %v5916
        %6158 = vmatmul.mubr.f32.gmra.mxu0 %v5915
        %v6159 = vpop.f32.mrf.mxu0
        %v6160 = vadd.f32 %v5966, %v6159
        %v6161 = vpop.f32.mrf.mxu0
        %6162 = vmatprep.mubr.f32.mxu0 %v5918
        %6163 = vmatmul.mubr.f32.gmra.mxu0 %v5917
        %v6164 = vpop.f32.mrf.mxu0
        %v6165 = vadd.f32 %v5966, %v6164
        %v6166 = vpop.f32.mrf.mxu0
        %6167 = vmatprep.mubr.f32.mxu0 %v5920
        %6168 = vmatmul.mubr.f32.gmra.mxu0 %v5919
        %v6169 = vpop.f32.mrf.mxu0
        %v6170 = vadd.f32 %v5966, %v6169
        %v6171 = vpop.f32.mrf.mxu0
        %6172 = vmatprep.mubr.f32.mxu0 %v5922
        %6173 = vmatmul.mubr.f32.gmra.mxu0 %v5921
        %v6174 = vpop.f32.mrf.mxu0
        %v6175 = vadd.f32 %v5966, %v6174
        %v6176 = vpop.f32.mrf.mxu0
        %6177 = vmatprep.mubr.f32.mxu0 %v5924
        %6178 = vmatmul.mubr.f32.gmra.mxu0 %v5923
        %v6179 = vpop.f32.mrf.mxu0
        %v6180 = vadd.f32 %v5966, %v6179
        %v6181 = vpop.f32.mrf.mxu0
        %6182 = vmatprep.mubr.f32.mxu0 %v5926
        %6183 = vmatmul.mubr.f32.gmra.mxu0 %v5925
        %v6184 = vpop.f32.mrf.mxu0
        %v6185 = vadd.f32 %v5966, %v6184
        %v6186 = vpop.f32.mrf.mxu0
        %6187 = vmatprep.mubr.f32.mxu0 %v5928
        %6188 = vmatmul.mubr.f32.gmra.mxu0 %v5927
        %v6189 = vpop.f32.mrf.mxu0
        %v6190 = vadd.f32 %v5966, %v6189
        %v6191 = vpop.f32.mrf.mxu0
        %6192 = vdwg.mxu0
        %v6193 = vmax.f32 %v6035, 0.0
        %v6194 = vmax.f32 %v6040, 0.0
        %v6195 = vmax.f32 %v6045, 0.0
        %v6196 = vmax.f32 %v6050, 0.0
        %v6197 = vmax.f32 %v6055, 0.0
        %v6198 = vmax.f32 %v6060, 0.0
        %v6199 = vmax.f32 %v6065, 0.0
        %v6200 = vmax.f32 %v6070, 0.0
        %v6201 = vmax.f32 %v6075, 0.0
        %v6202 = vmax.f32 %v6080, 0.0
        %v6203 = vmax.f32 %v6085, 0.0
        %v6204 = vmax.f32 %v6090, 0.0
        %v6205 = vmax.f32 %v6095, 0.0
        %v6206 = vmax.f32 %v6100, 0.0
        %v6207 = vmax.f32 %v6105, 0.0
        %v6208 = vmax.f32 %v6110, 0.0
        %v6209 = vmax.f32 %v6115, 0.0
        %v6210 = vmax.f32 %v6120, 0.0
        %v6211 = vmax.f32 %v6125, 0.0
        %v6212 = vmax.f32 %v6130, 0.0
        %v6213 = vmax.f32 %v6135, 0.0
        %v6214 = vmax.f32 %v6140, 0.0
        %v6215 = vmax.f32 %v6145, 0.0
        %v6216 = vmax.f32 %v6150, 0.0
        %v6217 = vmax.f32 %v6155, 0.0
        %v6218 = vmax.f32 %v6160, 0.0
        %v6219 = vmax.f32 %v6165, 0.0
        %v6220 = vmax.f32 %v6170, 0.0
        %v6221 = vmax.f32 %v6175, 0.0
        %v6222 = vmax.f32 %v6180, 0.0
        %v6223 = vmax.f32 %v6185, 0.0
        %v6224 = vmax.f32 %v6190, 0.0
        %v6225 = vld [vmem:[#allocation18] sm:$0xff]
        %v6226 = vld [vmem:[#allocation18 + $0x8] sm:$0xff]
        %v6227 = vld [vmem:[#allocation18 + $0x10] sm:$0xff]
        %v6228 = vld [vmem:[#allocation18 + $0x18] sm:$0xff]
        %v6229 = vld [vmem:[#allocation18 + $0x20] sm:$0xff]
        %v6230 = vld [vmem:[#allocation18 + $0x28] sm:$0xff]
        %v6231 = vld [vmem:[#allocation18 + $0x30] sm:$0xff]
        %v6232 = vld [vmem:[#allocation18 + $0x38] sm:$0xff]
        %v6233 = vld [vmem:[#allocation18 + $0x40] sm:$0xff]
        %v6234 = vld [vmem:[#allocation18 + $0x48] sm:$0xff]
        %v6235 = vld [vmem:[#allocation18 + $0x50] sm:$0xff]
        %v6236 = vld [vmem:[#allocation18 + $0x58] sm:$0xff]
        %v6237 = vld [vmem:[#allocation18 + $0x60] sm:$0xff]
        %v6238 = vld [vmem:[#allocation18 + $0x68] sm:$0xff]
        %v6239 = vld [vmem:[#allocation18 + $0x70] sm:$0xff]
        %v6240 = vld [vmem:[#allocation18 + $0x78] sm:$0xff]
        %v6241 = vld [vmem:[#allocation19] sm:$0x1]
        %v6243 = vlaneseq
        %v6244 = vshrl.u32 %v6243, 7
        %v6245 = vsub.s32 0, %v6244
        %v6246 = vrot.slane %v6241, %v6245
        %6248 = vmatprep.subr.mxu0 0.0
        %6249 = vmatpush1.msra.mxu0 %v6240
        %6250 = vmatprep.subr.mxu0 0.0
        %6251 = vmatpush1.msra.mxu0 %v6239
        %6252 = vmatprep.subr.mxu0 0.0
        %6253 = vmatpush1.msra.mxu0 %v6238
        %6254 = vmatprep.subr.mxu0 0.0
        %6255 = vmatpush1.msra.mxu0 %v6237
        %6256 = vmatprep.subr.mxu0 0.0
        %6257 = vmatpush1.msra.mxu0 %v6236
        %6258 = vmatprep.subr.mxu0 0.0
        %6259 = vmatpush1.msra.mxu0 %v6235
        %6260 = vmatprep.subr.mxu0 0.0
        %6261 = vmatpush1.msra.mxu0 %v6234
        %6262 = vmatprep.subr.mxu0 0.0
        %6263 = vmatpush1.msra.mxu0 %v6233
        %6264 = vmatprep.subr.mxu0 0.0
        %6265 = vmatpush1.msra.mxu0 %v6232
        %6266 = vmatprep.subr.mxu0 0.0
        %6267 = vmatpush1.msra.mxu0 %v6231
        %6268 = vmatprep.subr.mxu0 0.0
        %6269 = vmatpush1.msra.mxu0 %v6230
        %6270 = vmatprep.subr.mxu0 0.0
        %6271 = vmatpush1.msra.mxu0 %v6229
        %6272 = vmatprep.subr.mxu0 0.0
        %6273 = vmatpush1.msra.mxu0 %v6228
        %6274 = vmatprep.subr.mxu0 0.0
        %6275 = vmatpush1.msra.mxu0 %v6227
        %6276 = vmatprep.subr.mxu0 0.0
        %6277 = vmatpush1.msra.mxu0 %v6226
        %6278 = vmatprep.subr.mxu0 0.0
        %6279 = vmatpush1.msra.mxu0 %v6225
        %6280 = vmatprep.subr.mxu0 0.0
        %6281 = vmatpush2.msra.mxu0 0.0
        %6282 = vmatprep.subr.mxu0 0.0
        %6283 = vmatpush2.msra.mxu0 0.0
        %6284 = vmatprep.subr.mxu0 0.0
        %6285 = vmatpush2.msra.mxu0 0.0
        %6286 = vmatprep.subr.mxu0 0.0
        %6287 = vmatpush2.msra.mxu0 0.0
        %6288 = vmatprep.subr.mxu0 0.0
        %6289 = vmatpush2.msra.mxu0 0.0
        %6290 = vmatprep.subr.mxu0 0.0
        %6291 = vmatpush2.msra.mxu0 0.0
        %6292 = vmatprep.subr.mxu0 0.0
        %6293 = vmatpush2.msra.mxu0 0.0
        %6294 = vmatprep.subr.mxu0 0.0
        %6295 = vmatpush2.msra.mxu0 0.0
        %6296 = vmatprep.subr.mxu0 0.0
        %6297 = vmatpush2.msra.mxu0 0.0
        %6298 = vmatprep.subr.mxu0 0.0
        %6299 = vmatpush2.msra.mxu0 0.0
        %6300 = vmatprep.subr.mxu0 0.0
        %6301 = vmatpush2.msra.mxu0 0.0
        %6302 = vmatprep.subr.mxu0 0.0
        %6303 = vmatpush2.msra.mxu0 0.0
        %6304 = vmatprep.subr.mxu0 0.0
        %6305 = vmatpush2.msra.mxu0 0.0
        %6306 = vmatprep.subr.mxu0 0.0
        %6307 = vmatpush2.msra.mxu0 0.0
        %6308 = vmatprep.subr.mxu0 0.0
        %6309 = vmatpush2.msra.mxu0 0.0
        %6310 = vmatprep.subr.mxu0 0.0
        %6311 = vmatpush2.msra.mxu0 0.0
        %6312 = vmatprep.mubr.f32.mxu0 0.0
        %6313 = vmatmul.mubr.f32.gmra.mxu0 %v6193
        %v6314 = vpop.f32.mrf.mxu0
        %v6315 = vadd.f32 %v6246, %v6314
        %v6316 = vpop.f32.mrf.mxu0
        %6317 = vmatprep.mubr.f32.mxu0 0.0
        %6318 = vmatmul.mubr.f32.gmra.mxu0 %v6194
        %v6319 = vpop.f32.mrf.mxu0
        %v6320 = vadd.f32 %v6246, %v6319
        %v6321 = vpop.f32.mrf.mxu0
        %6322 = vmatprep.mubr.f32.mxu0 0.0
        %6323 = vmatmul.mubr.f32.gmra.mxu0 %v6195
        %v6324 = vpop.f32.mrf.mxu0
        %v6325 = vadd.f32 %v6246, %v6324
        %v6326 = vpop.f32.mrf.mxu0
        %6327 = vmatprep.mubr.f32.mxu0 0.0
        %6328 = vmatmul.mubr.f32.gmra.mxu0 %v6196
        %v6329 = vpop.f32.mrf.mxu0
        %v6330 = vadd.f32 %v6246, %v6329
        %v6331 = vpop.f32.mrf.mxu0
        %6332 = vmatprep.mubr.f32.mxu0 0.0
        %6333 = vmatmul.mubr.f32.gmra.mxu0 %v6197
        %v6334 = vpop.f32.mrf.mxu0
        %v6335 = vadd.f32 %v6246, %v6334
        %v6336 = vpop.f32.mrf.mxu0
        %6337 = vmatprep.mubr.f32.mxu0 0.0
        %6338 = vmatmul.mubr.f32.gmra.mxu0 %v6198
        %v6339 = vpop.f32.mrf.mxu0
        %v6340 = vadd.f32 %v6246, %v6339
        %v6341 = vpop.f32.mrf.mxu0
        %6342 = vmatprep.mubr.f32.mxu0 0.0
        %6343 = vmatmul.mubr.f32.gmra.mxu0 %v6199
        %v6344 = vpop.f32.mrf.mxu0
        %v6345 = vadd.f32 %v6246, %v6344
        %v6346 = vpop.f32.mrf.mxu0
        %6347 = vmatprep.mubr.f32.mxu0 0.0
        %6348 = vmatmul.mubr.f32.gmra.mxu0 %v6200
        %v6349 = vpop.f32.mrf.mxu0
        %v6350 = vadd.f32 %v6246, %v6349
        %v6351 = vpop.f32.mrf.mxu0
        %6352 = vmatprep.mubr.f32.mxu0 0.0
        %6353 = vmatmul.mubr.f32.gmra.mxu0 %v6201
        %v6354 = vpop.f32.mrf.mxu0
        %v6355 = vadd.f32 %v6246, %v6354
        %v6356 = vpop.f32.mrf.mxu0
        %6357 = vmatprep.mubr.f32.mxu0 0.0
        %6358 = vmatmul.mubr.f32.gmra.mxu0 %v6202
        %v6359 = vpop.f32.mrf.mxu0
        %v6360 = vadd.f32 %v6246, %v6359
        %v6361 = vpop.f32.mrf.mxu0
        %6362 = vmatprep.mubr.f32.mxu0 0.0
        %6363 = vmatmul.mubr.f32.gmra.mxu0 %v6203
        %v6364 = vpop.f32.mrf.mxu0
        %v6365 = vadd.f32 %v6246, %v6364
        %v6366 = vpop.f32.mrf.mxu0
        %6367 = vmatprep.mubr.f32.mxu0 0.0
        %6368 = vmatmul.mubr.f32.gmra.mxu0 %v6204
        %v6369 = vpop.f32.mrf.mxu0
        %v6370 = vadd.f32 %v6246, %v6369
        %v6371 = vpop.f32.mrf.mxu0
        %6372 = vmatprep.mubr.f32.mxu0 0.0
        %6373 = vmatmul.mubr.f32.gmra.mxu0 %v6205
        %v6374 = vpop.f32.mrf.mxu0
        %v6375 = vadd.f32 %v6246, %v6374
        %v6376 = vpop.f32.mrf.mxu0
        %6377 = vmatprep.mubr.f32.mxu0 0.0
        %6378 = vmatmul.mubr.f32.gmra.mxu0 %v6206
        %v6379 = vpop.f32.mrf.mxu0
        %v6380 = vadd.f32 %v6246, %v6379
        %v6381 = vpop.f32.mrf.mxu0
        %6382 = vmatprep.mubr.f32.mxu0 0.0
        %6383 = vmatmul.mubr.f32.gmra.mxu0 %v6207
        %v6384 = vpop.f32.mrf.mxu0
        %v6385 = vadd.f32 %v6246, %v6384
        %v6386 = vpop.f32.mrf.mxu0
        %6387 = vmatprep.mubr.f32.mxu0 0.0
        %6388 = vmatmul.mubr.f32.gmra.mxu0 %v6208
        %v6389 = vpop.f32.mrf.mxu0
        %v6390 = vadd.f32 %v6246, %v6389
        %v6391 = vpop.f32.mrf.mxu0
        %6392 = vmatprep.mubr.f32.mxu0 0.0
        %6393 = vmatmul.mubr.f32.gmra.mxu0 %v6209
        %v6394 = vpop.f32.mrf.mxu0
        %v6395 = vadd.f32 %v6246, %v6394
        %v6396 = vpop.f32.mrf.mxu0
        %6397 = vmatprep.mubr.f32.mxu0 0.0
        %6398 = vmatmul.mubr.f32.gmra.mxu0 %v6210
        %v6399 = vpop.f32.mrf.mxu0
        %v6400 = vadd.f32 %v6246, %v6399
        %v6401 = vpop.f32.mrf.mxu0
        %6402 = vmatprep.mubr.f32.mxu0 0.0
        %6403 = vmatmul.mubr.f32.gmra.mxu0 %v6211
        %v6404 = vpop.f32.mrf.mxu0
        %v6405 = vadd.f32 %v6246, %v6404
        %v6406 = vpop.f32.mrf.mxu0
        %6407 = vmatprep.mubr.f32.mxu0 0.0
        %6408 = vmatmul.mubr.f32.gmra.mxu0 %v6212
        %v6409 = vpop.f32.mrf.mxu0
        %v6410 = vadd.f32 %v6246, %v6409
        %v6411 = vpop.f32.mrf.mxu0
        %6412 = vmatprep.mubr.f32.mxu0 0.0
        %6413 = vmatmul.mubr.f32.gmra.mxu0 %v6213
        %v6414 = vpop.f32.mrf.mxu0
        %v6415 = vadd.f32 %v6246, %v6414
        %v6416 = vpop.f32.mrf.mxu0
        %6417 = vmatprep.mubr.f32.mxu0 0.0
        %6418 = vmatmul.mubr.f32.gmra.mxu0 %v6214
        %v6419 = vpop.f32.mrf.mxu0
        %v6420 = vadd.f32 %v6246, %v6419
        %v6421 = vpop.f32.mrf.mxu0
        %6422 = vmatprep.mubr.f32.mxu0 0.0
        %6423 = vmatmul.mubr.f32.gmra.mxu0 %v6215
        %v6424 = vpop.f32.mrf.mxu0
        %v6425 = vadd.f32 %v6246, %v6424
        %v6426 = vpop.f32.mrf.mxu0
        %6427 = vmatprep.mubr.f32.mxu0 0.0
        %6428 = vmatmul.mubr.f32.gmra.mxu0 %v6216
        %v6429 = vpop.f32.mrf.mxu0
        %v6430 = vadd.f32 %v6246, %v6429
        %v6431 = vpop.f32.mrf.mxu0
        %6432 = vmatprep.mubr.f32.mxu0 0.0
        %6433 = vmatmul.mubr.f32.gmra.mxu0 %v6217
        %v6434 = vpop.f32.mrf.mxu0
        %v6435 = vadd.f32 %v6246, %v6434
        %v6436 = vpop.f32.mrf.mxu0
        %6437 = vmatprep.mubr.f32.mxu0 0.0
        %6438 = vmatmul.mubr.f32.gmra.mxu0 %v6218
        %v6439 = vpop.f32.mrf.mxu0
        %v6440 = vadd.f32 %v6246, %v6439
        %v6441 = vpop.f32.mrf.mxu0
        %6442 = vmatprep.mubr.f32.mxu0 0.0
        %6443 = vmatmul.mubr.f32.gmra.mxu0 %v6219
        %v6444 = vpop.f32.mrf.mxu0
        %v6445 = vadd.f32 %v6246, %v6444
        %v6446 = vpop.f32.mrf.mxu0
        %6447 = vmatprep.mubr.f32.mxu0 0.0
        %6448 = vmatmul.mubr.f32.gmra.mxu0 %v6220
        %v6449 = vpop.f32.mrf.mxu0
        %v6450 = vadd.f32 %v6246, %v6449
        %v6451 = vpop.f32.mrf.mxu0
        %6452 = vmatprep.mubr.f32.mxu0 0.0
        %6453 = vmatmul.mubr.f32.gmra.mxu0 %v6221
        %v6454 = vpop.f32.mrf.mxu0
        %v6455 = vadd.f32 %v6246, %v6454
        %v6456 = vpop.f32.mrf.mxu0
        %6457 = vmatprep.mubr.f32.mxu0 0.0
        %6458 = vmatmul.mubr.f32.gmra.mxu0 %v6222
        %v6459 = vpop.f32.mrf.mxu0
        %v6460 = vadd.f32 %v6246, %v6459
        %v6461 = vpop.f32.mrf.mxu0
        %6462 = vmatprep.mubr.f32.mxu0 0.0
        %6463 = vmatmul.mubr.f32.gmra.mxu0 %v6223
        %v6464 = vpop.f32.mrf.mxu0
        %v6465 = vadd.f32 %v6246, %v6464
        %v6466 = vpop.f32.mrf.mxu0
        %6467 = vmatprep.mubr.f32.mxu0 0.0
        %6468 = vmatmul.mubr.f32.gmra.mxu0 %v6224
        %v6469 = vpop.f32.mrf.mxu0
        %v6470 = vadd.f32 %v6246, %v6469
        %v6471 = vpop.f32.mrf.mxu0
        %6472 = vdwg.mxu0
        %v6473 = vmax.f32 %v6315, 0.0
        %v6474 = vmax.f32 %v6320, 0.0
        %v6475 = vmax.f32 %v6325, 0.0
        %v6476 = vmax.f32 %v6330, 0.0
        %v6477 = vmax.f32 %v6335, 0.0
        %v6478 = vmax.f32 %v6340, 0.0
        %v6479 = vmax.f32 %v6345, 0.0
        %v6480 = vmax.f32 %v6350, 0.0
        %v6481 = vmax.f32 %v6355, 0.0
        %v6482 = vmax.f32 %v6360, 0.0
        %v6483 = vmax.f32 %v6365, 0.0
        %v6484 = vmax.f32 %v6370, 0.0
        %v6485 = vmax.f32 %v6375, 0.0
        %v6486 = vmax.f32 %v6380, 0.0
        %v6487 = vmax.f32 %v6385, 0.0
        %v6488 = vmax.f32 %v6390, 0.0
        %v6489 = vmax.f32 %v6395, 0.0
        %v6490 = vmax.f32 %v6400, 0.0
        %v6491 = vmax.f32 %v6405, 0.0
        %v6492 = vmax.f32 %v6410, 0.0
        %v6493 = vmax.f32 %v6415, 0.0
        %v6494 = vmax.f32 %v6420, 0.0
        %v6495 = vmax.f32 %v6425, 0.0
        %v6496 = vmax.f32 %v6430, 0.0
        %v6497 = vmax.f32 %v6435, 0.0
        %v6498 = vmax.f32 %v6440, 0.0
        %v6499 = vmax.f32 %v6445, 0.0
        %v6500 = vmax.f32 %v6450, 0.0
        %v6501 = vmax.f32 %v6455, 0.0
        %v6502 = vmax.f32 %v6460, 0.0
        %v6503 = vmax.f32 %v6465, 0.0
        %v6504 = vmax.f32 %v6470, 0.0
        %v6505 = vld [vmem:[#allocation21] sm:$0xff]
        %v6506 = vld [vmem:[#allocation21 + $0x8] sm:$0xff]
        %v6507 = vld [vmem:[#allocation21 + $0x10] sm:$0xff]
        %v6508 = vld [vmem:[#allocation21 + $0x18] sm:$0xff]
        %v6509 = vld [vmem:[#allocation21 + $0x20] sm:$0xff]
        %v6510 = vld [vmem:[#allocation21 + $0x28] sm:$0xff]
        %v6511 = vld [vmem:[#allocation21 + $0x30] sm:$0xff]
        %vm6512 = vcmask 457728
        %v6514 = vsel %vm6512, %v6473, 0
        %v6517 = vsel %vm6512, %v6474, 0
        %v6520 = vsel %vm6512, %v6475, 0
        %v6523 = vsel %vm6512, %v6476, 0
        %v6526 = vsel %vm6512, %v6477, 0
        %v6529 = vsel %vm6512, %v6478, 0
        %v6532 = vsel %vm6512, %v6479, 0
        %v6535 = vsel %vm6512, %v6480, 0
        %v6538 = vsel %vm6512, %v6481, 0
        %v6541 = vsel %vm6512, %v6482, 0
        %v6544 = vsel %vm6512, %v6483, 0
        %v6547 = vsel %vm6512, %v6484, 0
        %v6550 = vsel %vm6512, %v6485, 0
        %v6553 = vsel %vm6512, %v6486, 0
        %v6556 = vsel %vm6512, %v6487, 0
        %v6559 = vsel %vm6512, %v6488, 0
        %v6562 = vsel %vm6512, %v6489, 0
        %v6565 = vsel %vm6512, %v6490, 0
        %v6568 = vsel %vm6512, %v6491, 0
        %v6571 = vsel %vm6512, %v6492, 0
        %v6574 = vsel %vm6512, %v6493, 0
        %v6577 = vsel %vm6512, %v6494, 0
        %v6580 = vsel %vm6512, %v6495, 0
        %v6583 = vsel %vm6512, %v6496, 0
        %v6586 = vsel %vm6512, %v6497, 0
        %v6589 = vsel %vm6512, %v6498, 0
        %v6592 = vsel %vm6512, %v6499, 0
        %v6595 = vsel %vm6512, %v6500, 0
        %v6598 = vsel %vm6512, %v6501, 0
        %v6601 = vsel %vm6512, %v6502, 0
        %v6604 = vsel %vm6512, %v6503, 0
        %v6607 = vsel %vm6512, %v6504, 0
        %6609 = vmatprep.subr.mxu0 0.0
        %6610 = vmatpush1.msra.mxu0 0.0
        %6611 = vmatprep.subr.mxu0 0.0
        %6612 = vmatpush1.msra.mxu0 0.0
        %6613 = vmatprep.subr.mxu0 0.0
        %6614 = vmatpush1.msra.mxu0 0.0
        %6615 = vmatprep.subr.mxu0 0.0
        %6616 = vmatpush1.msra.mxu0 0.0
        %6617 = vmatprep.subr.mxu0 0.0
        %6618 = vmatpush1.msra.mxu0 0.0
        %6619 = vmatprep.subr.mxu0 0.0
        %6620 = vmatpush1.msra.mxu0 0.0
        %6621 = vmatprep.subr.mxu0 0.0
        %6622 = vmatpush1.msra.mxu0 0.0
        %6623 = vmatprep.subr.mxu0 0.0
        %6624 = vmatpush1.msra.mxu0 0.0
        %6625 = vmatprep.subr.mxu0 0.0
        %6626 = vmatpush1.msra.mxu0 0.0
        %6627 = vmatprep.subr.mxu0 0.0
        %6628 = vmatpush1.msra.mxu0 %v6511
        %6629 = vmatprep.subr.mxu0 0.0
        %6630 = vmatpush1.msra.mxu0 %v6510
        %6631 = vmatprep.subr.mxu0 0.0
        %6632 = vmatpush1.msra.mxu0 %v6509
        %6633 = vmatprep.subr.mxu0 0.0
        %6634 = vmatpush1.msra.mxu0 %v6508
        %6635 = vmatprep.subr.mxu0 0.0
        %6636 = vmatpush1.msra.mxu0 %v6507
        %6637 = vmatprep.subr.mxu0 0.0
        %6638 = vmatpush1.msra.mxu0 %v6506
        %6639 = vmatprep.subr.mxu0 0.0
        %6640 = vmatpush1.msra.mxu0 %v6505
        %6641 = vmatprep.subr.mxu0 0.0
        %6642 = vmatpush2.msra.mxu0 0.0
        %6643 = vmatprep.subr.mxu0 0.0
        %6644 = vmatpush2.msra.mxu0 0.0
        %6645 = vmatprep.subr.mxu0 0.0
        %6646 = vmatpush2.msra.mxu0 0.0
        %6647 = vmatprep.subr.mxu0 0.0
        %6648 = vmatpush2.msra.mxu0 0.0
        %6649 = vmatprep.subr.mxu0 0.0
        %6650 = vmatpush2.msra.mxu0 0.0
        %6651 = vmatprep.subr.mxu0 0.0
        %6652 = vmatpush2.msra.mxu0 0.0
        %6653 = vmatprep.subr.mxu0 0.0
        %6654 = vmatpush2.msra.mxu0 0.0
        %6655 = vmatprep.subr.mxu0 0.0
        %6656 = vmatpush2.msra.mxu0 0.0
        %6657 = vmatprep.subr.mxu0 0.0
        %6658 = vmatpush2.msra.mxu0 0.0
        %6659 = vmatprep.subr.mxu0 0.0
        %6660 = vmatpush2.msra.mxu0 0.0
        %6661 = vmatprep.subr.mxu0 0.0
        %6662 = vmatpush2.msra.mxu0 0.0
        %6663 = vmatprep.subr.mxu0 0.0
        %6664 = vmatpush2.msra.mxu0 0.0
        %6665 = vmatprep.subr.mxu0 0.0
        %6666 = vmatpush2.msra.mxu0 0.0
        %6667 = vmatprep.subr.mxu0 0.0
        %6668 = vmatpush2.msra.mxu0 0.0
        %6669 = vmatprep.subr.mxu0 0.0
        %6670 = vmatpush2.msra.mxu0 0.0
        %6671 = vmatprep.subr.mxu0 0.0
        %6672 = vmatpush2.msra.mxu0 0.0
        %6673 = vmatprep.mubr.f32.mxu0 0.0
        %6674 = vmatmul.mubr.f32.gmra.mxu0 %v6514
        %v6675 = vpop.f32.mrf.mxu0
        %v6676 = vadd.f32 0.0, %v6675
        %v6677 = vpop.f32.mrf.mxu0
        %6678 = vmatprep.mubr.f32.mxu0 0.0
        %6679 = vmatmul.mubr.f32.gmra.mxu0 %v6517
        %v6680 = vpop.f32.mrf.mxu0
        %v6681 = vadd.f32 0.0, %v6680
        %v6682 = vpop.f32.mrf.mxu0
        %6683 = vmatprep.mubr.f32.mxu0 0.0
        %6684 = vmatmul.mubr.f32.gmra.mxu0 %v6520
        %v6685 = vpop.f32.mrf.mxu0
        %v6686 = vadd.f32 0.0, %v6685
        %v6687 = vpop.f32.mrf.mxu0
        %6688 = vmatprep.mubr.f32.mxu0 0.0
        %6689 = vmatmul.mubr.f32.gmra.mxu0 %v6523
        %v6690 = vpop.f32.mrf.mxu0
        %v6691 = vadd.f32 0.0, %v6690
        %v6692 = vpop.f32.mrf.mxu0
        %6693 = vmatprep.mubr.f32.mxu0 0.0
        %6694 = vmatmul.mubr.f32.gmra.mxu0 %v6526
        %v6695 = vpop.f32.mrf.mxu0
        %v6696 = vadd.f32 0.0, %v6695
        %v6697 = vpop.f32.mrf.mxu0
        %6698 = vmatprep.mubr.f32.mxu0 0.0
        %6699 = vmatmul.mubr.f32.gmra.mxu0 %v6529
        %v6700 = vpop.f32.mrf.mxu0
        %v6701 = vadd.f32 0.0, %v6700
        %v6702 = vpop.f32.mrf.mxu0
        %6703 = vmatprep.mubr.f32.mxu0 0.0
        %6704 = vmatmul.mubr.f32.gmra.mxu0 %v6532
        %v6705 = vpop.f32.mrf.mxu0
        %v6706 = vadd.f32 0.0, %v6705
        %v6707 = vpop.f32.mrf.mxu0
        %6708 = vmatprep.mubr.f32.mxu0 0.0
        %6709 = vmatmul.mubr.f32.gmra.mxu0 %v6535
        %v6710 = vpop.f32.mrf.mxu0
        %v6711 = vadd.f32 0.0, %v6710
        %v6712 = vpop.f32.mrf.mxu0
        %6713 = vmatprep.mubr.f32.mxu0 0.0
        %6714 = vmatmul.mubr.f32.gmra.mxu0 %v6538
        %v6715 = vpop.f32.mrf.mxu0
        %v6716 = vadd.f32 0.0, %v6715
        %v6717 = vpop.f32.mrf.mxu0
        %6718 = vmatprep.mubr.f32.mxu0 0.0
        %6719 = vmatmul.mubr.f32.gmra.mxu0 %v6541
        %v6720 = vpop.f32.mrf.mxu0
        %v6721 = vadd.f32 0.0, %v6720
        %v6722 = vpop.f32.mrf.mxu0
        %6723 = vmatprep.mubr.f32.mxu0 0.0
        %6724 = vmatmul.mubr.f32.gmra.mxu0 %v6544
        %v6725 = vpop.f32.mrf.mxu0
        %v6726 = vadd.f32 0.0, %v6725
        %v6727 = vpop.f32.mrf.mxu0
        %6728 = vmatprep.mubr.f32.mxu0 0.0
        %6729 = vmatmul.mubr.f32.gmra.mxu0 %v6547
        %v6730 = vpop.f32.mrf.mxu0
        %v6731 = vadd.f32 0.0, %v6730
        %v6732 = vpop.f32.mrf.mxu0
        %6733 = vmatprep.mubr.f32.mxu0 0.0
        %6734 = vmatmul.mubr.f32.gmra.mxu0 %v6550
        %v6735 = vpop.f32.mrf.mxu0
        %v6736 = vadd.f32 0.0, %v6735
        %v6737 = vpop.f32.mrf.mxu0
        %6738 = vmatprep.mubr.f32.mxu0 0.0
        %6739 = vmatmul.mubr.f32.gmra.mxu0 %v6553
        %v6740 = vpop.f32.mrf.mxu0
        %v6741 = vadd.f32 0.0, %v6740
        %v6742 = vpop.f32.mrf.mxu0
        %6743 = vmatprep.mubr.f32.mxu0 0.0
        %6744 = vmatmul.mubr.f32.gmra.mxu0 %v6556
        %v6745 = vpop.f32.mrf.mxu0
        %v6746 = vadd.f32 0.0, %v6745
        %v6747 = vpop.f32.mrf.mxu0
        %6748 = vmatprep.mubr.f32.mxu0 0.0
        %6749 = vmatmul.mubr.f32.gmra.mxu0 %v6559
        %v6750 = vpop.f32.mrf.mxu0
        %v6751 = vadd.f32 0.0, %v6750
        %v6752 = vpop.f32.mrf.mxu0
        %6753 = vmatprep.mubr.f32.mxu0 0.0
        %6754 = vmatmul.mubr.f32.gmra.mxu0 %v6562
        %v6755 = vpop.f32.mrf.mxu0
        %v6756 = vadd.f32 0.0, %v6755
        %v6757 = vpop.f32.mrf.mxu0
        %6758 = vmatprep.mubr.f32.mxu0 0.0
        %6759 = vmatmul.mubr.f32.gmra.mxu0 %v6565
        %v6760 = vpop.f32.mrf.mxu0
        %v6761 = vadd.f32 0.0, %v6760
        %v6762 = vpop.f32.mrf.mxu0
        %6763 = vmatprep.mubr.f32.mxu0 0.0
        %6764 = vmatmul.mubr.f32.gmra.mxu0 %v6568
        %v6765 = vpop.f32.mrf.mxu0
        %v6766 = vadd.f32 0.0, %v6765
        %v6767 = vpop.f32.mrf.mxu0
        %6768 = vmatprep.mubr.f32.mxu0 0.0
        %6769 = vmatmul.mubr.f32.gmra.mxu0 %v6571
        %v6770 = vpop.f32.mrf.mxu0
        %v6771 = vadd.f32 0.0, %v6770
        %v6772 = vpop.f32.mrf.mxu0
        %6773 = vmatprep.mubr.f32.mxu0 0.0
        %6774 = vmatmul.mubr.f32.gmra.mxu0 %v6574
        %v6775 = vpop.f32.mrf.mxu0
        %v6776 = vadd.f32 0.0, %v6775
        %v6777 = vpop.f32.mrf.mxu0
        %6778 = vmatprep.mubr.f32.mxu0 0.0
        %6779 = vmatmul.mubr.f32.gmra.mxu0 %v6577
        %v6780 = vpop.f32.mrf.mxu0
        %v6781 = vadd.f32 0.0, %v6780
        %v6782 = vpop.f32.mrf.mxu0
        %6783 = vmatprep.mubr.f32.mxu0 0.0
        %6784 = vmatmul.mubr.f32.gmra.mxu0 %v6580
        %v6785 = vpop.f32.mrf.mxu0
        %v6786 = vadd.f32 0.0, %v6785
        %v6787 = vpop.f32.mrf.mxu0
        %6788 = vmatprep.mubr.f32.mxu0 0.0
        %6789 = vmatmul.mubr.f32.gmra.mxu0 %v6583
        %v6790 = vpop.f32.mrf.mxu0
        %v6791 = vadd.f32 0.0, %v6790
        %v6792 = vpop.f32.mrf.mxu0
        %6793 = vmatprep.mubr.f32.mxu0 0.0
        %6794 = vmatmul.mubr.f32.gmra.mxu0 %v6586
        %v6795 = vpop.f32.mrf.mxu0
        %v6796 = vadd.f32 0.0, %v6795
        %v6797 = vpop.f32.mrf.mxu0
        %6798 = vmatprep.mubr.f32.mxu0 0.0
        %6799 = vmatmul.mubr.f32.gmra.mxu0 %v6589
        %v6800 = vpop.f32.mrf.mxu0
        %v6801 = vadd.f32 0.0, %v6800
        %v6802 = vpop.f32.mrf.mxu0
        %6803 = vmatprep.mubr.f32.mxu0 0.0
        %6804 = vmatmul.mubr.f32.gmra.mxu0 %v6592
        %v6805 = vpop.f32.mrf.mxu0
        %v6806 = vadd.f32 0.0, %v6805
        %v6807 = vpop.f32.mrf.mxu0
        %6808 = vmatprep.mubr.f32.mxu0 0.0
        %6809 = vmatmul.mubr.f32.gmra.mxu0 %v6595
        %v6810 = vpop.f32.mrf.mxu0
        %v6811 = vadd.f32 0.0, %v6810
        %v6812 = vpop.f32.mrf.mxu0
        %6813 = vmatprep.mubr.f32.mxu0 0.0
        %6814 = vmatmul.mubr.f32.gmra.mxu0 %v6598
        %v6815 = vpop.f32.mrf.mxu0
        %v6816 = vadd.f32 0.0, %v6815
        %v6817 = vpop.f32.mrf.mxu0
        %6818 = vmatprep.mubr.f32.mxu0 0.0
        %6819 = vmatmul.mubr.f32.gmra.mxu0 %v6601
        %v6820 = vpop.f32.mrf.mxu0
        %v6821 = vadd.f32 0.0, %v6820
        %v6822 = vpop.f32.mrf.mxu0
        %6823 = vmatprep.mubr.f32.mxu0 0.0
        %6824 = vmatmul.mubr.f32.gmra.mxu0 %v6604
        %v6825 = vpop.f32.mrf.mxu0
        %v6826 = vadd.f32 0.0, %v6825
        %v6827 = vpop.f32.mrf.mxu0
        %6828 = vmatprep.mubr.f32.mxu0 0.0
        %6829 = vmatmul.mubr.f32.gmra.mxu0 %v6607
        %v6830 = vpop.f32.mrf.mxu0
        %v6831 = vadd.f32 0.0, %v6830
        %v6832 = vpop.f32.mrf.mxu0
        %6833 = vdwg.mxu0
        %v6834 = vadd.f32 %v3013, %v6676
        %v6835 = vadd.f32 %v3014, %v6681
        %v6836 = vadd.f32 %v3015, %v6686
        %v6837 = vadd.f32 %v3016, %v6691
        %v6838 = vadd.f32 %v3017, %v6696
        %v6839 = vadd.f32 %v3018, %v6701
        %v6840 = vadd.f32 %v3019, %v6706
        %v6841 = vadd.f32 %v3020, %v6711
        %v6842 = vadd.f32 %v3021, %v6716
        %v6843 = vadd.f32 %v3022, %v6721
        %v6844 = vadd.f32 %v3023, %v6726
        %v6845 = vadd.f32 %v3024, %v6731
        %v6846 = vadd.f32 %v3025, %v6736
        %v6847 = vadd.f32 %v3026, %v6741
        %v6848 = vadd.f32 %v3027, %v6746
        %v6849 = vadd.f32 %v3028, %v6751
        %v6850 = vadd.f32 %v3029, %v6756
        %v6851 = vadd.f32 %v3030, %v6761
        %v6852 = vadd.f32 %v3031, %v6766
        %v6853 = vadd.f32 %v3032, %v6771
        %v6854 = vadd.f32 %v3033, %v6776
        %v6855 = vadd.f32 %v3034, %v6781
        %v6856 = vadd.f32 %v3035, %v6786
        %v6857 = vadd.f32 %v3036, %v6791
        %v6858 = vadd.f32 %v3037, %v6796
        %v6859 = vadd.f32 %v3038, %v6801
        %v6860 = vadd.f32 %v3039, %v6806
        %v6861 = vadd.f32 %v3040, %v6811
        %v6862 = vadd.f32 %v3041, %v6816
        %v6863 = vadd.f32 %v3042, %v6821
        %v6864 = vadd.f32 %v3043, %v6826
        %v6865 = vadd.f32 %v3044, %v6831
        %s6866 = scalar_lea.vmem [#allocation12], 1024
        %v6867 = vld [vmem:[%s6866] sm:$0xff]
        %v6868 = vld [vmem:[%s6866 + $0x8] sm:$0xff]
        %v6869 = vld [vmem:[%s6866 + $0x10] sm:$0xff]
        %v6870 = vld [vmem:[%s6866 + $0x18] sm:$0xff]
        %v6871 = vld [vmem:[%s6866 + $0x20] sm:$0xff]
        %v6872 = vld [vmem:[%s6866 + $0x28] sm:$0xff]
        %v6873 = vld [vmem:[%s6866 + $0x30] sm:$0xff]
        %v6874 = vld [vmem:[%s6866 + $0x38] sm:$0xff]
        %v6875 = vld [vmem:[%s6866 + $0x40] sm:$0xff]
        %v6876 = vld [vmem:[%s6866 + $0x48] sm:$0xff]
        %v6877 = vld [vmem:[%s6866 + $0x50] sm:$0xff]
        %v6878 = vld [vmem:[%s6866 + $0x58] sm:$0xff]
        %v6879 = vld [vmem:[%s6866 + $0x60] sm:$0xff]
        %v6880 = vld [vmem:[%s6866 + $0x68] sm:$0xff]
        %v6881 = vld [vmem:[%s6866 + $0x70] sm:$0xff]
        %v6882 = vld [vmem:[%s6866 + $0x78] sm:$0xff]
        %v6883 = vld [vmem:[%s6866 + $0x80] sm:$0xff]
        %v6884 = vld [vmem:[%s6866 + $0x88] sm:$0xff]
        %v6885 = vld [vmem:[%s6866 + $0x90] sm:$0xff]
        %v6886 = vld [vmem:[%s6866 + $0x98] sm:$0xff]
        %v6887 = vld [vmem:[%s6866 + $0xa0] sm:$0xff]
        %v6888 = vld [vmem:[%s6866 + $0xa8] sm:$0xff]
        %v6889 = vld [vmem:[%s6866 + $0xb0] sm:$0xff]
        %v6890 = vld [vmem:[%s6866 + $0xb8] sm:$0xff]
        %v6891 = vld [vmem:[%s6866 + $0xc0] sm:$0xff]
        %v6892 = vld [vmem:[%s6866 + $0xc8] sm:$0xff]
        %v6893 = vld [vmem:[%s6866 + $0xd0] sm:$0xff]
        %v6894 = vld [vmem:[%s6866 + $0xd8] sm:$0xff]
        %v6895 = vld [vmem:[%s6866 + $0xe0] sm:$0xff]
        %v6896 = vld [vmem:[%s6866 + $0xe8] sm:$0xff]
        %v6897 = vld [vmem:[%s6866 + $0xf0] sm:$0xff]
        %v6898 = vld [vmem:[%s6866 + $0xf8] sm:$0xff]
        %v6899 = vld [vmem:[%s6866 + $0x100] sm:$0xff]
        %v6900 = vld [vmem:[%s6866 + $0x108] sm:$0xff]
        %v6901 = vld [vmem:[%s6866 + $0x110] sm:$0xff]
        %v6902 = vld [vmem:[%s6866 + $0x118] sm:$0xff]
        %v6903 = vld [vmem:[%s6866 + $0x120] sm:$0xff]
        %v6904 = vld [vmem:[%s6866 + $0x128] sm:$0xff]
        %v6905 = vld [vmem:[%s6866 + $0x130] sm:$0xff]
        %v6906 = vld [vmem:[%s6866 + $0x138] sm:$0xff]
        %v6907 = vld [vmem:[%s6866 + $0x140] sm:$0xff]
        %v6908 = vld [vmem:[%s6866 + $0x148] sm:$0xff]
        %v6909 = vld [vmem:[%s6866 + $0x150] sm:$0xff]
        %v6910 = vld [vmem:[%s6866 + $0x158] sm:$0xff]
        %v6911 = vld [vmem:[%s6866 + $0x160] sm:$0xff]
        %v6912 = vld [vmem:[%s6866 + $0x168] sm:$0xff]
        %v6913 = vld [vmem:[%s6866 + $0x170] sm:$0xff]
        %v6914 = vld [vmem:[%s6866 + $0x178] sm:$0xff]
        %v6915 = vld [vmem:[%s6866 + $0x180] sm:$0xff]
        %v6916 = vld [vmem:[%s6866 + $0x188] sm:$0xff]
        %v6917 = vld [vmem:[%s6866 + $0x190] sm:$0xff]
        %v6918 = vld [vmem:[%s6866 + $0x198] sm:$0xff]
        %v6919 = vld [vmem:[%s6866 + $0x1a0] sm:$0xff]
        %v6920 = vld [vmem:[%s6866 + $0x1a8] sm:$0xff]
        %v6921 = vld [vmem:[%s6866 + $0x1b0] sm:$0xff]
        %v6922 = vld [vmem:[%s6866 + $0x1b8] sm:$0xff]
        %v6923 = vld [vmem:[%s6866 + $0x1c0] sm:$0xff]
        %v6924 = vld [vmem:[%s6866 + $0x1c8] sm:$0xff]
        %v6925 = vld [vmem:[%s6866 + $0x1d0] sm:$0xff]
        %v6926 = vld [vmem:[%s6866 + $0x1d8] sm:$0xff]
        %v6927 = vld [vmem:[%s6866 + $0x1e0] sm:$0xff]
        %v6928 = vld [vmem:[%s6866 + $0x1e8] sm:$0xff]
        %v6929 = vld [vmem:[%s6866 + $0x1f0] sm:$0xff]
        %v6930 = vld [vmem:[%s6866 + $0x1f8] sm:$0xff]
        %v6931 = vld [vmem:[%s6866 + $0x200] sm:$0xff]
        %v6932 = vld [vmem:[%s6866 + $0x208] sm:$0xff]
        %v6933 = vld [vmem:[%s6866 + $0x210] sm:$0xff]
        %v6934 = vld [vmem:[%s6866 + $0x218] sm:$0xff]
        %v6935 = vld [vmem:[%s6866 + $0x220] sm:$0xff]
        %v6936 = vld [vmem:[%s6866 + $0x228] sm:$0xff]
        %v6937 = vld [vmem:[%s6866 + $0x230] sm:$0xff]
        %v6938 = vld [vmem:[%s6866 + $0x238] sm:$0xff]
        %v6939 = vld [vmem:[%s6866 + $0x240] sm:$0xff]
        %v6940 = vld [vmem:[%s6866 + $0x248] sm:$0xff]
        %v6941 = vld [vmem:[%s6866 + $0x250] sm:$0xff]
        %v6942 = vld [vmem:[%s6866 + $0x258] sm:$0xff]
        %v6943 = vld [vmem:[%s6866 + $0x260] sm:$0xff]
        %v6944 = vld [vmem:[%s6866 + $0x268] sm:$0xff]
        %v6945 = vld [vmem:[%s6866 + $0x270] sm:$0xff]
        %v6946 = vld [vmem:[%s6866 + $0x278] sm:$0xff]
        %v6947 = vld [vmem:[%s6866 + $0x280] sm:$0xff]
        %v6948 = vld [vmem:[%s6866 + $0x288] sm:$0xff]
        %v6949 = vld [vmem:[%s6866 + $0x290] sm:$0xff]
        %v6950 = vld [vmem:[%s6866 + $0x298] sm:$0xff]
        %v6951 = vld [vmem:[%s6866 + $0x2a0] sm:$0xff]
        %v6952 = vld [vmem:[%s6866 + $0x2a8] sm:$0xff]
        %v6953 = vld [vmem:[%s6866 + $0x2b0] sm:$0xff]
        %v6954 = vld [vmem:[%s6866 + $0x2b8] sm:$0xff]
        %v6955 = vld [vmem:[%s6866 + $0x2c0] sm:$0xff]
        %v6956 = vld [vmem:[%s6866 + $0x2c8] sm:$0xff]
        %v6957 = vld [vmem:[%s6866 + $0x2d0] sm:$0xff]
        %v6958 = vld [vmem:[%s6866 + $0x2d8] sm:$0xff]
        %v6959 = vld [vmem:[%s6866 + $0x2e0] sm:$0xff]
        %v6960 = vld [vmem:[%s6866 + $0x2e8] sm:$0xff]
        %v6961 = vld [vmem:[%s6866 + $0x2f0] sm:$0xff]
        %v6962 = vld [vmem:[%s6866 + $0x2f8] sm:$0xff]
        %v6963 = vld [vmem:[%s6866 + $0x300] sm:$0xff]
        %v6964 = vld [vmem:[%s6866 + $0x308] sm:$0xff]
        %v6965 = vld [vmem:[%s6866 + $0x310] sm:$0xff]
        %v6966 = vld [vmem:[%s6866 + $0x318] sm:$0xff]
        %v6967 = vld [vmem:[%s6866 + $0x320] sm:$0xff]
        %v6968 = vld [vmem:[%s6866 + $0x328] sm:$0xff]
        %v6969 = vld [vmem:[%s6866 + $0x330] sm:$0xff]
        %v6970 = vld [vmem:[%s6866 + $0x338] sm:$0xff]
        %v6971 = vld [vmem:[%s6866 + $0x340] sm:$0xff]
        %v6972 = vld [vmem:[%s6866 + $0x348] sm:$0xff]
        %v6973 = vld [vmem:[%s6866 + $0x350] sm:$0xff]
        %v6974 = vld [vmem:[%s6866 + $0x358] sm:$0xff]
        %v6975 = vld [vmem:[%s6866 + $0x360] sm:$0xff]
        %v6976 = vld [vmem:[%s6866 + $0x368] sm:$0xff]
        %v6977 = vld [vmem:[%s6866 + $0x370] sm:$0xff]
        %v6978 = vld [vmem:[%s6866 + $0x378] sm:$0xff]
        %v6979 = vld [vmem:[%s6866 + $0x380] sm:$0xff]
        %v6980 = vld [vmem:[%s6866 + $0x388] sm:$0xff]
        %v6981 = vld [vmem:[%s6866 + $0x390] sm:$0xff]
        %v6982 = vld [vmem:[%s6866 + $0x398] sm:$0xff]
        %v6983 = vld [vmem:[%s6866 + $0x3a0] sm:$0xff]
        %v6984 = vld [vmem:[%s6866 + $0x3a8] sm:$0xff]
        %v6985 = vld [vmem:[%s6866 + $0x3b0] sm:$0xff]
        %v6986 = vld [vmem:[%s6866 + $0x3b8] sm:$0xff]
        %v6987 = vld [vmem:[%s6866 + $0x3c0] sm:$0xff]
        %v6988 = vld [vmem:[%s6866 + $0x3c8] sm:$0xff]
        %v6989 = vld [vmem:[%s6866 + $0x3d0] sm:$0xff]
        %v6990 = vld [vmem:[%s6866 + $0x3d8] sm:$0xff]
        %v6991 = vld [vmem:[%s6866 + $0x3e0] sm:$0xff]
        %v6992 = vld [vmem:[%s6866 + $0x3e8] sm:$0xff]
        %v6993 = vld [vmem:[%s6866 + $0x3f0] sm:$0xff]
        %v6994 = vld [vmem:[%s6866 + $0x3f8] sm:$0xff]
        %s6995 = scalar_lea.vmem [#allocation13], 2
        %v6996 = vld [vmem:[%s6995] sm:$0x3]
        %v6998 = vlaneseq
        %v6999 = vshrl.u32 %v6998, 7
        %v7000 = vsub.s32 0, %v6999
        %v7001 = vrot.slane %v6996, %v7000
        %v7002 = vlaneseq
        %v7003 = vshrl.u32 %v7002, 7
        %v7004 = vsub.s32 1, %v7003
        %v7005 = vrot.slane %v6996, %v7004
        %7008 = vmatprep.subr.mxu0 %v6898
        %7009 = vmatpush1.msra.mxu0 %v6897
        %7010 = vmatprep.subr.mxu0 %v6896
        %7011 = vmatpush1.msra.mxu0 %v6895
        %7012 = vmatprep.subr.mxu0 %v6894
        %7013 = vmatpush1.msra.mxu0 %v6893
        %7014 = vmatprep.subr.mxu0 %v6892
        %7015 = vmatpush1.msra.mxu0 %v6891
        %7016 = vmatprep.subr.mxu0 %v6890
        %7017 = vmatpush1.msra.mxu0 %v6889
        %7018 = vmatprep.subr.mxu0 %v6888
        %7019 = vmatpush1.msra.mxu0 %v6887
        %7020 = vmatprep.subr.mxu0 %v6886
        %7021 = vmatpush1.msra.mxu0 %v6885
        %7022 = vmatprep.subr.mxu0 %v6884
        %7023 = vmatpush1.msra.mxu0 %v6883
        %7024 = vmatprep.subr.mxu0 %v6882
        %7025 = vmatpush1.msra.mxu0 %v6881
        %7026 = vmatprep.subr.mxu0 %v6880
        %7027 = vmatpush1.msra.mxu0 %v6879
        %7028 = vmatprep.subr.mxu0 %v6878
        %7029 = vmatpush1.msra.mxu0 %v6877
        %7030 = vmatprep.subr.mxu0 %v6876
        %7031 = vmatpush1.msra.mxu0 %v6875
        %7032 = vmatprep.subr.mxu0 %v6874
        %7033 = vmatpush1.msra.mxu0 %v6873
        %7034 = vmatprep.subr.mxu0 %v6872
        %7035 = vmatpush1.msra.mxu0 %v6871
        %7036 = vmatprep.subr.mxu0 %v6870
        %7037 = vmatpush1.msra.mxu0 %v6869
        %7038 = vmatprep.subr.mxu0 %v6868
        %7039 = vmatpush1.msra.mxu0 %v6867
        %7040 = vmatprep.subr.mxu0 %v6930
        %7041 = vmatpush2.msra.mxu0 %v6929
        %7042 = vmatprep.subr.mxu0 %v6928
        %7043 = vmatpush2.msra.mxu0 %v6927
        %7044 = vmatprep.subr.mxu0 %v6926
        %7045 = vmatpush2.msra.mxu0 %v6925
        %7046 = vmatprep.subr.mxu0 %v6924
        %7047 = vmatpush2.msra.mxu0 %v6923
        %7048 = vmatprep.subr.mxu0 %v6922
        %7049 = vmatpush2.msra.mxu0 %v6921
        %7050 = vmatprep.subr.mxu0 %v6920
        %7051 = vmatpush2.msra.mxu0 %v6919
        %7052 = vmatprep.subr.mxu0 %v6918
        %7053 = vmatpush2.msra.mxu0 %v6917
        %7054 = vmatprep.subr.mxu0 %v6916
        %7055 = vmatpush2.msra.mxu0 %v6915
        %7056 = vmatprep.subr.mxu0 %v6914
        %7057 = vmatpush2.msra.mxu0 %v6913
        %7058 = vmatprep.subr.mxu0 %v6912
        %7059 = vmatpush2.msra.mxu0 %v6911
        %7060 = vmatprep.subr.mxu0 %v6910
        %7061 = vmatpush2.msra.mxu0 %v6909
        %7062 = vmatprep.subr.mxu0 %v6908
        %7063 = vmatpush2.msra.mxu0 %v6907
        %7064 = vmatprep.subr.mxu0 %v6906
        %7065 = vmatpush2.msra.mxu0 %v6905
        %7066 = vmatprep.subr.mxu0 %v6904
        %7067 = vmatpush2.msra.mxu0 %v6903
        %7068 = vmatprep.subr.mxu0 %v6902
        %7069 = vmatpush2.msra.mxu0 %v6901
        %7070 = vmatprep.subr.mxu0 %v6900
        %7071 = vmatpush2.msra.mxu0 %v6899
        %7072 = vmatprep.mubr.f32.mxu0 %v4832
        %7073 = vmatmul.mubr.f32.gmra.mxu0 %v4831
        %v7074 = vpop.f32.mrf.mxu0
        %v7075 = vadd.f32 %v7001, %v7074
        %v7076 = vpop.f32.mrf.mxu0
        %v7077 = vadd.f32 %v7005, %v7076
        %7078 = vmatprep.mubr.f32.mxu0 %v4844
        %7079 = vmatmul.mubr.f32.gmra.mxu0 %v4843
        %v7080 = vpop.f32.mrf.mxu0
        %v7081 = vadd.f32 %v7001, %v7080
        %v7082 = vpop.f32.mrf.mxu0
        %v7083 = vadd.f32 %v7005, %v7082
        %7084 = vmatprep.mubr.f32.mxu0 %v4856
        %7085 = vmatmul.mubr.f32.gmra.mxu0 %v4855
        %v7086 = vpop.f32.mrf.mxu0
        %v7087 = vadd.f32 %v7001, %v7086
        %v7088 = vpop.f32.mrf.mxu0
        %v7089 = vadd.f32 %v7005, %v7088
        %7090 = vmatprep.mubr.f32.mxu0 %v4868
        %7091 = vmatmul.mubr.f32.gmra.mxu0 %v4867
        %v7092 = vpop.f32.mrf.mxu0
        %v7093 = vadd.f32 %v7001, %v7092
        %v7094 = vpop.f32.mrf.mxu0
        %v7095 = vadd.f32 %v7005, %v7094
        %7096 = vmatprep.mubr.f32.mxu0 %v4880
        %7097 = vmatmul.mubr.f32.gmra.mxu0 %v4879
        %v7098 = vpop.f32.mrf.mxu0
        %v7099 = vadd.f32 %v7001, %v7098
        %v7100 = vpop.f32.mrf.mxu0
        %v7101 = vadd.f32 %v7005, %v7100
        %7102 = vmatprep.mubr.f32.mxu0 %v4892
        %7103 = vmatmul.mubr.f32.gmra.mxu0 %v4891
        %v7104 = vpop.f32.mrf.mxu0
        %v7105 = vadd.f32 %v7001, %v7104
        %v7106 = vpop.f32.mrf.mxu0
        %v7107 = vadd.f32 %v7005, %v7106
        %7108 = vmatprep.mubr.f32.mxu0 %v4904
        %7109 = vmatmul.mubr.f32.gmra.mxu0 %v4903
        %v7110 = vpop.f32.mrf.mxu0
        %v7111 = vadd.f32 %v7001, %v7110
        %v7112 = vpop.f32.mrf.mxu0
        %v7113 = vadd.f32 %v7005, %v7112
        %7114 = vmatprep.mubr.f32.mxu0 %v4916
        %7115 = vmatmul.mubr.f32.gmra.mxu0 %v4915
        %v7116 = vpop.f32.mrf.mxu0
        %v7117 = vadd.f32 %v7001, %v7116
        %v7118 = vpop.f32.mrf.mxu0
        %v7119 = vadd.f32 %v7005, %v7118
        %7120 = vmatprep.mubr.f32.mxu0 %v4928
        %7121 = vmatmul.mubr.f32.gmra.mxu0 %v4927
        %v7122 = vpop.f32.mrf.mxu0
        %v7123 = vadd.f32 %v7001, %v7122
        %v7124 = vpop.f32.mrf.mxu0
        %v7125 = vadd.f32 %v7005, %v7124
        %7126 = vmatprep.mubr.f32.mxu0 %v4940
        %7127 = vmatmul.mubr.f32.gmra.mxu0 %v4939
        %v7128 = vpop.f32.mrf.mxu0
        %v7129 = vadd.f32 %v7001, %v7128
        %v7130 = vpop.f32.mrf.mxu0
        %v7131 = vadd.f32 %v7005, %v7130
        %7132 = vmatprep.mubr.f32.mxu0 %v4952
        %7133 = vmatmul.mubr.f32.gmra.mxu0 %v4951
        %v7134 = vpop.f32.mrf.mxu0
        %v7135 = vadd.f32 %v7001, %v7134
        %v7136 = vpop.f32.mrf.mxu0
        %v7137 = vadd.f32 %v7005, %v7136
        %7138 = vmatprep.mubr.f32.mxu0 %v4964
        %7139 = vmatmul.mubr.f32.gmra.mxu0 %v4963
        %v7140 = vpop.f32.mrf.mxu0
        %v7141 = vadd.f32 %v7001, %v7140
        %v7142 = vpop.f32.mrf.mxu0
        %v7143 = vadd.f32 %v7005, %v7142
        %7144 = vmatprep.mubr.f32.mxu0 %v4976
        %7145 = vmatmul.mubr.f32.gmra.mxu0 %v4975
        %v7146 = vpop.f32.mrf.mxu0
        %v7147 = vadd.f32 %v7001, %v7146
        %v7148 = vpop.f32.mrf.mxu0
        %v7149 = vadd.f32 %v7005, %v7148
        %7150 = vmatprep.mubr.f32.mxu0 %v4988
        %7151 = vmatmul.mubr.f32.gmra.mxu0 %v4987
        %v7152 = vpop.f32.mrf.mxu0
        %v7153 = vadd.f32 %v7001, %v7152
        %v7154 = vpop.f32.mrf.mxu0
        %v7155 = vadd.f32 %v7005, %v7154
        %7156 = vmatprep.mubr.f32.mxu0 %v5000
        %7157 = vmatmul.mubr.f32.gmra.mxu0 %v4999
        %v7158 = vpop.f32.mrf.mxu0
        %v7159 = vadd.f32 %v7001, %v7158
        %v7160 = vpop.f32.mrf.mxu0
        %v7161 = vadd.f32 %v7005, %v7160
        %7162 = vmatprep.mubr.f32.mxu0 %v5012
        %7163 = vmatmul.mubr.f32.gmra.mxu0 %v5011
        %v7164 = vpop.f32.mrf.mxu0
        %v7165 = vadd.f32 %v7001, %v7164
        %v7166 = vpop.f32.mrf.mxu0
        %v7167 = vadd.f32 %v7005, %v7166
        %7168 = vmatprep.mubr.f32.mxu0 %v5024
        %7169 = vmatmul.mubr.f32.gmra.mxu0 %v5023
        %v7170 = vpop.f32.mrf.mxu0
        %v7171 = vadd.f32 %v7001, %v7170
        %v7172 = vpop.f32.mrf.mxu0
        %v7173 = vadd.f32 %v7005, %v7172
        %7174 = vmatprep.mubr.f32.mxu0 %v5036
        %7175 = vmatmul.mubr.f32.gmra.mxu0 %v5035
        %v7176 = vpop.f32.mrf.mxu0
        %v7177 = vadd.f32 %v7001, %v7176
        %v7178 = vpop.f32.mrf.mxu0
        %v7179 = vadd.f32 %v7005, %v7178
        %7180 = vmatprep.mubr.f32.mxu0 %v5048
        %7181 = vmatmul.mubr.f32.gmra.mxu0 %v5047
        %v7182 = vpop.f32.mrf.mxu0
        %v7183 = vadd.f32 %v7001, %v7182
        %v7184 = vpop.f32.mrf.mxu0
        %v7185 = vadd.f32 %v7005, %v7184
        %7186 = vmatprep.mubr.f32.mxu0 %v5060
        %7187 = vmatmul.mubr.f32.gmra.mxu0 %v5059
        %v7188 = vpop.f32.mrf.mxu0
        %v7189 = vadd.f32 %v7001, %v7188
        %v7190 = vpop.f32.mrf.mxu0
        %v7191 = vadd.f32 %v7005, %v7190
        %7192 = vmatprep.mubr.f32.mxu0 %v5072
        %7193 = vmatmul.mubr.f32.gmra.mxu0 %v5071
        %v7194 = vpop.f32.mrf.mxu0
        %v7195 = vadd.f32 %v7001, %v7194
        %v7196 = vpop.f32.mrf.mxu0
        %v7197 = vadd.f32 %v7005, %v7196
        %7198 = vmatprep.mubr.f32.mxu0 %v5084
        %7199 = vmatmul.mubr.f32.gmra.mxu0 %v5083
        %v7200 = vpop.f32.mrf.mxu0
        %v7201 = vadd.f32 %v7001, %v7200
        %v7202 = vpop.f32.mrf.mxu0
        %v7203 = vadd.f32 %v7005, %v7202
        %7204 = vmatprep.mubr.f32.mxu0 %v5096
        %7205 = vmatmul.mubr.f32.gmra.mxu0 %v5095
        %v7206 = vpop.f32.mrf.mxu0
        %v7207 = vadd.f32 %v7001, %v7206
        %v7208 = vpop.f32.mrf.mxu0
        %v7209 = vadd.f32 %v7005, %v7208
        %7210 = vmatprep.mubr.f32.mxu0 %v5108
        %7211 = vmatmul.mubr.f32.gmra.mxu0 %v5107
        %v7212 = vpop.f32.mrf.mxu0
        %v7213 = vadd.f32 %v7001, %v7212
        %v7214 = vpop.f32.mrf.mxu0
        %v7215 = vadd.f32 %v7005, %v7214
        %7216 = vmatprep.mubr.f32.mxu0 %v5120
        %7217 = vmatmul.mubr.f32.gmra.mxu0 %v5119
        %v7218 = vpop.f32.mrf.mxu0
        %v7219 = vadd.f32 %v7001, %v7218
        %v7220 = vpop.f32.mrf.mxu0
        %v7221 = vadd.f32 %v7005, %v7220
        %7222 = vmatprep.mubr.f32.mxu0 %v5132
        %7223 = vmatmul.mubr.f32.gmra.mxu0 %v5131
        %v7224 = vpop.f32.mrf.mxu0
        %v7225 = vadd.f32 %v7001, %v7224
        %v7226 = vpop.f32.mrf.mxu0
        %v7227 = vadd.f32 %v7005, %v7226
        %7228 = vmatprep.mubr.f32.mxu0 %v5144
        %7229 = vmatmul.mubr.f32.gmra.mxu0 %v5143
        %v7230 = vpop.f32.mrf.mxu0
        %v7231 = vadd.f32 %v7001, %v7230
        %v7232 = vpop.f32.mrf.mxu0
        %v7233 = vadd.f32 %v7005, %v7232
        %7234 = vmatprep.mubr.f32.mxu0 %v5156
        %7235 = vmatmul.mubr.f32.gmra.mxu0 %v5155
        %v7236 = vpop.f32.mrf.mxu0
        %v7237 = vadd.f32 %v7001, %v7236
        %v7238 = vpop.f32.mrf.mxu0
        %v7239 = vadd.f32 %v7005, %v7238
        %7240 = vmatprep.mubr.f32.mxu0 %v5168
        %7241 = vmatmul.mubr.f32.gmra.mxu0 %v5167
        %v7242 = vpop.f32.mrf.mxu0
        %v7243 = vadd.f32 %v7001, %v7242
        %v7244 = vpop.f32.mrf.mxu0
        %v7245 = vadd.f32 %v7005, %v7244
        %7246 = vmatprep.mubr.f32.mxu0 %v5180
        %7247 = vmatmul.mubr.f32.gmra.mxu0 %v5179
        %v7248 = vpop.f32.mrf.mxu0
        %v7249 = vadd.f32 %v7001, %v7248
        %v7250 = vpop.f32.mrf.mxu0
        %v7251 = vadd.f32 %v7005, %v7250
        %7252 = vmatprep.mubr.f32.mxu0 %v5192
        %7253 = vmatmul.mubr.f32.gmra.mxu0 %v5191
        %v7254 = vpop.f32.mrf.mxu0
        %v7255 = vadd.f32 %v7001, %v7254
        %v7256 = vpop.f32.mrf.mxu0
        %v7257 = vadd.f32 %v7005, %v7256
        %7258 = vmatprep.mubr.f32.mxu0 %v5204
        %7259 = vmatmul.mubr.f32.gmra.mxu0 %v5203
        %v7260 = vpop.f32.mrf.mxu0
        %v7261 = vadd.f32 %v7001, %v7260
        %v7262 = vpop.f32.mrf.mxu0
        %v7263 = vadd.f32 %v7005, %v7262
        %7264 = vdwg.mxu0
        %7265 = vmatprep.subr.mxu0 %v6962
        %7266 = vmatpush1.msra.mxu0 %v6961
        %7267 = vmatprep.subr.mxu0 %v6960
        %7268 = vmatpush1.msra.mxu0 %v6959
        %7269 = vmatprep.subr.mxu0 %v6958
        %7270 = vmatpush1.msra.mxu0 %v6957
        %7271 = vmatprep.subr.mxu0 %v6956
        %7272 = vmatpush1.msra.mxu0 %v6955
        %7273 = vmatprep.subr.mxu0 %v6954
        %7274 = vmatpush1.msra.mxu0 %v6953
        %7275 = vmatprep.subr.mxu0 %v6952
        %7276 = vmatpush1.msra.mxu0 %v6951
        %7277 = vmatprep.subr.mxu0 %v6950
        %7278 = vmatpush1.msra.mxu0 %v6949
        %7279 = vmatprep.subr.mxu0 %v6948
        %7280 = vmatpush1.msra.mxu0 %v6947
        %7281 = vmatprep.subr.mxu0 %v6946
        %7282 = vmatpush1.msra.mxu0 %v6945
        %7283 = vmatprep.subr.mxu0 %v6944
        %7284 = vmatpush1.msra.mxu0 %v6943
        %7285 = vmatprep.subr.mxu0 %v6942
        %7286 = vmatpush1.msra.mxu0 %v6941
        %7287 = vmatprep.subr.mxu0 %v6940
        %7288 = vmatpush1.msra.mxu0 %v6939
        %7289 = vmatprep.subr.mxu0 %v6938
        %7290 = vmatpush1.msra.mxu0 %v6937
        %7291 = vmatprep.subr.mxu0 %v6936
        %7292 = vmatpush1.msra.mxu0 %v6935
        %7293 = vmatprep.subr.mxu0 %v6934
        %7294 = vmatpush1.msra.mxu0 %v6933
        %7295 = vmatprep.subr.mxu0 %v6932
        %7296 = vmatpush1.msra.mxu0 %v6931
        %7297 = vmatprep.subr.mxu0 %v6994
        %7298 = vmatpush2.msra.mxu0 %v6993
        %7299 = vmatprep.subr.mxu0 %v6992
        %7300 = vmatpush2.msra.mxu0 %v6991
        %7301 = vmatprep.subr.mxu0 %v6990
        %7302 = vmatpush2.msra.mxu0 %v6989
        %7303 = vmatprep.subr.mxu0 %v6988
        %7304 = vmatpush2.msra.mxu0 %v6987
        %7305 = vmatprep.subr.mxu0 %v6986
        %7306 = vmatpush2.msra.mxu0 %v6985
        %7307 = vmatprep.subr.mxu0 %v6984
        %7308 = vmatpush2.msra.mxu0 %v6983
        %7309 = vmatprep.subr.mxu0 %v6982
        %7310 = vmatpush2.msra.mxu0 %v6981
        %7311 = vmatprep.subr.mxu0 %v6980
        %7312 = vmatpush2.msra.mxu0 %v6979
        %7313 = vmatprep.subr.mxu0 %v6978
        %7314 = vmatpush2.msra.mxu0 %v6977
        %7315 = vmatprep.subr.mxu0 %v6976
        %7316 = vmatpush2.msra.mxu0 %v6975
        %7317 = vmatprep.subr.mxu0 %v6974
        %7318 = vmatpush2.msra.mxu0 %v6973
        %7319 = vmatprep.subr.mxu0 %v6972
        %7320 = vmatpush2.msra.mxu0 %v6971
        %7321 = vmatprep.subr.mxu0 %v6970
        %7322 = vmatpush2.msra.mxu0 %v6969
        %7323 = vmatprep.subr.mxu0 %v6968
        %7324 = vmatpush2.msra.mxu0 %v6967
        %7325 = vmatprep.subr.mxu0 %v6966
        %7326 = vmatpush2.msra.mxu0 %v6965
        %7327 = vmatprep.subr.mxu0 %v6964
        %7328 = vmatpush2.msra.mxu0 %v6963
        %7329 = vmatprep.mubr.f32.mxu0 %v4834
        %7330 = vmatmul.mubr.f32.gmra.mxu0 %v4833
        %v7331 = vpop.f32.mrf.mxu0
        %v7332 = vadd.f32 %v7075, %v7331
        %v7333 = vpop.f32.mrf.mxu0
        %v7334 = vadd.f32 %v7077, %v7333
        %7335 = vmatprep.mubr.f32.mxu0 %v4846
        %7336 = vmatmul.mubr.f32.gmra.mxu0 %v4845
        %v7337 = vpop.f32.mrf.mxu0
        %v7338 = vadd.f32 %v7081, %v7337
        %v7339 = vpop.f32.mrf.mxu0
        %v7340 = vadd.f32 %v7083, %v7339
        %7341 = vmatprep.mubr.f32.mxu0 %v4858
        %7342 = vmatmul.mubr.f32.gmra.mxu0 %v4857
        %v7343 = vpop.f32.mrf.mxu0
        %v7344 = vadd.f32 %v7087, %v7343
        %v7345 = vpop.f32.mrf.mxu0
        %v7346 = vadd.f32 %v7089, %v7345
        %7347 = vmatprep.mubr.f32.mxu0 %v4870
        %7348 = vmatmul.mubr.f32.gmra.mxu0 %v4869
        %v7349 = vpop.f32.mrf.mxu0
        %v7350 = vadd.f32 %v7093, %v7349
        %v7351 = vpop.f32.mrf.mxu0
        %v7352 = vadd.f32 %v7095, %v7351
        %7353 = vmatprep.mubr.f32.mxu0 %v4882
        %7354 = vmatmul.mubr.f32.gmra.mxu0 %v4881
        %v7355 = vpop.f32.mrf.mxu0
        %v7356 = vadd.f32 %v7099, %v7355
        %v7357 = vpop.f32.mrf.mxu0
        %v7358 = vadd.f32 %v7101, %v7357
        %7359 = vmatprep.mubr.f32.mxu0 %v4894
        %7360 = vmatmul.mubr.f32.gmra.mxu0 %v4893
        %v7361 = vpop.f32.mrf.mxu0
        %v7362 = vadd.f32 %v7105, %v7361
        %v7363 = vpop.f32.mrf.mxu0
        %v7364 = vadd.f32 %v7107, %v7363
        %7365 = vmatprep.mubr.f32.mxu0 %v4906
        %7366 = vmatmul.mubr.f32.gmra.mxu0 %v4905
        %v7367 = vpop.f32.mrf.mxu0
        %v7368 = vadd.f32 %v7111, %v7367
        %v7369 = vpop.f32.mrf.mxu0
        %v7370 = vadd.f32 %v7113, %v7369
        %7371 = vmatprep.mubr.f32.mxu0 %v4918
        %7372 = vmatmul.mubr.f32.gmra.mxu0 %v4917
        %v7373 = vpop.f32.mrf.mxu0
        %v7374 = vadd.f32 %v7117, %v7373
        %v7375 = vpop.f32.mrf.mxu0
        %v7376 = vadd.f32 %v7119, %v7375
        %7377 = vmatprep.mubr.f32.mxu0 %v4930
        %7378 = vmatmul.mubr.f32.gmra.mxu0 %v4929
        %v7379 = vpop.f32.mrf.mxu0
        %v7380 = vadd.f32 %v7123, %v7379
        %v7381 = vpop.f32.mrf.mxu0
        %v7382 = vadd.f32 %v7125, %v7381
        %7383 = vmatprep.mubr.f32.mxu0 %v4942
        %7384 = vmatmul.mubr.f32.gmra.mxu0 %v4941
        %v7385 = vpop.f32.mrf.mxu0
        %v7386 = vadd.f32 %v7129, %v7385
        %v7387 = vpop.f32.mrf.mxu0
        %v7388 = vadd.f32 %v7131, %v7387
        %7389 = vmatprep.mubr.f32.mxu0 %v4954
        %7390 = vmatmul.mubr.f32.gmra.mxu0 %v4953
        %v7391 = vpop.f32.mrf.mxu0
        %v7392 = vadd.f32 %v7135, %v7391
        %v7393 = vpop.f32.mrf.mxu0
        %v7394 = vadd.f32 %v7137, %v7393
        %7395 = vmatprep.mubr.f32.mxu0 %v4966
        %7396 = vmatmul.mubr.f32.gmra.mxu0 %v4965
        %v7397 = vpop.f32.mrf.mxu0
        %v7398 = vadd.f32 %v7141, %v7397
        %v7399 = vpop.f32.mrf.mxu0
        %v7400 = vadd.f32 %v7143, %v7399
        %7401 = vmatprep.mubr.f32.mxu0 %v4978
        %7402 = vmatmul.mubr.f32.gmra.mxu0 %v4977
        %v7403 = vpop.f32.mrf.mxu0
        %v7404 = vadd.f32 %v7147, %v7403
        %v7405 = vpop.f32.mrf.mxu0
        %v7406 = vadd.f32 %v7149, %v7405
        %7407 = vmatprep.mubr.f32.mxu0 %v4990
        %7408 = vmatmul.mubr.f32.gmra.mxu0 %v4989
        %v7409 = vpop.f32.mrf.mxu0
        %v7410 = vadd.f32 %v7153, %v7409
        %v7411 = vpop.f32.mrf.mxu0
        %v7412 = vadd.f32 %v7155, %v7411
        %7413 = vmatprep.mubr.f32.mxu0 %v5002
        %7414 = vmatmul.mubr.f32.gmra.mxu0 %v5001
        %v7415 = vpop.f32.mrf.mxu0
        %v7416 = vadd.f32 %v7159, %v7415
        %v7417 = vpop.f32.mrf.mxu0
        %v7418 = vadd.f32 %v7161, %v7417
        %7419 = vmatprep.mubr.f32.mxu0 %v5014
        %7420 = vmatmul.mubr.f32.gmra.mxu0 %v5013
        %v7421 = vpop.f32.mrf.mxu0
        %v7422 = vadd.f32 %v7165, %v7421
        %v7423 = vpop.f32.mrf.mxu0
        %v7424 = vadd.f32 %v7167, %v7423
        %7425 = vmatprep.mubr.f32.mxu0 %v5026
        %7426 = vmatmul.mubr.f32.gmra.mxu0 %v5025
        %v7427 = vpop.f32.mrf.mxu0
        %v7428 = vadd.f32 %v7171, %v7427
        %v7429 = vpop.f32.mrf.mxu0
        %v7430 = vadd.f32 %v7173, %v7429
        %7431 = vmatprep.mubr.f32.mxu0 %v5038
        %7432 = vmatmul.mubr.f32.gmra.mxu0 %v5037
        %v7433 = vpop.f32.mrf.mxu0
        %v7434 = vadd.f32 %v7177, %v7433
        %v7435 = vpop.f32.mrf.mxu0
        %v7436 = vadd.f32 %v7179, %v7435
        %7437 = vmatprep.mubr.f32.mxu0 %v5050
        %7438 = vmatmul.mubr.f32.gmra.mxu0 %v5049
        %v7439 = vpop.f32.mrf.mxu0
        %v7440 = vadd.f32 %v7183, %v7439
        %v7441 = vpop.f32.mrf.mxu0
        %v7442 = vadd.f32 %v7185, %v7441
        %7443 = vmatprep.mubr.f32.mxu0 %v5062
        %7444 = vmatmul.mubr.f32.gmra.mxu0 %v5061
        %v7445 = vpop.f32.mrf.mxu0
        %v7446 = vadd.f32 %v7189, %v7445
        %v7447 = vpop.f32.mrf.mxu0
        %v7448 = vadd.f32 %v7191, %v7447
        %7449 = vmatprep.mubr.f32.mxu0 %v5074
        %7450 = vmatmul.mubr.f32.gmra.mxu0 %v5073
        %v7451 = vpop.f32.mrf.mxu0
        %v7452 = vadd.f32 %v7195, %v7451
        %v7453 = vpop.f32.mrf.mxu0
        %v7454 = vadd.f32 %v7197, %v7453
        %7455 = vmatprep.mubr.f32.mxu0 %v5086
        %7456 = vmatmul.mubr.f32.gmra.mxu0 %v5085
        %v7457 = vpop.f32.mrf.mxu0
        %v7458 = vadd.f32 %v7201, %v7457
        %v7459 = vpop.f32.mrf.mxu0
        %v7460 = vadd.f32 %v7203, %v7459
        %7461 = vmatprep.mubr.f32.mxu0 %v5098
        %7462 = vmatmul.mubr.f32.gmra.mxu0 %v5097
        %v7463 = vpop.f32.mrf.mxu0
        %v7464 = vadd.f32 %v7207, %v7463
        %v7465 = vpop.f32.mrf.mxu0
        %v7466 = vadd.f32 %v7209, %v7465
        %7467 = vmatprep.mubr.f32.mxu0 %v5110
        %7468 = vmatmul.mubr.f32.gmra.mxu0 %v5109
        %v7469 = vpop.f32.mrf.mxu0
        %v7470 = vadd.f32 %v7213, %v7469
        %v7471 = vpop.f32.mrf.mxu0
        %v7472 = vadd.f32 %v7215, %v7471
        %7473 = vmatprep.mubr.f32.mxu0 %v5122
        %7474 = vmatmul.mubr.f32.gmra.mxu0 %v5121
        %v7475 = vpop.f32.mrf.mxu0
        %v7476 = vadd.f32 %v7219, %v7475
        %v7477 = vpop.f32.mrf.mxu0
        %v7478 = vadd.f32 %v7221, %v7477
        %7479 = vmatprep.mubr.f32.mxu0 %v5134
        %7480 = vmatmul.mubr.f32.gmra.mxu0 %v5133
        %v7481 = vpop.f32.mrf.mxu0
        %v7482 = vadd.f32 %v7225, %v7481
        %v7483 = vpop.f32.mrf.mxu0
        %v7484 = vadd.f32 %v7227, %v7483
        %7485 = vmatprep.mubr.f32.mxu0 %v5146
        %7486 = vmatmul.mubr.f32.gmra.mxu0 %v5145
        %v7487 = vpop.f32.mrf.mxu0
        %v7488 = vadd.f32 %v7231, %v7487
        %v7489 = vpop.f32.mrf.mxu0
        %v7490 = vadd.f32 %v7233, %v7489
        %7491 = vmatprep.mubr.f32.mxu0 %v5158
        %7492 = vmatmul.mubr.f32.gmra.mxu0 %v5157
        %v7493 = vpop.f32.mrf.mxu0
        %v7494 = vadd.f32 %v7237, %v7493
        %v7495 = vpop.f32.mrf.mxu0
        %v7496 = vadd.f32 %v7239, %v7495
        %7497 = vmatprep.mubr.f32.mxu0 %v5170
        %7498 = vmatmul.mubr.f32.gmra.mxu0 %v5169
        %v7499 = vpop.f32.mrf.mxu0
        %v7500 = vadd.f32 %v7243, %v7499
        %v7501 = vpop.f32.mrf.mxu0
        %v7502 = vadd.f32 %v7245, %v7501
        %7503 = vmatprep.mubr.f32.mxu0 %v5182
        %7504 = vmatmul.mubr.f32.gmra.mxu0 %v5181
        %v7505 = vpop.f32.mrf.mxu0
        %v7506 = vadd.f32 %v7249, %v7505
        %v7507 = vpop.f32.mrf.mxu0
        %v7508 = vadd.f32 %v7251, %v7507
        %7509 = vmatprep.mubr.f32.mxu0 %v5194
        %7510 = vmatmul.mubr.f32.gmra.mxu0 %v5193
        %v7511 = vpop.f32.mrf.mxu0
        %v7512 = vadd.f32 %v7255, %v7511
        %v7513 = vpop.f32.mrf.mxu0
        %v7514 = vadd.f32 %v7257, %v7513
        %7515 = vmatprep.mubr.f32.mxu0 %v5206
        %7516 = vmatmul.mubr.f32.gmra.mxu0 %v5205
        %v7517 = vpop.f32.mrf.mxu0
        %v7518 = vadd.f32 %v7261, %v7517
        %v7519 = vpop.f32.mrf.mxu0
        %v7520 = vadd.f32 %v7263, %v7519
        %7521 = vdwg.mxu0
        %v7522 = vmax.f32 %v7332, 0.0
        %v7523 = vmax.f32 %v7334, 0.0
        %v7524 = vmax.f32 %v7338, 0.0
        %v7525 = vmax.f32 %v7340, 0.0
        %v7526 = vmax.f32 %v7344, 0.0
        %v7527 = vmax.f32 %v7346, 0.0
        %v7528 = vmax.f32 %v7350, 0.0
        %v7529 = vmax.f32 %v7352, 0.0
        %v7530 = vmax.f32 %v7356, 0.0
        %v7531 = vmax.f32 %v7358, 0.0
        %v7532 = vmax.f32 %v7362, 0.0
        %v7533 = vmax.f32 %v7364, 0.0
        %v7534 = vmax.f32 %v7368, 0.0
        %v7535 = vmax.f32 %v7370, 0.0
        %v7536 = vmax.f32 %v7374, 0.0
        %v7537 = vmax.f32 %v7376, 0.0
        %v7538 = vmax.f32 %v7380, 0.0
        %v7539 = vmax.f32 %v7382, 0.0
        %v7540 = vmax.f32 %v7386, 0.0
        %v7541 = vmax.f32 %v7388, 0.0
        %v7542 = vmax.f32 %v7392, 0.0
        %v7543 = vmax.f32 %v7394, 0.0
        %v7544 = vmax.f32 %v7398, 0.0
        %v7545 = vmax.f32 %v7400, 0.0
        %v7546 = vmax.f32 %v7404, 0.0
        %v7547 = vmax.f32 %v7406, 0.0
        %v7548 = vmax.f32 %v7410, 0.0
        %v7549 = vmax.f32 %v7412, 0.0
        %v7550 = vmax.f32 %v7416, 0.0
        %v7551 = vmax.f32 %v7418, 0.0
        %v7552 = vmax.f32 %v7422, 0.0
        %v7553 = vmax.f32 %v7424, 0.0
        %v7554 = vmax.f32 %v7428, 0.0
        %v7555 = vmax.f32 %v7430, 0.0
        %v7556 = vmax.f32 %v7434, 0.0
        %v7557 = vmax.f32 %v7436, 0.0
        %v7558 = vmax.f32 %v7440, 0.0
        %v7559 = vmax.f32 %v7442, 0.0
        %v7560 = vmax.f32 %v7446, 0.0
        %v7561 = vmax.f32 %v7448, 0.0
        %v7562 = vmax.f32 %v7452, 0.0
        %v7563 = vmax.f32 %v7454, 0.0
        %v7564 = vmax.f32 %v7458, 0.0
        %v7565 = vmax.f32 %v7460, 0.0
        %v7566 = vmax.f32 %v7464, 0.0
        %v7567 = vmax.f32 %v7466, 0.0
        %v7568 = vmax.f32 %v7470, 0.0
        %v7569 = vmax.f32 %v7472, 0.0
        %v7570 = vmax.f32 %v7476, 0.0
        %v7571 = vmax.f32 %v7478, 0.0
        %v7572 = vmax.f32 %v7482, 0.0
        %v7573 = vmax.f32 %v7484, 0.0
        %v7574 = vmax.f32 %v7488, 0.0
        %v7575 = vmax.f32 %v7490, 0.0
        %v7576 = vmax.f32 %v7494, 0.0
        %v7577 = vmax.f32 %v7496, 0.0
        %v7578 = vmax.f32 %v7500, 0.0
        %v7579 = vmax.f32 %v7502, 0.0
        %v7580 = vmax.f32 %v7506, 0.0
        %v7581 = vmax.f32 %v7508, 0.0
        %v7582 = vmax.f32 %v7512, 0.0
        %v7583 = vmax.f32 %v7514, 0.0
        %v7584 = vmax.f32 %v7518, 0.0
        %v7585 = vmax.f32 %v7520, 0.0
        %s7586 = scalar_lea.vmem [#allocation15], 256
        %v7587 = vld [vmem:[%s7586] sm:$0xff]
        %v7588 = vld [vmem:[%s7586 + $0x8] sm:$0xff]
        %v7589 = vld [vmem:[%s7586 + $0x10] sm:$0xff]
        %v7590 = vld [vmem:[%s7586 + $0x18] sm:$0xff]
        %v7591 = vld [vmem:[%s7586 + $0x20] sm:$0xff]
        %v7592 = vld [vmem:[%s7586 + $0x28] sm:$0xff]
        %v7593 = vld [vmem:[%s7586 + $0x30] sm:$0xff]
        %v7594 = vld [vmem:[%s7586 + $0x38] sm:$0xff]
        %v7595 = vld [vmem:[%s7586 + $0x40] sm:$0xff]
        %v7596 = vld [vmem:[%s7586 + $0x48] sm:$0xff]
        %v7597 = vld [vmem:[%s7586 + $0x50] sm:$0xff]
        %v7598 = vld [vmem:[%s7586 + $0x58] sm:$0xff]
        %v7599 = vld [vmem:[%s7586 + $0x60] sm:$0xff]
        %v7600 = vld [vmem:[%s7586 + $0x68] sm:$0xff]
        %v7601 = vld [vmem:[%s7586 + $0x70] sm:$0xff]
        %v7602 = vld [vmem:[%s7586 + $0x78] sm:$0xff]
        %v7603 = vld [vmem:[%s7586 + $0x80] sm:$0xff]
        %v7604 = vld [vmem:[%s7586 + $0x88] sm:$0xff]
        %v7605 = vld [vmem:[%s7586 + $0x90] sm:$0xff]
        %v7606 = vld [vmem:[%s7586 + $0x98] sm:$0xff]
        %v7607 = vld [vmem:[%s7586 + $0xa0] sm:$0xff]
        %v7608 = vld [vmem:[%s7586 + $0xa8] sm:$0xff]
        %v7609 = vld [vmem:[%s7586 + $0xb0] sm:$0xff]
        %v7610 = vld [vmem:[%s7586 + $0xb8] sm:$0xff]
        %v7611 = vld [vmem:[%s7586 + $0xc0] sm:$0xff]
        %v7612 = vld [vmem:[%s7586 + $0xc8] sm:$0xff]
        %v7613 = vld [vmem:[%s7586 + $0xd0] sm:$0xff]
        %v7614 = vld [vmem:[%s7586 + $0xd8] sm:$0xff]
        %v7615 = vld [vmem:[%s7586 + $0xe0] sm:$0xff]
        %v7616 = vld [vmem:[%s7586 + $0xe8] sm:$0xff]
        %v7617 = vld [vmem:[%s7586 + $0xf0] sm:$0xff]
        %v7618 = vld [vmem:[%s7586 + $0xf8] sm:$0xff]
        %s7619 = scalar_lea.vmem [#allocation16], 1
        %v7620 = vld [vmem:[%s7619] sm:$0x1]
        %v7622 = vlaneseq
        %v7623 = vshrl.u32 %v7622, 7
        %v7624 = vsub.s32 0, %v7623
        %v7625 = vrot.slane %v7620, %v7624
        %7627 = vmatprep.subr.mxu0 0.0
        %7628 = vmatpush1.msra.mxu0 %v7602
        %7629 = vmatprep.subr.mxu0 0.0
        %7630 = vmatpush1.msra.mxu0 %v7601
        %7631 = vmatprep.subr.mxu0 0.0
        %7632 = vmatpush1.msra.mxu0 %v7600
        %7633 = vmatprep.subr.mxu0 0.0
        %7634 = vmatpush1.msra.mxu0 %v7599
        %7635 = vmatprep.subr.mxu0 0.0
        %7636 = vmatpush1.msra.mxu0 %v7598
        %7637 = vmatprep.subr.mxu0 0.0
        %7638 = vmatpush1.msra.mxu0 %v7597
        %7639 = vmatprep.subr.mxu0 0.0
        %7640 = vmatpush1.msra.mxu0 %v7596
        %7641 = vmatprep.subr.mxu0 0.0
        %7642 = vmatpush1.msra.mxu0 %v7595
        %7643 = vmatprep.subr.mxu0 0.0
        %7644 = vmatpush1.msra.mxu0 %v7594
        %7645 = vmatprep.subr.mxu0 0.0
        %7646 = vmatpush1.msra.mxu0 %v7593
        %7647 = vmatprep.subr.mxu0 0.0
        %7648 = vmatpush1.msra.mxu0 %v7592
        %7649 = vmatprep.subr.mxu0 0.0
        %7650 = vmatpush1.msra.mxu0 %v7591
        %7651 = vmatprep.subr.mxu0 0.0
        %7652 = vmatpush1.msra.mxu0 %v7590
        %7653 = vmatprep.subr.mxu0 0.0
        %7654 = vmatpush1.msra.mxu0 %v7589
        %7655 = vmatprep.subr.mxu0 0.0
        %7656 = vmatpush1.msra.mxu0 %v7588
        %7657 = vmatprep.subr.mxu0 0.0
        %7658 = vmatpush1.msra.mxu0 %v7587
        %7659 = vmatprep.subr.mxu0 0.0
        %7660 = vmatpush2.msra.mxu0 %v7618
        %7661 = vmatprep.subr.mxu0 0.0
        %7662 = vmatpush2.msra.mxu0 %v7617
        %7663 = vmatprep.subr.mxu0 0.0
        %7664 = vmatpush2.msra.mxu0 %v7616
        %7665 = vmatprep.subr.mxu0 0.0
        %7666 = vmatpush2.msra.mxu0 %v7615
        %7667 = vmatprep.subr.mxu0 0.0
        %7668 = vmatpush2.msra.mxu0 %v7614
        %7669 = vmatprep.subr.mxu0 0.0
        %7670 = vmatpush2.msra.mxu0 %v7613
        %7671 = vmatprep.subr.mxu0 0.0
        %7672 = vmatpush2.msra.mxu0 %v7612
        %7673 = vmatprep.subr.mxu0 0.0
        %7674 = vmatpush2.msra.mxu0 %v7611
        %7675 = vmatprep.subr.mxu0 0.0
        %7676 = vmatpush2.msra.mxu0 %v7610
        %7677 = vmatprep.subr.mxu0 0.0
        %7678 = vmatpush2.msra.mxu0 %v7609
        %7679 = vmatprep.subr.mxu0 0.0
        %7680 = vmatpush2.msra.mxu0 %v7608
        %7681 = vmatprep.subr.mxu0 0.0
        %7682 = vmatpush2.msra.mxu0 %v7607
        %7683 = vmatprep.subr.mxu0 0.0
        %7684 = vmatpush2.msra.mxu0 %v7606
        %7685 = vmatprep.subr.mxu0 0.0
        %7686 = vmatpush2.msra.mxu0 %v7605
        %7687 = vmatprep.subr.mxu0 0.0
        %7688 = vmatpush2.msra.mxu0 %v7604
        %7689 = vmatprep.subr.mxu0 0.0
        %7690 = vmatpush2.msra.mxu0 %v7603
        %7691 = vmatprep.mubr.f32.mxu0 %v7523
        %7692 = vmatmul.mubr.f32.gmra.mxu0 %v7522
        %v7693 = vpop.f32.mrf.mxu0
        %v7694 = vadd.f32 %v7625, %v7693
        %v7695 = vpop.f32.mrf.mxu0
        %7696 = vmatprep.mubr.f32.mxu0 %v7525
        %7697 = vmatmul.mubr.f32.gmra.mxu0 %v7524
        %v7698 = vpop.f32.mrf.mxu0
        %v7699 = vadd.f32 %v7625, %v7698
        %v7700 = vpop.f32.mrf.mxu0
        %7701 = vmatprep.mubr.f32.mxu0 %v7527
        %7702 = vmatmul.mubr.f32.gmra.mxu0 %v7526
        %v7703 = vpop.f32.mrf.mxu0
        %v7704 = vadd.f32 %v7625, %v7703
        %v7705 = vpop.f32.mrf.mxu0
        %7706 = vmatprep.mubr.f32.mxu0 %v7529
        %7707 = vmatmul.mubr.f32.gmra.mxu0 %v7528
        %v7708 = vpop.f32.mrf.mxu0
        %v7709 = vadd.f32 %v7625, %v7708
        %v7710 = vpop.f32.mrf.mxu0
        %7711 = vmatprep.mubr.f32.mxu0 %v7531
        %7712 = vmatmul.mubr.f32.gmra.mxu0 %v7530
        %v7713 = vpop.f32.mrf.mxu0
        %v7714 = vadd.f32 %v7625, %v7713
        %v7715 = vpop.f32.mrf.mxu0
        %7716 = vmatprep.mubr.f32.mxu0 %v7533
        %7717 = vmatmul.mubr.f32.gmra.mxu0 %v7532
        %v7718 = vpop.f32.mrf.mxu0
        %v7719 = vadd.f32 %v7625, %v7718
        %v7720 = vpop.f32.mrf.mxu0
        %7721 = vmatprep.mubr.f32.mxu0 %v7535
        %7722 = vmatmul.mubr.f32.gmra.mxu0 %v7534
        %v7723 = vpop.f32.mrf.mxu0
        %v7724 = vadd.f32 %v7625, %v7723
        %v7725 = vpop.f32.mrf.mxu0
        %7726 = vmatprep.mubr.f32.mxu0 %v7537
        %7727 = vmatmul.mubr.f32.gmra.mxu0 %v7536
        %v7728 = vpop.f32.mrf.mxu0
        %v7729 = vadd.f32 %v7625, %v7728
        %v7730 = vpop.f32.mrf.mxu0
        %7731 = vmatprep.mubr.f32.mxu0 %v7539
        %7732 = vmatmul.mubr.f32.gmra.mxu0 %v7538
        %v7733 = vpop.f32.mrf.mxu0
        %v7734 = vadd.f32 %v7625, %v7733
        %v7735 = vpop.f32.mrf.mxu0
        %7736 = vmatprep.mubr.f32.mxu0 %v7541
        %7737 = vmatmul.mubr.f32.gmra.mxu0 %v7540
        %v7738 = vpop.f32.mrf.mxu0
        %v7739 = vadd.f32 %v7625, %v7738
        %v7740 = vpop.f32.mrf.mxu0
        %7741 = vmatprep.mubr.f32.mxu0 %v7543
        %7742 = vmatmul.mubr.f32.gmra.mxu0 %v7542
        %v7743 = vpop.f32.mrf.mxu0
        %v7744 = vadd.f32 %v7625, %v7743
        %v7745 = vpop.f32.mrf.mxu0
        %7746 = vmatprep.mubr.f32.mxu0 %v7545
        %7747 = vmatmul.mubr.f32.gmra.mxu0 %v7544
        %v7748 = vpop.f32.mrf.mxu0
        %v7749 = vadd.f32 %v7625, %v7748
        %v7750 = vpop.f32.mrf.mxu0
        %7751 = vmatprep.mubr.f32.mxu0 %v7547
        %7752 = vmatmul.mubr.f32.gmra.mxu0 %v7546
        %v7753 = vpop.f32.mrf.mxu0
        %v7754 = vadd.f32 %v7625, %v7753
        %v7755 = vpop.f32.mrf.mxu0
        %7756 = vmatprep.mubr.f32.mxu0 %v7549
        %7757 = vmatmul.mubr.f32.gmra.mxu0 %v7548
        %v7758 = vpop.f32.mrf.mxu0
        %v7759 = vadd.f32 %v7625, %v7758
        %v7760 = vpop.f32.mrf.mxu0
        %7761 = vmatprep.mubr.f32.mxu0 %v7551
        %7762 = vmatmul.mubr.f32.gmra.mxu0 %v7550
        %v7763 = vpop.f32.mrf.mxu0
        %v7764 = vadd.f32 %v7625, %v7763
        %v7765 = vpop.f32.mrf.mxu0
        %7766 = vmatprep.mubr.f32.mxu0 %v7553
        %7767 = vmatmul.mubr.f32.gmra.mxu0 %v7552
        %v7768 = vpop.f32.mrf.mxu0
        %v7769 = vadd.f32 %v7625, %v7768
        %v7770 = vpop.f32.mrf.mxu0
        %7771 = vmatprep.mubr.f32.mxu0 %v7555
        %7772 = vmatmul.mubr.f32.gmra.mxu0 %v7554
        %v7773 = vpop.f32.mrf.mxu0
        %v7774 = vadd.f32 %v7625, %v7773
        %v7775 = vpop.f32.mrf.mxu0
        %7776 = vmatprep.mubr.f32.mxu0 %v7557
        %7777 = vmatmul.mubr.f32.gmra.mxu0 %v7556
        %v7778 = vpop.f32.mrf.mxu0
        %v7779 = vadd.f32 %v7625, %v7778
        %v7780 = vpop.f32.mrf.mxu0
        %7781 = vmatprep.mubr.f32.mxu0 %v7559
        %7782 = vmatmul.mubr.f32.gmra.mxu0 %v7558
        %v7783 = vpop.f32.mrf.mxu0
        %v7784 = vadd.f32 %v7625, %v7783
        %v7785 = vpop.f32.mrf.mxu0
        %7786 = vmatprep.mubr.f32.mxu0 %v7561
        %7787 = vmatmul.mubr.f32.gmra.mxu0 %v7560
        %v7788 = vpop.f32.mrf.mxu0
        %v7789 = vadd.f32 %v7625, %v7788
        %v7790 = vpop.f32.mrf.mxu0
        %7791 = vmatprep.mubr.f32.mxu0 %v7563
        %7792 = vmatmul.mubr.f32.gmra.mxu0 %v7562
        %v7793 = vpop.f32.mrf.mxu0
        %v7794 = vadd.f32 %v7625, %v7793
        %v7795 = vpop.f32.mrf.mxu0
        %7796 = vmatprep.mubr.f32.mxu0 %v7565
        %7797 = vmatmul.mubr.f32.gmra.mxu0 %v7564
        %v7798 = vpop.f32.mrf.mxu0
        %v7799 = vadd.f32 %v7625, %v7798
        %v7800 = vpop.f32.mrf.mxu0
        %7801 = vmatprep.mubr.f32.mxu0 %v7567
        %7802 = vmatmul.mubr.f32.gmra.mxu0 %v7566
        %v7803 = vpop.f32.mrf.mxu0
        %v7804 = vadd.f32 %v7625, %v7803
        %v7805 = vpop.f32.mrf.mxu0
        %7806 = vmatprep.mubr.f32.mxu0 %v7569
        %7807 = vmatmul.mubr.f32.gmra.mxu0 %v7568
        %v7808 = vpop.f32.mrf.mxu0
        %v7809 = vadd.f32 %v7625, %v7808
        %v7810 = vpop.f32.mrf.mxu0
        %7811 = vmatprep.mubr.f32.mxu0 %v7571
        %7812 = vmatmul.mubr.f32.gmra.mxu0 %v7570
        %v7813 = vpop.f32.mrf.mxu0
        %v7814 = vadd.f32 %v7625, %v7813
        %v7815 = vpop.f32.mrf.mxu0
        %7816 = vmatprep.mubr.f32.mxu0 %v7573
        %7817 = vmatmul.mubr.f32.gmra.mxu0 %v7572
        %v7818 = vpop.f32.mrf.mxu0
        %v7819 = vadd.f32 %v7625, %v7818
        %v7820 = vpop.f32.mrf.mxu0
        %7821 = vmatprep.mubr.f32.mxu0 %v7575
        %7822 = vmatmul.mubr.f32.gmra.mxu0 %v7574
        %v7823 = vpop.f32.mrf.mxu0
        %v7824 = vadd.f32 %v7625, %v7823
        %v7825 = vpop.f32.mrf.mxu0
        %7826 = vmatprep.mubr.f32.mxu0 %v7577
        %7827 = vmatmul.mubr.f32.gmra.mxu0 %v7576
        %v7828 = vpop.f32.mrf.mxu0
        %v7829 = vadd.f32 %v7625, %v7828
        %v7830 = vpop.f32.mrf.mxu0
        %7831 = vmatprep.mubr.f32.mxu0 %v7579
        %7832 = vmatmul.mubr.f32.gmra.mxu0 %v7578
        %v7833 = vpop.f32.mrf.mxu0
        %v7834 = vadd.f32 %v7625, %v7833
        %v7835 = vpop.f32.mrf.mxu0
        %7836 = vmatprep.mubr.f32.mxu0 %v7581
        %7837 = vmatmul.mubr.f32.gmra.mxu0 %v7580
        %v7838 = vpop.f32.mrf.mxu0
        %v7839 = vadd.f32 %v7625, %v7838
        %v7840 = vpop.f32.mrf.mxu0
        %7841 = vmatprep.mubr.f32.mxu0 %v7583
        %7842 = vmatmul.mubr.f32.gmra.mxu0 %v7582
        %v7843 = vpop.f32.mrf.mxu0
        %v7844 = vadd.f32 %v7625, %v7843
        %v7845 = vpop.f32.mrf.mxu0
        %7846 = vmatprep.mubr.f32.mxu0 %v7585
        %7847 = vmatmul.mubr.f32.gmra.mxu0 %v7584
        %v7848 = vpop.f32.mrf.mxu0
        %v7849 = vadd.f32 %v7625, %v7848
        %v7850 = vpop.f32.mrf.mxu0
        %7851 = vdwg.mxu0
        %v7852 = vmax.f32 %v7694, 0.0
        %v7853 = vmax.f32 %v7699, 0.0
        %v7854 = vmax.f32 %v7704, 0.0
        %v7855 = vmax.f32 %v7709, 0.0
        %v7856 = vmax.f32 %v7714, 0.0
        %v7857 = vmax.f32 %v7719, 0.0
        %v7858 = vmax.f32 %v7724, 0.0
        %v7859 = vmax.f32 %v7729, 0.0
        %v7860 = vmax.f32 %v7734, 0.0
        %v7861 = vmax.f32 %v7739, 0.0
        %v7862 = vmax.f32 %v7744, 0.0
        %v7863 = vmax.f32 %v7749, 0.0
        %v7864 = vmax.f32 %v7754, 0.0
        %v7865 = vmax.f32 %v7759, 0.0
        %v7866 = vmax.f32 %v7764, 0.0
        %v7867 = vmax.f32 %v7769, 0.0
        %v7868 = vmax.f32 %v7774, 0.0
        %v7869 = vmax.f32 %v7779, 0.0
        %v7870 = vmax.f32 %v7784, 0.0
        %v7871 = vmax.f32 %v7789, 0.0
        %v7872 = vmax.f32 %v7794, 0.0
        %v7873 = vmax.f32 %v7799, 0.0
        %v7874 = vmax.f32 %v7804, 0.0
        %v7875 = vmax.f32 %v7809, 0.0
        %v7876 = vmax.f32 %v7814, 0.0
        %v7877 = vmax.f32 %v7819, 0.0
        %v7878 = vmax.f32 %v7824, 0.0
        %v7879 = vmax.f32 %v7829, 0.0
        %v7880 = vmax.f32 %v7834, 0.0
        %v7881 = vmax.f32 %v7839, 0.0
        %v7882 = vmax.f32 %v7844, 0.0
        %v7883 = vmax.f32 %v7849, 0.0
        %s7884 = scalar_lea.vmem [#allocation18], 128
        %v7885 = vld [vmem:[%s7884] sm:$0xff]
        %v7886 = vld [vmem:[%s7884 + $0x8] sm:$0xff]
        %v7887 = vld [vmem:[%s7884 + $0x10] sm:$0xff]
        %v7888 = vld [vmem:[%s7884 + $0x18] sm:$0xff]
        %v7889 = vld [vmem:[%s7884 + $0x20] sm:$0xff]
        %v7890 = vld [vmem:[%s7884 + $0x28] sm:$0xff]
        %v7891 = vld [vmem:[%s7884 + $0x30] sm:$0xff]
        %v7892 = vld [vmem:[%s7884 + $0x38] sm:$0xff]
        %v7893 = vld [vmem:[%s7884 + $0x40] sm:$0xff]
        %v7894 = vld [vmem:[%s7884 + $0x48] sm:$0xff]
        %v7895 = vld [vmem:[%s7884 + $0x50] sm:$0xff]
        %v7896 = vld [vmem:[%s7884 + $0x58] sm:$0xff]
        %v7897 = vld [vmem:[%s7884 + $0x60] sm:$0xff]
        %v7898 = vld [vmem:[%s7884 + $0x68] sm:$0xff]
        %v7899 = vld [vmem:[%s7884 + $0x70] sm:$0xff]
        %v7900 = vld [vmem:[%s7884 + $0x78] sm:$0xff]
        %s7901 = scalar_lea.vmem [#allocation19], 1
        %v7902 = vld [vmem:[%s7901] sm:$0x1]
        %v7904 = vlaneseq
        %v7905 = vshrl.u32 %v7904, 7
        %v7906 = vsub.s32 0, %v7905
        %v7907 = vrot.slane %v7902, %v7906
        %7909 = vmatprep.subr.mxu0 0.0
        %7910 = vmatpush1.msra.mxu0 %v7900
        %7911 = vmatprep.subr.mxu0 0.0
        %7912 = vmatpush1.msra.mxu0 %v7899
        %7913 = vmatprep.subr.mxu0 0.0
        %7914 = vmatpush1.msra.mxu0 %v7898
        %7915 = vmatprep.subr.mxu0 0.0
        %7916 = vmatpush1.msra.mxu0 %v7897
        %7917 = vmatprep.subr.mxu0 0.0
        %7918 = vmatpush1.msra.mxu0 %v7896
        %7919 = vmatprep.subr.mxu0 0.0
        %7920 = vmatpush1.msra.mxu0 %v7895
        %7921 = vmatprep.subr.mxu0 0.0
        %7922 = vmatpush1.msra.mxu0 %v7894
        %7923 = vmatprep.subr.mxu0 0.0
        %7924 = vmatpush1.msra.mxu0 %v7893
        %7925 = vmatprep.subr.mxu0 0.0
        %7926 = vmatpush1.msra.mxu0 %v7892
        %7927 = vmatprep.subr.mxu0 0.0
        %7928 = vmatpush1.msra.mxu0 %v7891
        %7929 = vmatprep.subr.mxu0 0.0
        %7930 = vmatpush1.msra.mxu0 %v7890
        %7931 = vmatprep.subr.mxu0 0.0
        %7932 = vmatpush1.msra.mxu0 %v7889
        %7933 = vmatprep.subr.mxu0 0.0
        %7934 = vmatpush1.msra.mxu0 %v7888
        %7935 = vmatprep.subr.mxu0 0.0
        %7936 = vmatpush1.msra.mxu0 %v7887
        %7937 = vmatprep.subr.mxu0 0.0
        %7938 = vmatpush1.msra.mxu0 %v7886
        %7939 = vmatprep.subr.mxu0 0.0
        %7940 = vmatpush1.msra.mxu0 %v7885
        %7941 = vmatprep.subr.mxu0 0.0
        %7942 = vmatpush2.msra.mxu0 0.0
        %7943 = vmatprep.subr.mxu0 0.0
        %7944 = vmatpush2.msra.mxu0 0.0
        %7945 = vmatprep.subr.mxu0 0.0
        %7946 = vmatpush2.msra.mxu0 0.0
        %7947 = vmatprep.subr.mxu0 0.0
        %7948 = vmatpush2.msra.mxu0 0.0
        %7949 = vmatprep.subr.mxu0 0.0
        %7950 = vmatpush2.msra.mxu0 0.0
        %7951 = vmatprep.subr.mxu0 0.0
        %7952 = vmatpush2.msra.mxu0 0.0
        %7953 = vmatprep.subr.mxu0 0.0
        %7954 = vmatpush2.msra.mxu0 0.0
        %7955 = vmatprep.subr.mxu0 0.0
        %7956 = vmatpush2.msra.mxu0 0.0
        %7957 = vmatprep.subr.mxu0 0.0
        %7958 = vmatpush2.msra.mxu0 0.0
        %7959 = vmatprep.subr.mxu0 0.0
        %7960 = vmatpush2.msra.mxu0 0.0
        %7961 = vmatprep.subr.mxu0 0.0
        %7962 = vmatpush2.msra.mxu0 0.0
        %7963 = vmatprep.subr.mxu0 0.0
        %7964 = vmatpush2.msra.mxu0 0.0
        %7965 = vmatprep.subr.mxu0 0.0
        %7966 = vmatpush2.msra.mxu0 0.0
        %7967 = vmatprep.subr.mxu0 0.0
        %7968 = vmatpush2.msra.mxu0 0.0
        %7969 = vmatprep.subr.mxu0 0.0
        %7970 = vmatpush2.msra.mxu0 0.0
        %7971 = vmatprep.subr.mxu0 0.0
        %7972 = vmatpush2.msra.mxu0 0.0
        %7973 = vmatprep.mubr.f32.mxu0 0.0
        %7974 = vmatmul.mubr.f32.gmra.mxu0 %v7852
        %v7975 = vpop.f32.mrf.mxu0
        %v7976 = vadd.f32 %v7907, %v7975
        %v7977 = vpop.f32.mrf.mxu0
        %7978 = vmatprep.mubr.f32.mxu0 0.0
        %7979 = vmatmul.mubr.f32.gmra.mxu0 %v7853
        %v7980 = vpop.f32.mrf.mxu0
        %v7981 = vadd.f32 %v7907, %v7980
        %v7982 = vpop.f32.mrf.mxu0
        %7983 = vmatprep.mubr.f32.mxu0 0.0
        %7984 = vmatmul.mubr.f32.gmra.mxu0 %v7854
        %v7985 = vpop.f32.mrf.mxu0
        %v7986 = vadd.f32 %v7907, %v7985
        %v7987 = vpop.f32.mrf.mxu0
        %7988 = vmatprep.mubr.f32.mxu0 0.0
        %7989 = vmatmul.mubr.f32.gmra.mxu0 %v7855
        %v7990 = vpop.f32.mrf.mxu0
        %v7991 = vadd.f32 %v7907, %v7990
        %v7992 = vpop.f32.mrf.mxu0
        %7993 = vmatprep.mubr.f32.mxu0 0.0
        %7994 = vmatmul.mubr.f32.gmra.mxu0 %v7856
        %v7995 = vpop.f32.mrf.mxu0
        %v7996 = vadd.f32 %v7907, %v7995
        %v7997 = vpop.f32.mrf.mxu0
        %7998 = vmatprep.mubr.f32.mxu0 0.0
        %7999 = vmatmul.mubr.f32.gmra.mxu0 %v7857
        %v8000 = vpop.f32.mrf.mxu0
        %v8001 = vadd.f32 %v7907, %v8000
        %v8002 = vpop.f32.mrf.mxu0
        %8003 = vmatprep.mubr.f32.mxu0 0.0
        %8004 = vmatmul.mubr.f32.gmra.mxu0 %v7858
        %v8005 = vpop.f32.mrf.mxu0
        %v8006 = vadd.f32 %v7907, %v8005
        %v8007 = vpop.f32.mrf.mxu0
        %8008 = vmatprep.mubr.f32.mxu0 0.0
        %8009 = vmatmul.mubr.f32.gmra.mxu0 %v7859
        %v8010 = vpop.f32.mrf.mxu0
        %v8011 = vadd.f32 %v7907, %v8010
        %v8012 = vpop.f32.mrf.mxu0
        %8013 = vmatprep.mubr.f32.mxu0 0.0
        %8014 = vmatmul.mubr.f32.gmra.mxu0 %v7860
        %v8015 = vpop.f32.mrf.mxu0
        %v8016 = vadd.f32 %v7907, %v8015
        %v8017 = vpop.f32.mrf.mxu0
        %8018 = vmatprep.mubr.f32.mxu0 0.0
        %8019 = vmatmul.mubr.f32.gmra.mxu0 %v7861
        %v8020 = vpop.f32.mrf.mxu0
        %v8021 = vadd.f32 %v7907, %v8020
        %v8022 = vpop.f32.mrf.mxu0
        %8023 = vmatprep.mubr.f32.mxu0 0.0
        %8024 = vmatmul.mubr.f32.gmra.mxu0 %v7862
        %v8025 = vpop.f32.mrf.mxu0
        %v8026 = vadd.f32 %v7907, %v8025
        %v8027 = vpop.f32.mrf.mxu0
        %8028 = vmatprep.mubr.f32.mxu0 0.0
        %8029 = vmatmul.mubr.f32.gmra.mxu0 %v7863
        %v8030 = vpop.f32.mrf.mxu0
        %v8031 = vadd.f32 %v7907, %v8030
        %v8032 = vpop.f32.mrf.mxu0
        %8033 = vmatprep.mubr.f32.mxu0 0.0
        %8034 = vmatmul.mubr.f32.gmra.mxu0 %v7864
        %v8035 = vpop.f32.mrf.mxu0
        %v8036 = vadd.f32 %v7907, %v8035
        %v8037 = vpop.f32.mrf.mxu0
        %8038 = vmatprep.mubr.f32.mxu0 0.0
        %8039 = vmatmul.mubr.f32.gmra.mxu0 %v7865
        %v8040 = vpop.f32.mrf.mxu0
        %v8041 = vadd.f32 %v7907, %v8040
        %v8042 = vpop.f32.mrf.mxu0
        %8043 = vmatprep.mubr.f32.mxu0 0.0
        %8044 = vmatmul.mubr.f32.gmra.mxu0 %v7866
        %v8045 = vpop.f32.mrf.mxu0
        %v8046 = vadd.f32 %v7907, %v8045
        %v8047 = vpop.f32.mrf.mxu0
        %8048 = vmatprep.mubr.f32.mxu0 0.0
        %8049 = vmatmul.mubr.f32.gmra.mxu0 %v7867
        %v8050 = vpop.f32.mrf.mxu0
        %v8051 = vadd.f32 %v7907, %v8050
        %v8052 = vpop.f32.mrf.mxu0
        %8053 = vmatprep.mubr.f32.mxu0 0.0
        %8054 = vmatmul.mubr.f32.gmra.mxu0 %v7868
        %v8055 = vpop.f32.mrf.mxu0
        %v8056 = vadd.f32 %v7907, %v8055
        %v8057 = vpop.f32.mrf.mxu0
        %8058 = vmatprep.mubr.f32.mxu0 0.0
        %8059 = vmatmul.mubr.f32.gmra.mxu0 %v7869
        %v8060 = vpop.f32.mrf.mxu0
        %v8061 = vadd.f32 %v7907, %v8060
        %v8062 = vpop.f32.mrf.mxu0
        %8063 = vmatprep.mubr.f32.mxu0 0.0
        %8064 = vmatmul.mubr.f32.gmra.mxu0 %v7870
        %v8065 = vpop.f32.mrf.mxu0
        %v8066 = vadd.f32 %v7907, %v8065
        %v8067 = vpop.f32.mrf.mxu0
        %8068 = vmatprep.mubr.f32.mxu0 0.0
        %8069 = vmatmul.mubr.f32.gmra.mxu0 %v7871
        %v8070 = vpop.f32.mrf.mxu0
        %v8071 = vadd.f32 %v7907, %v8070
        %v8072 = vpop.f32.mrf.mxu0
        %8073 = vmatprep.mubr.f32.mxu0 0.0
        %8074 = vmatmul.mubr.f32.gmra.mxu0 %v7872
        %v8075 = vpop.f32.mrf.mxu0
        %v8076 = vadd.f32 %v7907, %v8075
        %v8077 = vpop.f32.mrf.mxu0
        %8078 = vmatprep.mubr.f32.mxu0 0.0
        %8079 = vmatmul.mubr.f32.gmra.mxu0 %v7873
        %v8080 = vpop.f32.mrf.mxu0
        %v8081 = vadd.f32 %v7907, %v8080
        %v8082 = vpop.f32.mrf.mxu0
        %8083 = vmatprep.mubr.f32.mxu0 0.0
        %8084 = vmatmul.mubr.f32.gmra.mxu0 %v7874
        %v8085 = vpop.f32.mrf.mxu0
        %v8086 = vadd.f32 %v7907, %v8085
        %v8087 = vpop.f32.mrf.mxu0
        %8088 = vmatprep.mubr.f32.mxu0 0.0
        %8089 = vmatmul.mubr.f32.gmra.mxu0 %v7875
        %v8090 = vpop.f32.mrf.mxu0
        %v8091 = vadd.f32 %v7907, %v8090
        %v8092 = vpop.f32.mrf.mxu0
        %8093 = vmatprep.mubr.f32.mxu0 0.0
        %8094 = vmatmul.mubr.f32.gmra.mxu0 %v7876
        %v8095 = vpop.f32.mrf.mxu0
        %v8096 = vadd.f32 %v7907, %v8095
        %v8097 = vpop.f32.mrf.mxu0
        %8098 = vmatprep.mubr.f32.mxu0 0.0
        %8099 = vmatmul.mubr.f32.gmra.mxu0 %v7877
        %v8100 = vpop.f32.mrf.mxu0
        %v8101 = vadd.f32 %v7907, %v8100
        %v8102 = vpop.f32.mrf.mxu0
        %8103 = vmatprep.mubr.f32.mxu0 0.0
        %8104 = vmatmul.mubr.f32.gmra.mxu0 %v7878
        %v8105 = vpop.f32.mrf.mxu0
        %v8106 = vadd.f32 %v7907, %v8105
        %v8107 = vpop.f32.mrf.mxu0
        %8108 = vmatprep.mubr.f32.mxu0 0.0
        %8109 = vmatmul.mubr.f32.gmra.mxu0 %v7879
        %v8110 = vpop.f32.mrf.mxu0
        %v8111 = vadd.f32 %v7907, %v8110
        %v8112 = vpop.f32.mrf.mxu0
        %8113 = vmatprep.mubr.f32.mxu0 0.0
        %8114 = vmatmul.mubr.f32.gmra.mxu0 %v7880
        %v8115 = vpop.f32.mrf.mxu0
        %v8116 = vadd.f32 %v7907, %v8115
        %v8117 = vpop.f32.mrf.mxu0
        %8118 = vmatprep.mubr.f32.mxu0 0.0
        %8119 = vmatmul.mubr.f32.gmra.mxu0 %v7881
        %v8120 = vpop.f32.mrf.mxu0
        %v8121 = vadd.f32 %v7907, %v8120
        %v8122 = vpop.f32.mrf.mxu0
        %8123 = vmatprep.mubr.f32.mxu0 0.0
        %8124 = vmatmul.mubr.f32.gmra.mxu0 %v7882
        %v8125 = vpop.f32.mrf.mxu0
        %v8126 = vadd.f32 %v7907, %v8125
        %v8127 = vpop.f32.mrf.mxu0
        %8128 = vmatprep.mubr.f32.mxu0 0.0
        %8129 = vmatmul.mubr.f32.gmra.mxu0 %v7883
        %v8130 = vpop.f32.mrf.mxu0
        %v8131 = vadd.f32 %v7907, %v8130
        %v8132 = vpop.f32.mrf.mxu0
        %8133 = vdwg.mxu0
        %v8134 = vmax.f32 %v7976, 0.0
        %v8135 = vmax.f32 %v7981, 0.0
        %v8136 = vmax.f32 %v7986, 0.0
        %v8137 = vmax.f32 %v7991, 0.0
        %v8138 = vmax.f32 %v7996, 0.0
        %v8139 = vmax.f32 %v8001, 0.0
        %v8140 = vmax.f32 %v8006, 0.0
        %v8141 = vmax.f32 %v8011, 0.0
        %v8142 = vmax.f32 %v8016, 0.0
        %v8143 = vmax.f32 %v8021, 0.0
        %v8144 = vmax.f32 %v8026, 0.0
        %v8145 = vmax.f32 %v8031, 0.0
        %v8146 = vmax.f32 %v8036, 0.0
        %v8147 = vmax.f32 %v8041, 0.0
        %v8148 = vmax.f32 %v8046, 0.0
        %v8149 = vmax.f32 %v8051, 0.0
        %v8150 = vmax.f32 %v8056, 0.0
        %v8151 = vmax.f32 %v8061, 0.0
        %v8152 = vmax.f32 %v8066, 0.0
        %v8153 = vmax.f32 %v8071, 0.0
        %v8154 = vmax.f32 %v8076, 0.0
        %v8155 = vmax.f32 %v8081, 0.0
        %v8156 = vmax.f32 %v8086, 0.0
        %v8157 = vmax.f32 %v8091, 0.0
        %v8158 = vmax.f32 %v8096, 0.0
        %v8159 = vmax.f32 %v8101, 0.0
        %v8160 = vmax.f32 %v8106, 0.0
        %v8161 = vmax.f32 %v8111, 0.0
        %v8162 = vmax.f32 %v8116, 0.0
        %v8163 = vmax.f32 %v8121, 0.0
        %v8164 = vmax.f32 %v8126, 0.0
        %v8165 = vmax.f32 %v8131, 0.0
        %s8166 = scalar_lea.vmem [#allocation21], 56
        %v8167 = vld [vmem:[%s8166] sm:$0xff]
        %v8168 = vld [vmem:[%s8166 + $0x8] sm:$0xff]
        %v8169 = vld [vmem:[%s8166 + $0x10] sm:$0xff]
        %v8170 = vld [vmem:[%s8166 + $0x18] sm:$0xff]
        %v8171 = vld [vmem:[%s8166 + $0x20] sm:$0xff]
        %v8172 = vld [vmem:[%s8166 + $0x28] sm:$0xff]
        %v8173 = vld [vmem:[%s8166 + $0x30] sm:$0xff]
        %v8175 = vsel %vm6512, %v8134, 0
        %v8178 = vsel %vm6512, %v8135, 0
        %v8181 = vsel %vm6512, %v8136, 0
        %v8184 = vsel %vm6512, %v8137, 0
        %v8187 = vsel %vm6512, %v8138, 0
        %v8190 = vsel %vm6512, %v8139, 0
        %v8193 = vsel %vm6512, %v8140, 0
        %v8196 = vsel %vm6512, %v8141, 0
        %v8199 = vsel %vm6512, %v8142, 0
        %v8202 = vsel %vm6512, %v8143, 0
        %v8205 = vsel %vm6512, %v8144, 0
        %v8208 = vsel %vm6512, %v8145, 0
        %v8211 = vsel %vm6512, %v8146, 0
        %v8214 = vsel %vm6512, %v8147, 0
        %v8217 = vsel %vm6512, %v8148, 0
        %v8220 = vsel %vm6512, %v8149, 0
        %v8223 = vsel %vm6512, %v8150, 0
        %v8226 = vsel %vm6512, %v8151, 0
        %v8229 = vsel %vm6512, %v8152, 0
        %v8232 = vsel %vm6512, %v8153, 0
        %v8235 = vsel %vm6512, %v8154, 0
        %v8238 = vsel %vm6512, %v8155, 0
        %v8241 = vsel %vm6512, %v8156, 0
        %v8244 = vsel %vm6512, %v8157, 0
        %v8247 = vsel %vm6512, %v8158, 0
        %v8250 = vsel %vm6512, %v8159, 0
        %v8253 = vsel %vm6512, %v8160, 0
        %v8256 = vsel %vm6512, %v8161, 0
        %v8259 = vsel %vm6512, %v8162, 0
        %v8262 = vsel %vm6512, %v8163, 0
        %v8265 = vsel %vm6512, %v8164, 0
        %v8268 = vsel %vm6512, %v8165, 0
        %8270 = vmatprep.subr.mxu0 0.0
        %8271 = vmatpush1.msra.mxu0 0.0
        %8272 = vmatprep.subr.mxu0 0.0
        %8273 = vmatpush1.msra.mxu0 0.0
        %8274 = vmatprep.subr.mxu0 0.0
        %8275 = vmatpush1.msra.mxu0 0.0
        %8276 = vmatprep.subr.mxu0 0.0
        %8277 = vmatpush1.msra.mxu0 0.0
        %8278 = vmatprep.subr.mxu0 0.0
        %8279 = vmatpush1.msra.mxu0 0.0
        %8280 = vmatprep.subr.mxu0 0.0
        %8281 = vmatpush1.msra.mxu0 0.0
        %8282 = vmatprep.subr.mxu0 0.0
        %8283 = vmatpush1.msra.mxu0 0.0
        %8284 = vmatprep.subr.mxu0 0.0
        %8285 = vmatpush1.msra.mxu0 0.0
        %8286 = vmatprep.subr.mxu0 0.0
        %8287 = vmatpush1.msra.mxu0 0.0
        %8288 = vmatprep.subr.mxu0 0.0
        %8289 = vmatpush1.msra.mxu0 %v8173
        %8290 = vmatprep.subr.mxu0 0.0
        %8291 = vmatpush1.msra.mxu0 %v8172
        %8292 = vmatprep.subr.mxu0 0.0
        %8293 = vmatpush1.msra.mxu0 %v8171
        %8294 = vmatprep.subr.mxu0 0.0
        %8295 = vmatpush1.msra.mxu0 %v8170
        %8296 = vmatprep.subr.mxu0 0.0
        %8297 = vmatpush1.msra.mxu0 %v8169
        %8298 = vmatprep.subr.mxu0 0.0
        %8299 = vmatpush1.msra.mxu0 %v8168
        %8300 = vmatprep.subr.mxu0 0.0
        %8301 = vmatpush1.msra.mxu0 %v8167
        %8302 = vmatprep.subr.mxu0 0.0
        %8303 = vmatpush2.msra.mxu0 0.0
        %8304 = vmatprep.subr.mxu0 0.0
        %8305 = vmatpush2.msra.mxu0 0.0
        %8306 = vmatprep.subr.mxu0 0.0
        %8307 = vmatpush2.msra.mxu0 0.0
        %8308 = vmatprep.subr.mxu0 0.0
        %8309 = vmatpush2.msra.mxu0 0.0
        %8310 = vmatprep.subr.mxu0 0.0
        %8311 = vmatpush2.msra.mxu0 0.0
        %8312 = vmatprep.subr.mxu0 0.0
        %8313 = vmatpush2.msra.mxu0 0.0
        %8314 = vmatprep.subr.mxu0 0.0
        %8315 = vmatpush2.msra.mxu0 0.0
        %8316 = vmatprep.subr.mxu0 0.0
        %8317 = vmatpush2.msra.mxu0 0.0
        %8318 = vmatprep.subr.mxu0 0.0
        %8319 = vmatpush2.msra.mxu0 0.0
        %8320 = vmatprep.subr.mxu0 0.0
        %8321 = vmatpush2.msra.mxu0 0.0
        %8322 = vmatprep.subr.mxu0 0.0
        %8323 = vmatpush2.msra.mxu0 0.0
        %8324 = vmatprep.subr.mxu0 0.0
        %8325 = vmatpush2.msra.mxu0 0.0
        %8326 = vmatprep.subr.mxu0 0.0
        %8327 = vmatpush2.msra.mxu0 0.0
        %8328 = vmatprep.subr.mxu0 0.0
        %8329 = vmatpush2.msra.mxu0 0.0
        %8330 = vmatprep.subr.mxu0 0.0
        %8331 = vmatpush2.msra.mxu0 0.0
        %8332 = vmatprep.subr.mxu0 0.0
        %8333 = vmatpush2.msra.mxu0 0.0
        %8334 = vmatprep.mubr.f32.mxu0 0.0
        %8335 = vmatmul.mubr.f32.gmra.mxu0 %v8175
        %v8336 = vpop.f32.mrf.mxu0
        %v8337 = vadd.f32 0.0, %v8336
        %v8338 = vpop.f32.mrf.mxu0
        %8339 = vmatprep.mubr.f32.mxu0 0.0
        %8340 = vmatmul.mubr.f32.gmra.mxu0 %v8178
        %v8341 = vpop.f32.mrf.mxu0
        %v8342 = vadd.f32 0.0, %v8341
        %v8343 = vpop.f32.mrf.mxu0
        %8344 = vmatprep.mubr.f32.mxu0 0.0
        %8345 = vmatmul.mubr.f32.gmra.mxu0 %v8181
        %v8346 = vpop.f32.mrf.mxu0
        %v8347 = vadd.f32 0.0, %v8346
        %v8348 = vpop.f32.mrf.mxu0
        %8349 = vmatprep.mubr.f32.mxu0 0.0
        %8350 = vmatmul.mubr.f32.gmra.mxu0 %v8184
        %v8351 = vpop.f32.mrf.mxu0
        %v8352 = vadd.f32 0.0, %v8351
        %v8353 = vpop.f32.mrf.mxu0
        %8354 = vmatprep.mubr.f32.mxu0 0.0
        %8355 = vmatmul.mubr.f32.gmra.mxu0 %v8187
        %v8356 = vpop.f32.mrf.mxu0
        %v8357 = vadd.f32 0.0, %v8356
        %v8358 = vpop.f32.mrf.mxu0
        %8359 = vmatprep.mubr.f32.mxu0 0.0
        %8360 = vmatmul.mubr.f32.gmra.mxu0 %v8190
        %v8361 = vpop.f32.mrf.mxu0
        %v8362 = vadd.f32 0.0, %v8361
        %v8363 = vpop.f32.mrf.mxu0
        %8364 = vmatprep.mubr.f32.mxu0 0.0
        %8365 = vmatmul.mubr.f32.gmra.mxu0 %v8193
        %v8366 = vpop.f32.mrf.mxu0
        %v8367 = vadd.f32 0.0, %v8366
        %v8368 = vpop.f32.mrf.mxu0
        %8369 = vmatprep.mubr.f32.mxu0 0.0
        %8370 = vmatmul.mubr.f32.gmra.mxu0 %v8196
        %v8371 = vpop.f32.mrf.mxu0
        %v8372 = vadd.f32 0.0, %v8371
        %v8373 = vpop.f32.mrf.mxu0
        %8374 = vmatprep.mubr.f32.mxu0 0.0
        %8375 = vmatmul.mubr.f32.gmra.mxu0 %v8199
        %v8376 = vpop.f32.mrf.mxu0
        %v8377 = vadd.f32 0.0, %v8376
        %v8378 = vpop.f32.mrf.mxu0
        %8379 = vmatprep.mubr.f32.mxu0 0.0
        %8380 = vmatmul.mubr.f32.gmra.mxu0 %v8202
        %v8381 = vpop.f32.mrf.mxu0
        %v8382 = vadd.f32 0.0, %v8381
        %v8383 = vpop.f32.mrf.mxu0
        %8384 = vmatprep.mubr.f32.mxu0 0.0
        %8385 = vmatmul.mubr.f32.gmra.mxu0 %v8205
        %v8386 = vpop.f32.mrf.mxu0
        %v8387 = vadd.f32 0.0, %v8386
        %v8388 = vpop.f32.mrf.mxu0
        %8389 = vmatprep.mubr.f32.mxu0 0.0
        %8390 = vmatmul.mubr.f32.gmra.mxu0 %v8208
        %v8391 = vpop.f32.mrf.mxu0
        %v8392 = vadd.f32 0.0, %v8391
        %v8393 = vpop.f32.mrf.mxu0
        %8394 = vmatprep.mubr.f32.mxu0 0.0
        %8395 = vmatmul.mubr.f32.gmra.mxu0 %v8211
        %v8396 = vpop.f32.mrf.mxu0
        %v8397 = vadd.f32 0.0, %v8396
        %v8398 = vpop.f32.mrf.mxu0
        %8399 = vmatprep.mubr.f32.mxu0 0.0
        %8400 = vmatmul.mubr.f32.gmra.mxu0 %v8214
        %v8401 = vpop.f32.mrf.mxu0
        %v8402 = vadd.f32 0.0, %v8401
        %v8403 = vpop.f32.mrf.mxu0
        %8404 = vmatprep.mubr.f32.mxu0 0.0
        %8405 = vmatmul.mubr.f32.gmra.mxu0 %v8217
        %v8406 = vpop.f32.mrf.mxu0
        %v8407 = vadd.f32 0.0, %v8406
        %v8408 = vpop.f32.mrf.mxu0
        %8409 = vmatprep.mubr.f32.mxu0 0.0
        %8410 = vmatmul.mubr.f32.gmra.mxu0 %v8220
        %v8411 = vpop.f32.mrf.mxu0
        %v8412 = vadd.f32 0.0, %v8411
        %v8413 = vpop.f32.mrf.mxu0
        %8414 = vmatprep.mubr.f32.mxu0 0.0
        %8415 = vmatmul.mubr.f32.gmra.mxu0 %v8223
        %v8416 = vpop.f32.mrf.mxu0
        %v8417 = vadd.f32 0.0, %v8416
        %v8418 = vpop.f32.mrf.mxu0
        %8419 = vmatprep.mubr.f32.mxu0 0.0
        %8420 = vmatmul.mubr.f32.gmra.mxu0 %v8226
        %v8421 = vpop.f32.mrf.mxu0
        %v8422 = vadd.f32 0.0, %v8421
        %v8423 = vpop.f32.mrf.mxu0
        %8424 = vmatprep.mubr.f32.mxu0 0.0
        %8425 = vmatmul.mubr.f32.gmra.mxu0 %v8229
        %v8426 = vpop.f32.mrf.mxu0
        %v8427 = vadd.f32 0.0, %v8426
        %v8428 = vpop.f32.mrf.mxu0
        %8429 = vmatprep.mubr.f32.mxu0 0.0
        %8430 = vmatmul.mubr.f32.gmra.mxu0 %v8232
        %v8431 = vpop.f32.mrf.mxu0
        %v8432 = vadd.f32 0.0, %v8431
        %v8433 = vpop.f32.mrf.mxu0
        %8434 = vmatprep.mubr.f32.mxu0 0.0
        %8435 = vmatmul.mubr.f32.gmra.mxu0 %v8235
        %v8436 = vpop.f32.mrf.mxu0
        %v8437 = vadd.f32 0.0, %v8436
        %v8438 = vpop.f32.mrf.mxu0
        %8439 = vmatprep.mubr.f32.mxu0 0.0
        %8440 = vmatmul.mubr.f32.gmra.mxu0 %v8238
        %v8441 = vpop.f32.mrf.mxu0
        %v8442 = vadd.f32 0.0, %v8441
        %v8443 = vpop.f32.mrf.mxu0
        %8444 = vmatprep.mubr.f32.mxu0 0.0
        %8445 = vmatmul.mubr.f32.gmra.mxu0 %v8241
        %v8446 = vpop.f32.mrf.mxu0
        %v8447 = vadd.f32 0.0, %v8446
        %v8448 = vpop.f32.mrf.mxu0
        %8449 = vmatprep.mubr.f32.mxu0 0.0
        %8450 = vmatmul.mubr.f32.gmra.mxu0 %v8244
        %v8451 = vpop.f32.mrf.mxu0
        %v8452 = vadd.f32 0.0, %v8451
        %v8453 = vpop.f32.mrf.mxu0
        %8454 = vmatprep.mubr.f32.mxu0 0.0
        %8455 = vmatmul.mubr.f32.gmra.mxu0 %v8247
        %v8456 = vpop.f32.mrf.mxu0
        %v8457 = vadd.f32 0.0, %v8456
        %v8458 = vpop.f32.mrf.mxu0
        %8459 = vmatprep.mubr.f32.mxu0 0.0
        %8460 = vmatmul.mubr.f32.gmra.mxu0 %v8250
        %v8461 = vpop.f32.mrf.mxu0
        %v8462 = vadd.f32 0.0, %v8461
        %v8463 = vpop.f32.mrf.mxu0
        %8464 = vmatprep.mubr.f32.mxu0 0.0
        %8465 = vmatmul.mubr.f32.gmra.mxu0 %v8253
        %v8466 = vpop.f32.mrf.mxu0
        %v8467 = vadd.f32 0.0, %v8466
        %v8468 = vpop.f32.mrf.mxu0
        %8469 = vmatprep.mubr.f32.mxu0 0.0
        %8470 = vmatmul.mubr.f32.gmra.mxu0 %v8256
        %v8471 = vpop.f32.mrf.mxu0
        %v8472 = vadd.f32 0.0, %v8471
        %v8473 = vpop.f32.mrf.mxu0
        %8474 = vmatprep.mubr.f32.mxu0 0.0
        %8475 = vmatmul.mubr.f32.gmra.mxu0 %v8259
        %v8476 = vpop.f32.mrf.mxu0
        %v8477 = vadd.f32 0.0, %v8476
        %v8478 = vpop.f32.mrf.mxu0
        %8479 = vmatprep.mubr.f32.mxu0 0.0
        %8480 = vmatmul.mubr.f32.gmra.mxu0 %v8262
        %v8481 = vpop.f32.mrf.mxu0
        %v8482 = vadd.f32 0.0, %v8481
        %v8483 = vpop.f32.mrf.mxu0
        %8484 = vmatprep.mubr.f32.mxu0 0.0
        %8485 = vmatmul.mubr.f32.gmra.mxu0 %v8265
        %v8486 = vpop.f32.mrf.mxu0
        %v8487 = vadd.f32 0.0, %v8486
        %v8488 = vpop.f32.mrf.mxu0
        %8489 = vmatprep.mubr.f32.mxu0 0.0
        %8490 = vmatmul.mubr.f32.gmra.mxu0 %v8268
        %v8491 = vpop.f32.mrf.mxu0
        %v8492 = vadd.f32 0.0, %v8491
        %v8493 = vpop.f32.mrf.mxu0
        %8494 = vdwg.mxu0
        %v8495 = vadd.f32 %v6834, %v8337
        %v8496 = vadd.f32 %v6835, %v8342
        %v8497 = vadd.f32 %v6836, %v8347
        %v8498 = vadd.f32 %v6837, %v8352
        %v8499 = vadd.f32 %v6838, %v8357
        %v8500 = vadd.f32 %v6839, %v8362
        %v8501 = vadd.f32 %v6840, %v8367
        %v8502 = vadd.f32 %v6841, %v8372
        %v8503 = vadd.f32 %v6842, %v8377
        %v8504 = vadd.f32 %v6843, %v8382
        %v8505 = vadd.f32 %v6844, %v8387
        %v8506 = vadd.f32 %v6845, %v8392
        %v8507 = vadd.f32 %v6846, %v8397
        %v8508 = vadd.f32 %v6847, %v8402
        %v8509 = vadd.f32 %v6848, %v8407
        %v8510 = vadd.f32 %v6849, %v8412
        %v8511 = vadd.f32 %v6850, %v8417
        %v8512 = vadd.f32 %v6851, %v8422
        %v8513 = vadd.f32 %v6852, %v8427
        %v8514 = vadd.f32 %v6853, %v8432
        %v8515 = vadd.f32 %v6854, %v8437
        %v8516 = vadd.f32 %v6855, %v8442
        %v8517 = vadd.f32 %v6856, %v8447
        %v8518 = vadd.f32 %v6857, %v8452
        %v8519 = vadd.f32 %v6858, %v8457
        %v8520 = vadd.f32 %v6859, %v8462
        %v8521 = vadd.f32 %v6860, %v8467
        %v8522 = vadd.f32 %v6861, %v8472
        %v8523 = vadd.f32 %v6862, %v8477
        %v8524 = vadd.f32 %v6863, %v8482
        %v8525 = vadd.f32 %v6864, %v8487
        %v8526 = vadd.f32 %v6865, %v8492
        %s8527 = scalar_lea.vmem [#allocation12], 2048
        %v8528 = vld [vmem:[%s8527] sm:$0xff]
        %v8529 = vld [vmem:[%s8527 + $0x8] sm:$0xff]
        %v8530 = vld [vmem:[%s8527 + $0x10] sm:$0xff]
        %v8531 = vld [vmem:[%s8527 + $0x18] sm:$0xff]
        %v8532 = vld [vmem:[%s8527 + $0x20] sm:$0xff]
        %v8533 = vld [vmem:[%s8527 + $0x28] sm:$0xff]
        %v8534 = vld [vmem:[%s8527 + $0x30] sm:$0xff]
        %v8535 = vld [vmem:[%s8527 + $0x38] sm:$0xff]
        %v8536 = vld [vmem:[%s8527 + $0x40] sm:$0xff]
        %v8537 = vld [vmem:[%s8527 + $0x48] sm:$0xff]
        %v8538 = vld [vmem:[%s8527 + $0x50] sm:$0xff]
        %v8539 = vld [vmem:[%s8527 + $0x58] sm:$0xff]
        %v8540 = vld [vmem:[%s8527 + $0x60] sm:$0xff]
        %v8541 = vld [vmem:[%s8527 + $0x68] sm:$0xff]
        %v8542 = vld [vmem:[%s8527 + $0x70] sm:$0xff]
        %v8543 = vld [vmem:[%s8527 + $0x78] sm:$0xff]
        %v8544 = vld [vmem:[%s8527 + $0x80] sm:$0xff]
        %v8545 = vld [vmem:[%s8527 + $0x88] sm:$0xff]
        %v8546 = vld [vmem:[%s8527 + $0x90] sm:$0xff]
        %v8547 = vld [vmem:[%s8527 + $0x98] sm:$0xff]
        %v8548 = vld [vmem:[%s8527 + $0xa0] sm:$0xff]
        %v8549 = vld [vmem:[%s8527 + $0xa8] sm:$0xff]
        %v8550 = vld [vmem:[%s8527 + $0xb0] sm:$0xff]
        %v8551 = vld [vmem:[%s8527 + $0xb8] sm:$0xff]
        %v8552 = vld [vmem:[%s8527 + $0xc0] sm:$0xff]
        %v8553 = vld [vmem:[%s8527 + $0xc8] sm:$0xff]
        %v8554 = vld [vmem:[%s8527 + $0xd0] sm:$0xff]
        %v8555 = vld [vmem:[%s8527 + $0xd8] sm:$0xff]
        %v8556 = vld [vmem:[%s8527 + $0xe0] sm:$0xff]
        %v8557 = vld [vmem:[%s8527 + $0xe8] sm:$0xff]
        %v8558 = vld [vmem:[%s8527 + $0xf0] sm:$0xff]
        %v8559 = vld [vmem:[%s8527 + $0xf8] sm:$0xff]
        %v8560 = vld [vmem:[%s8527 + $0x100] sm:$0xff]
        %v8561 = vld [vmem:[%s8527 + $0x108] sm:$0xff]
        %v8562 = vld [vmem:[%s8527 + $0x110] sm:$0xff]
        %v8563 = vld [vmem:[%s8527 + $0x118] sm:$0xff]
        %v8564 = vld [vmem:[%s8527 + $0x120] sm:$0xff]
        %v8565 = vld [vmem:[%s8527 + $0x128] sm:$0xff]
        %v8566 = vld [vmem:[%s8527 + $0x130] sm:$0xff]
        %v8567 = vld [vmem:[%s8527 + $0x138] sm:$0xff]
        %v8568 = vld [vmem:[%s8527 + $0x140] sm:$0xff]
        %v8569 = vld [vmem:[%s8527 + $0x148] sm:$0xff]
        %v8570 = vld [vmem:[%s8527 + $0x150] sm:$0xff]
        %v8571 = vld [vmem:[%s8527 + $0x158] sm:$0xff]
        %v8572 = vld [vmem:[%s8527 + $0x160] sm:$0xff]
        %v8573 = vld [vmem:[%s8527 + $0x168] sm:$0xff]
        %v8574 = vld [vmem:[%s8527 + $0x170] sm:$0xff]
        %v8575 = vld [vmem:[%s8527 + $0x178] sm:$0xff]
        %v8576 = vld [vmem:[%s8527 + $0x180] sm:$0xff]
        %v8577 = vld [vmem:[%s8527 + $0x188] sm:$0xff]
        %v8578 = vld [vmem:[%s8527 + $0x190] sm:$0xff]
        %v8579 = vld [vmem:[%s8527 + $0x198] sm:$0xff]
        %v8580 = vld [vmem:[%s8527 + $0x1a0] sm:$0xff]
        %v8581 = vld [vmem:[%s8527 + $0x1a8] sm:$0xff]
        %v8582 = vld [vmem:[%s8527 + $0x1b0] sm:$0xff]
        %v8583 = vld [vmem:[%s8527 + $0x1b8] sm:$0xff]
        %v8584 = vld [vmem:[%s8527 + $0x1c0] sm:$0xff]
        %v8585 = vld [vmem:[%s8527 + $0x1c8] sm:$0xff]
        %v8586 = vld [vmem:[%s8527 + $0x1d0] sm:$0xff]
        %v8587 = vld [vmem:[%s8527 + $0x1d8] sm:$0xff]
        %v8588 = vld [vmem:[%s8527 + $0x1e0] sm:$0xff]
        %v8589 = vld [vmem:[%s8527 + $0x1e8] sm:$0xff]
        %v8590 = vld [vmem:[%s8527 + $0x1f0] sm:$0xff]
        %v8591 = vld [vmem:[%s8527 + $0x1f8] sm:$0xff]
        %v8592 = vld [vmem:[%s8527 + $0x200] sm:$0xff]
        %v8593 = vld [vmem:[%s8527 + $0x208] sm:$0xff]
        %v8594 = vld [vmem:[%s8527 + $0x210] sm:$0xff]
        %v8595 = vld [vmem:[%s8527 + $0x218] sm:$0xff]
        %v8596 = vld [vmem:[%s8527 + $0x220] sm:$0xff]
        %v8597 = vld [vmem:[%s8527 + $0x228] sm:$0xff]
        %v8598 = vld [vmem:[%s8527 + $0x230] sm:$0xff]
        %v8599 = vld [vmem:[%s8527 + $0x238] sm:$0xff]
        %v8600 = vld [vmem:[%s8527 + $0x240] sm:$0xff]
        %v8601 = vld [vmem:[%s8527 + $0x248] sm:$0xff]
        %v8602 = vld [vmem:[%s8527 + $0x250] sm:$0xff]
        %v8603 = vld [vmem:[%s8527 + $0x258] sm:$0xff]
        %v8604 = vld [vmem:[%s8527 + $0x260] sm:$0xff]
        %v8605 = vld [vmem:[%s8527 + $0x268] sm:$0xff]
        %v8606 = vld [vmem:[%s8527 + $0x270] sm:$0xff]
        %v8607 = vld [vmem:[%s8527 + $0x278] sm:$0xff]
        %v8608 = vld [vmem:[%s8527 + $0x280] sm:$0xff]
        %v8609 = vld [vmem:[%s8527 + $0x288] sm:$0xff]
        %v8610 = vld [vmem:[%s8527 + $0x290] sm:$0xff]
        %v8611 = vld [vmem:[%s8527 + $0x298] sm:$0xff]
        %v8612 = vld [vmem:[%s8527 + $0x2a0] sm:$0xff]
        %v8613 = vld [vmem:[%s8527 + $0x2a8] sm:$0xff]
        %v8614 = vld [vmem:[%s8527 + $0x2b0] sm:$0xff]
        %v8615 = vld [vmem:[%s8527 + $0x2b8] sm:$0xff]
        %v8616 = vld [vmem:[%s8527 + $0x2c0] sm:$0xff]
        %v8617 = vld [vmem:[%s8527 + $0x2c8] sm:$0xff]
        %v8618 = vld [vmem:[%s8527 + $0x2d0] sm:$0xff]
        %v8619 = vld [vmem:[%s8527 + $0x2d8] sm:$0xff]
        %v8620 = vld [vmem:[%s8527 + $0x2e0] sm:$0xff]
        %v8621 = vld [vmem:[%s8527 + $0x2e8] sm:$0xff]
        %v8622 = vld [vmem:[%s8527 + $0x2f0] sm:$0xff]
        %v8623 = vld [vmem:[%s8527 + $0x2f8] sm:$0xff]
        %v8624 = vld [vmem:[%s8527 + $0x300] sm:$0xff]
        %v8625 = vld [vmem:[%s8527 + $0x308] sm:$0xff]
        %v8626 = vld [vmem:[%s8527 + $0x310] sm:$0xff]
        %v8627 = vld [vmem:[%s8527 + $0x318] sm:$0xff]
        %v8628 = vld [vmem:[%s8527 + $0x320] sm:$0xff]
        %v8629 = vld [vmem:[%s8527 + $0x328] sm:$0xff]
        %v8630 = vld [vmem:[%s8527 + $0x330] sm:$0xff]
        %v8631 = vld [vmem:[%s8527 + $0x338] sm:$0xff]
        %v8632 = vld [vmem:[%s8527 + $0x340] sm:$0xff]
        %v8633 = vld [vmem:[%s8527 + $0x348] sm:$0xff]
        %v8634 = vld [vmem:[%s8527 + $0x350] sm:$0xff]
        %v8635 = vld [vmem:[%s8527 + $0x358] sm:$0xff]
        %v8636 = vld [vmem:[%s8527 + $0x360] sm:$0xff]
        %v8637 = vld [vmem:[%s8527 + $0x368] sm:$0xff]
        %v8638 = vld [vmem:[%s8527 + $0x370] sm:$0xff]
        %v8639 = vld [vmem:[%s8527 + $0x378] sm:$0xff]
        %v8640 = vld [vmem:[%s8527 + $0x380] sm:$0xff]
        %v8641 = vld [vmem:[%s8527 + $0x388] sm:$0xff]
        %v8642 = vld [vmem:[%s8527 + $0x390] sm:$0xff]
        %v8643 = vld [vmem:[%s8527 + $0x398] sm:$0xff]
        %v8644 = vld [vmem:[%s8527 + $0x3a0] sm:$0xff]
        %v8645 = vld [vmem:[%s8527 + $0x3a8] sm:$0xff]
        %v8646 = vld [vmem:[%s8527 + $0x3b0] sm:$0xff]
        %v8647 = vld [vmem:[%s8527 + $0x3b8] sm:$0xff]
        %v8648 = vld [vmem:[%s8527 + $0x3c0] sm:$0xff]
        %v8649 = vld [vmem:[%s8527 + $0x3c8] sm:$0xff]
        %v8650 = vld [vmem:[%s8527 + $0x3d0] sm:$0xff]
        %v8651 = vld [vmem:[%s8527 + $0x3d8] sm:$0xff]
        %v8652 = vld [vmem:[%s8527 + $0x3e0] sm:$0xff]
        %v8653 = vld [vmem:[%s8527 + $0x3e8] sm:$0xff]
        %v8654 = vld [vmem:[%s8527 + $0x3f0] sm:$0xff]
        %v8655 = vld [vmem:[%s8527 + $0x3f8] sm:$0xff]
        %s8656 = scalar_lea.vmem [#allocation13], 4
        %v8657 = vld [vmem:[%s8656] sm:$0x3]
        %v8659 = vlaneseq
        %v8660 = vshrl.u32 %v8659, 7
        %v8661 = vsub.s32 0, %v8660
        %v8662 = vrot.slane %v8657, %v8661
        %v8663 = vlaneseq
        %v8664 = vshrl.u32 %v8663, 7
        %v8665 = vsub.s32 1, %v8664
        %v8666 = vrot.slane %v8657, %v8665
        %8669 = vmatprep.subr.mxu0 %v8559
        %8670 = vmatpush1.msra.mxu0 %v8558
        %8671 = vmatprep.subr.mxu0 %v8557
        %8672 = vmatpush1.msra.mxu0 %v8556
        %8673 = vmatprep.subr.mxu0 %v8555
        %8674 = vmatpush1.msra.mxu0 %v8554
        %8675 = vmatprep.subr.mxu0 %v8553
        %8676 = vmatpush1.msra.mxu0 %v8552
        %8677 = vmatprep.subr.mxu0 %v8551
        %8678 = vmatpush1.msra.mxu0 %v8550
        %8679 = vmatprep.subr.mxu0 %v8549
        %8680 = vmatpush1.msra.mxu0 %v8548
        %8681 = vmatprep.subr.mxu0 %v8547
        %8682 = vmatpush1.msra.mxu0 %v8546
        %8683 = vmatprep.subr.mxu0 %v8545
        %8684 = vmatpush1.msra.mxu0 %v8544
        %8685 = vmatprep.subr.mxu0 %v8543
        %8686 = vmatpush1.msra.mxu0 %v8542
        %8687 = vmatprep.subr.mxu0 %v8541
        %8688 = vmatpush1.msra.mxu0 %v8540
        %8689 = vmatprep.subr.mxu0 %v8539
        %8690 = vmatpush1.msra.mxu0 %v8538
        %8691 = vmatprep.subr.mxu0 %v8537
        %8692 = vmatpush1.msra.mxu0 %v8536
        %8693 = vmatprep.subr.mxu0 %v8535
        %8694 = vmatpush1.msra.mxu0 %v8534
        %8695 = vmatprep.subr.mxu0 %v8533
        %8696 = vmatpush1.msra.mxu0 %v8532
        %8697 = vmatprep.subr.mxu0 %v8531
        %8698 = vmatpush1.msra.mxu0 %v8530
        %8699 = vmatprep.subr.mxu0 %v8529
        %8700 = vmatpush1.msra.mxu0 %v8528
        %8701 = vmatprep.subr.mxu0 %v8591
        %8702 = vmatpush2.msra.mxu0 %v8590
        %8703 = vmatprep.subr.mxu0 %v8589
        %8704 = vmatpush2.msra.mxu0 %v8588
        %8705 = vmatprep.subr.mxu0 %v8587
        %8706 = vmatpush2.msra.mxu0 %v8586
        %8707 = vmatprep.subr.mxu0 %v8585
        %8708 = vmatpush2.msra.mxu0 %v8584
        %8709 = vmatprep.subr.mxu0 %v8583
        %8710 = vmatpush2.msra.mxu0 %v8582
        %8711 = vmatprep.subr.mxu0 %v8581
        %8712 = vmatpush2.msra.mxu0 %v8580
        %8713 = vmatprep.subr.mxu0 %v8579
        %8714 = vmatpush2.msra.mxu0 %v8578
        %8715 = vmatprep.subr.mxu0 %v8577
        %8716 = vmatpush2.msra.mxu0 %v8576
        %8717 = vmatprep.subr.mxu0 %v8575
        %8718 = vmatpush2.msra.mxu0 %v8574
        %8719 = vmatprep.subr.mxu0 %v8573
        %8720 = vmatpush2.msra.mxu0 %v8572
        %8721 = vmatprep.subr.mxu0 %v8571
        %8722 = vmatpush2.msra.mxu0 %v8570
        %8723 = vmatprep.subr.mxu0 %v8569
        %8724 = vmatpush2.msra.mxu0 %v8568
        %8725 = vmatprep.subr.mxu0 %v8567
        %8726 = vmatpush2.msra.mxu0 %v8566
        %8727 = vmatprep.subr.mxu0 %v8565
        %8728 = vmatpush2.msra.mxu0 %v8564
        %8729 = vmatprep.subr.mxu0 %v8563
        %8730 = vmatpush2.msra.mxu0 %v8562
        %8731 = vmatprep.subr.mxu0 %v8561
        %8732 = vmatpush2.msra.mxu0 %v8560
        %8733 = vmatprep.mubr.f32.mxu0 %v4836
        %8734 = vmatmul.mubr.f32.gmra.mxu0 %v4835
        %v8735 = vpop.f32.mrf.mxu0
        %v8736 = vadd.f32 %v8662, %v8735
        %v8737 = vpop.f32.mrf.mxu0
        %v8738 = vadd.f32 %v8666, %v8737
        %8739 = vmatprep.mubr.f32.mxu0 %v4848
        %8740 = vmatmul.mubr.f32.gmra.mxu0 %v4847
        %v8741 = vpop.f32.mrf.mxu0
        %v8742 = vadd.f32 %v8662, %v8741
        %v8743 = vpop.f32.mrf.mxu0
        %v8744 = vadd.f32 %v8666, %v8743
        %8745 = vmatprep.mubr.f32.mxu0 %v4860
        %8746 = vmatmul.mubr.f32.gmra.mxu0 %v4859
        %v8747 = vpop.f32.mrf.mxu0
        %v8748 = vadd.f32 %v8662, %v8747
        %v8749 = vpop.f32.mrf.mxu0
        %v8750 = vadd.f32 %v8666, %v8749
        %8751 = vmatprep.mubr.f32.mxu0 %v4872
        %8752 = vmatmul.mubr.f32.gmra.mxu0 %v4871
        %v8753 = vpop.f32.mrf.mxu0
        %v8754 = vadd.f32 %v8662, %v8753
        %v8755 = vpop.f32.mrf.mxu0
        %v8756 = vadd.f32 %v8666, %v8755
        %8757 = vmatprep.mubr.f32.mxu0 %v4884
        %8758 = vmatmul.mubr.f32.gmra.mxu0 %v4883
        %v8759 = vpop.f32.mrf.mxu0
        %v8760 = vadd.f32 %v8662, %v8759
        %v8761 = vpop.f32.mrf.mxu0
        %v8762 = vadd.f32 %v8666, %v8761
        %8763 = vmatprep.mubr.f32.mxu0 %v4896
        %8764 = vmatmul.mubr.f32.gmra.mxu0 %v4895
        %v8765 = vpop.f32.mrf.mxu0
        %v8766 = vadd.f32 %v8662, %v8765
        %v8767 = vpop.f32.mrf.mxu0
        %v8768 = vadd.f32 %v8666, %v8767
        %8769 = vmatprep.mubr.f32.mxu0 %v4908
        %8770 = vmatmul.mubr.f32.gmra.mxu0 %v4907
        %v8771 = vpop.f32.mrf.mxu0
        %v8772 = vadd.f32 %v8662, %v8771
        %v8773 = vpop.f32.mrf.mxu0
        %v8774 = vadd.f32 %v8666, %v8773
        %8775 = vmatprep.mubr.f32.mxu0 %v4920
        %8776 = vmatmul.mubr.f32.gmra.mxu0 %v4919
        %v8777 = vpop.f32.mrf.mxu0
        %v8778 = vadd.f32 %v8662, %v8777
        %v8779 = vpop.f32.mrf.mxu0
        %v8780 = vadd.f32 %v8666, %v8779
        %8781 = vmatprep.mubr.f32.mxu0 %v4932
        %8782 = vmatmul.mubr.f32.gmra.mxu0 %v4931
        %v8783 = vpop.f32.mrf.mxu0
        %v8784 = vadd.f32 %v8662, %v8783
        %v8785 = vpop.f32.mrf.mxu0
        %v8786 = vadd.f32 %v8666, %v8785
        %8787 = vmatprep.mubr.f32.mxu0 %v4944
        %8788 = vmatmul.mubr.f32.gmra.mxu0 %v4943
        %v8789 = vpop.f32.mrf.mxu0
        %v8790 = vadd.f32 %v8662, %v8789
        %v8791 = vpop.f32.mrf.mxu0
        %v8792 = vadd.f32 %v8666, %v8791
        %8793 = vmatprep.mubr.f32.mxu0 %v4956
        %8794 = vmatmul.mubr.f32.gmra.mxu0 %v4955
        %v8795 = vpop.f32.mrf.mxu0
        %v8796 = vadd.f32 %v8662, %v8795
        %v8797 = vpop.f32.mrf.mxu0
        %v8798 = vadd.f32 %v8666, %v8797
        %8799 = vmatprep.mubr.f32.mxu0 %v4968
        %8800 = vmatmul.mubr.f32.gmra.mxu0 %v4967
        %v8801 = vpop.f32.mrf.mxu0
        %v8802 = vadd.f32 %v8662, %v8801
        %v8803 = vpop.f32.mrf.mxu0
        %v8804 = vadd.f32 %v8666, %v8803
        %8805 = vmatprep.mubr.f32.mxu0 %v4980
        %8806 = vmatmul.mubr.f32.gmra.mxu0 %v4979
        %v8807 = vpop.f32.mrf.mxu0
        %v8808 = vadd.f32 %v8662, %v8807
        %v8809 = vpop.f32.mrf.mxu0
        %v8810 = vadd.f32 %v8666, %v8809
        %8811 = vmatprep.mubr.f32.mxu0 %v4992
        %8812 = vmatmul.mubr.f32.gmra.mxu0 %v4991
        %v8813 = vpop.f32.mrf.mxu0
        %v8814 = vadd.f32 %v8662, %v8813
        %v8815 = vpop.f32.mrf.mxu0
        %v8816 = vadd.f32 %v8666, %v8815
        %8817 = vmatprep.mubr.f32.mxu0 %v5004
        %8818 = vmatmul.mubr.f32.gmra.mxu0 %v5003
        %v8819 = vpop.f32.mrf.mxu0
        %v8820 = vadd.f32 %v8662, %v8819
        %v8821 = vpop.f32.mrf.mxu0
        %v8822 = vadd.f32 %v8666, %v8821
        %8823 = vmatprep.mubr.f32.mxu0 %v5016
        %8824 = vmatmul.mubr.f32.gmra.mxu0 %v5015
        %v8825 = vpop.f32.mrf.mxu0
        %v8826 = vadd.f32 %v8662, %v8825
        %v8827 = vpop.f32.mrf.mxu0
        %v8828 = vadd.f32 %v8666, %v8827
        %8829 = vmatprep.mubr.f32.mxu0 %v5028
        %8830 = vmatmul.mubr.f32.gmra.mxu0 %v5027
        %v8831 = vpop.f32.mrf.mxu0
        %v8832 = vadd.f32 %v8662, %v8831
        %v8833 = vpop.f32.mrf.mxu0
        %v8834 = vadd.f32 %v8666, %v8833
        %8835 = vmatprep.mubr.f32.mxu0 %v5040
        %8836 = vmatmul.mubr.f32.gmra.mxu0 %v5039
        %v8837 = vpop.f32.mrf.mxu0
        %v8838 = vadd.f32 %v8662, %v8837
        %v8839 = vpop.f32.mrf.mxu0
        %v8840 = vadd.f32 %v8666, %v8839
        %8841 = vmatprep.mubr.f32.mxu0 %v5052
        %8842 = vmatmul.mubr.f32.gmra.mxu0 %v5051
        %v8843 = vpop.f32.mrf.mxu0
        %v8844 = vadd.f32 %v8662, %v8843
        %v8845 = vpop.f32.mrf.mxu0
        %v8846 = vadd.f32 %v8666, %v8845
        %8847 = vmatprep.mubr.f32.mxu0 %v5064
        %8848 = vmatmul.mubr.f32.gmra.mxu0 %v5063
        %v8849 = vpop.f32.mrf.mxu0
        %v8850 = vadd.f32 %v8662, %v8849
        %v8851 = vpop.f32.mrf.mxu0
        %v8852 = vadd.f32 %v8666, %v8851
        %8853 = vmatprep.mubr.f32.mxu0 %v5076
        %8854 = vmatmul.mubr.f32.gmra.mxu0 %v5075
        %v8855 = vpop.f32.mrf.mxu0
        %v8856 = vadd.f32 %v8662, %v8855
        %v8857 = vpop.f32.mrf.mxu0
        %v8858 = vadd.f32 %v8666, %v8857
        %8859 = vmatprep.mubr.f32.mxu0 %v5088
        %8860 = vmatmul.mubr.f32.gmra.mxu0 %v5087
        %v8861 = vpop.f32.mrf.mxu0
        %v8862 = vadd.f32 %v8662, %v8861
        %v8863 = vpop.f32.mrf.mxu0
        %v8864 = vadd.f32 %v8666, %v8863
        %8865 = vmatprep.mubr.f32.mxu0 %v5100
        %8866 = vmatmul.mubr.f32.gmra.mxu0 %v5099
        %v8867 = vpop.f32.mrf.mxu0
        %v8868 = vadd.f32 %v8662, %v8867
        %v8869 = vpop.f32.mrf.mxu0
        %v8870 = vadd.f32 %v8666, %v8869
        %8871 = vmatprep.mubr.f32.mxu0 %v5112
        %8872 = vmatmul.mubr.f32.gmra.mxu0 %v5111
        %v8873 = vpop.f32.mrf.mxu0
        %v8874 = vadd.f32 %v8662, %v8873
        %v8875 = vpop.f32.mrf.mxu0
        %v8876 = vadd.f32 %v8666, %v8875
        %8877 = vmatprep.mubr.f32.mxu0 %v5124
        %8878 = vmatmul.mubr.f32.gmra.mxu0 %v5123
        %v8879 = vpop.f32.mrf.mxu0
        %v8880 = vadd.f32 %v8662, %v8879
        %v8881 = vpop.f32.mrf.mxu0
        %v8882 = vadd.f32 %v8666, %v8881
        %8883 = vmatprep.mubr.f32.mxu0 %v5136
        %8884 = vmatmul.mubr.f32.gmra.mxu0 %v5135
        %v8885 = vpop.f32.mrf.mxu0
        %v8886 = vadd.f32 %v8662, %v8885
        %v8887 = vpop.f32.mrf.mxu0
        %v8888 = vadd.f32 %v8666, %v8887
        %8889 = vmatprep.mubr.f32.mxu0 %v5148
        %8890 = vmatmul.mubr.f32.gmra.mxu0 %v5147
        %v8891 = vpop.f32.mrf.mxu0
        %v8892 = vadd.f32 %v8662, %v8891
        %v8893 = vpop.f32.mrf.mxu0
        %v8894 = vadd.f32 %v8666, %v8893
        %8895 = vmatprep.mubr.f32.mxu0 %v5160
        %8896 = vmatmul.mubr.f32.gmra.mxu0 %v5159
        %v8897 = vpop.f32.mrf.mxu0
        %v8898 = vadd.f32 %v8662, %v8897
        %v8899 = vpop.f32.mrf.mxu0
        %v8900 = vadd.f32 %v8666, %v8899
        %8901 = vmatprep.mubr.f32.mxu0 %v5172
        %8902 = vmatmul.mubr.f32.gmra.mxu0 %v5171
        %v8903 = vpop.f32.mrf.mxu0
        %v8904 = vadd.f32 %v8662, %v8903
        %v8905 = vpop.f32.mrf.mxu0
        %v8906 = vadd.f32 %v8666, %v8905
        %8907 = vmatprep.mubr.f32.mxu0 %v5184
        %8908 = vmatmul.mubr.f32.gmra.mxu0 %v5183
        %v8909 = vpop.f32.mrf.mxu0
        %v8910 = vadd.f32 %v8662, %v8909
        %v8911 = vpop.f32.mrf.mxu0
        %v8912 = vadd.f32 %v8666, %v8911
        %8913 = vmatprep.mubr.f32.mxu0 %v5196
        %8914 = vmatmul.mubr.f32.gmra.mxu0 %v5195
        %v8915 = vpop.f32.mrf.mxu0
        %v8916 = vadd.f32 %v8662, %v8915
        %v8917 = vpop.f32.mrf.mxu0
        %v8918 = vadd.f32 %v8666, %v8917
        %8919 = vmatprep.mubr.f32.mxu0 %v5208
        %8920 = vmatmul.mubr.f32.gmra.mxu0 %v5207
        %v8921 = vpop.f32.mrf.mxu0
        %v8922 = vadd.f32 %v8662, %v8921
        %v8923 = vpop.f32.mrf.mxu0
        %v8924 = vadd.f32 %v8666, %v8923
        %8925 = vdwg.mxu0
        %8926 = vmatprep.subr.mxu0 %v8623
        %8927 = vmatpush1.msra.mxu0 %v8622
        %8928 = vmatprep.subr.mxu0 %v8621
        %8929 = vmatpush1.msra.mxu0 %v8620
        %8930 = vmatprep.subr.mxu0 %v8619
        %8931 = vmatpush1.msra.mxu0 %v8618
        %8932 = vmatprep.subr.mxu0 %v8617
        %8933 = vmatpush1.msra.mxu0 %v8616
        %8934 = vmatprep.subr.mxu0 %v8615
        %8935 = vmatpush1.msra.mxu0 %v8614
        %8936 = vmatprep.subr.mxu0 %v8613
        %8937 = vmatpush1.msra.mxu0 %v8612
        %8938 = vmatprep.subr.mxu0 %v8611
        %8939 = vmatpush1.msra.mxu0 %v8610
        %8940 = vmatprep.subr.mxu0 %v8609
        %8941 = vmatpush1.msra.mxu0 %v8608
        %8942 = vmatprep.subr.mxu0 %v8607
        %8943 = vmatpush1.msra.mxu0 %v8606
        %8944 = vmatprep.subr.mxu0 %v8605
        %8945 = vmatpush1.msra.mxu0 %v8604
        %8946 = vmatprep.subr.mxu0 %v8603
        %8947 = vmatpush1.msra.mxu0 %v8602
        %8948 = vmatprep.subr.mxu0 %v8601
        %8949 = vmatpush1.msra.mxu0 %v8600
        %8950 = vmatprep.subr.mxu0 %v8599
        %8951 = vmatpush1.msra.mxu0 %v8598
        %8952 = vmatprep.subr.mxu0 %v8597
        %8953 = vmatpush1.msra.mxu0 %v8596
        %8954 = vmatprep.subr.mxu0 %v8595
        %8955 = vmatpush1.msra.mxu0 %v8594
        %8956 = vmatprep.subr.mxu0 %v8593
        %8957 = vmatpush1.msra.mxu0 %v8592
        %8958 = vmatprep.subr.mxu0 %v8655
        %8959 = vmatpush2.msra.mxu0 %v8654
        %8960 = vmatprep.subr.mxu0 %v8653
        %8961 = vmatpush2.msra.mxu0 %v8652
        %8962 = vmatprep.subr.mxu0 %v8651
        %8963 = vmatpush2.msra.mxu0 %v8650
        %8964 = vmatprep.subr.mxu0 %v8649
        %8965 = vmatpush2.msra.mxu0 %v8648
        %8966 = vmatprep.subr.mxu0 %v8647
        %8967 = vmatpush2.msra.mxu0 %v8646
        %8968 = vmatprep.subr.mxu0 %v8645
        %8969 = vmatpush2.msra.mxu0 %v8644
        %8970 = vmatprep.subr.mxu0 %v8643
        %8971 = vmatpush2.msra.mxu0 %v8642
        %8972 = vmatprep.subr.mxu0 %v8641
        %8973 = vmatpush2.msra.mxu0 %v8640
        %8974 = vmatprep.subr.mxu0 %v8639
        %8975 = vmatpush2.msra.mxu0 %v8638
        %8976 = vmatprep.subr.mxu0 %v8637
        %8977 = vmatpush2.msra.mxu0 %v8636
        %8978 = vmatprep.subr.mxu0 %v8635
        %8979 = vmatpush2.msra.mxu0 %v8634
        %8980 = vmatprep.subr.mxu0 %v8633
        %8981 = vmatpush2.msra.mxu0 %v8632
        %8982 = vmatprep.subr.mxu0 %v8631
        %8983 = vmatpush2.msra.mxu0 %v8630
        %8984 = vmatprep.subr.mxu0 %v8629
        %8985 = vmatpush2.msra.mxu0 %v8628
        %8986 = vmatprep.subr.mxu0 %v8627
        %8987 = vmatpush2.msra.mxu0 %v8626
        %8988 = vmatprep.subr.mxu0 %v8625
        %8989 = vmatpush2.msra.mxu0 %v8624
        %8990 = vmatprep.mubr.f32.mxu0 %v4838
        %8991 = vmatmul.mubr.f32.gmra.mxu0 %v4837
        %v8992 = vpop.f32.mrf.mxu0
        %v8993 = vadd.f32 %v8736, %v8992
        %v8994 = vpop.f32.mrf.mxu0
        %v8995 = vadd.f32 %v8738, %v8994
        %8996 = vmatprep.mubr.f32.mxu0 %v4850
        %8997 = vmatmul.mubr.f32.gmra.mxu0 %v4849
        %v8998 = vpop.f32.mrf.mxu0
        %v8999 = vadd.f32 %v8742, %v8998
        %v9000 = vpop.f32.mrf.mxu0
        %v9001 = vadd.f32 %v8744, %v9000
        %9002 = vmatprep.mubr.f32.mxu0 %v4862
        %9003 = vmatmul.mubr.f32.gmra.mxu0 %v4861
        %v9004 = vpop.f32.mrf.mxu0
        %v9005 = vadd.f32 %v8748, %v9004
        %v9006 = vpop.f32.mrf.mxu0
        %v9007 = vadd.f32 %v8750, %v9006
        %9008 = vmatprep.mubr.f32.mxu0 %v4874
        %9009 = vmatmul.mubr.f32.gmra.mxu0 %v4873
        %v9010 = vpop.f32.mrf.mxu0
        %v9011 = vadd.f32 %v8754, %v9010
        %v9012 = vpop.f32.mrf.mxu0
        %v9013 = vadd.f32 %v8756, %v9012
        %9014 = vmatprep.mubr.f32.mxu0 %v4886
        %9015 = vmatmul.mubr.f32.gmra.mxu0 %v4885
        %v9016 = vpop.f32.mrf.mxu0
        %v9017 = vadd.f32 %v8760, %v9016
        %v9018 = vpop.f32.mrf.mxu0
        %v9019 = vadd.f32 %v8762, %v9018
        %9020 = vmatprep.mubr.f32.mxu0 %v4898
        %9021 = vmatmul.mubr.f32.gmra.mxu0 %v4897
        %v9022 = vpop.f32.mrf.mxu0
        %v9023 = vadd.f32 %v8766, %v9022
        %v9024 = vpop.f32.mrf.mxu0
        %v9025 = vadd.f32 %v8768, %v9024
        %9026 = vmatprep.mubr.f32.mxu0 %v4910
        %9027 = vmatmul.mubr.f32.gmra.mxu0 %v4909
        %v9028 = vpop.f32.mrf.mxu0
        %v9029 = vadd.f32 %v8772, %v9028
        %v9030 = vpop.f32.mrf.mxu0
        %v9031 = vadd.f32 %v8774, %v9030
        %9032 = vmatprep.mubr.f32.mxu0 %v4922
        %9033 = vmatmul.mubr.f32.gmra.mxu0 %v4921
        %v9034 = vpop.f32.mrf.mxu0
        %v9035 = vadd.f32 %v8778, %v9034
        %v9036 = vpop.f32.mrf.mxu0
        %v9037 = vadd.f32 %v8780, %v9036
        %9038 = vmatprep.mubr.f32.mxu0 %v4934
        %9039 = vmatmul.mubr.f32.gmra.mxu0 %v4933
        %v9040 = vpop.f32.mrf.mxu0
        %v9041 = vadd.f32 %v8784, %v9040
        %v9042 = vpop.f32.mrf.mxu0
        %v9043 = vadd.f32 %v8786, %v9042
        %9044 = vmatprep.mubr.f32.mxu0 %v4946
        %9045 = vmatmul.mubr.f32.gmra.mxu0 %v4945
        %v9046 = vpop.f32.mrf.mxu0
        %v9047 = vadd.f32 %v8790, %v9046
        %v9048 = vpop.f32.mrf.mxu0
        %v9049 = vadd.f32 %v8792, %v9048
        %9050 = vmatprep.mubr.f32.mxu0 %v4958
        %9051 = vmatmul.mubr.f32.gmra.mxu0 %v4957
        %v9052 = vpop.f32.mrf.mxu0
        %v9053 = vadd.f32 %v8796, %v9052
        %v9054 = vpop.f32.mrf.mxu0
        %v9055 = vadd.f32 %v8798, %v9054
        %9056 = vmatprep.mubr.f32.mxu0 %v4970
        %9057 = vmatmul.mubr.f32.gmra.mxu0 %v4969
        %v9058 = vpop.f32.mrf.mxu0
        %v9059 = vadd.f32 %v8802, %v9058
        %v9060 = vpop.f32.mrf.mxu0
        %v9061 = vadd.f32 %v8804, %v9060
        %9062 = vmatprep.mubr.f32.mxu0 %v4982
        %9063 = vmatmul.mubr.f32.gmra.mxu0 %v4981
        %v9064 = vpop.f32.mrf.mxu0
        %v9065 = vadd.f32 %v8808, %v9064
        %v9066 = vpop.f32.mrf.mxu0
        %v9067 = vadd.f32 %v8810, %v9066
        %9068 = vmatprep.mubr.f32.mxu0 %v4994
        %9069 = vmatmul.mubr.f32.gmra.mxu0 %v4993
        %v9070 = vpop.f32.mrf.mxu0
        %v9071 = vadd.f32 %v8814, %v9070
        %v9072 = vpop.f32.mrf.mxu0
        %v9073 = vadd.f32 %v8816, %v9072
        %9074 = vmatprep.mubr.f32.mxu0 %v5006
        %9075 = vmatmul.mubr.f32.gmra.mxu0 %v5005
        %v9076 = vpop.f32.mrf.mxu0
        %v9077 = vadd.f32 %v8820, %v9076
        %v9078 = vpop.f32.mrf.mxu0
        %v9079 = vadd.f32 %v8822, %v9078
        %9080 = vmatprep.mubr.f32.mxu0 %v5018
        %9081 = vmatmul.mubr.f32.gmra.mxu0 %v5017
        %v9082 = vpop.f32.mrf.mxu0
        %v9083 = vadd.f32 %v8826, %v9082
        %v9084 = vpop.f32.mrf.mxu0
        %v9085 = vadd.f32 %v8828, %v9084
        %9086 = vmatprep.mubr.f32.mxu0 %v5030
        %9087 = vmatmul.mubr.f32.gmra.mxu0 %v5029
        %v9088 = vpop.f32.mrf.mxu0
        %v9089 = vadd.f32 %v8832, %v9088
        %v9090 = vpop.f32.mrf.mxu0
        %v9091 = vadd.f32 %v8834, %v9090
        %9092 = vmatprep.mubr.f32.mxu0 %v5042
        %9093 = vmatmul.mubr.f32.gmra.mxu0 %v5041
        %v9094 = vpop.f32.mrf.mxu0
        %v9095 = vadd.f32 %v8838, %v9094
        %v9096 = vpop.f32.mrf.mxu0
        %v9097 = vadd.f32 %v8840, %v9096
        %9098 = vmatprep.mubr.f32.mxu0 %v5054
        %9099 = vmatmul.mubr.f32.gmra.mxu0 %v5053
        %v9100 = vpop.f32.mrf.mxu0
        %v9101 = vadd.f32 %v8844, %v9100
        %v9102 = vpop.f32.mrf.mxu0
        %v9103 = vadd.f32 %v8846, %v9102
        %9104 = vmatprep.mubr.f32.mxu0 %v5066
        %9105 = vmatmul.mubr.f32.gmra.mxu0 %v5065
        %v9106 = vpop.f32.mrf.mxu0
        %v9107 = vadd.f32 %v8850, %v9106
        %v9108 = vpop.f32.mrf.mxu0
        %v9109 = vadd.f32 %v8852, %v9108
        %9110 = vmatprep.mubr.f32.mxu0 %v5078
        %9111 = vmatmul.mubr.f32.gmra.mxu0 %v5077
        %v9112 = vpop.f32.mrf.mxu0
        %v9113 = vadd.f32 %v8856, %v9112
        %v9114 = vpop.f32.mrf.mxu0
        %v9115 = vadd.f32 %v8858, %v9114
        %9116 = vmatprep.mubr.f32.mxu0 %v5090
        %9117 = vmatmul.mubr.f32.gmra.mxu0 %v5089
        %v9118 = vpop.f32.mrf.mxu0
        %v9119 = vadd.f32 %v8862, %v9118
        %v9120 = vpop.f32.mrf.mxu0
        %v9121 = vadd.f32 %v8864, %v9120
        %9122 = vmatprep.mubr.f32.mxu0 %v5102
        %9123 = vmatmul.mubr.f32.gmra.mxu0 %v5101
        %v9124 = vpop.f32.mrf.mxu0
        %v9125 = vadd.f32 %v8868, %v9124
        %v9126 = vpop.f32.mrf.mxu0
        %v9127 = vadd.f32 %v8870, %v9126
        %9128 = vmatprep.mubr.f32.mxu0 %v5114
        %9129 = vmatmul.mubr.f32.gmra.mxu0 %v5113
        %v9130 = vpop.f32.mrf.mxu0
        %v9131 = vadd.f32 %v8874, %v9130
        %v9132 = vpop.f32.mrf.mxu0
        %v9133 = vadd.f32 %v8876, %v9132
        %9134 = vmatprep.mubr.f32.mxu0 %v5126
        %9135 = vmatmul.mubr.f32.gmra.mxu0 %v5125
        %v9136 = vpop.f32.mrf.mxu0
        %v9137 = vadd.f32 %v8880, %v9136
        %v9138 = vpop.f32.mrf.mxu0
        %v9139 = vadd.f32 %v8882, %v9138
        %9140 = vmatprep.mubr.f32.mxu0 %v5138
        %9141 = vmatmul.mubr.f32.gmra.mxu0 %v5137
        %v9142 = vpop.f32.mrf.mxu0
        %v9143 = vadd.f32 %v8886, %v9142
        %v9144 = vpop.f32.mrf.mxu0
        %v9145 = vadd.f32 %v8888, %v9144
        %9146 = vmatprep.mubr.f32.mxu0 %v5150
        %9147 = vmatmul.mubr.f32.gmra.mxu0 %v5149
        %v9148 = vpop.f32.mrf.mxu0
        %v9149 = vadd.f32 %v8892, %v9148
        %v9150 = vpop.f32.mrf.mxu0
        %v9151 = vadd.f32 %v8894, %v9150
        %9152 = vmatprep.mubr.f32.mxu0 %v5162
        %9153 = vmatmul.mubr.f32.gmra.mxu0 %v5161
        %v9154 = vpop.f32.mrf.mxu0
        %v9155 = vadd.f32 %v8898, %v9154
        %v9156 = vpop.f32.mrf.mxu0
        %v9157 = vadd.f32 %v8900, %v9156
        %9158 = vmatprep.mubr.f32.mxu0 %v5174
        %9159 = vmatmul.mubr.f32.gmra.mxu0 %v5173
        %v9160 = vpop.f32.mrf.mxu0
        %v9161 = vadd.f32 %v8904, %v9160
        %v9162 = vpop.f32.mrf.mxu0
        %v9163 = vadd.f32 %v8906, %v9162
        %9164 = vmatprep.mubr.f32.mxu0 %v5186
        %9165 = vmatmul.mubr.f32.gmra.mxu0 %v5185
        %v9166 = vpop.f32.mrf.mxu0
        %v9167 = vadd.f32 %v8910, %v9166
        %v9168 = vpop.f32.mrf.mxu0
        %v9169 = vadd.f32 %v8912, %v9168
        %9170 = vmatprep.mubr.f32.mxu0 %v5198
        %9171 = vmatmul.mubr.f32.gmra.mxu0 %v5197
        %v9172 = vpop.f32.mrf.mxu0
        %v9173 = vadd.f32 %v8916, %v9172
        %v9174 = vpop.f32.mrf.mxu0
        %v9175 = vadd.f32 %v8918, %v9174
        %9176 = vmatprep.mubr.f32.mxu0 %v5210
        %9177 = vmatmul.mubr.f32.gmra.mxu0 %v5209
        %v9178 = vpop.f32.mrf.mxu0
        %v9179 = vadd.f32 %v8922, %v9178
        %v9180 = vpop.f32.mrf.mxu0
        %v9181 = vadd.f32 %v8924, %v9180
        %9182 = vdwg.mxu0
        %v9183 = vmax.f32 %v8993, 0.0
        %v9184 = vmax.f32 %v8995, 0.0
        %v9185 = vmax.f32 %v8999, 0.0
        %v9186 = vmax.f32 %v9001, 0.0
        %v9187 = vmax.f32 %v9005, 0.0
        %v9188 = vmax.f32 %v9007, 0.0
        %v9189 = vmax.f32 %v9011, 0.0
        %v9190 = vmax.f32 %v9013, 0.0
        %v9191 = vmax.f32 %v9017, 0.0
        %v9192 = vmax.f32 %v9019, 0.0
        %v9193 = vmax.f32 %v9023, 0.0
        %v9194 = vmax.f32 %v9025, 0.0
        %v9195 = vmax.f32 %v9029, 0.0
        %v9196 = vmax.f32 %v9031, 0.0
        %v9197 = vmax.f32 %v9035, 0.0
        %v9198 = vmax.f32 %v9037, 0.0
        %v9199 = vmax.f32 %v9041, 0.0
        %v9200 = vmax.f32 %v9043, 0.0
        %v9201 = vmax.f32 %v9047, 0.0
        %v9202 = vmax.f32 %v9049, 0.0
        %v9203 = vmax.f32 %v9053, 0.0
        %v9204 = vmax.f32 %v9055, 0.0
        %v9205 = vmax.f32 %v9059, 0.0
        %v9206 = vmax.f32 %v9061, 0.0
        %v9207 = vmax.f32 %v9065, 0.0
        %v9208 = vmax.f32 %v9067, 0.0
        %v9209 = vmax.f32 %v9071, 0.0
        %v9210 = vmax.f32 %v9073, 0.0
        %v9211 = vmax.f32 %v9077, 0.0
        %v9212 = vmax.f32 %v9079, 0.0
        %v9213 = vmax.f32 %v9083, 0.0
        %v9214 = vmax.f32 %v9085, 0.0
        %v9215 = vmax.f32 %v9089, 0.0
        %v9216 = vmax.f32 %v9091, 0.0
        %v9217 = vmax.f32 %v9095, 0.0
        %v9218 = vmax.f32 %v9097, 0.0
        %v9219 = vmax.f32 %v9101, 0.0
        %v9220 = vmax.f32 %v9103, 0.0
        %v9221 = vmax.f32 %v9107, 0.0
        %v9222 = vmax.f32 %v9109, 0.0
        %v9223 = vmax.f32 %v9113, 0.0
        %v9224 = vmax.f32 %v9115, 0.0
        %v9225 = vmax.f32 %v9119, 0.0
        %v9226 = vmax.f32 %v9121, 0.0
        %v9227 = vmax.f32 %v9125, 0.0
        %v9228 = vmax.f32 %v9127, 0.0
        %v9229 = vmax.f32 %v9131, 0.0
        %v9230 = vmax.f32 %v9133, 0.0
        %v9231 = vmax.f32 %v9137, 0.0
        %v9232 = vmax.f32 %v9139, 0.0
        %v9233 = vmax.f32 %v9143, 0.0
        %v9234 = vmax.f32 %v9145, 0.0
        %v9235 = vmax.f32 %v9149, 0.0
        %v9236 = vmax.f32 %v9151, 0.0
        %v9237 = vmax.f32 %v9155, 0.0
        %v9238 = vmax.f32 %v9157, 0.0
        %v9239 = vmax.f32 %v9161, 0.0
        %v9240 = vmax.f32 %v9163, 0.0
        %v9241 = vmax.f32 %v9167, 0.0
        %v9242 = vmax.f32 %v9169, 0.0
        %v9243 = vmax.f32 %v9173, 0.0
        %v9244 = vmax.f32 %v9175, 0.0
        %v9245 = vmax.f32 %v9179, 0.0
        %v9246 = vmax.f32 %v9181, 0.0
        %s9247 = scalar_lea.vmem [#allocation15], 512
        %v9248 = vld [vmem:[%s9247] sm:$0xff]
        %v9249 = vld [vmem:[%s9247 + $0x8] sm:$0xff]
        %v9250 = vld [vmem:[%s9247 + $0x10] sm:$0xff]
        %v9251 = vld [vmem:[%s9247 + $0x18] sm:$0xff]
        %v9252 = vld [vmem:[%s9247 + $0x20] sm:$0xff]
        %v9253 = vld [vmem:[%s9247 + $0x28] sm:$0xff]
        %v9254 = vld [vmem:[%s9247 + $0x30] sm:$0xff]
        %v9255 = vld [vmem:[%s9247 + $0x38] sm:$0xff]
        %v9256 = vld [vmem:[%s9247 + $0x40] sm:$0xff]
        %v9257 = vld [vmem:[%s9247 + $0x48] sm:$0xff]
        %v9258 = vld [vmem:[%s9247 + $0x50] sm:$0xff]
        %v9259 = vld [vmem:[%s9247 + $0x58] sm:$0xff]
        %v9260 = vld [vmem:[%s9247 + $0x60] sm:$0xff]
        %v9261 = vld [vmem:[%s9247 + $0x68] sm:$0xff]
        %v9262 = vld [vmem:[%s9247 + $0x70] sm:$0xff]
        %v9263 = vld [vmem:[%s9247 + $0x78] sm:$0xff]
        %v9264 = vld [vmem:[%s9247 + $0x80] sm:$0xff]
        %v9265 = vld [vmem:[%s9247 + $0x88] sm:$0xff]
        %v9266 = vld [vmem:[%s9247 + $0x90] sm:$0xff]
        %v9267 = vld [vmem:[%s9247 + $0x98] sm:$0xff]
        %v9268 = vld [vmem:[%s9247 + $0xa0] sm:$0xff]
        %v9269 = vld [vmem:[%s9247 + $0xa8] sm:$0xff]
        %v9270 = vld [vmem:[%s9247 + $0xb0] sm:$0xff]
        %v9271 = vld [vmem:[%s9247 + $0xb8] sm:$0xff]
        %v9272 = vld [vmem:[%s9247 + $0xc0] sm:$0xff]
        %v9273 = vld [vmem:[%s9247 + $0xc8] sm:$0xff]
        %v9274 = vld [vmem:[%s9247 + $0xd0] sm:$0xff]
        %v9275 = vld [vmem:[%s9247 + $0xd8] sm:$0xff]
        %v9276 = vld [vmem:[%s9247 + $0xe0] sm:$0xff]
        %v9277 = vld [vmem:[%s9247 + $0xe8] sm:$0xff]
        %v9278 = vld [vmem:[%s9247 + $0xf0] sm:$0xff]
        %v9279 = vld [vmem:[%s9247 + $0xf8] sm:$0xff]
        %s9280 = scalar_lea.vmem [#allocation16], 2
        %v9281 = vld [vmem:[%s9280] sm:$0x1]
        %v9283 = vlaneseq
        %v9284 = vshrl.u32 %v9283, 7
        %v9285 = vsub.s32 0, %v9284
        %v9286 = vrot.slane %v9281, %v9285
        %9288 = vmatprep.subr.mxu0 0.0
        %9289 = vmatpush1.msra.mxu0 %v9263
        %9290 = vmatprep.subr.mxu0 0.0
        %9291 = vmatpush1.msra.mxu0 %v9262
        %9292 = vmatprep.subr.mxu0 0.0
        %9293 = vmatpush1.msra.mxu0 %v9261
        %9294 = vmatprep.subr.mxu0 0.0
        %9295 = vmatpush1.msra.mxu0 %v9260
        %9296 = vmatprep.subr.mxu0 0.0
        %9297 = vmatpush1.msra.mxu0 %v9259
        %9298 = vmatprep.subr.mxu0 0.0
        %9299 = vmatpush1.msra.mxu0 %v9258
        %9300 = vmatprep.subr.mxu0 0.0
        %9301 = vmatpush1.msra.mxu0 %v9257
        %9302 = vmatprep.subr.mxu0 0.0
        %9303 = vmatpush1.msra.mxu0 %v9256
        %9304 = vmatprep.subr.mxu0 0.0
        %9305 = vmatpush1.msra.mxu0 %v9255
        %9306 = vmatprep.subr.mxu0 0.0
        %9307 = vmatpush1.msra.mxu0 %v9254
        %9308 = vmatprep.subr.mxu0 0.0
        %9309 = vmatpush1.msra.mxu0 %v9253
        %9310 = vmatprep.subr.mxu0 0.0
        %9311 = vmatpush1.msra.mxu0 %v9252
        %9312 = vmatprep.subr.mxu0 0.0
        %9313 = vmatpush1.msra.mxu0 %v9251
        %9314 = vmatprep.subr.mxu0 0.0
        %9315 = vmatpush1.msra.mxu0 %v9250
        %9316 = vmatprep.subr.mxu0 0.0
        %9317 = vmatpush1.msra.mxu0 %v9249
        %9318 = vmatprep.subr.mxu0 0.0
        %9319 = vmatpush1.msra.mxu0 %v9248
        %9320 = vmatprep.subr.mxu0 0.0
        %9321 = vmatpush2.msra.mxu0 %v9279
        %9322 = vmatprep.subr.mxu0 0.0
        %9323 = vmatpush2.msra.mxu0 %v9278
        %9324 = vmatprep.subr.mxu0 0.0
        %9325 = vmatpush2.msra.mxu0 %v9277
        %9326 = vmatprep.subr.mxu0 0.0
        %9327 = vmatpush2.msra.mxu0 %v9276
        %9328 = vmatprep.subr.mxu0 0.0
        %9329 = vmatpush2.msra.mxu0 %v9275
        %9330 = vmatprep.subr.mxu0 0.0
        %9331 = vmatpush2.msra.mxu0 %v9274
        %9332 = vmatprep.subr.mxu0 0.0
        %9333 = vmatpush2.msra.mxu0 %v9273
        %9334 = vmatprep.subr.mxu0 0.0
        %9335 = vmatpush2.msra.mxu0 %v9272
        %9336 = vmatprep.subr.mxu0 0.0
        %9337 = vmatpush2.msra.mxu0 %v9271
        %9338 = vmatprep.subr.mxu0 0.0
        %9339 = vmatpush2.msra.mxu0 %v9270
        %9340 = vmatprep.subr.mxu0 0.0
        %9341 = vmatpush2.msra.mxu0 %v9269
        %9342 = vmatprep.subr.mxu0 0.0
        %9343 = vmatpush2.msra.mxu0 %v9268
        %9344 = vmatprep.subr.mxu0 0.0
        %9345 = vmatpush2.msra.mxu0 %v9267
        %9346 = vmatprep.subr.mxu0 0.0
        %9347 = vmatpush2.msra.mxu0 %v9266
        %9348 = vmatprep.subr.mxu0 0.0
        %9349 = vmatpush2.msra.mxu0 %v9265
        %9350 = vmatprep.subr.mxu0 0.0
        %9351 = vmatpush2.msra.mxu0 %v9264
        %9352 = vmatprep.mubr.f32.mxu0 %v9184
        %9353 = vmatmul.mubr.f32.gmra.mxu0 %v9183
        %v9354 = vpop.f32.mrf.mxu0
        %v9355 = vadd.f32 %v9286, %v9354
        %v9356 = vpop.f32.mrf.mxu0
        %9357 = vmatprep.mubr.f32.mxu0 %v9186
        %9358 = vmatmul.mubr.f32.gmra.mxu0 %v9185
        %v9359 = vpop.f32.mrf.mxu0
        %v9360 = vadd.f32 %v9286, %v9359
        %v9361 = vpop.f32.mrf.mxu0
        %9362 = vmatprep.mubr.f32.mxu0 %v9188
        %9363 = vmatmul.mubr.f32.gmra.mxu0 %v9187
        %v9364 = vpop.f32.mrf.mxu0
        %v9365 = vadd.f32 %v9286, %v9364
        %v9366 = vpop.f32.mrf.mxu0
        %9367 = vmatprep.mubr.f32.mxu0 %v9190
        %9368 = vmatmul.mubr.f32.gmra.mxu0 %v9189
        %v9369 = vpop.f32.mrf.mxu0
        %v9370 = vadd.f32 %v9286, %v9369
        %v9371 = vpop.f32.mrf.mxu0
        %9372 = vmatprep.mubr.f32.mxu0 %v9192
        %9373 = vmatmul.mubr.f32.gmra.mxu0 %v9191
        %v9374 = vpop.f32.mrf.mxu0
        %v9375 = vadd.f32 %v9286, %v9374
        %v9376 = vpop.f32.mrf.mxu0
        %9377 = vmatprep.mubr.f32.mxu0 %v9194
        %9378 = vmatmul.mubr.f32.gmra.mxu0 %v9193
        %v9379 = vpop.f32.mrf.mxu0
        %v9380 = vadd.f32 %v9286, %v9379
        %v9381 = vpop.f32.mrf.mxu0
        %9382 = vmatprep.mubr.f32.mxu0 %v9196
        %9383 = vmatmul.mubr.f32.gmra.mxu0 %v9195
        %v9384 = vpop.f32.mrf.mxu0
        %v9385 = vadd.f32 %v9286, %v9384
        %v9386 = vpop.f32.mrf.mxu0
        %9387 = vmatprep.mubr.f32.mxu0 %v9198
        %9388 = vmatmul.mubr.f32.gmra.mxu0 %v9197
        %v9389 = vpop.f32.mrf.mxu0
        %v9390 = vadd.f32 %v9286, %v9389
        %v9391 = vpop.f32.mrf.mxu0
        %9392 = vmatprep.mubr.f32.mxu0 %v9200
        %9393 = vmatmul.mubr.f32.gmra.mxu0 %v9199
        %v9394 = vpop.f32.mrf.mxu0
        %v9395 = vadd.f32 %v9286, %v9394
        %v9396 = vpop.f32.mrf.mxu0
        %9397 = vmatprep.mubr.f32.mxu0 %v9202
        %9398 = vmatmul.mubr.f32.gmra.mxu0 %v9201
        %v9399 = vpop.f32.mrf.mxu0
        %v9400 = vadd.f32 %v9286, %v9399
        %v9401 = vpop.f32.mrf.mxu0
        %9402 = vmatprep.mubr.f32.mxu0 %v9204
        %9403 = vmatmul.mubr.f32.gmra.mxu0 %v9203
        %v9404 = vpop.f32.mrf.mxu0
        %v9405 = vadd.f32 %v9286, %v9404
        %v9406 = vpop.f32.mrf.mxu0
        %9407 = vmatprep.mubr.f32.mxu0 %v9206
        %9408 = vmatmul.mubr.f32.gmra.mxu0 %v9205
        %v9409 = vpop.f32.mrf.mxu0
        %v9410 = vadd.f32 %v9286, %v9409
        %v9411 = vpop.f32.mrf.mxu0
        %9412 = vmatprep.mubr.f32.mxu0 %v9208
        %9413 = vmatmul.mubr.f32.gmra.mxu0 %v9207
        %v9414 = vpop.f32.mrf.mxu0
        %v9415 = vadd.f32 %v9286, %v9414
        %v9416 = vpop.f32.mrf.mxu0
        %9417 = vmatprep.mubr.f32.mxu0 %v9210
        %9418 = vmatmul.mubr.f32.gmra.mxu0 %v9209
        %v9419 = vpop.f32.mrf.mxu0
        %v9420 = vadd.f32 %v9286, %v9419
        %v9421 = vpop.f32.mrf.mxu0
        %9422 = vmatprep.mubr.f32.mxu0 %v9212
        %9423 = vmatmul.mubr.f32.gmra.mxu0 %v9211
        %v9424 = vpop.f32.mrf.mxu0
        %v9425 = vadd.f32 %v9286, %v9424
        %v9426 = vpop.f32.mrf.mxu0
        %9427 = vmatprep.mubr.f32.mxu0 %v9214
        %9428 = vmatmul.mubr.f32.gmra.mxu0 %v9213
        %v9429 = vpop.f32.mrf.mxu0
        %v9430 = vadd.f32 %v9286, %v9429
        %v9431 = vpop.f32.mrf.mxu0
        %9432 = vmatprep.mubr.f32.mxu0 %v9216
        %9433 = vmatmul.mubr.f32.gmra.mxu0 %v9215
        %v9434 = vpop.f32.mrf.mxu0
        %v9435 = vadd.f32 %v9286, %v9434
        %v9436 = vpop.f32.mrf.mxu0
        %9437 = vmatprep.mubr.f32.mxu0 %v9218
        %9438 = vmatmul.mubr.f32.gmra.mxu0 %v9217
        %v9439 = vpop.f32.mrf.mxu0
        %v9440 = vadd.f32 %v9286, %v9439
        %v9441 = vpop.f32.mrf.mxu0
        %9442 = vmatprep.mubr.f32.mxu0 %v9220
        %9443 = vmatmul.mubr.f32.gmra.mxu0 %v9219
        %v9444 = vpop.f32.mrf.mxu0
        %v9445 = vadd.f32 %v9286, %v9444
        %v9446 = vpop.f32.mrf.mxu0
        %9447 = vmatprep.mubr.f32.mxu0 %v9222
        %9448 = vmatmul.mubr.f32.gmra.mxu0 %v9221
        %v9449 = vpop.f32.mrf.mxu0
        %v9450 = vadd.f32 %v9286, %v9449
        %v9451 = vpop.f32.mrf.mxu0
        %9452 = vmatprep.mubr.f32.mxu0 %v9224
        %9453 = vmatmul.mubr.f32.gmra.mxu0 %v9223
        %v9454 = vpop.f32.mrf.mxu0
        %v9455 = vadd.f32 %v9286, %v9454
        %v9456 = vpop.f32.mrf.mxu0
        %9457 = vmatprep.mubr.f32.mxu0 %v9226
        %9458 = vmatmul.mubr.f32.gmra.mxu0 %v9225
        %v9459 = vpop.f32.mrf.mxu0
        %v9460 = vadd.f32 %v9286, %v9459
        %v9461 = vpop.f32.mrf.mxu0
        %9462 = vmatprep.mubr.f32.mxu0 %v9228
        %9463 = vmatmul.mubr.f32.gmra.mxu0 %v9227
        %v9464 = vpop.f32.mrf.mxu0
        %v9465 = vadd.f32 %v9286, %v9464
        %v9466 = vpop.f32.mrf.mxu0
        %9467 = vmatprep.mubr.f32.mxu0 %v9230
        %9468 = vmatmul.mubr.f32.gmra.mxu0 %v9229
        %v9469 = vpop.f32.mrf.mxu0
        %v9470 = vadd.f32 %v9286, %v9469
        %v9471 = vpop.f32.mrf.mxu0
        %9472 = vmatprep.mubr.f32.mxu0 %v9232
        %9473 = vmatmul.mubr.f32.gmra.mxu0 %v9231
        %v9474 = vpop.f32.mrf.mxu0
        %v9475 = vadd.f32 %v9286, %v9474
        %v9476 = vpop.f32.mrf.mxu0
        %9477 = vmatprep.mubr.f32.mxu0 %v9234
        %9478 = vmatmul.mubr.f32.gmra.mxu0 %v9233
        %v9479 = vpop.f32.mrf.mxu0
        %v9480 = vadd.f32 %v9286, %v9479
        %v9481 = vpop.f32.mrf.mxu0
        %9482 = vmatprep.mubr.f32.mxu0 %v9236
        %9483 = vmatmul.mubr.f32.gmra.mxu0 %v9235
        %v9484 = vpop.f32.mrf.mxu0
        %v9485 = vadd.f32 %v9286, %v9484
        %v9486 = vpop.f32.mrf.mxu0
        %9487 = vmatprep.mubr.f32.mxu0 %v9238
        %9488 = vmatmul.mubr.f32.gmra.mxu0 %v9237
        %v9489 = vpop.f32.mrf.mxu0
        %v9490 = vadd.f32 %v9286, %v9489
        %v9491 = vpop.f32.mrf.mxu0
        %9492 = vmatprep.mubr.f32.mxu0 %v9240
        %9493 = vmatmul.mubr.f32.gmra.mxu0 %v9239
        %v9494 = vpop.f32.mrf.mxu0
        %v9495 = vadd.f32 %v9286, %v9494
        %v9496 = vpop.f32.mrf.mxu0
        %9497 = vmatprep.mubr.f32.mxu0 %v9242
        %9498 = vmatmul.mubr.f32.gmra.mxu0 %v9241
        %v9499 = vpop.f32.mrf.mxu0
        %v9500 = vadd.f32 %v9286, %v9499
        %v9501 = vpop.f32.mrf.mxu0
        %9502 = vmatprep.mubr.f32.mxu0 %v9244
        %9503 = vmatmul.mubr.f32.gmra.mxu0 %v9243
        %v9504 = vpop.f32.mrf.mxu0
        %v9505 = vadd.f32 %v9286, %v9504
        %v9506 = vpop.f32.mrf.mxu0
        %9507 = vmatprep.mubr.f32.mxu0 %v9246
        %9508 = vmatmul.mubr.f32.gmra.mxu0 %v9245
        %v9509 = vpop.f32.mrf.mxu0
        %v9510 = vadd.f32 %v9286, %v9509
        %v9511 = vpop.f32.mrf.mxu0
        %9512 = vdwg.mxu0
        %v9513 = vmax.f32 %v9355, 0.0
        %v9514 = vmax.f32 %v9360, 0.0
        %v9515 = vmax.f32 %v9365, 0.0
        %v9516 = vmax.f32 %v9370, 0.0
        %v9517 = vmax.f32 %v9375, 0.0
        %v9518 = vmax.f32 %v9380, 0.0
        %v9519 = vmax.f32 %v9385, 0.0
        %v9520 = vmax.f32 %v9390, 0.0
        %v9521 = vmax.f32 %v9395, 0.0
        %v9522 = vmax.f32 %v9400, 0.0
        %v9523 = vmax.f32 %v9405, 0.0
        %v9524 = vmax.f32 %v9410, 0.0
        %v9525 = vmax.f32 %v9415, 0.0
        %v9526 = vmax.f32 %v9420, 0.0
        %v9527 = vmax.f32 %v9425, 0.0
        %v9528 = vmax.f32 %v9430, 0.0
        %v9529 = vmax.f32 %v9435, 0.0
        %v9530 = vmax.f32 %v9440, 0.0
        %v9531 = vmax.f32 %v9445, 0.0
        %v9532 = vmax.f32 %v9450, 0.0
        %v9533 = vmax.f32 %v9455, 0.0
        %v9534 = vmax.f32 %v9460, 0.0
        %v9535 = vmax.f32 %v9465, 0.0
        %v9536 = vmax.f32 %v9470, 0.0
        %v9537 = vmax.f32 %v9475, 0.0
        %v9538 = vmax.f32 %v9480, 0.0
        %v9539 = vmax.f32 %v9485, 0.0
        %v9540 = vmax.f32 %v9490, 0.0
        %v9541 = vmax.f32 %v9495, 0.0
        %v9542 = vmax.f32 %v9500, 0.0
        %v9543 = vmax.f32 %v9505, 0.0
        %v9544 = vmax.f32 %v9510, 0.0
        %s9545 = scalar_lea.vmem [#allocation18], 256
        %v9546 = vld [vmem:[%s9545] sm:$0xff]
        %v9547 = vld [vmem:[%s9545 + $0x8] sm:$0xff]
        %v9548 = vld [vmem:[%s9545 + $0x10] sm:$0xff]
        %v9549 = vld [vmem:[%s9545 + $0x18] sm:$0xff]
        %v9550 = vld [vmem:[%s9545 + $0x20] sm:$0xff]
        %v9551 = vld [vmem:[%s9545 + $0x28] sm:$0xff]
        %v9552 = vld [vmem:[%s9545 + $0x30] sm:$0xff]
        %v9553 = vld [vmem:[%s9545 + $0x38] sm:$0xff]
        %v9554 = vld [vmem:[%s9545 + $0x40] sm:$0xff]
        %v9555 = vld [vmem:[%s9545 + $0x48] sm:$0xff]
        %v9556 = vld [vmem:[%s9545 + $0x50] sm:$0xff]
        %v9557 = vld [vmem:[%s9545 + $0x58] sm:$0xff]
        %v9558 = vld [vmem:[%s9545 + $0x60] sm:$0xff]
        %v9559 = vld [vmem:[%s9545 + $0x68] sm:$0xff]
        %v9560 = vld [vmem:[%s9545 + $0x70] sm:$0xff]
        %v9561 = vld [vmem:[%s9545 + $0x78] sm:$0xff]
        %s9562 = scalar_lea.vmem [#allocation19], 2
        %v9563 = vld [vmem:[%s9562] sm:$0x1]
        %v9565 = vlaneseq
        %v9566 = vshrl.u32 %v9565, 7
        %v9567 = vsub.s32 0, %v9566
        %v9568 = vrot.slane %v9563, %v9567
        %9570 = vmatprep.subr.mxu0 0.0
        %9571 = vmatpush1.msra.mxu0 %v9561
        %9572 = vmatprep.subr.mxu0 0.0
        %9573 = vmatpush1.msra.mxu0 %v9560
        %9574 = vmatprep.subr.mxu0 0.0
        %9575 = vmatpush1.msra.mxu0 %v9559
        %9576 = vmatprep.subr.mxu0 0.0
        %9577 = vmatpush1.msra.mxu0 %v9558
        %9578 = vmatprep.subr.mxu0 0.0
        %9579 = vmatpush1.msra.mxu0 %v9557
        %9580 = vmatprep.subr.mxu0 0.0
        %9581 = vmatpush1.msra.mxu0 %v9556
        %9582 = vmatprep.subr.mxu0 0.0
        %9583 = vmatpush1.msra.mxu0 %v9555
        %9584 = vmatprep.subr.mxu0 0.0
        %9585 = vmatpush1.msra.mxu0 %v9554
        %9586 = vmatprep.subr.mxu0 0.0
        %9587 = vmatpush1.msra.mxu0 %v9553
        %9588 = vmatprep.subr.mxu0 0.0
        %9589 = vmatpush1.msra.mxu0 %v9552
        %9590 = vmatprep.subr.mxu0 0.0
        %9591 = vmatpush1.msra.mxu0 %v9551
        %9592 = vmatprep.subr.mxu0 0.0
        %9593 = vmatpush1.msra.mxu0 %v9550
        %9594 = vmatprep.subr.mxu0 0.0
        %9595 = vmatpush1.msra.mxu0 %v9549
        %9596 = vmatprep.subr.mxu0 0.0
        %9597 = vmatpush1.msra.mxu0 %v9548
        %9598 = vmatprep.subr.mxu0 0.0
        %9599 = vmatpush1.msra.mxu0 %v9547
        %9600 = vmatprep.subr.mxu0 0.0
        %9601 = vmatpush1.msra.mxu0 %v9546
        %9602 = vmatprep.subr.mxu0 0.0
        %9603 = vmatpush2.msra.mxu0 0.0
        %9604 = vmatprep.subr.mxu0 0.0
        %9605 = vmatpush2.msra.mxu0 0.0
        %9606 = vmatprep.subr.mxu0 0.0
        %9607 = vmatpush2.msra.mxu0 0.0
        %9608 = vmatprep.subr.mxu0 0.0
        %9609 = vmatpush2.msra.mxu0 0.0
        %9610 = vmatprep.subr.mxu0 0.0
        %9611 = vmatpush2.msra.mxu0 0.0
        %9612 = vmatprep.subr.mxu0 0.0
        %9613 = vmatpush2.msra.mxu0 0.0
        %9614 = vmatprep.subr.mxu0 0.0
        %9615 = vmatpush2.msra.mxu0 0.0
        %9616 = vmatprep.subr.mxu0 0.0
        %9617 = vmatpush2.msra.mxu0 0.0
        %9618 = vmatprep.subr.mxu0 0.0
        %9619 = vmatpush2.msra.mxu0 0.0
        %9620 = vmatprep.subr.mxu0 0.0
        %9621 = vmatpush2.msra.mxu0 0.0
        %9622 = vmatprep.subr.mxu0 0.0
        %9623 = vmatpush2.msra.mxu0 0.0
        %9624 = vmatprep.subr.mxu0 0.0
        %9625 = vmatpush2.msra.mxu0 0.0
        %9626 = vmatprep.subr.mxu0 0.0
        %9627 = vmatpush2.msra.mxu0 0.0
        %9628 = vmatprep.subr.mxu0 0.0
        %9629 = vmatpush2.msra.mxu0 0.0
        %9630 = vmatprep.subr.mxu0 0.0
        %9631 = vmatpush2.msra.mxu0 0.0
        %9632 = vmatprep.subr.mxu0 0.0
        %9633 = vmatpush2.msra.mxu0 0.0
        %9634 = vmatprep.mubr.f32.mxu0 0.0
        %9635 = vmatmul.mubr.f32.gmra.mxu0 %v9513
        %v9636 = vpop.f32.mrf.mxu0
        %v9637 = vadd.f32 %v9568, %v9636
        %v9638 = vpop.f32.mrf.mxu0
        %9639 = vmatprep.mubr.f32.mxu0 0.0
        %9640 = vmatmul.mubr.f32.gmra.mxu0 %v9514
        %v9641 = vpop.f32.mrf.mxu0
        %v9642 = vadd.f32 %v9568, %v9641
        %v9643 = vpop.f32.mrf.mxu0
        %9644 = vmatprep.mubr.f32.mxu0 0.0
        %9645 = vmatmul.mubr.f32.gmra.mxu0 %v9515
        %v9646 = vpop.f32.mrf.mxu0
        %v9647 = vadd.f32 %v9568, %v9646
        %v9648 = vpop.f32.mrf.mxu0
        %9649 = vmatprep.mubr.f32.mxu0 0.0
        %9650 = vmatmul.mubr.f32.gmra.mxu0 %v9516
        %v9651 = vpop.f32.mrf.mxu0
        %v9652 = vadd.f32 %v9568, %v9651
        %v9653 = vpop.f32.mrf.mxu0
        %9654 = vmatprep.mubr.f32.mxu0 0.0
        %9655 = vmatmul.mubr.f32.gmra.mxu0 %v9517
        %v9656 = vpop.f32.mrf.mxu0
        %v9657 = vadd.f32 %v9568, %v9656
        %v9658 = vpop.f32.mrf.mxu0
        %9659 = vmatprep.mubr.f32.mxu0 0.0
        %9660 = vmatmul.mubr.f32.gmra.mxu0 %v9518
        %v9661 = vpop.f32.mrf.mxu0
        %v9662 = vadd.f32 %v9568, %v9661
        %v9663 = vpop.f32.mrf.mxu0
        %9664 = vmatprep.mubr.f32.mxu0 0.0
        %9665 = vmatmul.mubr.f32.gmra.mxu0 %v9519
        %v9666 = vpop.f32.mrf.mxu0
        %v9667 = vadd.f32 %v9568, %v9666
        %v9668 = vpop.f32.mrf.mxu0
        %9669 = vmatprep.mubr.f32.mxu0 0.0
        %9670 = vmatmul.mubr.f32.gmra.mxu0 %v9520
        %v9671 = vpop.f32.mrf.mxu0
        %v9672 = vadd.f32 %v9568, %v9671
        %v9673 = vpop.f32.mrf.mxu0
        %9674 = vmatprep.mubr.f32.mxu0 0.0
        %9675 = vmatmul.mubr.f32.gmra.mxu0 %v9521
        %v9676 = vpop.f32.mrf.mxu0
        %v9677 = vadd.f32 %v9568, %v9676
        %v9678 = vpop.f32.mrf.mxu0
        %9679 = vmatprep.mubr.f32.mxu0 0.0
        %9680 = vmatmul.mubr.f32.gmra.mxu0 %v9522
        %v9681 = vpop.f32.mrf.mxu0
        %v9682 = vadd.f32 %v9568, %v9681
        %v9683 = vpop.f32.mrf.mxu0
        %9684 = vmatprep.mubr.f32.mxu0 0.0
        %9685 = vmatmul.mubr.f32.gmra.mxu0 %v9523
        %v9686 = vpop.f32.mrf.mxu0
        %v9687 = vadd.f32 %v9568, %v9686
        %v9688 = vpop.f32.mrf.mxu0
        %9689 = vmatprep.mubr.f32.mxu0 0.0
        %9690 = vmatmul.mubr.f32.gmra.mxu0 %v9524
        %v9691 = vpop.f32.mrf.mxu0
        %v9692 = vadd.f32 %v9568, %v9691
        %v9693 = vpop.f32.mrf.mxu0
        %9694 = vmatprep.mubr.f32.mxu0 0.0
        %9695 = vmatmul.mubr.f32.gmra.mxu0 %v9525
        %v9696 = vpop.f32.mrf.mxu0
        %v9697 = vadd.f32 %v9568, %v9696
        %v9698 = vpop.f32.mrf.mxu0
        %9699 = vmatprep.mubr.f32.mxu0 0.0
        %9700 = vmatmul.mubr.f32.gmra.mxu0 %v9526
        %v9701 = vpop.f32.mrf.mxu0
        %v9702 = vadd.f32 %v9568, %v9701
        %v9703 = vpop.f32.mrf.mxu0
        %9704 = vmatprep.mubr.f32.mxu0 0.0
        %9705 = vmatmul.mubr.f32.gmra.mxu0 %v9527
        %v9706 = vpop.f32.mrf.mxu0
        %v9707 = vadd.f32 %v9568, %v9706
        %v9708 = vpop.f32.mrf.mxu0
        %9709 = vmatprep.mubr.f32.mxu0 0.0
        %9710 = vmatmul.mubr.f32.gmra.mxu0 %v9528
        %v9711 = vpop.f32.mrf.mxu0
        %v9712 = vadd.f32 %v9568, %v9711
        %v9713 = vpop.f32.mrf.mxu0
        %9714 = vmatprep.mubr.f32.mxu0 0.0
        %9715 = vmatmul.mubr.f32.gmra.mxu0 %v9529
        %v9716 = vpop.f32.mrf.mxu0
        %v9717 = vadd.f32 %v9568, %v9716
        %v9718 = vpop.f32.mrf.mxu0
        %9719 = vmatprep.mubr.f32.mxu0 0.0
        %9720 = vmatmul.mubr.f32.gmra.mxu0 %v9530
        %v9721 = vpop.f32.mrf.mxu0
        %v9722 = vadd.f32 %v9568, %v9721
        %v9723 = vpop.f32.mrf.mxu0
        %9724 = vmatprep.mubr.f32.mxu0 0.0
        %9725 = vmatmul.mubr.f32.gmra.mxu0 %v9531
        %v9726 = vpop.f32.mrf.mxu0
        %v9727 = vadd.f32 %v9568, %v9726
        %v9728 = vpop.f32.mrf.mxu0
        %9729 = vmatprep.mubr.f32.mxu0 0.0
        %9730 = vmatmul.mubr.f32.gmra.mxu0 %v9532
        %v9731 = vpop.f32.mrf.mxu0
        %v9732 = vadd.f32 %v9568, %v9731
        %v9733 = vpop.f32.mrf.mxu0
        %9734 = vmatprep.mubr.f32.mxu0 0.0
        %9735 = vmatmul.mubr.f32.gmra.mxu0 %v9533
        %v9736 = vpop.f32.mrf.mxu0
        %v9737 = vadd.f32 %v9568, %v9736
        %v9738 = vpop.f32.mrf.mxu0
        %9739 = vmatprep.mubr.f32.mxu0 0.0
        %9740 = vmatmul.mubr.f32.gmra.mxu0 %v9534
        %v9741 = vpop.f32.mrf.mxu0
        %v9742 = vadd.f32 %v9568, %v9741
        %v9743 = vpop.f32.mrf.mxu0
        %9744 = vmatprep.mubr.f32.mxu0 0.0
        %9745 = vmatmul.mubr.f32.gmra.mxu0 %v9535
        %v9746 = vpop.f32.mrf.mxu0
        %v9747 = vadd.f32 %v9568, %v9746
        %v9748 = vpop.f32.mrf.mxu0
        %9749 = vmatprep.mubr.f32.mxu0 0.0
        %9750 = vmatmul.mubr.f32.gmra.mxu0 %v9536
        %v9751 = vpop.f32.mrf.mxu0
        %v9752 = vadd.f32 %v9568, %v9751
        %v9753 = vpop.f32.mrf.mxu0
        %9754 = vmatprep.mubr.f32.mxu0 0.0
        %9755 = vmatmul.mubr.f32.gmra.mxu0 %v9537
        %v9756 = vpop.f32.mrf.mxu0
        %v9757 = vadd.f32 %v9568, %v9756
        %v9758 = vpop.f32.mrf.mxu0
        %9759 = vmatprep.mubr.f32.mxu0 0.0
        %9760 = vmatmul.mubr.f32.gmra.mxu0 %v9538
        %v9761 = vpop.f32.mrf.mxu0
        %v9762 = vadd.f32 %v9568, %v9761
        %v9763 = vpop.f32.mrf.mxu0
        %9764 = vmatprep.mubr.f32.mxu0 0.0
        %9765 = vmatmul.mubr.f32.gmra.mxu0 %v9539
        %v9766 = vpop.f32.mrf.mxu0
        %v9767 = vadd.f32 %v9568, %v9766
        %v9768 = vpop.f32.mrf.mxu0
        %9769 = vmatprep.mubr.f32.mxu0 0.0
        %9770 = vmatmul.mubr.f32.gmra.mxu0 %v9540
        %v9771 = vpop.f32.mrf.mxu0
        %v9772 = vadd.f32 %v9568, %v9771
        %v9773 = vpop.f32.mrf.mxu0
        %9774 = vmatprep.mubr.f32.mxu0 0.0
        %9775 = vmatmul.mubr.f32.gmra.mxu0 %v9541
        %v9776 = vpop.f32.mrf.mxu0
        %v9777 = vadd.f32 %v9568, %v9776
        %v9778 = vpop.f32.mrf.mxu0
        %9779 = vmatprep.mubr.f32.mxu0 0.0
        %9780 = vmatmul.mubr.f32.gmra.mxu0 %v9542
        %v9781 = vpop.f32.mrf.mxu0
        %v9782 = vadd.f32 %v9568, %v9781
        %v9783 = vpop.f32.mrf.mxu0
        %9784 = vmatprep.mubr.f32.mxu0 0.0
        %9785 = vmatmul.mubr.f32.gmra.mxu0 %v9543
        %v9786 = vpop.f32.mrf.mxu0
        %v9787 = vadd.f32 %v9568, %v9786
        %v9788 = vpop.f32.mrf.mxu0
        %9789 = vmatprep.mubr.f32.mxu0 0.0
        %9790 = vmatmul.mubr.f32.gmra.mxu0 %v9544
        %v9791 = vpop.f32.mrf.mxu0
        %v9792 = vadd.f32 %v9568, %v9791
        %v9793 = vpop.f32.mrf.mxu0
        %9794 = vdwg.mxu0
        %v9795 = vmax.f32 %v9637, 0.0
        %v9796 = vmax.f32 %v9642, 0.0
        %v9797 = vmax.f32 %v9647, 0.0
        %v9798 = vmax.f32 %v9652, 0.0
        %v9799 = vmax.f32 %v9657, 0.0
        %v9800 = vmax.f32 %v9662, 0.0
        %v9801 = vmax.f32 %v9667, 0.0
        %v9802 = vmax.f32 %v9672, 0.0
        %v9803 = vmax.f32 %v9677, 0.0
        %v9804 = vmax.f32 %v9682, 0.0
        %v9805 = vmax.f32 %v9687, 0.0
        %v9806 = vmax.f32 %v9692, 0.0
        %v9807 = vmax.f32 %v9697, 0.0
        %v9808 = vmax.f32 %v9702, 0.0
        %v9809 = vmax.f32 %v9707, 0.0
        %v9810 = vmax.f32 %v9712, 0.0
        %v9811 = vmax.f32 %v9717, 0.0
        %v9812 = vmax.f32 %v9722, 0.0
        %v9813 = vmax.f32 %v9727, 0.0
        %v9814 = vmax.f32 %v9732, 0.0
        %v9815 = vmax.f32 %v9737, 0.0
        %v9816 = vmax.f32 %v9742, 0.0
        %v9817 = vmax.f32 %v9747, 0.0
        %v9818 = vmax.f32 %v9752, 0.0
        %v9819 = vmax.f32 %v9757, 0.0
        %v9820 = vmax.f32 %v9762, 0.0
        %v9821 = vmax.f32 %v9767, 0.0
        %v9822 = vmax.f32 %v9772, 0.0
        %v9823 = vmax.f32 %v9777, 0.0
        %v9824 = vmax.f32 %v9782, 0.0
        %v9825 = vmax.f32 %v9787, 0.0
        %v9826 = vmax.f32 %v9792, 0.0
        %s9827 = scalar_lea.vmem [#allocation21], 112
        %v9828 = vld [vmem:[%s9827] sm:$0xff]
        %v9829 = vld [vmem:[%s9827 + $0x8] sm:$0xff]
        %v9830 = vld [vmem:[%s9827 + $0x10] sm:$0xff]
        %v9831 = vld [vmem:[%s9827 + $0x18] sm:$0xff]
        %v9832 = vld [vmem:[%s9827 + $0x20] sm:$0xff]
        %v9833 = vld [vmem:[%s9827 + $0x28] sm:$0xff]
        %v9834 = vld [vmem:[%s9827 + $0x30] sm:$0xff]
        %v9836 = vsel %vm6512, %v9795, 0
        %v9839 = vsel %vm6512, %v9796, 0
        %v9842 = vsel %vm6512, %v9797, 0
        %v9845 = vsel %vm6512, %v9798, 0
        %v9848 = vsel %vm6512, %v9799, 0
        %v9851 = vsel %vm6512, %v9800, 0
        %v9854 = vsel %vm6512, %v9801, 0
        %v9857 = vsel %vm6512, %v9802, 0
        %v9860 = vsel %vm6512, %v9803, 0
        %v9863 = vsel %vm6512, %v9804, 0
        %v9866 = vsel %vm6512, %v9805, 0
        %v9869 = vsel %vm6512, %v9806, 0
        %v9872 = vsel %vm6512, %v9807, 0
        %v9875 = vsel %vm6512, %v9808, 0
        %v9878 = vsel %vm6512, %v9809, 0
        %v9881 = vsel %vm6512, %v9810, 0
        %v9884 = vsel %vm6512, %v9811, 0
        %v9887 = vsel %vm6512, %v9812, 0
        %v9890 = vsel %vm6512, %v9813, 0
        %v9893 = vsel %vm6512, %v9814, 0
        %v9896 = vsel %vm6512, %v9815, 0
        %v9899 = vsel %vm6512, %v9816, 0
        %v9902 = vsel %vm6512, %v9817, 0
        %v9905 = vsel %vm6512, %v9818, 0
        %v9908 = vsel %vm6512, %v9819, 0
        %v9911 = vsel %vm6512, %v9820, 0
        %v9914 = vsel %vm6512, %v9821, 0
        %v9917 = vsel %vm6512, %v9822, 0
        %v9920 = vsel %vm6512, %v9823, 0
        %v9923 = vsel %vm6512, %v9824, 0
        %v9926 = vsel %vm6512, %v9825, 0
        %v9929 = vsel %vm6512, %v9826, 0
        %9931 = vmatprep.subr.mxu0 0.0
        %9932 = vmatpush1.msra.mxu0 0.0
        %9933 = vmatprep.subr.mxu0 0.0
        %9934 = vmatpush1.msra.mxu0 0.0
        %9935 = vmatprep.subr.mxu0 0.0
        %9936 = vmatpush1.msra.mxu0 0.0
        %9937 = vmatprep.subr.mxu0 0.0
        %9938 = vmatpush1.msra.mxu0 0.0
        %9939 = vmatprep.subr.mxu0 0.0
        %9940 = vmatpush1.msra.mxu0 0.0
        %9941 = vmatprep.subr.mxu0 0.0
        %9942 = vmatpush1.msra.mxu0 0.0
        %9943 = vmatprep.subr.mxu0 0.0
        %9944 = vmatpush1.msra.mxu0 0.0
        %9945 = vmatprep.subr.mxu0 0.0
        %9946 = vmatpush1.msra.mxu0 0.0
        %9947 = vmatprep.subr.mxu0 0.0
        %9948 = vmatpush1.msra.mxu0 0.0
        %9949 = vmatprep.subr.mxu0 0.0
        %9950 = vmatpush1.msra.mxu0 %v9834
        %9951 = vmatprep.subr.mxu0 0.0
        %9952 = vmatpush1.msra.mxu0 %v9833
        %9953 = vmatprep.subr.mxu0 0.0
        %9954 = vmatpush1.msra.mxu0 %v9832
        %9955 = vmatprep.subr.mxu0 0.0
        %9956 = vmatpush1.msra.mxu0 %v9831
        %9957 = vmatprep.subr.mxu0 0.0
        %9958 = vmatpush1.msra.mxu0 %v9830
        %9959 = vmatprep.subr.mxu0 0.0
        %9960 = vmatpush1.msra.mxu0 %v9829
        %9961 = vmatprep.subr.mxu0 0.0
        %9962 = vmatpush1.msra.mxu0 %v9828
        %9963 = vmatprep.subr.mxu0 0.0
        %9964 = vmatpush2.msra.mxu0 0.0
        %9965 = vmatprep.subr.mxu0 0.0
        %9966 = vmatpush2.msra.mxu0 0.0
        %9967 = vmatprep.subr.mxu0 0.0
        %9968 = vmatpush2.msra.mxu0 0.0
        %9969 = vmatprep.subr.mxu0 0.0
        %9970 = vmatpush2.msra.mxu0 0.0
        %9971 = vmatprep.subr.mxu0 0.0
        %9972 = vmatpush2.msra.mxu0 0.0
        %9973 = vmatprep.subr.mxu0 0.0
        %9974 = vmatpush2.msra.mxu0 0.0
        %9975 = vmatprep.subr.mxu0 0.0
        %9976 = vmatpush2.msra.mxu0 0.0
        %9977 = vmatprep.subr.mxu0 0.0
        %9978 = vmatpush2.msra.mxu0 0.0
        %9979 = vmatprep.subr.mxu0 0.0
        %9980 = vmatpush2.msra.mxu0 0.0
        %9981 = vmatprep.subr.mxu0 0.0
        %9982 = vmatpush2.msra.mxu0 0.0
        %9983 = vmatprep.subr.mxu0 0.0
        %9984 = vmatpush2.msra.mxu0 0.0
        %9985 = vmatprep.subr.mxu0 0.0
        %9986 = vmatpush2.msra.mxu0 0.0
        %9987 = vmatprep.subr.mxu0 0.0
        %9988 = vmatpush2.msra.mxu0 0.0
        %9989 = vmatprep.subr.mxu0 0.0
        %9990 = vmatpush2.msra.mxu0 0.0
        %9991 = vmatprep.subr.mxu0 0.0
        %9992 = vmatpush2.msra.mxu0 0.0
        %9993 = vmatprep.subr.mxu0 0.0
        %9994 = vmatpush2.msra.mxu0 0.0
        %9995 = vmatprep.mubr.f32.mxu0 0.0
        %9996 = vmatmul.mubr.f32.gmra.mxu0 %v9836
        %v9997 = vpop.f32.mrf.mxu0
        %v9998 = vadd.f32 0.0, %v9997
        %v9999 = vpop.f32.mrf.mxu0
        %10000 = vmatprep.mubr.f32.mxu0 0.0
        %10001 = vmatmul.mubr.f32.gmra.mxu0 %v9839
        %v10002 = vpop.f32.mrf.mxu0
        %v10003 = vadd.f32 0.0, %v10002
        %v10004 = vpop.f32.mrf.mxu0
        %10005 = vmatprep.mubr.f32.mxu0 0.0
        %10006 = vmatmul.mubr.f32.gmra.mxu0 %v9842
        %v10007 = vpop.f32.mrf.mxu0
        %v10008 = vadd.f32 0.0, %v10007
        %v10009 = vpop.f32.mrf.mxu0
        %10010 = vmatprep.mubr.f32.mxu0 0.0
        %10011 = vmatmul.mubr.f32.gmra.mxu0 %v9845
        %v10012 = vpop.f32.mrf.mxu0
        %v10013 = vadd.f32 0.0, %v10012
        %v10014 = vpop.f32.mrf.mxu0
        %10015 = vmatprep.mubr.f32.mxu0 0.0
        %10016 = vmatmul.mubr.f32.gmra.mxu0 %v9848
        %v10017 = vpop.f32.mrf.mxu0
        %v10018 = vadd.f32 0.0, %v10017
        %v10019 = vpop.f32.mrf.mxu0
        %10020 = vmatprep.mubr.f32.mxu0 0.0
        %10021 = vmatmul.mubr.f32.gmra.mxu0 %v9851
        %v10022 = vpop.f32.mrf.mxu0
        %v10023 = vadd.f32 0.0, %v10022
        %v10024 = vpop.f32.mrf.mxu0
        %10025 = vmatprep.mubr.f32.mxu0 0.0
        %10026 = vmatmul.mubr.f32.gmra.mxu0 %v9854
        %v10027 = vpop.f32.mrf.mxu0
        %v10028 = vadd.f32 0.0, %v10027
        %v10029 = vpop.f32.mrf.mxu0
        %10030 = vmatprep.mubr.f32.mxu0 0.0
        %10031 = vmatmul.mubr.f32.gmra.mxu0 %v9857
        %v10032 = vpop.f32.mrf.mxu0
        %v10033 = vadd.f32 0.0, %v10032
        %v10034 = vpop.f32.mrf.mxu0
        %10035 = vmatprep.mubr.f32.mxu0 0.0
        %10036 = vmatmul.mubr.f32.gmra.mxu0 %v9860
        %v10037 = vpop.f32.mrf.mxu0
        %v10038 = vadd.f32 0.0, %v10037
        %v10039 = vpop.f32.mrf.mxu0
        %10040 = vmatprep.mubr.f32.mxu0 0.0
        %10041 = vmatmul.mubr.f32.gmra.mxu0 %v9863
        %v10042 = vpop.f32.mrf.mxu0
        %v10043 = vadd.f32 0.0, %v10042
        %v10044 = vpop.f32.mrf.mxu0
        %10045 = vmatprep.mubr.f32.mxu0 0.0
        %10046 = vmatmul.mubr.f32.gmra.mxu0 %v9866
        %v10047 = vpop.f32.mrf.mxu0
        %v10048 = vadd.f32 0.0, %v10047
        %v10049 = vpop.f32.mrf.mxu0
        %10050 = vmatprep.mubr.f32.mxu0 0.0
        %10051 = vmatmul.mubr.f32.gmra.mxu0 %v9869
        %v10052 = vpop.f32.mrf.mxu0
        %v10053 = vadd.f32 0.0, %v10052
        %v10054 = vpop.f32.mrf.mxu0
        %10055 = vmatprep.mubr.f32.mxu0 0.0
        %10056 = vmatmul.mubr.f32.gmra.mxu0 %v9872
        %v10057 = vpop.f32.mrf.mxu0
        %v10058 = vadd.f32 0.0, %v10057
        %v10059 = vpop.f32.mrf.mxu0
        %10060 = vmatprep.mubr.f32.mxu0 0.0
        %10061 = vmatmul.mubr.f32.gmra.mxu0 %v9875
        %v10062 = vpop.f32.mrf.mxu0
        %v10063 = vadd.f32 0.0, %v10062
        %v10064 = vpop.f32.mrf.mxu0
        %10065 = vmatprep.mubr.f32.mxu0 0.0
        %10066 = vmatmul.mubr.f32.gmra.mxu0 %v9878
        %v10067 = vpop.f32.mrf.mxu0
        %v10068 = vadd.f32 0.0, %v10067
        %v10069 = vpop.f32.mrf.mxu0
        %10070 = vmatprep.mubr.f32.mxu0 0.0
        %10071 = vmatmul.mubr.f32.gmra.mxu0 %v9881
        %v10072 = vpop.f32.mrf.mxu0
        %v10073 = vadd.f32 0.0, %v10072
        %v10074 = vpop.f32.mrf.mxu0
        %10075 = vmatprep.mubr.f32.mxu0 0.0
        %10076 = vmatmul.mubr.f32.gmra.mxu0 %v9884
        %v10077 = vpop.f32.mrf.mxu0
        %v10078 = vadd.f32 0.0, %v10077
        %v10079 = vpop.f32.mrf.mxu0
        %10080 = vmatprep.mubr.f32.mxu0 0.0
        %10081 = vmatmul.mubr.f32.gmra.mxu0 %v9887
        %v10082 = vpop.f32.mrf.mxu0
        %v10083 = vadd.f32 0.0, %v10082
        %v10084 = vpop.f32.mrf.mxu0
        %10085 = vmatprep.mubr.f32.mxu0 0.0
        %10086 = vmatmul.mubr.f32.gmra.mxu0 %v9890
        %v10087 = vpop.f32.mrf.mxu0
        %v10088 = vadd.f32 0.0, %v10087
        %v10089 = vpop.f32.mrf.mxu0
        %10090 = vmatprep.mubr.f32.mxu0 0.0
        %10091 = vmatmul.mubr.f32.gmra.mxu0 %v9893
        %v10092 = vpop.f32.mrf.mxu0
        %v10093 = vadd.f32 0.0, %v10092
        %v10094 = vpop.f32.mrf.mxu0
        %10095 = vmatprep.mubr.f32.mxu0 0.0
        %10096 = vmatmul.mubr.f32.gmra.mxu0 %v9896
        %v10097 = vpop.f32.mrf.mxu0
        %v10098 = vadd.f32 0.0, %v10097
        %v10099 = vpop.f32.mrf.mxu0
        %10100 = vmatprep.mubr.f32.mxu0 0.0
        %10101 = vmatmul.mubr.f32.gmra.mxu0 %v9899
        %v10102 = vpop.f32.mrf.mxu0
        %v10103 = vadd.f32 0.0, %v10102
        %v10104 = vpop.f32.mrf.mxu0
        %10105 = vmatprep.mubr.f32.mxu0 0.0
        %10106 = vmatmul.mubr.f32.gmra.mxu0 %v9902
        %v10107 = vpop.f32.mrf.mxu0
        %v10108 = vadd.f32 0.0, %v10107
        %v10109 = vpop.f32.mrf.mxu0
        %10110 = vmatprep.mubr.f32.mxu0 0.0
        %10111 = vmatmul.mubr.f32.gmra.mxu0 %v9905
        %v10112 = vpop.f32.mrf.mxu0
        %v10113 = vadd.f32 0.0, %v10112
        %v10114 = vpop.f32.mrf.mxu0
        %10115 = vmatprep.mubr.f32.mxu0 0.0
        %10116 = vmatmul.mubr.f32.gmra.mxu0 %v9908
        %v10117 = vpop.f32.mrf.mxu0
        %v10118 = vadd.f32 0.0, %v10117
        %v10119 = vpop.f32.mrf.mxu0
        %10120 = vmatprep.mubr.f32.mxu0 0.0
        %10121 = vmatmul.mubr.f32.gmra.mxu0 %v9911
        %v10122 = vpop.f32.mrf.mxu0
        %v10123 = vadd.f32 0.0, %v10122
        %v10124 = vpop.f32.mrf.mxu0
        %10125 = vmatprep.mubr.f32.mxu0 0.0
        %10126 = vmatmul.mubr.f32.gmra.mxu0 %v9914
        %v10127 = vpop.f32.mrf.mxu0
        %v10128 = vadd.f32 0.0, %v10127
        %v10129 = vpop.f32.mrf.mxu0
        %10130 = vmatprep.mubr.f32.mxu0 0.0
        %10131 = vmatmul.mubr.f32.gmra.mxu0 %v9917
        %v10132 = vpop.f32.mrf.mxu0
        %v10133 = vadd.f32 0.0, %v10132
        %v10134 = vpop.f32.mrf.mxu0
        %10135 = vmatprep.mubr.f32.mxu0 0.0
        %10136 = vmatmul.mubr.f32.gmra.mxu0 %v9920
        %v10137 = vpop.f32.mrf.mxu0
        %v10138 = vadd.f32 0.0, %v10137
        %v10139 = vpop.f32.mrf.mxu0
        %10140 = vmatprep.mubr.f32.mxu0 0.0
        %10141 = vmatmul.mubr.f32.gmra.mxu0 %v9923
        %v10142 = vpop.f32.mrf.mxu0
        %v10143 = vadd.f32 0.0, %v10142
        %v10144 = vpop.f32.mrf.mxu0
        %10145 = vmatprep.mubr.f32.mxu0 0.0
        %10146 = vmatmul.mubr.f32.gmra.mxu0 %v9926
        %v10147 = vpop.f32.mrf.mxu0
        %v10148 = vadd.f32 0.0, %v10147
        %v10149 = vpop.f32.mrf.mxu0
        %10150 = vmatprep.mubr.f32.mxu0 0.0
        %10151 = vmatmul.mubr.f32.gmra.mxu0 %v9929
        %v10152 = vpop.f32.mrf.mxu0
        %v10153 = vadd.f32 0.0, %v10152
        %v10154 = vpop.f32.mrf.mxu0
        %10155 = vdwg.mxu0
        %v10156 = vadd.f32 %v8495, %v9998
        %v10157 = vadd.f32 %v8496, %v10003
        %v10158 = vadd.f32 %v8497, %v10008
        %v10159 = vadd.f32 %v8498, %v10013
        %v10160 = vadd.f32 %v8499, %v10018
        %v10161 = vadd.f32 %v8500, %v10023
        %v10162 = vadd.f32 %v8501, %v10028
        %v10163 = vadd.f32 %v8502, %v10033
        %v10164 = vadd.f32 %v8503, %v10038
        %v10165 = vadd.f32 %v8504, %v10043
        %v10166 = vadd.f32 %v8505, %v10048
        %v10167 = vadd.f32 %v8506, %v10053
        %v10168 = vadd.f32 %v8507, %v10058
        %v10169 = vadd.f32 %v8508, %v10063
        %v10170 = vadd.f32 %v8509, %v10068
        %v10171 = vadd.f32 %v8510, %v10073
        %v10172 = vadd.f32 %v8511, %v10078
        %v10173 = vadd.f32 %v8512, %v10083
        %v10174 = vadd.f32 %v8513, %v10088
        %v10175 = vadd.f32 %v8514, %v10093
        %v10176 = vadd.f32 %v8515, %v10098
        %v10177 = vadd.f32 %v8516, %v10103
        %v10178 = vadd.f32 %v8517, %v10108
        %v10179 = vadd.f32 %v8518, %v10113
        %v10180 = vadd.f32 %v8519, %v10118
        %v10181 = vadd.f32 %v8520, %v10123
        %v10182 = vadd.f32 %v8521, %v10128
        %v10183 = vadd.f32 %v8522, %v10133
        %v10184 = vadd.f32 %v8523, %v10138
        %v10185 = vadd.f32 %v8524, %v10143
        %v10186 = vadd.f32 %v8525, %v10148
        %v10187 = vadd.f32 %v8526, %v10153
        %vm10188 = vcmask 121856
        %10189 = vst.msk [vmem:[%s769] sm:$0xff] %vm10188, %v10156
        %10190 = vst.msk [vmem:[%s769 + $0x8] sm:$0xff] %vm10188, %v10157
        %10191 = vst.msk [vmem:[%s769 + $0x10] sm:$0xff] %vm10188, %v10158
        %10192 = vst.msk [vmem:[%s769 + $0x18] sm:$0xff] %vm10188, %v10159
        %10193 = vst.msk [vmem:[%s769 + $0x20] sm:$0xff] %vm10188, %v10160
        %10194 = vst.msk [vmem:[%s769 + $0x28] sm:$0xff] %vm10188, %v10161
        %10195 = vst.msk [vmem:[%s769 + $0x30] sm:$0xff] %vm10188, %v10162
        %10196 = vst.msk [vmem:[%s769 + $0x38] sm:$0xff] %vm10188, %v10163
        %10197 = vst.msk [vmem:[%s769 + $0x40] sm:$0xff] %vm10188, %v10164
        %10198 = vst.msk [vmem:[%s769 + $0x48] sm:$0xff] %vm10188, %v10165
        %10199 = vst.msk [vmem:[%s769 + $0x50] sm:$0xff] %vm10188, %v10166
        %10200 = vst.msk [vmem:[%s769 + $0x58] sm:$0xff] %vm10188, %v10167
        %10201 = vst.msk [vmem:[%s769 + $0x60] sm:$0xff] %vm10188, %v10168
        %10202 = vst.msk [vmem:[%s769 + $0x68] sm:$0xff] %vm10188, %v10169
        %10203 = vst.msk [vmem:[%s769 + $0x70] sm:$0xff] %vm10188, %v10170
        %10204 = vst.msk [vmem:[%s769 + $0x78] sm:$0xff] %vm10188, %v10171
        %10205 = vst.msk [vmem:[%s769 + $0x80] sm:$0xff] %vm10188, %v10172
        %10206 = vst.msk [vmem:[%s769 + $0x88] sm:$0xff] %vm10188, %v10173
        %10207 = vst.msk [vmem:[%s769 + $0x90] sm:$0xff] %vm10188, %v10174
        %10208 = vst.msk [vmem:[%s769 + $0x98] sm:$0xff] %vm10188, %v10175
        %10209 = vst.msk [vmem:[%s769 + $0xa0] sm:$0xff] %vm10188, %v10176
        %10210 = vst.msk [vmem:[%s769 + $0xa8] sm:$0xff] %vm10188, %v10177
        %10211 = vst.msk [vmem:[%s769 + $0xb0] sm:$0xff] %vm10188, %v10178
        %10212 = vst.msk [vmem:[%s769 + $0xb8] sm:$0xff] %vm10188, %v10179
        %10213 = vst.msk [vmem:[%s769 + $0xc0] sm:$0xff] %vm10188, %v10180
        %10214 = vst.msk [vmem:[%s769 + $0xc8] sm:$0xff] %vm10188, %v10181
        %10215 = vst.msk [vmem:[%s769 + $0xd0] sm:$0xff] %vm10188, %v10182
        %10216 = vst.msk [vmem:[%s769 + $0xd8] sm:$0xff] %vm10188, %v10183
        %10217 = vst.msk [vmem:[%s769 + $0xe0] sm:$0xff] %vm10188, %v10184
        %10218 = vst.msk [vmem:[%s769 + $0xe8] sm:$0xff] %vm10188, %v10185
        %10219 = vst.msk [vmem:[%s769 + $0xf0] sm:$0xff] %vm10188, %v10186
        %10220 = vst.msk [vmem:[%s769 + $0xf8] sm:$0xff] %vm10188, %v10187
        %s10221 = smul.u32 32, %s37
        %p10222 = scmp.lt.s32.totalorder %s10221, 63
        %s10223 = scalar_select %p10222, %s10221, 63
        %s10224 = smul.addr %s10223, 8
        %s10225 = scalar_lea.vmem %s17, %s10224
        // Predicated region
        $region153: #{_lambda_.1} parent=87 // pred_check
          %p10226 = pneg %p417
        $region154: #{_lambda_.1} parent=87 // pred_check_branch
          %10228 = sbr.rel (%p10226) target = $region156
        $region155: #{_lambda_.1} parent=87 // pred_region
          %s10229 = smul.u32 32, %s37
        $region156: #{_lambda_.1} parent=87 // pred_fallthru
          _
      $region88: #{_lambda_.1} parent=5 // pred_fallthru
        _
      %p10230 = scmp.le.s32.totalorder 2, %s32
      // Predicated region
      $region157: #{_lambda_.1} parent=5 // pred_check
        %p10231 = pneg %p10230
      $region158: #{_lambda_.1} parent=5 // pred_check_branch
        %10233 = sbr.rel (%p10231) target = $region160
      $region159: #{_lambda_.1} parent=5 // pred_region
        %s10234 = ssub.s32 %s32, 2
        // Predicated region
        $region161: #{_lambda_.1} parent=159 // pred_check
          %p10235 = pneg %p423
        $region162: #{_lambda_.1} parent=159 // pred_check_branch
          %10237 = sbr.rel (%p10235) target = $region164
        $region163: #{_lambda_.1} parent=159 // pred_region
          %s10238 = smul.u32 32, %s38
          %p10239 = scmp.lt.s32.totalorder %s10238, 63
          %s10240 = scalar_select %p10239, %s10238, 63
          %s10241 = smul.addr %s10240, 8
          %s10242 = scalar_lea.vmem %s17, %s10241
        $region164: #{_lambda_.1} parent=159 // pred_fallthru
          _
      $region160: #{_lambda_.1} parent=5 // pred_fallthru
        _
    $region6: #{_lambda_.1} parent=1 // loop_footer
      %s36 = sadd.s32 1, %s32
    $region7: #{_lambda_.1} parent=1 // loop_footer_branch
      %31 = sbr.rel target = $region3
    $region8: #{_lambda_.1} parent=1 // loop_exit
      _
    %10243 = vsyncpa [#allocation3], 1
    %s10244 = scalar_lea.sflag [#allocation3], 1
    %10245 = vsyncpa %s10244, 1
    %10246 = vsyncpa [#allocation5], 1
    %10247 = vsyncpa [#allocation8], 1
    %10248 = vsyncpa [#allocation11], 1
    %10249 = vsyncpa [#allocation14], 1
    %10250 = vsyncpa [#allocation17], 1
    %10251 = vsyncpa [#allocation20], 1
    %10252 = vsyncpa [#allocation23], 1
    %10253 = vsyncpa [#allocation26], 1

</llo_original>
